<compile_context>
chip_gen: v7x
topology: tpu7x:2x2x1
jax: 0.10.0
libtpu: 0.0.40
codegen_flags: <defaults>
</compile_context>

<pallas_src>
import functools

import jax
import jax.numpy as jnp
from jax.experimental import pallas as pl
from jax.experimental.pallas import tpu as pltpu


# ----------------------------- in-kernel math -------------------------------

_SQRT1_2 = 0.7071067811865476


def _gelu(x):
    # Exact (erf) GELU, matching PyTorch nn.GELU() default, via the A&S 7.1.26
    # erf polynomial restructured with odd symmetry:
    #   q = 0.5*x*poly(t)*exp(-x^2/2),  t = 1/(1 + p*|x|/sqrt(2))
    #   gelu(x) = x - q   (x >= 0)      = q   (x < 0)
    # -> no sign multiply / (1+erf) recombination; exp and the divide ride the
    #    EUP slot, the polynomial is 5 FMAs on the VPU.
    a1, a2, a3, a4, a5 = 0.254829592, -0.284496736, 1.421413741, -1.453152027, 1.061405429
    p = 0.3275911
    z = jnp.abs(x) * _SQRT1_2
    t = 1.0 / (1.0 + p * z)
    poly = ((((a5 * t + a4) * t + a3) * t + a2) * t + a1) * t
    q = 0.5 * x * poly * jnp.exp(-z * z)
    return jnp.where(x >= 0.0, x - q, q)


# ------------------------------ Pallas kernels ------------------------------

def _encode0_kernel(x_ref, p_ref, o_ref):
    # encode0: Conv2d(1,1,1) -> GELU -> Dropout(id) -> Conv2d(1,1,1) -> GELU -> Dropout(id)
    # A 1x1 conv with Cin=Cout=1 is a scalar affine map; runs on a lane-dense slab.
    w0 = p_ref[0]
    b0 = p_ref[1]
    w1 = p_ref[2]
    b1 = p_ref[3]
    x = x_ref[...]
    x = _gelu(x * w0 + b0)
    x = _gelu(x * w1 + b1)
    o_ref[...] = x


def _conv_kernel(act, use_mxu, w_ref, p_ref, b_ref, o_ref):
    # Channels-major fused conv:  y = act(W(Cout,K) @ P(K,M) + b)
    # (BatchNorm of the *previous* layer is already folded into W, b.)
    if use_mxu:
        y = jnp.dot(w_ref[...], p_ref[...], preferred_element_type=jnp.float32)
    else:
        # Tiny contraction (K = 9 for the first conv): unrolled VPU FMAs
        # instead of a >93%-wasted MXU pass.
        w = w_ref[...]
        p = p_ref[...]
        y = w[:, 0:1] * p[0:1, :]
        for k in range(1, w.shape[1]):
            y = y + w[:, k:k + 1] * p[k:k + 1, :]
    y = y + b_ref[...]
    if act == "gelu":
        y = _gelu(y)
    else:
        y = jnp.tanh(y)
    o_ref[...] = y


# ------------------------------ kernel wrappers ------------------------------

def encode0_call(img, p4):
    N, C, H, W = img.shape
    total = N * C * H * W
    if total % 128 == 0:                  # lane-dense slab (full-width vld/vst)
        R, L = total // 128, 128
    else:
        R, L = N * C * H, W
    x2d = img.reshape(R, L)
    out = pl.pallas_call(
        _encode0_kernel,
        out_shape=jax.ShapeDtypeStruct((R, L), jnp.float32),
        grid=(1,),
        in_specs=[
            pl.BlockSpec((R, L), lambda i: (0, 0)),
            pl.BlockSpec(memory_space=pltpu.MemorySpace.SMEM),   # 4 scalars
        ],
        out_specs=pl.BlockSpec((R, L), lambda i: (0, 0)),
    )(x2d, p4)
    return out.reshape(N, C, H, W)


def conv_matmul(w2d, patches, bias, act):
    # w2d: (Cout, K); patches: (K, M); bias: (Cout,)  ->  (Cout, M) lane-dense.
    Cout, K = w2d.shape
    M = patches.shape[1]
    use_mxu = K >= 16
    kernel = functools.partial(_conv_kernel, act, use_mxu)
    return pl.pallas_call(
        kernel,
        out_shape=jax.ShapeDtypeStruct((Cout, M), jnp.float32),
        grid=(1,),
        in_specs=[
            pl.BlockSpec((Cout, K), lambda i: (0, 0)),
            pl.BlockSpec((K, M), lambda i: (0, 0)),
            pl.BlockSpec((Cout, 1), lambda i: (0, 0)),
        ],
        out_specs=pl.BlockSpec((Cout, M), lambda i: (0, 0)),
    )(w2d, patches, bias.reshape(Cout, 1))


# ------------------------------ JAX glue -------------------------------------

def _im2col_cm(x4, kh, kw):
    # x4: (C, N, H, W) channels-major -> (C*kh*kw, N*Ho*Wo)
    # K-index ordering c*kh*kw + ky*kw + kx matches torch weight.reshape(Cout, Cin*kh*kw).
    C, N, H, W = x4.shape
    Ho, Wo = H - kh + 1, W - kw + 1
    taps = jnp.stack(
        [x4[:, :, ky:ky + Ho, kx:kx + Wo] for ky in range(kh) for kx in range(kw)],
        axis=1,
    )                                       # (C, kh*kw, N, Ho, Wo)
    return taps.reshape(C * kh * kw, N * Ho * Wo)


def _maxpool2_cm(x4):
    # 2x2/stride-2 max-pool on (C, N, H, W); pure XLA glue (fused with im2col).
    return jnp.maximum(
        jnp.maximum(x4[:, :, 0::2, 0::2], x4[:, :, 0::2, 1::2]),
        jnp.maximum(x4[:, :, 1::2, 0::2], x4[:, :, 1::2, 1::2]))


def conv_layer(x4, w, b, *, act):
    # x4: (Cin, N, H, W); w: (Cout, Cin, kh, kw) (BN-prefolded); b: (Cout,)
    Cin, N, H, W = x4.shape
    Cout, _, kh, kw = w.shape
    Ho, Wo = H - kh + 1, W - kw + 1
    patches = _im2col_cm(x4, kh, kw)                    # (K, M)
    w2d = w.reshape(Cout, Cin * kh * kw)
    y = conv_matmul(w2d, patches, b, act)               # (Cout, M) lane-dense
    return y.reshape(Cout, N, Ho, Wo)                   # stays channels-major


def fold_bn_into_next_conv(w, b, bn):
    # Sequential order: Conv -> GELU -> (Dropout) -> BN [-> MaxPool] -> next Conv.
    # Eval BN is the per-input-channel affine z*s + t, s = gamma/rsqrt-ish,
    # which folds exactly into the NEXT conv:
    #   w'[o,c,.,.] = w[o,c,.,.] * s[c]
    #   b'[o]       = b[o] + sum_{c,ky,kx} w[o,c,ky,kx] * t[c]
    # (Exact; commuting the affine past MaxPool2d requires s > 0, which holds
    #  for default / typical BN state.)
    gamma, beta, mean, var, eps = bn
    s = gamma / jnp.sqrt(var + eps)
    t = beta - mean * s
    w_f = w * s[None, :, None, None]
    b_f = b + jnp.einsum("oikl,i->o", w, t)
    return w_f, b_f


@jax.jit
def encoder_forward(img, params):
    N = img.shape[0]

    # ---- encode0 (elementwise, lane-dense slab) ----
    p0 = jnp.stack([params["w0a"], params["b0a"],
                    params["w0b"], params["b0b"]]).astype(jnp.float32)
    img_out = encode0_call(img, p0)                        # (N, 1, 32, 32)

    # ---- fold each eval-BN into the conv that consumes it ----
    w2, b2 = fold_bn_into_next_conv(params["w2"], params["b2"], params["bn1"])
    w3, b3 = fold_bn_into_next_conv(params["w3"], params["b3"], params["bn2"])
    w4, b4 = fold_bn_into_next_conv(params["w4"], params["b4"], params["bn3"])
    w5, b5 = fold_bn_into_next_conv(params["w5"], params["b5"], params["bn4"])

    # ---- encode1 (channels-major throughout; pools in fused XLA glue) ----
    x = img_out.transpose(1, 0, 2, 3)                      # (1,  N, 32, 32)
    x = conv_layer(x, params["w1"], params["b1"], act="gelu")   # (16, N, 30, 30)
    x = conv_layer(x, w2, b2, act="gelu")                       # (32, N, 28, 28)
    x = _maxpool2_cm(x)                                         # (32, N, 14, 14)
    x = conv_layer(x, w3, b3, act="gelu")                       # (64, N, 12, 12)
    x = _maxpool2_cm(x)                                         # (64, N, 6, 6)
    x = conv_layer(x, w4, b4, act="gelu")                       # (64, N, 4, 4)
    x = _maxpool2_cm(x)                                         # (64, N, 2, 2)
    x = conv_layer(x, w5, b5, act="tanh")                       # (64, N, 1, 1)

    out = x.reshape(64, N).T                                    # == output.view(bs, -1)
    return out, img_out


# ------------------------------ parameter init -------------------------------

def conv_init(key, cout, cin, kh, kw):
    # PyTorch default Conv2d init: U(-1/sqrt(fan_in), 1/sqrt(fan_in))
    kw_, kb_ = jax.random.split(key)
    fan_in = cin * kh * kw
    bound = 1.0 / (fan_in ** 0.5)
    w = jax.random.uniform(kw_, (cout, cin, kh, kw), jnp.float32, -bound, bound)
    b = jax.random.uniform(kb_, (cout,), jnp.float32, -bound, bound)
    return w, b


def bn_default(c):
    # (gamma, beta, running_mean, running_var, eps) -- fresh nn.BatchNorm2d state
    return (jnp.ones((c,), jnp.float32), jnp.zeros((c,), jnp.float32),
            jnp.zeros((c,), jnp.float32), jnp.ones((c,), jnp.float32), 1e-5)


# ---------------------------------- main --------------------------------------

if __name__ == "__main__":
    key = jax.random.PRNGKey(0)
    k_img, k0a, k0b, k1, k2, k3, k4, k5 = jax.random.split(key, 8)

    # Input: NCHW, single channel, 32x32 so the conv/pool chain ends at 1x1.
    img = jax.random.normal(k_img, (2, 1, 32, 32), jnp.float32)

    params = {}
    w, b = conv_init(k0a, 1, 1, 1, 1)
    params["w0a"], params["b0a"] = w[0, 0, 0, 0], b[0]
    w, b = conv_init(k0b, 1, 1, 1, 1)
    params["w0b"], params["b0b"] = w[0, 0, 0, 0], b[0]
    params["w1"], params["b1"] = conv_init(k1, 16, 1, 3, 3)
    params["w2"], params["b2"] = conv_init(k2, 32, 16, 3, 3)
    params["w3"], params["b3"] = conv_init(k3, 64, 32, 3, 3)
    params["w4"], params["b4"] = conv_init(k4, 64, 64, 3, 3)
    params["w5"], params["b5"] = conv_init(k5, 64, 64, 2, 2)
    params["bn1"] = bn_default(16)
    params["bn2"] = bn_default(32)
    params["bn3"] = bn_default(64)
    params["bn4"] = bn_default(64)

    out_flat, img_out = encoder_forward(img, params)
    out_flat = jax.block_until_ready(out_flat)
    img_out = jax.block_until_ready(img_out)

    assert out_flat.shape == (2, 64), out_flat.shape
    assert img_out.shape == (2, 1, 32, 32), img_out.shape
    assert bool(jnp.all(jnp.isfinite(out_flat))) and bool(jnp.all(jnp.isfinite(img_out)))
    print("KERNEL_OK")
</pallas_src>

<mosaic_0001>
module attributes {stable_mosaic.version = 11 : i64} {
  func.func @_encode0_kernel(%arg0: i32, %arg1: memref<16x128xf32, #tpu.memory_space<vmem>>, %arg2: memref<4xf32, #tpu.memory_space<smem>>, %arg3: memref<16x128xf32, #tpu.memory_space<vmem>>) attributes {dimension_semantics = [#tpu.dimension_semantics<arbitrary>], iteration_bounds = array<i64: 1>, scalar_prefetch = 0 : i64, scratch_operands = 0 : i64, tpu.core_type = #tpu.core_type<tc>, window_params = [{pipeline_mode = #tpu.pipeline_mode<synchronous>, transform_indices = @transform_0, window_bounds = array<i64: 16, 128>}, {transform_indices = @transform_1, window_bounds = array<i64: 4>}, {pipeline_mode = #tpu.pipeline_mode<synchronous>, transform_indices = @transform_2, window_bounds = array<i64: 16, 128>}]} {
    %c0 = arith.constant 0 : index
    %0 = memref.load %arg2[%c0] : memref<4xf32, #tpu.memory_space<smem>>
    %c1 = arith.constant 1 : index
    %1 = memref.load %arg2[%c1] : memref<4xf32, #tpu.memory_space<smem>>
    %c2 = arith.constant 2 : index
    %2 = memref.load %arg2[%c2] : memref<4xf32, #tpu.memory_space<smem>>
    %c3 = arith.constant 3 : index
    %3 = memref.load %arg2[%c3] : memref<4xf32, #tpu.memory_space<smem>>
    %c0_0 = arith.constant 0 : index
    %c0_1 = arith.constant 0 : index
    %4 = vector.load %arg1[%c0_0, %c0_1] : memref<16x128xf32, #tpu.memory_space<vmem>>, vector<16x128xf32>
    %5 = vector.broadcast %0 : f32 to vector<16x128xf32>
    %6 = arith.mulf %4, %5 : vector<16x128xf32>
    %7 = vector.broadcast %1 : f32 to vector<16x128xf32>
    %8 = arith.addf %6, %7 : vector<16x128xf32>
    %9 = math.absf %8 : vector<16x128xf32>
    %cst = arith.constant 0.707106769 : f32
    %10 = vector.broadcast %cst : f32 to vector<16x128xf32>
    %11 = arith.mulf %9, %10 : vector<16x128xf32>
    %cst_2 = arith.constant 0.327591091 : f32
    %12 = vector.broadcast %cst_2 : f32 to vector<16x128xf32>
    %13 = arith.mulf %12, %11 : vector<16x128xf32>
    %cst_3 = arith.constant 1.000000e+00 : f32
    %14 = vector.broadcast %cst_3 : f32 to vector<16x128xf32>
    %15 = arith.addf %14, %13 : vector<16x128xf32>
    %cst_4 = arith.constant 1.000000e+00 : f32
    %16 = vector.broadcast %cst_4 : f32 to vector<16x128xf32>
    %17 = arith.divf %16, %15 : vector<16x128xf32>
    %cst_5 = arith.constant 1.06140542 : f32
    %18 = vector.broadcast %cst_5 : f32 to vector<16x128xf32>
    %19 = arith.mulf %18, %17 : vector<16x128xf32>
    %cst_6 = arith.constant -1.45315206 : f32
    %20 = vector.broadcast %cst_6 : f32 to vector<16x128xf32>
    %21 = arith.addf %19, %20 : vector<16x128xf32>
    %22 = arith.mulf %21, %17 : vector<16x128xf32>
    %cst_7 = arith.constant 1.42141378 : f32
    %23 = vector.broadcast %cst_7 : f32 to vector<16x128xf32>
    %24 = arith.addf %22, %23 : vector<16x128xf32>
    %25 = arith.mulf %24, %17 : vector<16x128xf32>
    %cst_8 = arith.constant -0.284496725 : f32
    %26 = vector.broadcast %cst_8 : f32 to vector<16x128xf32>
    %27 = arith.addf %25, %26 : vector<16x128xf32>
    %28 = arith.mulf %27, %17 : vector<16x128xf32>
    %cst_9 = arith.constant 0.254829586 : f32
    %29 = vector.broadcast %cst_9 : f32 to vector<16x128xf32>
    %30 = arith.addf %28, %29 : vector<16x128xf32>
    %31 = arith.mulf %30, %17 : vector<16x128xf32>
    %cst_10 = arith.constant 5.000000e-01 : f32
    %32 = vector.broadcast %cst_10 : f32 to vector<16x128xf32>
    %33 = arith.mulf %32, %8 : vector<16x128xf32>
    %34 = arith.mulf %33, %31 : vector<16x128xf32>
    %cst_11 = arith.constant 0.000000e+00 : f32
    %35 = vector.broadcast %cst_11 : f32 to vector<16x128xf32>
    %36 = arith.subf %35, %11 : vector<16x128xf32>
    %37 = arith.mulf %36, %11 : vector<16x128xf32>
    %38 = math.exp %37 : vector<16x128xf32>
    %39 = arith.mulf %34, %38 : vector<16x128xf32>
    %cst_12 = arith.constant 0.000000e+00 : f32
    %40 = vector.broadcast %cst_12 : f32 to vector<16x128xf32>
    %41 = arith.cmpf oge, %8, %40 : vector<16x128xf32>
    %42 = arith.subf %8, %39 : vector<16x128xf32>
    %43 = arith.select %41, %42, %39 : vector<16x128xi1>, vector<16x128xf32>
    %44 = vector.broadcast %2 : f32 to vector<16x128xf32>
    %45 = arith.mulf %43, %44 : vector<16x128xf32>
    %46 = vector.broadcast %3 : f32 to vector<16x128xf32>
    %47 = arith.addf %45, %46 : vector<16x128xf32>
    %48 = math.absf %47 : vector<16x128xf32>
    %cst_13 = arith.constant 0.707106769 : f32
    %49 = vector.broadcast %cst_13 : f32 to vector<16x128xf32>
    %50 = arith.mulf %48, %49 : vector<16x128xf32>
    %cst_14 = arith.constant 0.327591091 : f32
    %51 = vector.broadcast %cst_14 : f32 to vector<16x128xf32>
    %52 = arith.mulf %51, %50 : vector<16x128xf32>
    %cst_15 = arith.constant 1.000000e+00 : f32
    %53 = vector.broadcast %cst_15 : f32 to vector<16x128xf32>
    %54 = arith.addf %53, %52 : vector<16x128xf32>
    %cst_16 = arith.constant 1.000000e+00 : f32
    %55 = vector.broadcast %cst_16 : f32 to vector<16x128xf32>
    %56 = arith.divf %55, %54 : vector<16x128xf32>
    %cst_17 = arith.constant 1.06140542 : f32
    %57 = vector.broadcast %cst_17 : f32 to vector<16x128xf32>
    %58 = arith.mulf %57, %56 : vector<16x128xf32>
    %cst_18 = arith.constant -1.45315206 : f32
    %59 = vector.broadcast %cst_18 : f32 to vector<16x128xf32>
    %60 = arith.addf %58, %59 : vector<16x128xf32>
    %61 = arith.mulf %60, %56 : vector<16x128xf32>
    %cst_19 = arith.constant 1.42141378 : f32
    %62 = vector.broadcast %cst_19 : f32 to vector<16x128xf32>
    %63 = arith.addf %61, %62 : vector<16x128xf32>
    %64 = arith.mulf %63, %56 : vector<16x128xf32>
    %cst_20 = arith.constant -0.284496725 : f32
    %65 = vector.broadcast %cst_20 : f32 to vector<16x128xf32>
    %66 = arith.addf %64, %65 : vector<16x128xf32>
    %67 = arith.mulf %66, %56 : vector<16x128xf32>
    %cst_21 = arith.constant 0.254829586 : f32
    %68 = vector.broadcast %cst_21 : f32 to vector<16x128xf32>
    %69 = arith.addf %67, %68 : vector<16x128xf32>
    %70 = arith.mulf %69, %56 : vector<16x128xf32>
    %cst_22 = arith.constant 5.000000e-01 : f32
    %71 = vector.broadcast %cst_22 : f32 to vector<16x128xf32>
    %72 = arith.mulf %71, %47 : vector<16x128xf32>
    %73 = arith.mulf %72, %70 : vector<16x128xf32>
    %cst_23 = arith.constant 0.000000e+00 : f32
    %74 = vector.broadcast %cst_23 : f32 to vector<16x128xf32>
    %75 = arith.subf %74, %50 : vector<16x128xf32>
    %76 = arith.mulf %75, %50 : vector<16x128xf32>
    %77 = math.exp %76 : vector<16x128xf32>
    %78 = arith.mulf %73, %77 : vector<16x128xf32>
    %cst_24 = arith.constant 0.000000e+00 : f32
    %79 = vector.broadcast %cst_24 : f32 to vector<16x128xf32>
    %80 = arith.cmpf oge, %47, %79 : vector<16x128xf32>
    %81 = arith.subf %47, %78 : vector<16x128xf32>
    %82 = arith.select %80, %81, %78 : vector<16x128xi1>, vector<16x128xf32>
    %c0_25 = arith.constant 0 : index
    %c0_26 = arith.constant 0 : index
    %83 = vector.load %arg3[%c0_25, %c0_26] : memref<16x128xf32, #tpu.memory_space<vmem>>, vector<16x128xf32>
    tpu.vector_store %arg3[%c0_25, %c0_26], %82 {strides = array<i32>} : memref<16x128xf32, #tpu.memory_space<vmem>>, vector<16x128xf32>,
    return
  }
  func.func @transform_0(%arg0: i32) -> (i32, i32) {
    %c0_i32 = arith.constant 0 : i32
    %c0_i32_0 = arith.constant 0 : i32
    %c0_i32_1 = arith.constant 0 : i32
    return %c0_i32, %c0_i32_0 : i32, i32
  }
  func.func @transform_1(%arg0: i32) -> i32 {
    %c0_i32 = arith.constant 0 : i32
    %c0_i32_0 = arith.constant 0 : i32
    return %c0_i32 : i32
  }
  func.func @transform_2(%arg0: i32) -> (i32, i32) {
    %c0_i32 = arith.constant 0 : i32
    %c0_i32_0 = arith.constant 0 : i32
    %c0_i32_1 = arith.constant 0 : i32
    return %c0_i32, %c0_i32_0 : i32, i32
  }
}

module attributes {stable_mosaic.version = 11 : i64} {
  func.func @_conv_kernel(%arg0: i32, %arg1: memref<16x9xf32, #tpu.memory_space<vmem>>, %arg2: memref<9x1800xf32, #tpu.memory_space<vmem>>, %arg3: memref<16x1xf32, #tpu.memory_space<vmem>>, %arg4: memref<16x1800xf32, #tpu.memory_space<vmem>>) attributes {dimension_semantics = [#tpu.dimension_semantics<arbitrary>], iteration_bounds = array<i64: 1>, scalar_prefetch = 0 : i64, scratch_operands = 0 : i64, tpu.core_type = #tpu.core_type<tc>, window_params = [{pipeline_mode = #tpu.pipeline_mode<synchronous>, transform_indices = @transform_0, window_bounds = array<i64: 16, 9>}, {pipeline_mode = #tpu.pipeline_mode<synchronous>, transform_indices = @transform_1, window_bounds = array<i64: 9, 1800>}, {pipeline_mode = #tpu.pipeline_mode<synchronous>, transform_indices = @transform_2, window_bounds = array<i64: 16, 1>}, {pipeline_mode = #tpu.pipeline_mode<synchronous>, transform_indices = @transform_3, window_bounds = array<i64: 16, 1800>}]} {
    %c0 = arith.constant 0 : index
    %c0_0 = arith.constant 0 : index
    %0 = vector.load %arg1[%c0, %c0_0] : memref<16x9xf32, #tpu.memory_space<vmem>>, vector<16x9xf32>
    %c0_1 = arith.constant 0 : index
    %c0_2 = arith.constant 0 : index
    %1 = vector.load %arg2[%c0_1, %c0_2] : memref<9x1800xf32, #tpu.memory_space<vmem>>, vector<9x1800xf32>
    %2 = vector.extract_strided_slice %0 {offsets = [0, 0], sizes = [16, 1], strides = [1, 1]} : vector<16x9xf32> to vector<16x1xf32>
    %3 = vector.extract_strided_slice %1 {offsets = [0, 0], sizes = [1, 1800], strides = [1, 1]} : vector<9x1800xf32> to vector<1x1800xf32>
    %4 = vector.broadcast %2 : vector<16x1xf32> to vector<16x1800xf32>
    %5 = vector.broadcast %3 : vector<1x1800xf32> to vector<16x1800xf32>
    %6 = arith.mulf %4, %5 : vector<16x1800xf32>
    %7 = vector.extract_strided_slice %0 {offsets = [0, 1], sizes = [16, 1], strides = [1, 1]} : vector<16x9xf32> to vector<16x1xf32>
    %8 = vector.extract_strided_slice %1 {offsets = [1, 0], sizes = [1, 1800], strides = [1, 1]} : vector<9x1800xf32> to vector<1x1800xf32>
    %9 = vector.broadcast %7 : vector<16x1xf32> to vector<16x1800xf32>
    %10 = vector.broadcast %8 : vector<1x1800xf32> to vector<16x1800xf32>
    %11 = arith.mulf %9, %10 : vector<16x1800xf32>
    %12 = arith.addf %6, %11 : vector<16x1800xf32>
    %13 = vector.extract_strided_slice %0 {offsets = [0, 2], sizes = [16, 1], strides = [1, 1]} : vector<16x9xf32> to vector<16x1xf32>
    %14 = vector.extract_strided_slice %1 {offsets = [2, 0], sizes = [1, 1800], strides = [1, 1]} : vector<9x1800xf32> to vector<1x1800xf32>
    %15 = vector.broadcast %13 : vector<16x1xf32> to vector<16x1800xf32>
    %16 = vector.broadcast %14 : vector<1x1800xf32> to vector<16x1800xf32>
    %17 = arith.mulf %15, %16 : vector<16x1800xf32>
    %18 = arith.addf %12, %17 : vector<16x1800xf32>
    %19 = vector.extract_strided_slice %0 {offsets = [0, 3], sizes = [16, 1], strides = [1, 1]} : vector<16x9xf32> to vector<16x1xf32>
    %20 = vector.extract_strided_slice %1 {offsets = [3, 0], sizes = [1, 1800], strides = [1, 1]} : vector<9x1800xf32> to vector<1x1800xf32>
    %21 = vector.broadcast %19 : vector<16x1xf32> to vector<16x1800xf32>
    %22 = vector.broadcast %20 : vector<1x1800xf32> to vector<16x1800xf32>
    %23 = arith.mulf %21, %22 : vector<16x1800xf32>
    %24 = arith.addf %18, %23 : vector<16x1800xf32>
    %25 = vector.extract_strided_slice %0 {offsets = [0, 4], sizes = [16, 1], strides = [1, 1]} : vector<16x9xf32> to vector<16x1xf32>
    %26 = vector.extract_strided_slice %1 {offsets = [4, 0], sizes = [1, 1800], strides = [1, 1]} : vector<9x1800xf32> to vector<1x1800xf32>
    %27 = vector.broadcast %25 : vector<16x1xf32> to vector<16x1800xf32>
    %28 = vector.broadcast %26 : vector<1x1800xf32> to vector<16x1800xf32>
    %29 = arith.mulf %27, %28 : vector<16x1800xf32>
    %30 = arith.addf %24, %29 : vector<16x1800xf32>
    %31 = vector.extract_strided_slice %0 {offsets = [0, 5], sizes = [16, 1], strides = [1, 1]} : vector<16x9xf32> to vector<16x1xf32>
    %32 = vector.extract_strided_slice %1 {offsets = [5, 0], sizes = [1, 1800], strides = [1, 1]} : vector<9x1800xf32> to vector<1x1800xf32>
    %33 = vector.broadcast %31 : vector<16x1xf32> to vector<16x1800xf32>
    %34 = vector.broadcast %32 : vector<1x1800xf32> to vector<16x1800xf32>
    %35 = arith.mulf %33, %34 : vector<16x1800xf32>
    %36 = arith.addf %30, %35 : vector<16x1800xf32>
    %37 = vector.extract_strided_slice %0 {offsets = [0, 6], sizes = [16, 1], strides = [1, 1]} : vector<16x9xf32> to vector<16x1xf32>
    %38 = vector.extract_strided_slice %1 {offsets = [6, 0], sizes = [1, 1800], strides = [1, 1]} : vector<9x1800xf32> to vector<1x1800xf32>
    %39 = vector.broadcast %37 : vector<16x1xf32> to vector<16x1800xf32>
    %40 = vector.broadcast %38 : vector<1x1800xf32> to vector<16x1800xf32>
    %41 = arith.mulf %39, %40 : vector<16x1800xf32>
    %42 = arith.addf %36, %41 : vector<16x1800xf32>
    %43 = vector.extract_strided_slice %0 {offsets = [0, 7], sizes = [16, 1], strides = [1, 1]} : vector<16x9xf32> to vector<16x1xf32>
    %44 = vector.extract_strided_slice %1 {offsets = [7, 0], sizes = [1, 1800], strides = [1, 1]} : vector<9x1800xf32> to vector<1x1800xf32>
    %45 = vector.broadcast %43 : vector<16x1xf32> to vector<16x1800xf32>
    %46 = vector.broadcast %44 : vector<1x1800xf32> to vector<16x1800xf32>
    %47 = arith.mulf %45, %46 : vector<16x1800xf32>
    %48 = arith.addf %42, %47 : vector<16x1800xf32>
    %49 = vector.extract_strided_slice %0 {offsets = [0, 8], sizes = [16, 1], strides = [1, 1]} : vector<16x9xf32> to vector<16x1xf32>
    %50 = vector.extract_strided_slice %1 {offsets = [8, 0], sizes = [1, 1800], strides = [1, 1]} : vector<9x1800xf32> to vector<1x1800xf32>
    %51 = vector.broadcast %49 : vector<16x1xf32> to vector<16x1800xf32>
    %52 = vector.broadcast %50 : vector<1x1800xf32> to vector<16x1800xf32>
    %53 = arith.mulf %51, %52 : vector<16x1800xf32>
    %54 = arith.addf %48, %53 : vector<16x1800xf32>
    %c0_3 = arith.constant 0 : index
    %c0_4 = arith.constant 0 : index
    %55 = vector.load %arg3[%c0_3, %c0_4] : memref<16x1xf32, #tpu.memory_space<vmem>>, vector<16x1xf32>
    %56 = vector.broadcast %55 : vector<16x1xf32> to vector<16x1800xf32>
    %57 = arith.addf %54, %56 : vector<16x1800xf32>
    %58 = math.absf %57 : vector<16x1800xf32>
    %cst = arith.constant 0.707106769 : f32
    %59 = vector.broadcast %cst : f32 to vector<16x1800xf32>
    %60 = arith.mulf %58, %59 : vector<16x1800xf32>
    %cst_5 = arith.constant 0.327591091 : f32
    %61 = vector.broadcast %cst_5 : f32 to vector<16x1800xf32>
    %62 = arith.mulf %61, %60 : vector<16x1800xf32>
    %cst_6 = arith.constant 1.000000e+00 : f32
    %63 = vector.broadcast %cst_6 : f32 to vector<16x1800xf32>
    %64 = arith.addf %63, %62 : vector<16x1800xf32>
    %cst_7 = arith.constant 1.000000e+00 : f32
    %65 = vector.broadcast %cst_7 : f32 to vector<16x1800xf32>
    %66 = arith.divf %65, %64 : vector<16x1800xf32>
    %cst_8 = arith.constant 1.06140542 : f32
    %67 = vector.broadcast %cst_8 : f32 to vector<16x1800xf32>
    %68 = arith.mulf %67, %66 : vector<16x1800xf32>
    %cst_9 = arith.constant -1.45315206 : f32
    %69 = vector.broadcast %cst_9 : f32 to vector<16x1800xf32>
    %70 = arith.addf %68, %69 : vector<16x1800xf32>
    %71 = arith.mulf %70, %66 : vector<16x1800xf32>
    %cst_10 = arith.constant 1.42141378 : f32
    %72 = vector.broadcast %cst_10 : f32 to vector<16x1800xf32>
    %73 = arith.addf %71, %72 : vector<16x1800xf32>
    %74 = arith.mulf %73, %66 : vector<16x1800xf32>
    %cst_11 = arith.constant -0.284496725 : f32
    %75 = vector.broadcast %cst_11 : f32 to vector<16x1800xf32>
    %76 = arith.addf %74, %75 : vector<16x1800xf32>
    %77 = arith.mulf %76, %66 : vector<16x1800xf32>
    %cst_12 = arith.constant 0.254829586 : f32
    %78 = vector.broadcast %cst_12 : f32 to vector<16x1800xf32>
    %79 = arith.addf %77, %78 : vector<16x1800xf32>
    %80 = arith.mulf %79, %66 : vector<16x1800xf32>
    %cst_13 = arith.constant 5.000000e-01 : f32
    %81 = vector.broadcast %cst_13 : f32 to vector<16x1800xf32>
    %82 = arith.mulf %81, %57 : vector<16x1800xf32>
    %83 = arith.mulf %82, %80 : vector<16x1800xf32>
    %cst_14 = arith.constant 0.000000e+00 : f32
    %84 = vector.broadcast %cst_14 : f32 to vector<16x1800xf32>
    %85 = arith.subf %84, %60 : vector<16x1800xf32>
    %86 = arith.mulf %85, %60 : vector<16x1800xf32>
    %87 = math.exp %86 : vector<16x1800xf32>
    %88 = arith.mulf %83, %87 : vector<16x1800xf32>
    %cst_15 = arith.constant 0.000000e+00 : f32
    %89 = vector.broadcast %cst_15 : f32 to vector<16x1800xf32>
    %90 = arith.cmpf oge, %57, %89 : vector<16x1800xf32>
    %91 = arith.subf %57, %88 : vector<16x1800xf32>
    %92 = arith.select %90, %91, %88 : vector<16x1800xi1>, vector<16x1800xf32>
    %c0_16 = arith.constant 0 : index
    %c0_17 = arith.constant 0 : index
    %93 = vector.load %arg4[%c0_16, %c0_17] : memref<16x1800xf32, #tpu.memory_space<vmem>>, vector<16x1800xf32>
    tpu.vector_store %arg4[%c0_16, %c0_17], %92 {strides = array<i32>} : memref<16x1800xf32, #tpu.memory_space<vmem>>, vector<16x1800xf32>,
    return
  }
  func.func @transform_0(%arg0: i32) -> (i32, i32) {
    %c0_i32 = arith.constant 0 : i32
    %c0_i32_0 = arith.constant 0 : i32
    %c0_i32_1 = arith.constant 0 : i32
    return %c0_i32, %c0_i32_0 : i32, i32
  }
  func.func @transform_1(%arg0: i32) -> (i32, i32) {
    %c0_i32 = arith.constant 0 : i32
    %c0_i32_0 = arith.constant 0 : i32
    %c0_i32_1 = arith.constant 0 : i32
    return %c0_i32, %c0_i32_0 : i32, i32
  }
  func.func @transform_2(%arg0: i32) -> (i32, i32) {
    %c0_i32 = arith.constant 0 : i32
    %c0_i32_0 = arith.constant 0 : i32
    %c0_i32_1 = arith.constant 0 : i32
    return %c0_i32, %c0_i32_0 : i32, i32
  }
  func.func @transform_3(%arg0: i32) -> (i32, i32) {
    %c0_i32 = arith.constant 0 : i32
    %c0_i32_0 = arith.constant 0 : i32
    %c0_i32_1 = arith.constant 0 : i32
    return %c0_i32, %c0_i32_0 : i32, i32
  }
}

module attributes {stable_mosaic.version = 11 : i64} {
  func.func @_conv_kernel(%arg0: i32, %arg1: memref<32x144xf32, #tpu.memory_space<vmem>>, %arg2: memref<144x1568xf32, #tpu.memory_space<vmem>>, %arg3: memref<32x1xf32, #tpu.memory_space<vmem>>, %arg4: memref<32x1568xf32, #tpu.memory_space<vmem>>) attributes {dimension_semantics = [#tpu.dimension_semantics<arbitrary>], iteration_bounds = array<i64: 1>, scalar_prefetch = 0 : i64, scratch_operands = 0 : i64, tpu.core_type = #tpu.core_type<tc>, window_params = [{pipeline_mode = #tpu.pipeline_mode<synchronous>, transform_indices = @transform_0, window_bounds = array<i64: 32, 144>}, {pipeline_mode = #tpu.pipeline_mode<synchronous>, transform_indices = @transform_1, window_bounds = array<i64: 144, 1568>}, {pipeline_mode = #tpu.pipeline_mode<synchronous>, transform_indices = @transform_2, window_bounds = array<i64: 32, 1>}, {pipeline_mode = #tpu.pipeline_mode<synchronous>, transform_indices = @transform_3, window_bounds = array<i64: 32, 1568>}]} {
    %c0 = arith.constant 0 : index
    %c0_0 = arith.constant 0 : index
    %0 = vector.load %arg1[%c0, %c0_0] : memref<32x144xf32, #tpu.memory_space<vmem>>, vector<32x144xf32>
    %c0_1 = arith.constant 0 : index
    %c0_2 = arith.constant 0 : index
    %1 = vector.load %arg2[%c0_1, %c0_2] : memref<144x1568xf32, #tpu.memory_space<vmem>>, vector<144x1568xf32>
    %cst = arith.constant dense<0.000000e+00> : vector<32x1568xf32>
    %2 = tpu.matmul %0, %1, %cst {dimension_numbers = #tpu.dot_dimension_numbers<[1], [0], [0], [1], [0, 0, 1, 1], [], []>} : vector<32x144xf32>, vector<144x1568xf32>, vector<32x1568xf32> -> vector<32x1568xf32>
    %c0_3 = arith.constant 0 : index
    %c0_4 = arith.constant 0 : index
    %3 = vector.load %arg3[%c0_3, %c0_4] : memref<32x1xf32, #tpu.memory_space<vmem>>, vector<32x1xf32>
    %4 = vector.broadcast %3 : vector<32x1xf32> to vector<32x1568xf32>
    %5 = arith.addf %2, %4 : vector<32x1568xf32>
    %6 = math.absf %5 : vector<32x1568xf32>
    %cst_5 = arith.constant 0.707106769 : f32
    %7 = vector.broadcast %cst_5 : f32 to vector<32x1568xf32>
    %8 = arith.mulf %6, %7 : vector<32x1568xf32>
    %cst_6 = arith.constant 0.327591091 : f32
    %9 = vector.broadcast %cst_6 : f32 to vector<32x1568xf32>
    %10 = arith.mulf %9, %8 : vector<32x1568xf32>
    %cst_7 = arith.constant 1.000000e+00 : f32
    %11 = vector.broadcast %cst_7 : f32 to vector<32x1568xf32>
    %12 = arith.addf %11, %10 : vector<32x1568xf32>
    %cst_8 = arith.constant 1.000000e+00 : f32
    %13 = vector.broadcast %cst_8 : f32 to vector<32x1568xf32>
    %14 = arith.divf %13, %12 : vector<32x1568xf32>
    %cst_9 = arith.constant 1.06140542 : f32
    %15 = vector.broadcast %cst_9 : f32 to vector<32x1568xf32>
    %16 = arith.mulf %15, %14 : vector<32x1568xf32>
    %cst_10 = arith.constant -1.45315206 : f32
    %17 = vector.broadcast %cst_10 : f32 to vector<32x1568xf32>
    %18 = arith.addf %16, %17 : vector<32x1568xf32>
    %19 = arith.mulf %18, %14 : vector<32x1568xf32>
    %cst_11 = arith.constant 1.42141378 : f32
    %20 = vector.broadcast %cst_11 : f32 to vector<32x1568xf32>
    %21 = arith.addf %19, %20 : vector<32x1568xf32>
    %22 = arith.mulf %21, %14 : vector<32x1568xf32>
    %cst_12 = arith.constant -0.284496725 : f32
    %23 = vector.broadcast %cst_12 : f32 to vector<32x1568xf32>
    %24 = arith.addf %22, %23 : vector<32x1568xf32>
    %25 = arith.mulf %24, %14 : vector<32x1568xf32>
    %cst_13 = arith.constant 0.254829586 : f32
    %26 = vector.broadcast %cst_13 : f32 to vector<32x1568xf32>
    %27 = arith.addf %25, %26 : vector<32x1568xf32>
    %28 = arith.mulf %27, %14 : vector<32x1568xf32>
    %cst_14 = arith.constant 5.000000e-01 : f32
    %29 = vector.broadcast %cst_14 : f32 to vector<32x1568xf32>
    %30 = arith.mulf %29, %5 : vector<32x1568xf32>
    %31 = arith.mulf %30, %28 : vector<32x1568xf32>
    %cst_15 = arith.constant 0.000000e+00 : f32
    %32 = vector.broadcast %cst_15 : f32 to vector<32x1568xf32>
    %33 = arith.subf %32, %8 : vector<32x1568xf32>
    %34 = arith.mulf %33, %8 : vector<32x1568xf32>
    %35 = math.exp %34 : vector<32x1568xf32>
    %36 = arith.mulf %31, %35 : vector<32x1568xf32>
    %cst_16 = arith.constant 0.000000e+00 : f32
    %37 = vector.broadcast %cst_16 : f32 to vector<32x1568xf32>
    %38 = arith.cmpf oge, %5, %37 : vector<32x1568xf32>
    %39 = arith.subf %5, %36 : vector<32x1568xf32>
    %40 = arith.select %38, %39, %36 : vector<32x1568xi1>, vector<32x1568xf32>
    %c0_17 = arith.constant 0 : index
    %c0_18 = arith.constant 0 : index
    %41 = vector.load %arg4[%c0_17, %c0_18] : memref<32x1568xf32, #tpu.memory_space<vmem>>, vector<32x1568xf32>
    tpu.vector_store %arg4[%c0_17, %c0_18], %40 {strides = array<i32>} : memref<32x1568xf32, #tpu.memory_space<vmem>>, vector<32x1568xf32>,
    return
  }
  func.func @transform_0(%arg0: i32) -> (i32, i32) {
    %c0_i32 = arith.constant 0 : i32
    %c0_i32_0 = arith.constant 0 : i32
    %c0_i32_1 = arith.constant 0 : i32
    return %c0_i32, %c0_i32_0 : i32, i32
  }
  func.func @transform_1(%arg0: i32) -> (i32, i32) {
    %c0_i32 = arith.constant 0 : i32
    %c0_i32_0 = arith.constant 0 : i32
    %c0_i32_1 = arith.constant 0 : i32
    return %c0_i32, %c0_i32_0 : i32, i32
  }
  func.func @transform_2(%arg0: i32) -> (i32, i32) {
    %c0_i32 = arith.constant 0 : i32
    %c0_i32_0 = arith.constant 0 : i32
    %c0_i32_1 = arith.constant 0 : i32
    return %c0_i32, %c0_i32_0 : i32, i32
  }
  func.func @transform_3(%arg0: i32) -> (i32, i32) {
    %c0_i32 = arith.constant 0 : i32
    %c0_i32_0 = arith.constant 0 : i32
    %c0_i32_1 = arith.constant 0 : i32
    return %c0_i32, %c0_i32_0 : i32, i32
  }
}

module attributes {stable_mosaic.version = 11 : i64} {
  func.func @_conv_kernel(%arg0: i32, %arg1: memref<64x288xf32, #tpu.memory_space<vmem>>, %arg2: memref<288x288xf32, #tpu.memory_space<vmem>>, %arg3: memref<64x1xf32, #tpu.memory_space<vmem>>, %arg4: memref<64x288xf32, #tpu.memory_space<vmem>>) attributes {dimension_semantics = [#tpu.dimension_semantics<arbitrary>], iteration_bounds = array<i64: 1>, scalar_prefetch = 0 : i64, scratch_operands = 0 : i64, tpu.core_type = #tpu.core_type<tc>, window_params = [{pipeline_mode = #tpu.pipeline_mode<synchronous>, transform_indices = @transform_0, window_bounds = array<i64: 64, 288>}, {pipeline_mode = #tpu.pipeline_mode<synchronous>, transform_indices = @transform_1, window_bounds = array<i64: 288, 288>}, {pipeline_mode = #tpu.pipeline_mode<synchronous>, transform_indices = @transform_2, window_bounds = array<i64: 64, 1>}, {pipeline_mode = #tpu.pipeline_mode<synchronous>, transform_indices = @transform_3, window_bounds = array<i64: 64, 288>}]} {
    %c0 = arith.constant 0 : index
    %c0_0 = arith.constant 0 : index
    %0 = vector.load %arg1[%c0, %c0_0] : memref<64x288xf32, #tpu.memory_space<vmem>>, vector<64x288xf32>
    %c0_1 = arith.constant 0 : index
    %c0_2 = arith.constant 0 : index
    %1 = vector.load %arg2[%c0_1, %c0_2] : memref<288x288xf32, #tpu.memory_space<vmem>>, vector<288x288xf32>
    %cst = arith.constant dense<0.000000e+00> : vector<64x288xf32>
    %2 = tpu.matmul %0, %1, %cst {dimension_numbers = #tpu.dot_dimension_numbers<[1], [0], [0], [1], [0, 0, 1, 1], [], []>} : vector<64x288xf32>, vector<288x288xf32>, vector<64x288xf32> -> vector<64x288xf32>
    %c0_3 = arith.constant 0 : index
    %c0_4 = arith.constant 0 : index
    %3 = vector.load %arg3[%c0_3, %c0_4] : memref<64x1xf32, #tpu.memory_space<vmem>>, vector<64x1xf32>
    %4 = vector.broadcast %3 : vector<64x1xf32> to vector<64x288xf32>
    %5 = arith.addf %2, %4 : vector<64x288xf32>
    %6 = math.absf %5 : vector<64x288xf32>
    %cst_5 = arith.constant 0.707106769 : f32
    %7 = vector.broadcast %cst_5 : f32 to vector<64x288xf32>
    %8 = arith.mulf %6, %7 : vector<64x288xf32>
    %cst_6 = arith.constant 0.327591091 : f32
    %9 = vector.broadcast %cst_6 : f32 to vector<64x288xf32>
    %10 = arith.mulf %9, %8 : vector<64x288xf32>
    %cst_7 = arith.constant 1.000000e+00 : f32
    %11 = vector.broadcast %cst_7 : f32 to vector<64x288xf32>
    %12 = arith.addf %11, %10 : vector<64x288xf32>
    %cst_8 = arith.constant 1.000000e+00 : f32
    %13 = vector.broadcast %cst_8 : f32 to vector<64x288xf32>
    %14 = arith.divf %13, %12 : vector<64x288xf32>
    %cst_9 = arith.constant 1.06140542 : f32
    %15 = vector.broadcast %cst_9 : f32 to vector<64x288xf32>
    %16 = arith.mulf %15, %14 : vector<64x288xf32>
    %cst_10 = arith.constant -1.45315206 : f32
    %17 = vector.broadcast %cst_10 : f32 to vector<64x288xf32>
    %18 = arith.addf %16, %17 : vector<64x288xf32>
    %19 = arith.mulf %18, %14 : vector<64x288xf32>
    %cst_11 = arith.constant 1.42141378 : f32
    %20 = vector.broadcast %cst_11 : f32 to vector<64x288xf32>
    %21 = arith.addf %19, %20 : vector<64x288xf32>
    %22 = arith.mulf %21, %14 : vector<64x288xf32>
    %cst_12 = arith.constant -0.284496725 : f32
    %23 = vector.broadcast %cst_12 : f32 to vector<64x288xf32>
    %24 = arith.addf %22, %23 : vector<64x288xf32>
    %25 = arith.mulf %24, %14 : vector<64x288xf32>
    %cst_13 = arith.constant 0.254829586 : f32
    %26 = vector.broadcast %cst_13 : f32 to vector<64x288xf32>
    %27 = arith.addf %25, %26 : vector<64x288xf32>
    %28 = arith.mulf %27, %14 : vector<64x288xf32>
    %cst_14 = arith.constant 5.000000e-01 : f32
    %29 = vector.broadcast %cst_14 : f32 to vector<64x288xf32>
    %30 = arith.mulf %29, %5 : vector<64x288xf32>
    %31 = arith.mulf %30, %28 : vector<64x288xf32>
    %cst_15 = arith.constant 0.000000e+00 : f32
    %32 = vector.broadcast %cst_15 : f32 to vector<64x288xf32>
    %33 = arith.subf %32, %8 : vector<64x288xf32>
    %34 = arith.mulf %33, %8 : vector<64x288xf32>
    %35 = math.exp %34 : vector<64x288xf32>
    %36 = arith.mulf %31, %35 : vector<64x288xf32>
    %cst_16 = arith.constant 0.000000e+00 : f32
    %37 = vector.broadcast %cst_16 : f32 to vector<64x288xf32>
    %38 = arith.cmpf oge, %5, %37 : vector<64x288xf32>
    %39 = arith.subf %5, %36 : vector<64x288xf32>
    %40 = arith.select %38, %39, %36 : vector<64x288xi1>, vector<64x288xf32>
    %c0_17 = arith.constant 0 : index
    %c0_18 = arith.constant 0 : index
    %41 = vector.load %arg4[%c0_17, %c0_18] : memref<64x288xf32, #tpu.memory_space<vmem>>, vector<64x288xf32>
    tpu.vector_store %arg4[%c0_17, %c0_18], %40 {strides = array<i32>} : memref<64x288xf32, #tpu.memory_space<vmem>>, vector<64x288xf32>,
    return
  }
  func.func @transform_0(%arg0: i32) -> (i32, i32) {
    %c0_i32 = arith.constant 0 : i32
    %c0_i32_0 = arith.constant 0 : i32
    %c0_i32_1 = arith.constant 0 : i32
    return %c0_i32, %c0_i32_0 : i32, i32
  }
  func.func @transform_1(%arg0: i32) -> (i32, i32) {
    %c0_i32 = arith.constant 0 : i32
    %c0_i32_0 = arith.constant 0 : i32
    %c0_i32_1 = arith.constant 0 : i32
    return %c0_i32, %c0_i32_0 : i32, i32
  }
  func.func @transform_2(%arg0: i32) -> (i32, i32) {
    %c0_i32 = arith.constant 0 : i32
    %c0_i32_0 = arith.constant 0 : i32
    %c0_i32_1 = arith.constant 0 : i32
    return %c0_i32, %c0_i32_0 : i32, i32
  }
  func.func @transform_3(%arg0: i32) -> (i32, i32) {
    %c0_i32 = arith.constant 0 : i32
    %c0_i32_0 = arith.constant 0 : i32
    %c0_i32_1 = arith.constant 0 : i32
    return %c0_i32, %c0_i32_0 : i32, i32
  }
}

module attributes {stable_mosaic.version = 11 : i64} {
  func.func @_conv_kernel(%arg0: i32, %arg1: memref<64x576xf32, #tpu.memory_space<vmem>>, %arg2: memref<576x32xf32, #tpu.memory_space<vmem>>, %arg3: memref<64x1xf32, #tpu.memory_space<vmem>>, %arg4: memref<64x32xf32, #tpu.memory_space<vmem>>) attributes {dimension_semantics = [#tpu.dimension_semantics<arbitrary>], iteration_bounds = array<i64: 1>, scalar_prefetch = 0 : i64, scratch_operands = 0 : i64, tpu.core_type = #tpu.core_type<tc>, window_params = [{pipeline_mode = #tpu.pipeline_mode<synchronous>, transform_indices = @transform_0, window_bounds = array<i64: 64, 576>}, {pipeline_mode = #tpu.pipeline_mode<synchronous>, transform_indices = @transform_1, window_bounds = array<i64: 576, 32>}, {pipeline_mode = #tpu.pipeline_mode<synchronous>, transform_indices = @transform_2, window_bounds = array<i64: 64, 1>}, {pipeline_mode = #tpu.pipeline_mode<synchronous>, transform_indices = @transform_3, window_bounds = array<i64: 64, 32>}]} {
    %c0 = arith.constant 0 : index
    %c0_0 = arith.constant 0 : index
    %0 = vector.load %arg1[%c0, %c0_0] : memref<64x576xf32, #tpu.memory_space<vmem>>, vector<64x576xf32>
    %c0_1 = arith.constant 0 : index
    %c0_2 = arith.constant 0 : index
    %1 = vector.load %arg2[%c0_1, %c0_2] : memref<576x32xf32, #tpu.memory_space<vmem>>, vector<576x32xf32>
    %cst = arith.constant dense<0.000000e+00> : vector<64x32xf32>
    %2 = tpu.matmul %0, %1, %cst {dimension_numbers = #tpu.dot_dimension_numbers<[1], [0], [0], [1], [0, 0, 1, 1], [], []>} : vector<64x576xf32>, vector<576x32xf32>, vector<64x32xf32> -> vector<64x32xf32>
    %c0_3 = arith.constant 0 : index
    %c0_4 = arith.constant 0 : index
    %3 = vector.load %arg3[%c0_3, %c0_4] : memref<64x1xf32, #tpu.memory_space<vmem>>, vector<64x1xf32>
    %4 = vector.broadcast %3 : vector<64x1xf32> to vector<64x32xf32>
    %5 = arith.addf %2, %4 : vector<64x32xf32>
    %6 = math.absf %5 : vector<64x32xf32>
    %cst_5 = arith.constant 0.707106769 : f32
    %7 = vector.broadcast %cst_5 : f32 to vector<64x32xf32>
    %8 = arith.mulf %6, %7 : vector<64x32xf32>
    %cst_6 = arith.constant 0.327591091 : f32
    %9 = vector.broadcast %cst_6 : f32 to vector<64x32xf32>
    %10 = arith.mulf %9, %8 : vector<64x32xf32>
    %cst_7 = arith.constant 1.000000e+00 : f32
    %11 = vector.broadcast %cst_7 : f32 to vector<64x32xf32>
    %12 = arith.addf %11, %10 : vector<64x32xf32>
    %cst_8 = arith.constant 1.000000e+00 : f32
    %13 = vector.broadcast %cst_8 : f32 to vector<64x32xf32>
    %14 = arith.divf %13, %12 : vector<64x32xf32>
    %cst_9 = arith.constant 1.06140542 : f32
    %15 = vector.broadcast %cst_9 : f32 to vector<64x32xf32>
    %16 = arith.mulf %15, %14 : vector<64x32xf32>
    %cst_10 = arith.constant -1.45315206 : f32
    %17 = vector.broadcast %cst_10 : f32 to vector<64x32xf32>
    %18 = arith.addf %16, %17 : vector<64x32xf32>
    %19 = arith.mulf %18, %14 : vector<64x32xf32>
    %cst_11 = arith.constant 1.42141378 : f32
    %20 = vector.broadcast %cst_11 : f32 to vector<64x32xf32>
    %21 = arith.addf %19, %20 : vector<64x32xf32>
    %22 = arith.mulf %21, %14 : vector<64x32xf32>
    %cst_12 = arith.constant -0.284496725 : f32
    %23 = vector.broadcast %cst_12 : f32 to vector<64x32xf32>
    %24 = arith.addf %22, %23 : vector<64x32xf32>
    %25 = arith.mulf %24, %14 : vector<64x32xf32>
    %cst_13 = arith.constant 0.254829586 : f32
    %26 = vector.broadcast %cst_13 : f32 to vector<64x32xf32>
    %27 = arith.addf %25, %26 : vector<64x32xf32>
    %28 = arith.mulf %27, %14 : vector<64x32xf32>
    %cst_14 = arith.constant 5.000000e-01 : f32
    %29 = vector.broadcast %cst_14 : f32 to vector<64x32xf32>
    %30 = arith.mulf %29, %5 : vector<64x32xf32>
    %31 = arith.mulf %30, %28 : vector<64x32xf32>
    %cst_15 = arith.constant 0.000000e+00 : f32
    %32 = vector.broadcast %cst_15 : f32 to vector<64x32xf32>
    %33 = arith.subf %32, %8 : vector<64x32xf32>
    %34 = arith.mulf %33, %8 : vector<64x32xf32>
    %35 = math.exp %34 : vector<64x32xf32>
    %36 = arith.mulf %31, %35 : vector<64x32xf32>
    %cst_16 = arith.constant 0.000000e+00 : f32
    %37 = vector.broadcast %cst_16 : f32 to vector<64x32xf32>
    %38 = arith.cmpf oge, %5, %37 : vector<64x32xf32>
    %39 = arith.subf %5, %36 : vector<64x32xf32>
    %40 = arith.select %38, %39, %36 : vector<64x32xi1>, vector<64x32xf32>
    %c0_17 = arith.constant 0 : index
    %c0_18 = arith.constant 0 : index
    %41 = vector.load %arg4[%c0_17, %c0_18] : memref<64x32xf32, #tpu.memory_space<vmem>>, vector<64x32xf32>
    tpu.vector_store %arg4[%c0_17, %c0_18], %40 {strides = array<i32>} : memref<64x32xf32, #tpu.memory_space<vmem>>, vector<64x32xf32>,
    return
  }
  func.func @transform_0(%arg0: i32) -> (i32, i32) {
    %c0_i32 = arith.constant 0 : i32
    %c0_i32_0 = arith.constant 0 : i32
    %c0_i32_1 = arith.constant 0 : i32
    return %c0_i32, %c0_i32_0 : i32, i32
  }
  func.func @transform_1(%arg0: i32) -> (i32, i32) {
    %c0_i32 = arith.constant 0 : i32
    %c0_i32_0 = arith.constant 0 : i32
    %c0_i32_1 = arith.constant 0 : i32
    return %c0_i32, %c0_i32_0 : i32, i32
  }
  func.func @transform_2(%arg0: i32) -> (i32, i32) {
    %c0_i32 = arith.constant 0 : i32
    %c0_i32_0 = arith.constant 0 : i32
    %c0_i32_1 = arith.constant 0 : i32
    return %c0_i32, %c0_i32_0 : i32, i32
  }
  func.func @transform_3(%arg0: i32) -> (i32, i32) {
    %c0_i32 = arith.constant 0 : i32
    %c0_i32_0 = arith.constant 0 : i32
    %c0_i32_1 = arith.constant 0 : i32
    return %c0_i32, %c0_i32_0 : i32, i32
  }
}

module attributes {stable_mosaic.version = 11 : i64} {
  func.func @_conv_kernel(%arg0: i32, %arg1: memref<64x256xf32, #tpu.memory_space<vmem>>, %arg2: memref<256x2xf32, #tpu.memory_space<vmem>>, %arg3: memref<64x1xf32, #tpu.memory_space<vmem>>, %arg4: memref<64x2xf32, #tpu.memory_space<vmem>>) attributes {dimension_semantics = [#tpu.dimension_semantics<arbitrary>], iteration_bounds = array<i64: 1>, scalar_prefetch = 0 : i64, scratch_operands = 0 : i64, tpu.core_type = #tpu.core_type<tc>, window_params = [{pipeline_mode = #tpu.pipeline_mode<synchronous>, transform_indices = @transform_0, window_bounds = array<i64: 64, 256>}, {pipeline_mode = #tpu.pipeline_mode<synchronous>, transform_indices = @transform_1, window_bounds = array<i64: 256, 2>}, {pipeline_mode = #tpu.pipeline_mode<synchronous>, transform_indices = @transform_2, window_bounds = array<i64: 64, 1>}, {pipeline_mode = #tpu.pipeline_mode<synchronous>, transform_indices = @transform_3, window_bounds = array<i64: 64, 2>}]} {
    %c0 = arith.constant 0 : index
    %c0_0 = arith.constant 0 : index
    %0 = vector.load %arg1[%c0, %c0_0] : memref<64x256xf32, #tpu.memory_space<vmem>>, vector<64x256xf32>
    %c0_1 = arith.constant 0 : index
    %c0_2 = arith.constant 0 : index
    %1 = vector.load %arg2[%c0_1, %c0_2] : memref<256x2xf32, #tpu.memory_space<vmem>>, vector<256x2xf32>
    %cst = arith.constant dense<0.000000e+00> : vector<64x2xf32>
    %2 = tpu.matmul %0, %1, %cst {dimension_numbers = #tpu.dot_dimension_numbers<[1], [0], [0], [1], [0, 0, 1, 1], [], []>} : vector<64x256xf32>, vector<256x2xf32>, vector<64x2xf32> -> vector<64x2xf32>
    %c0_3 = arith.constant 0 : index
    %c0_4 = arith.constant 0 : index
    %3 = vector.load %arg3[%c0_3, %c0_4] : memref<64x1xf32, #tpu.memory_space<vmem>>, vector<64x1xf32>
    %4 = vector.broadcast %3 : vector<64x1xf32> to vector<64x2xf32>
    %5 = arith.addf %2, %4 : vector<64x2xf32>
    %6 = math.tanh %5 : vector<64x2xf32>
    %c0_5 = arith.constant 0 : index
    %c0_6 = arith.constant 0 : index
    %7 = vector.load %arg4[%c0_5, %c0_6] : memref<64x2xf32, #tpu.memory_space<vmem>>, vector<64x2xf32>
    tpu.vector_store %arg4[%c0_5, %c0_6], %6 {strides = array<i32>} : memref<64x2xf32, #tpu.memory_space<vmem>>, vector<64x2xf32>,
    return
  }
  func.func @transform_0(%arg0: i32) -> (i32, i32) {
    %c0_i32 = arith.constant 0 : i32
    %c0_i32_0 = arith.constant 0 : i32
    %c0_i32_1 = arith.constant 0 : i32
    return %c0_i32, %c0_i32_0 : i32, i32
  }
  func.func @transform_1(%arg0: i32) -> (i32, i32) {
    %c0_i32 = arith.constant 0 : i32
    %c0_i32_0 = arith.constant 0 : i32
    %c0_i32_1 = arith.constant 0 : i32
    return %c0_i32, %c0_i32_0 : i32, i32
  }
  func.func @transform_2(%arg0: i32) -> (i32, i32) {
    %c0_i32 = arith.constant 0 : i32
    %c0_i32_0 = arith.constant 0 : i32
    %c0_i32_1 = arith.constant 0 : i32
    return %c0_i32, %c0_i32_0 : i32, i32
  }
  func.func @transform_3(%arg0: i32) -> (i32, i32) {
    %c0_i32 = arith.constant 0 : i32
    %c0_i32_0 = arith.constant 0 : i32
    %c0_i32_1 = arith.constant 0 : i32
    return %c0_i32, %c0_i32_0 : i32, i32
  }
}

</mosaic_0001>

<llo_original>
// kernel: encoder_forward.6
$region0: #{encoder_forward.6}
  #allocation0 [shape = 'u32[]', space=smem, size = 0x4, offset = 0x4, fixed_abs, tag = 'smem constant byte address 0x4 - core index']
  #allocation1 [shape = 'u32[144,128]{1,0:T(1,128)}', space=vmem, size = 0x12000, scoped, tag = 'internal scratch']
  %s0 = inlined_call_operand.vmem [shape: f32[16,128], index: 0, kind: input, shape index: {}]
  %s1 = inlined_call_operand.vmem [shape: f32[4], index: 1, kind: input, shape index: {}]
  %s2 = inlined_call_operand.vmem [shape: f32[16,128], index: 2, kind: output, shape index: {}]
  %s3 = sld [smem:[#allocation0]]
  $region22: #{encoder_forward.6} parent=0
    _
  %s5 = ssub.s32 1, %s3
  %s6 = scalar_select 0, %s5, %s3
  $region1: #{encoder_forward.6} parent=0
    #allocation2 [shape = 'u8[512]{0}', space=smem, size = 0x200, scoped, tag = 'input window, operand 1, single buffered']
    #allocation3 [shape = 's32[1]{0}', space=sflag, size = 0x4, scoped, tag = 'scoped memory for encoder_forward.6']
    %7 = vsyncpa [#allocation3], 0
    // Predicated region
    $region2: #{encoder_forward.6} parent=1 // pred_check
      _
    $region3: #{encoder_forward.6} parent=1 // pred_check_branch
      %9 = sbr.rel (0) target = $region5
    $region4: #{encoder_forward.6} parent=1 // pred_region
      _
    $region5: #{encoder_forward.6} parent=1 // pred_fallthru
      _
    // Predicated region
    $region6: #{encoder_forward.6} parent=1 // pred_check
      _
    $region7: #{encoder_forward.6} parent=1 // pred_check_branch
      %11 = sbr.rel (0) target = $region9
    $region8: #{encoder_forward.6} parent=1 // pred_region
      %s13 = ssub.s32 16, 16
      %14 = vsyncadd [#allocation3], %s13
      %s16 = sshll.u32 %s1, 4
      %s17 = int_to_ptr.vmem [resolvable:$true] %s16
      %19 = dma.vmem_to_smem %s17, 16, [#allocation2], [#allocation3]
    $region9: #{encoder_forward.6} parent=1 // pred_fallthru
      _
    // Predicated region
    $region10: #{encoder_forward.6} parent=1 // pred_check
      _
    $region11: #{encoder_forward.6} parent=1 // pred_check_branch
      %21 = sbr.rel (0) target = $region13
    $region12: #{encoder_forward.6} parent=1 // pred_region
      %22 = dma.done [#allocation3], 16
    $region13: #{encoder_forward.6} parent=1 // pred_fallthru
      _
    %23 = sfence
    %s24 = sld [smem:[#allocation2]]
    %s25 = sld [smem:[#allocation2 + $0x1]]
    %s26 = sld [smem:[#allocation2 + $0x2]]
    %s27 = sld [smem:[#allocation2 + $0x3]]
    %v28 = vld [vmem:[%s0] sm:$0xff]
    %v29 = vld [vmem:[%s0 + $0x8] sm:$0xff]
    %v30 = vstv %s24
    %v31 = vmul.f32 %v28, %v30
    %v32 = vmul.f32 %v29, %v30
    %v33 = vstv %s25
    %v34 = vadd.f32 %v31, %v33
    %v35 = vadd.f32 %v32, %v33
    %v36 = vand.u32 2147483647, %v34
    %v37 = vand.u32 2147483647, %v35
    %v38 = vmul.f32 %v36, 0.70710677
    %v39 = vmul.f32 %v37, 0.70710677
    %v40 = vmul.f32 %v38, 0.3275911
    %v41 = vmul.f32 %v39, 0.3275911
    %v42 = vadd.f32 %v40, 1.0
    %v43 = vadd.f32 %v41, 1.0
    %v44 = vrcp.pop %v42
    %v45 = vmul.f32 1.0, %v44
    %v46 = vrcp.pop %v43
    %v47 = vmul.f32 1.0, %v46
    %v48 = vmul.f32 %v45, 1.0614054
    %v49 = vmul.f32 %v47, 1.0614054
    %v50 = vadd.f32 %v48, -1.4531521
    %v51 = vadd.f32 %v49, -1.4531521
    %v52 = vmul.f32 %v50, %v45
    %v53 = vmul.f32 %v51, %v47
    %v54 = vadd.f32 %v52, 1.4214138
    %v55 = vadd.f32 %v53, 1.4214138
    %v56 = vmul.f32 %v54, %v45
    %v57 = vmul.f32 %v55, %v47
    %v58 = vadd.f32 %v56, -0.28449672
    %v59 = vadd.f32 %v57, -0.28449672
    %v60 = vmul.f32 %v58, %v45
    %v61 = vmul.f32 %v59, %v47
    %v62 = vadd.f32 %v60, 0.2548296
    %v63 = vadd.f32 %v61, 0.2548296
    %v64 = vmul.f32 %v62, %v45
    %v65 = vmul.f32 %v63, %v47
    %v66 = vmul.f32 %v34, 0.5
    %v67 = vmul.f32 %v35, 0.5
    %v68 = vmul.f32 %v66, %v64
    %v69 = vmul.f32 %v67, %v65
    %v70 = vsub.f32 0.0, %v38
    %v71 = vsub.f32 0.0, %v39
    %v72 = vmul.f32 %v70, %v38
    %v73 = vmul.f32 %v71, %v39
    %v74 = vmul.f32 %v72, 1.442695
    %v75 = vpow.pop %v74
    %v76 = vmul.f32 %v73, 1.442695
    %v77 = vpow.pop %v76
    %v78 = vmul.f32 %v68, %v75
    %v79 = vmul.f32 %v69, %v77
    %vm80 = vcmp.ge.f32.partialorder %v34, 0.0
    %vm81 = vcmp.ge.f32.partialorder %v35, 0.0
    %v82 = vsub.f32 %v34, %v78
    %v83 = vsub.f32 %v35, %v79
    %v84 = vsel %vm80, %v82, %v78
    %v85 = vsel %vm81, %v83, %v79
    %v86 = vstv %s26
    %v87 = vmul.f32 %v84, %v86
    %v88 = vmul.f32 %v85, %v86
    %v89 = vstv %s27
    %v90 = vadd.f32 %v87, %v89
    %v91 = vadd.f32 %v88, %v89
    %v92 = vand.u32 2147483647, %v90
    %v93 = vand.u32 2147483647, %v91
    %v94 = vmul.f32 %v92, 0.70710677
    %v95 = vmul.f32 %v93, 0.70710677
    %v96 = vmul.f32 %v94, 0.3275911
    %v97 = vmul.f32 %v95, 0.3275911
    %v98 = vadd.f32 %v96, 1.0
    %v99 = vadd.f32 %v97, 1.0
    %v100 = vrcp.pop %v98
    %v101 = vmul.f32 1.0, %v100
    %v102 = vrcp.pop %v99
    %v103 = vmul.f32 1.0, %v102
    %v104 = vmul.f32 %v101, 1.0614054
    %v105 = vmul.f32 %v103, 1.0614054
    %v106 = vadd.f32 %v104, -1.4531521
    %v107 = vadd.f32 %v105, -1.4531521
    %v108 = vmul.f32 %v106, %v101
    %v109 = vmul.f32 %v107, %v103
    %v110 = vadd.f32 %v108, 1.4214138
    %v111 = vadd.f32 %v109, 1.4214138
    %v112 = vmul.f32 %v110, %v101
    %v113 = vmul.f32 %v111, %v103
    %v114 = vadd.f32 %v112, -0.28449672
    %v115 = vadd.f32 %v113, -0.28449672
    %v116 = vmul.f32 %v114, %v101
    %v117 = vmul.f32 %v115, %v103
    %v118 = vadd.f32 %v116, 0.2548296
    %v119 = vadd.f32 %v117, 0.2548296
    %v120 = vmul.f32 %v118, %v101
    %v121 = vmul.f32 %v119, %v103
    %v122 = vmul.f32 %v90, 0.5
    %v123 = vmul.f32 %v91, 0.5
    %v124 = vmul.f32 %v122, %v120
    %v125 = vmul.f32 %v123, %v121
    %v126 = vsub.f32 0.0, %v94
    %v127 = vsub.f32 0.0, %v95
    %v128 = vmul.f32 %v126, %v94
    %v129 = vmul.f32 %v127, %v95
    %v130 = vmul.f32 %v128, 1.442695
    %v131 = vpow.pop %v130
    %v132 = vmul.f32 %v129, 1.442695
    %v133 = vpow.pop %v132
    %v134 = vmul.f32 %v124, %v131
    %v135 = vmul.f32 %v125, %v133
    %vm136 = vcmp.ge.f32.partialorder %v90, 0.0
    %vm137 = vcmp.ge.f32.partialorder %v91, 0.0
    %v138 = vsub.f32 %v90, %v134
    %v139 = vsub.f32 %v91, %v135
    %v140 = vsel %vm136, %v138, %v134
    %v141 = vsel %vm137, %v139, %v135
    %142 = vst [vmem:[%s2] sm:$0xff] %v140
    %143 = vst [vmem:[%s2 + $0x8] sm:$0xff] %v141
    // Predicated region
    $region14: #{encoder_forward.6} parent=1 // pred_check
      _
    $region15: #{encoder_forward.6} parent=1 // pred_check_branch
      %145 = sbr.rel (0) target = $region17
    $region16: #{encoder_forward.6} parent=1 // pred_region
      _
    $region17: #{encoder_forward.6} parent=1 // pred_fallthru
      _
    // Predicated region
    $region18: #{encoder_forward.6} parent=1 // pred_check
      _
    $region19: #{encoder_forward.6} parent=1 // pred_check_branch
      %147 = sbr.rel (0) target = $region21
    $region20: #{encoder_forward.6} parent=1 // pred_region
      _
    $region21: #{encoder_forward.6} parent=1 // pred_fallthru
      _
    %148 = vsyncpa [#allocation3], 1

// kernel: encoder_forward.7
$region0: #{encoder_forward.7}
  #allocation0 [shape = 'u32[]', space=smem, size = 0x4, offset = 0x4, fixed_abs, tag = 'smem constant byte address 0x4 - core index']
  #allocation1 [shape = 'u32[144,128]{1,0:T(1,128)}', space=vmem, size = 0x12000, scoped, tag = 'internal scratch']
  %s0 = inlined_call_operand.vmem [shape: f32[16,9], index: 0, kind: input, shape index: {}]
  %s1 = inlined_call_operand.vmem [shape: f32[9,1800], index: 1, kind: input, shape index: {}]
  %s2 = inlined_call_operand.vmem [shape: f32[16,1], index: 2, kind: input, shape index: {}]
  %s3 = inlined_call_operand.vmem [shape: f32[16,1800], index: 3, kind: output, shape index: {}]
  %s4 = sld [smem:[#allocation0]]
  $region22: #{encoder_forward.7} parent=0
    _
  %s6 = ssub.s32 1, %s4
  %s7 = scalar_select 0, %s6, %s4
  // Predicated region
  $region2: #{encoder_forward.7} parent=0 // pred_check
    _
  $region3: #{encoder_forward.7} parent=0 // pred_check_branch
    %9 = sbr.rel (0) target = $region5
  $region4: #{encoder_forward.7} parent=0 // pred_region
    _
  $region5: #{encoder_forward.7} parent=0 // pred_fallthru
    _
  // Predicated region
  $region6: #{encoder_forward.7} parent=0 // pred_check
    _
  $region7: #{encoder_forward.7} parent=0 // pred_check_branch
    %11 = sbr.rel (0) target = $region9
  $region8: #{encoder_forward.7} parent=0 // pred_region
    _
  $region9: #{encoder_forward.7} parent=0 // pred_fallthru
    _
  // Predicated region
  $region10: #{encoder_forward.7} parent=0 // pred_check
    _
  $region11: #{encoder_forward.7} parent=0 // pred_check_branch
    %13 = sbr.rel (0) target = $region13
  $region12: #{encoder_forward.7} parent=0 // pred_region
    _
  $region13: #{encoder_forward.7} parent=0 // pred_fallthru
    _
  %v14 = vld [vmem:[%s0] sm:$0xff]
  %v15 = vld [vmem:[%s0 + $0x8] sm:$0xff]
  %v16 = vld [vmem:[%s1] sm:$0xff]
  %v17 = vld [vmem:[%s1 + $0x8] sm:$0xff]
  %v18 = vld [vmem:[%s1 + $0x10] sm:$0xff]
  %v19 = vld [vmem:[%s1 + $0x18] sm:$0xff]
  %v20 = vld [vmem:[%s1 + $0x20] sm:$0xff]
  %v21 = vld [vmem:[%s1 + $0x28] sm:$0xff]
  %v22 = vld [vmem:[%s1 + $0x30] sm:$0xff]
  %v23 = vld [vmem:[%s1 + $0x38] sm:$0xff]
  %v24 = vld [vmem:[%s1 + $0x40] sm:$0xff]
  %v25 = vld [vmem:[%s1 + $0x48] sm:$0xff]
  %v26 = vld [vmem:[%s1 + $0x50] sm:$0xff]
  %v27 = vld [vmem:[%s1 + $0x58] sm:$0xff]
  %v28 = vld [vmem:[%s1 + $0x60] sm:$0xff]
  %v29 = vld [vmem:[%s1 + $0x68] sm:$0xff]
  %v30 = vld [vmem:[%s1 + $0x70] sm:$0xff]
  %v31 = vld [vmem:[%s1 + $0x78] sm:$0x1]
  %v32 = vld [vmem:[%s1 + $0x80] sm:$0x1]
  %v33 = vld [vmem:[%s1 + $0x88] sm:$0x1]
  %v34 = vld [vmem:[%s1 + $0x90] sm:$0x1]
  %v35 = vld [vmem:[%s1 + $0x98] sm:$0x1]
  %v36 = vld [vmem:[%s1 + $0xa0] sm:$0x1]
  %v37 = vld [vmem:[%s1 + $0xa8] sm:$0x1]
  %v38 = vld [vmem:[%s1 + $0xb0] sm:$0x1]
  %v39 = vld [vmem:[%s1 + $0xb8] sm:$0x1]
  %v40 = vld [vmem:[%s1 + $0xc0] sm:$0x1]
  %v41 = vld [vmem:[%s1 + $0xc8] sm:$0x1]
  %v42 = vld [vmem:[%s1 + $0xd0] sm:$0x1]
  %v43 = vld [vmem:[%s1 + $0xd8] sm:$0x1]
  %v44 = vld [vmem:[%s1 + $0xe0] sm:$0x1]
  %v45 = vld [vmem:[%s1 + $0xe8] sm:$0x1]
  %47 = vset.pattern.permute.xlu0 0
  %48 = vperm.xlu0 %47, %v14
  %v49 = vpop.permute.xlu0 %48
  %52 = vset.pattern.permute.xlu0 0
  %53 = vperm.xlu0 %52, %v15
  %v54 = vpop.permute.xlu0 %53
  %v56 = vlaneseq
  %v57 = vshrl.u32 %v56, 7
  %v58 = vsub.s32 0, %v57
  %v59 = vrot.slane %v16, %v58
  %v60 = vlaneseq
  %v61 = vshrl.u32 %v60, 7
  %v62 = vsub.s32 0, %v61
  %v63 = vrot.slane %v17, %v62
  %v64 = vlaneseq
  %v65 = vshrl.u32 %v64, 7
  %v66 = vsub.s32 0, %v65
  %v67 = vrot.slane %v18, %v66
  %v68 = vlaneseq
  %v69 = vshrl.u32 %v68, 7
  %v70 = vsub.s32 0, %v69
  %v71 = vrot.slane %v19, %v70
  %v72 = vlaneseq
  %v73 = vshrl.u32 %v72, 7
  %v74 = vsub.s32 0, %v73
  %v75 = vrot.slane %v20, %v74
  %v76 = vlaneseq
  %v77 = vshrl.u32 %v76, 7
  %v78 = vsub.s32 0, %v77
  %v79 = vrot.slane %v21, %v78
  %v80 = vlaneseq
  %v81 = vshrl.u32 %v80, 7
  %v82 = vsub.s32 0, %v81
  %v83 = vrot.slane %v22, %v82
  %v84 = vlaneseq
  %v85 = vshrl.u32 %v84, 7
  %v86 = vsub.s32 0, %v85
  %v87 = vrot.slane %v23, %v86
  %v88 = vlaneseq
  %v89 = vshrl.u32 %v88, 7
  %v90 = vsub.s32 0, %v89
  %v91 = vrot.slane %v24, %v90
  %v92 = vlaneseq
  %v93 = vshrl.u32 %v92, 7
  %v94 = vsub.s32 0, %v93
  %v95 = vrot.slane %v25, %v94
  %v96 = vlaneseq
  %v97 = vshrl.u32 %v96, 7
  %v98 = vsub.s32 0, %v97
  %v99 = vrot.slane %v26, %v98
  %v100 = vlaneseq
  %v101 = vshrl.u32 %v100, 7
  %v102 = vsub.s32 0, %v101
  %v103 = vrot.slane %v27, %v102
  %v104 = vlaneseq
  %v105 = vshrl.u32 %v104, 7
  %v106 = vsub.s32 0, %v105
  %v107 = vrot.slane %v28, %v106
  %v108 = vlaneseq
  %v109 = vshrl.u32 %v108, 7
  %v110 = vsub.s32 0, %v109
  %v111 = vrot.slane %v29, %v110
  %v112 = vlaneseq
  %v113 = vshrl.u32 %v112, 7
  %v114 = vsub.s32 0, %v113
  %v115 = vrot.slane %v30, %v114
  %v116 = vmul.f32 %v49, %v59
  %v117 = vmul.f32 %v49, %v63
  %v118 = vmul.f32 %v49, %v67
  %v119 = vmul.f32 %v49, %v71
  %v120 = vmul.f32 %v49, %v75
  %v121 = vmul.f32 %v49, %v79
  %v122 = vmul.f32 %v49, %v83
  %v123 = vmul.f32 %v49, %v87
  %v124 = vmul.f32 %v49, %v91
  %v125 = vmul.f32 %v49, %v95
  %v126 = vmul.f32 %v49, %v99
  %v127 = vmul.f32 %v49, %v103
  %v128 = vmul.f32 %v49, %v107
  %v129 = vmul.f32 %v49, %v111
  %v130 = vmul.f32 %v49, %v115
  %v131 = vmul.f32 %v54, %v59
  %v132 = vmul.f32 %v54, %v63
  %v133 = vmul.f32 %v54, %v67
  %v134 = vmul.f32 %v54, %v71
  %v135 = vmul.f32 %v54, %v75
  %v136 = vmul.f32 %v54, %v79
  %v137 = vmul.f32 %v54, %v83
  %v138 = vmul.f32 %v54, %v87
  %v139 = vmul.f32 %v54, %v91
  %v140 = vmul.f32 %v54, %v95
  %v141 = vmul.f32 %v54, %v99
  %v142 = vmul.f32 %v54, %v103
  %v143 = vmul.f32 %v54, %v107
  %v144 = vmul.f32 %v54, %v111
  %v145 = vmul.f32 %v54, %v115
  %146 = vset.pattern.permute.xlu0 1
  %147 = vperm.xlu0 %146, %v14
  %v148 = vpop.permute.xlu0 %147
  %150 = vset.pattern.permute.xlu0 1
  %151 = vperm.xlu0 %150, %v15
  %v152 = vpop.permute.xlu0 %151
  %v154 = vlaneseq
  %v155 = vshrl.u32 %v154, 7
  %v156 = vsub.s32 1, %v155
  %v157 = vrot.slane %v16, %v156
  %v158 = vlaneseq
  %v159 = vshrl.u32 %v158, 7
  %v160 = vsub.s32 1, %v159
  %v161 = vrot.slane %v17, %v160
  %v162 = vlaneseq
  %v163 = vshrl.u32 %v162, 7
  %v164 = vsub.s32 1, %v163
  %v165 = vrot.slane %v18, %v164
  %v166 = vlaneseq
  %v167 = vshrl.u32 %v166, 7
  %v168 = vsub.s32 1, %v167
  %v169 = vrot.slane %v19, %v168
  %v170 = vlaneseq
  %v171 = vshrl.u32 %v170, 7
  %v172 = vsub.s32 1, %v171
  %v173 = vrot.slane %v20, %v172
  %v174 = vlaneseq
  %v175 = vshrl.u32 %v174, 7
  %v176 = vsub.s32 1, %v175
  %v177 = vrot.slane %v21, %v176
  %v178 = vlaneseq
  %v179 = vshrl.u32 %v178, 7
  %v180 = vsub.s32 1, %v179
  %v181 = vrot.slane %v22, %v180
  %v182 = vlaneseq
  %v183 = vshrl.u32 %v182, 7
  %v184 = vsub.s32 1, %v183
  %v185 = vrot.slane %v23, %v184
  %v186 = vlaneseq
  %v187 = vshrl.u32 %v186, 7
  %v188 = vsub.s32 1, %v187
  %v189 = vrot.slane %v24, %v188
  %v190 = vlaneseq
  %v191 = vshrl.u32 %v190, 7
  %v192 = vsub.s32 1, %v191
  %v193 = vrot.slane %v25, %v192
  %v194 = vlaneseq
  %v195 = vshrl.u32 %v194, 7
  %v196 = vsub.s32 1, %v195
  %v197 = vrot.slane %v26, %v196
  %v198 = vlaneseq
  %v199 = vshrl.u32 %v198, 7
  %v200 = vsub.s32 1, %v199
  %v201 = vrot.slane %v27, %v200
  %v202 = vlaneseq
  %v203 = vshrl.u32 %v202, 7
  %v204 = vsub.s32 1, %v203
  %v205 = vrot.slane %v28, %v204
  %v206 = vlaneseq
  %v207 = vshrl.u32 %v206, 7
  %v208 = vsub.s32 1, %v207
  %v209 = vrot.slane %v29, %v208
  %v210 = vlaneseq
  %v211 = vshrl.u32 %v210, 7
  %v212 = vsub.s32 1, %v211
  %v213 = vrot.slane %v30, %v212
  %v214 = vmul.f32 %v148, %v157
  %v215 = vmul.f32 %v148, %v161
  %v216 = vmul.f32 %v148, %v165
  %v217 = vmul.f32 %v148, %v169
  %v218 = vmul.f32 %v148, %v173
  %v219 = vmul.f32 %v148, %v177
  %v220 = vmul.f32 %v148, %v181
  %v221 = vmul.f32 %v148, %v185
  %v222 = vmul.f32 %v148, %v189
  %v223 = vmul.f32 %v148, %v193
  %v224 = vmul.f32 %v148, %v197
  %v225 = vmul.f32 %v148, %v201
  %v226 = vmul.f32 %v148, %v205
  %v227 = vmul.f32 %v148, %v209
  %v228 = vmul.f32 %v148, %v213
  %v229 = vmul.f32 %v152, %v157
  %v230 = vmul.f32 %v152, %v161
  %v231 = vmul.f32 %v152, %v165
  %v232 = vmul.f32 %v152, %v169
  %v233 = vmul.f32 %v152, %v173
  %v234 = vmul.f32 %v152, %v177
  %v235 = vmul.f32 %v152, %v181
  %v236 = vmul.f32 %v152, %v185
  %v237 = vmul.f32 %v152, %v189
  %v238 = vmul.f32 %v152, %v193
  %v239 = vmul.f32 %v152, %v197
  %v240 = vmul.f32 %v152, %v201
  %v241 = vmul.f32 %v152, %v205
  %v242 = vmul.f32 %v152, %v209
  %v243 = vmul.f32 %v152, %v213
  %v244 = vadd.f32 %v116, %v214
  %v245 = vadd.f32 %v117, %v215
  %v246 = vadd.f32 %v118, %v216
  %v247 = vadd.f32 %v119, %v217
  %v248 = vadd.f32 %v120, %v218
  %v249 = vadd.f32 %v121, %v219
  %v250 = vadd.f32 %v122, %v220
  %v251 = vadd.f32 %v123, %v221
  %v252 = vadd.f32 %v124, %v222
  %v253 = vadd.f32 %v125, %v223
  %v254 = vadd.f32 %v126, %v224
  %v255 = vadd.f32 %v127, %v225
  %v256 = vadd.f32 %v128, %v226
  %v257 = vadd.f32 %v129, %v227
  %v258 = vadd.f32 %v130, %v228
  %v259 = vadd.f32 %v131, %v229
  %v260 = vadd.f32 %v132, %v230
  %v261 = vadd.f32 %v133, %v231
  %v262 = vadd.f32 %v134, %v232
  %v263 = vadd.f32 %v135, %v233
  %v264 = vadd.f32 %v136, %v234
  %v265 = vadd.f32 %v137, %v235
  %v266 = vadd.f32 %v138, %v236
  %v267 = vadd.f32 %v139, %v237
  %v268 = vadd.f32 %v140, %v238
  %v269 = vadd.f32 %v141, %v239
  %v270 = vadd.f32 %v142, %v240
  %v271 = vadd.f32 %v143, %v241
  %v272 = vadd.f32 %v144, %v242
  %v273 = vadd.f32 %v145, %v243
  %274 = vset.pattern.permute.xlu0 2
  %275 = vperm.xlu0 %274, %v14
  %v276 = vpop.permute.xlu0 %275
  %278 = vset.pattern.permute.xlu0 2
  %279 = vperm.xlu0 %278, %v15
  %v280 = vpop.permute.xlu0 %279
  %v282 = vlaneseq
  %v283 = vshrl.u32 %v282, 7
  %v284 = vsub.s32 2, %v283
  %v285 = vrot.slane %v16, %v284
  %v286 = vlaneseq
  %v287 = vshrl.u32 %v286, 7
  %v288 = vsub.s32 2, %v287
  %v289 = vrot.slane %v17, %v288
  %v290 = vlaneseq
  %v291 = vshrl.u32 %v290, 7
  %v292 = vsub.s32 2, %v291
  %v293 = vrot.slane %v18, %v292
  %v294 = vlaneseq
  %v295 = vshrl.u32 %v294, 7
  %v296 = vsub.s32 2, %v295
  %v297 = vrot.slane %v19, %v296
  %v298 = vlaneseq
  %v299 = vshrl.u32 %v298, 7
  %v300 = vsub.s32 2, %v299
  %v301 = vrot.slane %v20, %v300
  %v302 = vlaneseq
  %v303 = vshrl.u32 %v302, 7
  %v304 = vsub.s32 2, %v303
  %v305 = vrot.slane %v21, %v304
  %v306 = vlaneseq
  %v307 = vshrl.u32 %v306, 7
  %v308 = vsub.s32 2, %v307
  %v309 = vrot.slane %v22, %v308
  %v310 = vlaneseq
  %v311 = vshrl.u32 %v310, 7
  %v312 = vsub.s32 2, %v311
  %v313 = vrot.slane %v23, %v312
  %v314 = vlaneseq
  %v315 = vshrl.u32 %v314, 7
  %v316 = vsub.s32 2, %v315
  %v317 = vrot.slane %v24, %v316
  %v318 = vlaneseq
  %v319 = vshrl.u32 %v318, 7
  %v320 = vsub.s32 2, %v319
  %v321 = vrot.slane %v25, %v320
  %v322 = vlaneseq
  %v323 = vshrl.u32 %v322, 7
  %v324 = vsub.s32 2, %v323
  %v325 = vrot.slane %v26, %v324
  %v326 = vlaneseq
  %v327 = vshrl.u32 %v326, 7
  %v328 = vsub.s32 2, %v327
  %v329 = vrot.slane %v27, %v328
  %v330 = vlaneseq
  %v331 = vshrl.u32 %v330, 7
  %v332 = vsub.s32 2, %v331
  %v333 = vrot.slane %v28, %v332
  %v334 = vlaneseq
  %v335 = vshrl.u32 %v334, 7
  %v336 = vsub.s32 2, %v335
  %v337 = vrot.slane %v29, %v336
  %v338 = vlaneseq
  %v339 = vshrl.u32 %v338, 7
  %v340 = vsub.s32 2, %v339
  %v341 = vrot.slane %v30, %v340
  %v342 = vmul.f32 %v276, %v285
  %v343 = vmul.f32 %v276, %v289
  %v344 = vmul.f32 %v276, %v293
  %v345 = vmul.f32 %v276, %v297
  %v346 = vmul.f32 %v276, %v301
  %v347 = vmul.f32 %v276, %v305
  %v348 = vmul.f32 %v276, %v309
  %v349 = vmul.f32 %v276, %v313
  %v350 = vmul.f32 %v276, %v317
  %v351 = vmul.f32 %v276, %v321
  %v352 = vmul.f32 %v276, %v325
  %v353 = vmul.f32 %v276, %v329
  %v354 = vmul.f32 %v276, %v333
  %v355 = vmul.f32 %v276, %v337
  %v356 = vmul.f32 %v276, %v341
  %v357 = vmul.f32 %v280, %v285
  %v358 = vmul.f32 %v280, %v289
  %v359 = vmul.f32 %v280, %v293
  %v360 = vmul.f32 %v280, %v297
  %v361 = vmul.f32 %v280, %v301
  %v362 = vmul.f32 %v280, %v305
  %v363 = vmul.f32 %v280, %v309
  %v364 = vmul.f32 %v280, %v313
  %v365 = vmul.f32 %v280, %v317
  %v366 = vmul.f32 %v280, %v321
  %v367 = vmul.f32 %v280, %v325
  %v368 = vmul.f32 %v280, %v329
  %v369 = vmul.f32 %v280, %v333
  %v370 = vmul.f32 %v280, %v337
  %v371 = vmul.f32 %v280, %v341
  %v372 = vadd.f32 %v244, %v342
  %v373 = vadd.f32 %v245, %v343
  %v374 = vadd.f32 %v246, %v344
  %v375 = vadd.f32 %v247, %v345
  %v376 = vadd.f32 %v248, %v346
  %v377 = vadd.f32 %v249, %v347
  %v378 = vadd.f32 %v250, %v348
  %v379 = vadd.f32 %v251, %v349
  %v380 = vadd.f32 %v252, %v350
  %v381 = vadd.f32 %v253, %v351
  %v382 = vadd.f32 %v254, %v352
  %v383 = vadd.f32 %v255, %v353
  %v384 = vadd.f32 %v256, %v354
  %v385 = vadd.f32 %v257, %v355
  %v386 = vadd.f32 %v258, %v356
  %v387 = vadd.f32 %v259, %v357
  %v388 = vadd.f32 %v260, %v358
  %v389 = vadd.f32 %v261, %v359
  %v390 = vadd.f32 %v262, %v360
  %v391 = vadd.f32 %v263, %v361
  %v392 = vadd.f32 %v264, %v362
  %v393 = vadd.f32 %v265, %v363
  %v394 = vadd.f32 %v266, %v364
  %v395 = vadd.f32 %v267, %v365
  %v396 = vadd.f32 %v268, %v366
  %v397 = vadd.f32 %v269, %v367
  %v398 = vadd.f32 %v270, %v368
  %v399 = vadd.f32 %v271, %v369
  %v400 = vadd.f32 %v272, %v370
  %v401 = vadd.f32 %v273, %v371
  %402 = vset.pattern.permute.xlu0 3
  %403 = vperm.xlu0 %402, %v14
  %v404 = vpop.permute.xlu0 %403
  %406 = vset.pattern.permute.xlu0 3
  %407 = vperm.xlu0 %406, %v15
  %v408 = vpop.permute.xlu0 %407
  %v410 = vlaneseq
  %v411 = vshrl.u32 %v410, 7
  %v412 = vsub.s32 3, %v411
  %v413 = vrot.slane %v16, %v412
  %v414 = vlaneseq
  %v415 = vshrl.u32 %v414, 7
  %v416 = vsub.s32 3, %v415
  %v417 = vrot.slane %v17, %v416
  %v418 = vlaneseq
  %v419 = vshrl.u32 %v418, 7
  %v420 = vsub.s32 3, %v419
  %v421 = vrot.slane %v18, %v420
  %v422 = vlaneseq
  %v423 = vshrl.u32 %v422, 7
  %v424 = vsub.s32 3, %v423
  %v425 = vrot.slane %v19, %v424
  %v426 = vlaneseq
  %v427 = vshrl.u32 %v426, 7
  %v428 = vsub.s32 3, %v427
  %v429 = vrot.slane %v20, %v428
  %v430 = vlaneseq
  %v431 = vshrl.u32 %v430, 7
  %v432 = vsub.s32 3, %v431
  %v433 = vrot.slane %v21, %v432
  %v434 = vlaneseq
  %v435 = vshrl.u32 %v434, 7
  %v436 = vsub.s32 3, %v435
  %v437 = vrot.slane %v22, %v436
  %v438 = vlaneseq
  %v439 = vshrl.u32 %v438, 7
  %v440 = vsub.s32 3, %v439
  %v441 = vrot.slane %v23, %v440
  %v442 = vlaneseq
  %v443 = vshrl.u32 %v442, 7
  %v444 = vsub.s32 3, %v443
  %v445 = vrot.slane %v24, %v444
  %v446 = vlaneseq
  %v447 = vshrl.u32 %v446, 7
  %v448 = vsub.s32 3, %v447
  %v449 = vrot.slane %v25, %v448
  %v450 = vlaneseq
  %v451 = vshrl.u32 %v450, 7
  %v452 = vsub.s32 3, %v451
  %v453 = vrot.slane %v26, %v452
  %v454 = vlaneseq
  %v455 = vshrl.u32 %v454, 7
  %v456 = vsub.s32 3, %v455
  %v457 = vrot.slane %v27, %v456
  %v458 = vlaneseq
  %v459 = vshrl.u32 %v458, 7
  %v460 = vsub.s32 3, %v459
  %v461 = vrot.slane %v28, %v460
  %v462 = vlaneseq
  %v463 = vshrl.u32 %v462, 7
  %v464 = vsub.s32 3, %v463
  %v465 = vrot.slane %v29, %v464
  %v466 = vlaneseq
  %v467 = vshrl.u32 %v466, 7
  %v468 = vsub.s32 3, %v467
  %v469 = vrot.slane %v30, %v468
  %v470 = vmul.f32 %v404, %v413
  %v471 = vmul.f32 %v404, %v417
  %v472 = vmul.f32 %v404, %v421
  %v473 = vmul.f32 %v404, %v425
  %v474 = vmul.f32 %v404, %v429
  %v475 = vmul.f32 %v404, %v433
  %v476 = vmul.f32 %v404, %v437
  %v477 = vmul.f32 %v404, %v441
  %v478 = vmul.f32 %v404, %v445
  %v479 = vmul.f32 %v404, %v449
  %v480 = vmul.f32 %v404, %v453
  %v481 = vmul.f32 %v404, %v457
  %v482 = vmul.f32 %v404, %v461
  %v483 = vmul.f32 %v404, %v465
  %v484 = vmul.f32 %v404, %v469
  %v485 = vmul.f32 %v408, %v413
  %v486 = vmul.f32 %v408, %v417
  %v487 = vmul.f32 %v408, %v421
  %v488 = vmul.f32 %v408, %v425
  %v489 = vmul.f32 %v408, %v429
  %v490 = vmul.f32 %v408, %v433
  %v491 = vmul.f32 %v408, %v437
  %v492 = vmul.f32 %v408, %v441
  %v493 = vmul.f32 %v408, %v445
  %v494 = vmul.f32 %v408, %v449
  %v495 = vmul.f32 %v408, %v453
  %v496 = vmul.f32 %v408, %v457
  %v497 = vmul.f32 %v408, %v461
  %v498 = vmul.f32 %v408, %v465
  %v499 = vmul.f32 %v408, %v469
  %v500 = vadd.f32 %v372, %v470
  %v501 = vadd.f32 %v373, %v471
  %v502 = vadd.f32 %v374, %v472
  %v503 = vadd.f32 %v375, %v473
  %v504 = vadd.f32 %v376, %v474
  %v505 = vadd.f32 %v377, %v475
  %v506 = vadd.f32 %v378, %v476
  %v507 = vadd.f32 %v379, %v477
  %v508 = vadd.f32 %v380, %v478
  %v509 = vadd.f32 %v381, %v479
  %v510 = vadd.f32 %v382, %v480
  %v511 = vadd.f32 %v383, %v481
  %v512 = vadd.f32 %v384, %v482
  %v513 = vadd.f32 %v385, %v483
  %v514 = vadd.f32 %v386, %v484
  %v515 = vadd.f32 %v387, %v485
  %v516 = vadd.f32 %v388, %v486
  %v517 = vadd.f32 %v389, %v487
  %v518 = vadd.f32 %v390, %v488
  %v519 = vadd.f32 %v391, %v489
  %v520 = vadd.f32 %v392, %v490
  %v521 = vadd.f32 %v393, %v491
  %v522 = vadd.f32 %v394, %v492
  %v523 = vadd.f32 %v395, %v493
  %v524 = vadd.f32 %v396, %v494
  %v525 = vadd.f32 %v397, %v495
  %v526 = vadd.f32 %v398, %v496
  %v527 = vadd.f32 %v399, %v497
  %v528 = vadd.f32 %v400, %v498
  %v529 = vadd.f32 %v401, %v499
  %530 = vset.pattern.permute.xlu0 4
  %531 = vperm.xlu0 %530, %v14
  %v532 = vpop.permute.xlu0 %531
  %534 = vset.pattern.permute.xlu0 4
  %535 = vperm.xlu0 %534, %v15
  %v536 = vpop.permute.xlu0 %535
  %v538 = vlaneseq
  %v539 = vshrl.u32 %v538, 7
  %v540 = vsub.s32 4, %v539
  %v541 = vrot.slane %v16, %v540
  %v542 = vlaneseq
  %v543 = vshrl.u32 %v542, 7
  %v544 = vsub.s32 4, %v543
  %v545 = vrot.slane %v17, %v544
  %v546 = vlaneseq
  %v547 = vshrl.u32 %v546, 7
  %v548 = vsub.s32 4, %v547
  %v549 = vrot.slane %v18, %v548
  %v550 = vlaneseq
  %v551 = vshrl.u32 %v550, 7
  %v552 = vsub.s32 4, %v551
  %v553 = vrot.slane %v19, %v552
  %v554 = vlaneseq
  %v555 = vshrl.u32 %v554, 7
  %v556 = vsub.s32 4, %v555
  %v557 = vrot.slane %v20, %v556
  %v558 = vlaneseq
  %v559 = vshrl.u32 %v558, 7
  %v560 = vsub.s32 4, %v559
  %v561 = vrot.slane %v21, %v560
  %v562 = vlaneseq
  %v563 = vshrl.u32 %v562, 7
  %v564 = vsub.s32 4, %v563
  %v565 = vrot.slane %v22, %v564
  %v566 = vlaneseq
  %v567 = vshrl.u32 %v566, 7
  %v568 = vsub.s32 4, %v567
  %v569 = vrot.slane %v23, %v568
  %v570 = vlaneseq
  %v571 = vshrl.u32 %v570, 7
  %v572 = vsub.s32 4, %v571
  %v573 = vrot.slane %v24, %v572
  %v574 = vlaneseq
  %v575 = vshrl.u32 %v574, 7
  %v576 = vsub.s32 4, %v575
  %v577 = vrot.slane %v25, %v576
  %v578 = vlaneseq
  %v579 = vshrl.u32 %v578, 7
  %v580 = vsub.s32 4, %v579
  %v581 = vrot.slane %v26, %v580
  %v582 = vlaneseq
  %v583 = vshrl.u32 %v582, 7
  %v584 = vsub.s32 4, %v583
  %v585 = vrot.slane %v27, %v584
  %v586 = vlaneseq
  %v587 = vshrl.u32 %v586, 7
  %v588 = vsub.s32 4, %v587
  %v589 = vrot.slane %v28, %v588
  %v590 = vlaneseq
  %v591 = vshrl.u32 %v590, 7
  %v592 = vsub.s32 4, %v591
  %v593 = vrot.slane %v29, %v592
  %v594 = vlaneseq
  %v595 = vshrl.u32 %v594, 7
  %v596 = vsub.s32 4, %v595
  %v597 = vrot.slane %v30, %v596
  %v598 = vmul.f32 %v532, %v541
  %v599 = vmul.f32 %v532, %v545
  %v600 = vmul.f32 %v532, %v549
  %v601 = vmul.f32 %v532, %v553
  %v602 = vmul.f32 %v532, %v557
  %v603 = vmul.f32 %v532, %v561
  %v604 = vmul.f32 %v532, %v565
  %v605 = vmul.f32 %v532, %v569
  %v606 = vmul.f32 %v532, %v573
  %v607 = vmul.f32 %v532, %v577
  %v608 = vmul.f32 %v532, %v581
  %v609 = vmul.f32 %v532, %v585
  %v610 = vmul.f32 %v532, %v589
  %v611 = vmul.f32 %v532, %v593
  %v612 = vmul.f32 %v532, %v597
  %v613 = vmul.f32 %v536, %v541
  %v614 = vmul.f32 %v536, %v545
  %v615 = vmul.f32 %v536, %v549
  %v616 = vmul.f32 %v536, %v553
  %v617 = vmul.f32 %v536, %v557
  %v618 = vmul.f32 %v536, %v561
  %v619 = vmul.f32 %v536, %v565
  %v620 = vmul.f32 %v536, %v569
  %v621 = vmul.f32 %v536, %v573
  %v622 = vmul.f32 %v536, %v577
  %v623 = vmul.f32 %v536, %v581
  %v624 = vmul.f32 %v536, %v585
  %v625 = vmul.f32 %v536, %v589
  %v626 = vmul.f32 %v536, %v593
  %v627 = vmul.f32 %v536, %v597
  %v628 = vadd.f32 %v500, %v598
  %v629 = vadd.f32 %v501, %v599
  %v630 = vadd.f32 %v502, %v600
  %v631 = vadd.f32 %v503, %v601
  %v632 = vadd.f32 %v504, %v602
  %v633 = vadd.f32 %v505, %v603
  %v634 = vadd.f32 %v506, %v604
  %v635 = vadd.f32 %v507, %v605
  %v636 = vadd.f32 %v508, %v606
  %v637 = vadd.f32 %v509, %v607
  %v638 = vadd.f32 %v510, %v608
  %v639 = vadd.f32 %v511, %v609
  %v640 = vadd.f32 %v512, %v610
  %v641 = vadd.f32 %v513, %v611
  %v642 = vadd.f32 %v514, %v612
  %v643 = vadd.f32 %v515, %v613
  %v644 = vadd.f32 %v516, %v614
  %v645 = vadd.f32 %v517, %v615
  %v646 = vadd.f32 %v518, %v616
  %v647 = vadd.f32 %v519, %v617
  %v648 = vadd.f32 %v520, %v618
  %v649 = vadd.f32 %v521, %v619
  %v650 = vadd.f32 %v522, %v620
  %v651 = vadd.f32 %v523, %v621
  %v652 = vadd.f32 %v524, %v622
  %v653 = vadd.f32 %v525, %v623
  %v654 = vadd.f32 %v526, %v624
  %v655 = vadd.f32 %v527, %v625
  %v656 = vadd.f32 %v528, %v626
  %v657 = vadd.f32 %v529, %v627
  %658 = vset.pattern.permute.xlu0 5
  %659 = vperm.xlu0 %658, %v14
  %v660 = vpop.permute.xlu0 %659
  %662 = vset.pattern.permute.xlu0 5
  %663 = vperm.xlu0 %662, %v15
  %v664 = vpop.permute.xlu0 %663
  %v666 = vlaneseq
  %v667 = vshrl.u32 %v666, 7
  %v668 = vsub.s32 5, %v667
  %v669 = vrot.slane %v16, %v668
  %v670 = vlaneseq
  %v671 = vshrl.u32 %v670, 7
  %v672 = vsub.s32 5, %v671
  %v673 = vrot.slane %v17, %v672
  %v674 = vlaneseq
  %v675 = vshrl.u32 %v674, 7
  %v676 = vsub.s32 5, %v675
  %v677 = vrot.slane %v18, %v676
  %v678 = vlaneseq
  %v679 = vshrl.u32 %v678, 7
  %v680 = vsub.s32 5, %v679
  %v681 = vrot.slane %v19, %v680
  %v682 = vlaneseq
  %v683 = vshrl.u32 %v682, 7
  %v684 = vsub.s32 5, %v683
  %v685 = vrot.slane %v20, %v684
  %v686 = vlaneseq
  %v687 = vshrl.u32 %v686, 7
  %v688 = vsub.s32 5, %v687
  %v689 = vrot.slane %v21, %v688
  %v690 = vlaneseq
  %v691 = vshrl.u32 %v690, 7
  %v692 = vsub.s32 5, %v691
  %v693 = vrot.slane %v22, %v692
  %v694 = vlaneseq
  %v695 = vshrl.u32 %v694, 7
  %v696 = vsub.s32 5, %v695
  %v697 = vrot.slane %v23, %v696
  %v698 = vlaneseq
  %v699 = vshrl.u32 %v698, 7
  %v700 = vsub.s32 5, %v699
  %v701 = vrot.slane %v24, %v700
  %v702 = vlaneseq
  %v703 = vshrl.u32 %v702, 7
  %v704 = vsub.s32 5, %v703
  %v705 = vrot.slane %v25, %v704
  %v706 = vlaneseq
  %v707 = vshrl.u32 %v706, 7
  %v708 = vsub.s32 5, %v707
  %v709 = vrot.slane %v26, %v708
  %v710 = vlaneseq
  %v711 = vshrl.u32 %v710, 7
  %v712 = vsub.s32 5, %v711
  %v713 = vrot.slane %v27, %v712
  %v714 = vlaneseq
  %v715 = vshrl.u32 %v714, 7
  %v716 = vsub.s32 5, %v715
  %v717 = vrot.slane %v28, %v716
  %v718 = vlaneseq
  %v719 = vshrl.u32 %v718, 7
  %v720 = vsub.s32 5, %v719
  %v721 = vrot.slane %v29, %v720
  %v722 = vlaneseq
  %v723 = vshrl.u32 %v722, 7
  %v724 = vsub.s32 5, %v723
  %v725 = vrot.slane %v30, %v724
  %v726 = vmul.f32 %v660, %v669
  %v727 = vmul.f32 %v660, %v673
  %v728 = vmul.f32 %v660, %v677
  %v729 = vmul.f32 %v660, %v681
  %v730 = vmul.f32 %v660, %v685
  %v731 = vmul.f32 %v660, %v689
  %v732 = vmul.f32 %v660, %v693
  %v733 = vmul.f32 %v660, %v697
  %v734 = vmul.f32 %v660, %v701
  %v735 = vmul.f32 %v660, %v705
  %v736 = vmul.f32 %v660, %v709
  %v737 = vmul.f32 %v660, %v713
  %v738 = vmul.f32 %v660, %v717
  %v739 = vmul.f32 %v660, %v721
  %v740 = vmul.f32 %v660, %v725
  %v741 = vmul.f32 %v664, %v669
  %v742 = vmul.f32 %v664, %v673
  %v743 = vmul.f32 %v664, %v677
  %v744 = vmul.f32 %v664, %v681
  %v745 = vmul.f32 %v664, %v685
  %v746 = vmul.f32 %v664, %v689
  %v747 = vmul.f32 %v664, %v693
  %v748 = vmul.f32 %v664, %v697
  %v749 = vmul.f32 %v664, %v701
  %v750 = vmul.f32 %v664, %v705
  %v751 = vmul.f32 %v664, %v709
  %v752 = vmul.f32 %v664, %v713
  %v753 = vmul.f32 %v664, %v717
  %v754 = vmul.f32 %v664, %v721
  %v755 = vmul.f32 %v664, %v725
  %v756 = vadd.f32 %v628, %v726
  %v757 = vadd.f32 %v629, %v727
  %v758 = vadd.f32 %v630, %v728
  %v759 = vadd.f32 %v631, %v729
  %v760 = vadd.f32 %v632, %v730
  %v761 = vadd.f32 %v633, %v731
  %v762 = vadd.f32 %v634, %v732
  %v763 = vadd.f32 %v635, %v733
  %v764 = vadd.f32 %v636, %v734
  %v765 = vadd.f32 %v637, %v735
  %v766 = vadd.f32 %v638, %v736
  %v767 = vadd.f32 %v639, %v737
  %v768 = vadd.f32 %v640, %v738
  %v769 = vadd.f32 %v641, %v739
  %v770 = vadd.f32 %v642, %v740
  %v771 = vadd.f32 %v643, %v741
  %v772 = vadd.f32 %v644, %v742
  %v773 = vadd.f32 %v645, %v743
  %v774 = vadd.f32 %v646, %v744
  %v775 = vadd.f32 %v647, %v745
  %v776 = vadd.f32 %v648, %v746
  %v777 = vadd.f32 %v649, %v747
  %v778 = vadd.f32 %v650, %v748
  %v779 = vadd.f32 %v651, %v749
  %v780 = vadd.f32 %v652, %v750
  %v781 = vadd.f32 %v653, %v751
  %v782 = vadd.f32 %v654, %v752
  %v783 = vadd.f32 %v655, %v753
  %v784 = vadd.f32 %v656, %v754
  %v785 = vadd.f32 %v657, %v755
  %786 = vset.pattern.permute.xlu0 6
  %787 = vperm.xlu0 %786, %v14
  %v788 = vpop.permute.xlu0 %787
  %790 = vset.pattern.permute.xlu0 6
  %791 = vperm.xlu0 %790, %v15
  %v792 = vpop.permute.xlu0 %791
  %v794 = vlaneseq
  %v795 = vshrl.u32 %v794, 7
  %v796 = vsub.s32 6, %v795
  %v797 = vrot.slane %v16, %v796
  %v798 = vlaneseq
  %v799 = vshrl.u32 %v798, 7
  %v800 = vsub.s32 6, %v799
  %v801 = vrot.slane %v17, %v800
  %v802 = vlaneseq
  %v803 = vshrl.u32 %v802, 7
  %v804 = vsub.s32 6, %v803
  %v805 = vrot.slane %v18, %v804
  %v806 = vlaneseq
  %v807 = vshrl.u32 %v806, 7
  %v808 = vsub.s32 6, %v807
  %v809 = vrot.slane %v19, %v808
  %v810 = vlaneseq
  %v811 = vshrl.u32 %v810, 7
  %v812 = vsub.s32 6, %v811
  %v813 = vrot.slane %v20, %v812
  %v814 = vlaneseq
  %v815 = vshrl.u32 %v814, 7
  %v816 = vsub.s32 6, %v815
  %v817 = vrot.slane %v21, %v816
  %v818 = vlaneseq
  %v819 = vshrl.u32 %v818, 7
  %v820 = vsub.s32 6, %v819
  %v821 = vrot.slane %v22, %v820
  %v822 = vlaneseq
  %v823 = vshrl.u32 %v822, 7
  %v824 = vsub.s32 6, %v823
  %v825 = vrot.slane %v23, %v824
  %v826 = vlaneseq
  %v827 = vshrl.u32 %v826, 7
  %v828 = vsub.s32 6, %v827
  %v829 = vrot.slane %v24, %v828
  %v830 = vlaneseq
  %v831 = vshrl.u32 %v830, 7
  %v832 = vsub.s32 6, %v831
  %v833 = vrot.slane %v25, %v832
  %v834 = vlaneseq
  %v835 = vshrl.u32 %v834, 7
  %v836 = vsub.s32 6, %v835
  %v837 = vrot.slane %v26, %v836
  %v838 = vlaneseq
  %v839 = vshrl.u32 %v838, 7
  %v840 = vsub.s32 6, %v839
  %v841 = vrot.slane %v27, %v840
  %v842 = vlaneseq
  %v843 = vshrl.u32 %v842, 7
  %v844 = vsub.s32 6, %v843
  %v845 = vrot.slane %v28, %v844
  %v846 = vlaneseq
  %v847 = vshrl.u32 %v846, 7
  %v848 = vsub.s32 6, %v847
  %v849 = vrot.slane %v29, %v848
  %v850 = vlaneseq
  %v851 = vshrl.u32 %v850, 7
  %v852 = vsub.s32 6, %v851
  %v853 = vrot.slane %v30, %v852
  %v854 = vmul.f32 %v788, %v797
  %v855 = vmul.f32 %v788, %v801
  %v856 = vmul.f32 %v788, %v805
  %v857 = vmul.f32 %v788, %v809
  %v858 = vmul.f32 %v788, %v813
  %v859 = vmul.f32 %v788, %v817
  %v860 = vmul.f32 %v788, %v821
  %v861 = vmul.f32 %v788, %v825
  %v862 = vmul.f32 %v788, %v829
  %v863 = vmul.f32 %v788, %v833
  %v864 = vmul.f32 %v788, %v837
  %v865 = vmul.f32 %v788, %v841
  %v866 = vmul.f32 %v788, %v845
  %v867 = vmul.f32 %v788, %v849
  %v868 = vmul.f32 %v788, %v853
  %v869 = vmul.f32 %v792, %v797
  %v870 = vmul.f32 %v792, %v801
  %v871 = vmul.f32 %v792, %v805
  %v872 = vmul.f32 %v792, %v809
  %v873 = vmul.f32 %v792, %v813
  %v874 = vmul.f32 %v792, %v817
  %v875 = vmul.f32 %v792, %v821
  %v876 = vmul.f32 %v792, %v825
  %v877 = vmul.f32 %v792, %v829
  %v878 = vmul.f32 %v792, %v833
  %v879 = vmul.f32 %v792, %v837
  %v880 = vmul.f32 %v792, %v841
  %v881 = vmul.f32 %v792, %v845
  %v882 = vmul.f32 %v792, %v849
  %v883 = vmul.f32 %v792, %v853
  %v884 = vadd.f32 %v756, %v854
  %v885 = vadd.f32 %v757, %v855
  %v886 = vadd.f32 %v758, %v856
  %v887 = vadd.f32 %v759, %v857
  %v888 = vadd.f32 %v760, %v858
  %v889 = vadd.f32 %v761, %v859
  %v890 = vadd.f32 %v762, %v860
  %v891 = vadd.f32 %v763, %v861
  %v892 = vadd.f32 %v764, %v862
  %v893 = vadd.f32 %v765, %v863
  %v894 = vadd.f32 %v766, %v864
  %v895 = vadd.f32 %v767, %v865
  %v896 = vadd.f32 %v768, %v866
  %v897 = vadd.f32 %v769, %v867
  %v898 = vadd.f32 %v770, %v868
  %v899 = vadd.f32 %v771, %v869
  %v900 = vadd.f32 %v772, %v870
  %v901 = vadd.f32 %v773, %v871
  %v902 = vadd.f32 %v774, %v872
  %v903 = vadd.f32 %v775, %v873
  %v904 = vadd.f32 %v776, %v874
  %v905 = vadd.f32 %v777, %v875
  %v906 = vadd.f32 %v778, %v876
  %v907 = vadd.f32 %v779, %v877
  %v908 = vadd.f32 %v780, %v878
  %v909 = vadd.f32 %v781, %v879
  %v910 = vadd.f32 %v782, %v880
  %v911 = vadd.f32 %v783, %v881
  %v912 = vadd.f32 %v784, %v882
  %v913 = vadd.f32 %v785, %v883
  %914 = vset.pattern.permute.xlu0 7
  %915 = vperm.xlu0 %914, %v14
  %v916 = vpop.permute.xlu0 %915
  %918 = vset.pattern.permute.xlu0 7
  %919 = vperm.xlu0 %918, %v15
  %v920 = vpop.permute.xlu0 %919
  %v922 = vlaneseq
  %v923 = vshrl.u32 %v922, 7
  %v924 = vsub.s32 7, %v923
  %v925 = vrot.slane %v16, %v924
  %v926 = vlaneseq
  %v927 = vshrl.u32 %v926, 7
  %v928 = vsub.s32 7, %v927
  %v929 = vrot.slane %v17, %v928
  %v930 = vlaneseq
  %v931 = vshrl.u32 %v930, 7
  %v932 = vsub.s32 7, %v931
  %v933 = vrot.slane %v18, %v932
  %v934 = vlaneseq
  %v935 = vshrl.u32 %v934, 7
  %v936 = vsub.s32 7, %v935
  %v937 = vrot.slane %v19, %v936
  %v938 = vlaneseq
  %v939 = vshrl.u32 %v938, 7
  %v940 = vsub.s32 7, %v939
  %v941 = vrot.slane %v20, %v940
  %v942 = vlaneseq
  %v943 = vshrl.u32 %v942, 7
  %v944 = vsub.s32 7, %v943
  %v945 = vrot.slane %v21, %v944
  %v946 = vlaneseq
  %v947 = vshrl.u32 %v946, 7
  %v948 = vsub.s32 7, %v947
  %v949 = vrot.slane %v22, %v948
  %v950 = vlaneseq
  %v951 = vshrl.u32 %v950, 7
  %v952 = vsub.s32 7, %v951
  %v953 = vrot.slane %v23, %v952
  %v954 = vlaneseq
  %v955 = vshrl.u32 %v954, 7
  %v956 = vsub.s32 7, %v955
  %v957 = vrot.slane %v24, %v956
  %v958 = vlaneseq
  %v959 = vshrl.u32 %v958, 7
  %v960 = vsub.s32 7, %v959
  %v961 = vrot.slane %v25, %v960
  %v962 = vlaneseq
  %v963 = vshrl.u32 %v962, 7
  %v964 = vsub.s32 7, %v963
  %v965 = vrot.slane %v26, %v964
  %v966 = vlaneseq
  %v967 = vshrl.u32 %v966, 7
  %v968 = vsub.s32 7, %v967
  %v969 = vrot.slane %v27, %v968
  %v970 = vlaneseq
  %v971 = vshrl.u32 %v970, 7
  %v972 = vsub.s32 7, %v971
  %v973 = vrot.slane %v28, %v972
  %v974 = vlaneseq
  %v975 = vshrl.u32 %v974, 7
  %v976 = vsub.s32 7, %v975
  %v977 = vrot.slane %v29, %v976
  %v978 = vlaneseq
  %v979 = vshrl.u32 %v978, 7
  %v980 = vsub.s32 7, %v979
  %v981 = vrot.slane %v30, %v980
  %v982 = vmul.f32 %v916, %v925
  %v983 = vmul.f32 %v916, %v929
  %v984 = vmul.f32 %v916, %v933
  %v985 = vmul.f32 %v916, %v937
  %v986 = vmul.f32 %v916, %v941
  %v987 = vmul.f32 %v916, %v945
  %v988 = vmul.f32 %v916, %v949
  %v989 = vmul.f32 %v916, %v953
  %v990 = vmul.f32 %v916, %v957
  %v991 = vmul.f32 %v916, %v961
  %v992 = vmul.f32 %v916, %v965
  %v993 = vmul.f32 %v916, %v969
  %v994 = vmul.f32 %v916, %v973
  %v995 = vmul.f32 %v916, %v977
  %v996 = vmul.f32 %v916, %v981
  %v997 = vmul.f32 %v920, %v925
  %v998 = vmul.f32 %v920, %v929
  %v999 = vmul.f32 %v920, %v933
  %v1000 = vmul.f32 %v920, %v937
  %v1001 = vmul.f32 %v920, %v941
  %v1002 = vmul.f32 %v920, %v945
  %v1003 = vmul.f32 %v920, %v949
  %v1004 = vmul.f32 %v920, %v953
  %v1005 = vmul.f32 %v920, %v957
  %v1006 = vmul.f32 %v920, %v961
  %v1007 = vmul.f32 %v920, %v965
  %v1008 = vmul.f32 %v920, %v969
  %v1009 = vmul.f32 %v920, %v973
  %v1010 = vmul.f32 %v920, %v977
  %v1011 = vmul.f32 %v920, %v981
  %v1012 = vadd.f32 %v884, %v982
  %v1013 = vadd.f32 %v885, %v983
  %v1014 = vadd.f32 %v886, %v984
  %v1015 = vadd.f32 %v887, %v985
  %v1016 = vadd.f32 %v888, %v986
  %v1017 = vadd.f32 %v889, %v987
  %v1018 = vadd.f32 %v890, %v988
  %v1019 = vadd.f32 %v891, %v989
  %v1020 = vadd.f32 %v892, %v990
  %v1021 = vadd.f32 %v893, %v991
  %v1022 = vadd.f32 %v894, %v992
  %v1023 = vadd.f32 %v895, %v993
  %v1024 = vadd.f32 %v896, %v994
  %v1025 = vadd.f32 %v897, %v995
  %v1026 = vadd.f32 %v898, %v996
  %v1027 = vadd.f32 %v899, %v997
  %v1028 = vadd.f32 %v900, %v998
  %v1029 = vadd.f32 %v901, %v999
  %v1030 = vadd.f32 %v902, %v1000
  %v1031 = vadd.f32 %v903, %v1001
  %v1032 = vadd.f32 %v904, %v1002
  %v1033 = vadd.f32 %v905, %v1003
  %v1034 = vadd.f32 %v906, %v1004
  %v1035 = vadd.f32 %v907, %v1005
  %v1036 = vadd.f32 %v908, %v1006
  %v1037 = vadd.f32 %v909, %v1007
  %v1038 = vadd.f32 %v910, %v1008
  %v1039 = vadd.f32 %v911, %v1009
  %v1040 = vadd.f32 %v912, %v1010
  %v1041 = vadd.f32 %v913, %v1011
  %1042 = vset.pattern.permute.xlu0 8
  %1043 = vperm.xlu0 %1042, %v14
  %v1044 = vpop.permute.xlu0 %1043
  %1046 = vset.pattern.permute.xlu0 8
  %1047 = vperm.xlu0 %1046, %v15
  %v1048 = vpop.permute.xlu0 %1047
  %v1050 = vlaneseq
  %v1051 = vshrl.u32 %v1050, 7
  %v1052 = vsub.s32 0, %v1051
  %v1053 = vrot.slane %v31, %v1052
  %v1054 = vlaneseq
  %v1055 = vshrl.u32 %v1054, 7
  %v1056 = vsub.s32 0, %v1055
  %v1057 = vrot.slane %v32, %v1056
  %v1058 = vlaneseq
  %v1059 = vshrl.u32 %v1058, 7
  %v1060 = vsub.s32 0, %v1059
  %v1061 = vrot.slane %v33, %v1060
  %v1062 = vlaneseq
  %v1063 = vshrl.u32 %v1062, 7
  %v1064 = vsub.s32 0, %v1063
  %v1065 = vrot.slane %v34, %v1064
  %v1066 = vlaneseq
  %v1067 = vshrl.u32 %v1066, 7
  %v1068 = vsub.s32 0, %v1067
  %v1069 = vrot.slane %v35, %v1068
  %v1070 = vlaneseq
  %v1071 = vshrl.u32 %v1070, 7
  %v1072 = vsub.s32 0, %v1071
  %v1073 = vrot.slane %v36, %v1072
  %v1074 = vlaneseq
  %v1075 = vshrl.u32 %v1074, 7
  %v1076 = vsub.s32 0, %v1075
  %v1077 = vrot.slane %v37, %v1076
  %v1078 = vlaneseq
  %v1079 = vshrl.u32 %v1078, 7
  %v1080 = vsub.s32 0, %v1079
  %v1081 = vrot.slane %v38, %v1080
  %v1082 = vlaneseq
  %v1083 = vshrl.u32 %v1082, 7
  %v1084 = vsub.s32 0, %v1083
  %v1085 = vrot.slane %v39, %v1084
  %v1086 = vlaneseq
  %v1087 = vshrl.u32 %v1086, 7
  %v1088 = vsub.s32 0, %v1087
  %v1089 = vrot.slane %v40, %v1088
  %v1090 = vlaneseq
  %v1091 = vshrl.u32 %v1090, 7
  %v1092 = vsub.s32 0, %v1091
  %v1093 = vrot.slane %v41, %v1092
  %v1094 = vlaneseq
  %v1095 = vshrl.u32 %v1094, 7
  %v1096 = vsub.s32 0, %v1095
  %v1097 = vrot.slane %v42, %v1096
  %v1098 = vlaneseq
  %v1099 = vshrl.u32 %v1098, 7
  %v1100 = vsub.s32 0, %v1099
  %v1101 = vrot.slane %v43, %v1100
  %v1102 = vlaneseq
  %v1103 = vshrl.u32 %v1102, 7
  %v1104 = vsub.s32 0, %v1103
  %v1105 = vrot.slane %v44, %v1104
  %v1106 = vlaneseq
  %v1107 = vshrl.u32 %v1106, 7
  %v1108 = vsub.s32 0, %v1107
  %v1109 = vrot.slane %v45, %v1108
  %v1110 = vmul.f32 %v1044, %v1053
  %v1111 = vmul.f32 %v1044, %v1057
  %v1112 = vmul.f32 %v1044, %v1061
  %v1113 = vmul.f32 %v1044, %v1065
  %v1114 = vmul.f32 %v1044, %v1069
  %v1115 = vmul.f32 %v1044, %v1073
  %v1116 = vmul.f32 %v1044, %v1077
  %v1117 = vmul.f32 %v1044, %v1081
  %v1118 = vmul.f32 %v1044, %v1085
  %v1119 = vmul.f32 %v1044, %v1089
  %v1120 = vmul.f32 %v1044, %v1093
  %v1121 = vmul.f32 %v1044, %v1097
  %v1122 = vmul.f32 %v1044, %v1101
  %v1123 = vmul.f32 %v1044, %v1105
  %v1124 = vmul.f32 %v1044, %v1109
  %v1125 = vmul.f32 %v1048, %v1053
  %v1126 = vmul.f32 %v1048, %v1057
  %v1127 = vmul.f32 %v1048, %v1061
  %v1128 = vmul.f32 %v1048, %v1065
  %v1129 = vmul.f32 %v1048, %v1069
  %v1130 = vmul.f32 %v1048, %v1073
  %v1131 = vmul.f32 %v1048, %v1077
  %v1132 = vmul.f32 %v1048, %v1081
  %v1133 = vmul.f32 %v1048, %v1085
  %v1134 = vmul.f32 %v1048, %v1089
  %v1135 = vmul.f32 %v1048, %v1093
  %v1136 = vmul.f32 %v1048, %v1097
  %v1137 = vmul.f32 %v1048, %v1101
  %v1138 = vmul.f32 %v1048, %v1105
  %v1139 = vmul.f32 %v1048, %v1109
  %v1140 = vadd.f32 %v1012, %v1110
  %v1141 = vadd.f32 %v1013, %v1111
  %v1142 = vadd.f32 %v1014, %v1112
  %v1143 = vadd.f32 %v1015, %v1113
  %v1144 = vadd.f32 %v1016, %v1114
  %v1145 = vadd.f32 %v1017, %v1115
  %v1146 = vadd.f32 %v1018, %v1116
  %v1147 = vadd.f32 %v1019, %v1117
  %v1148 = vadd.f32 %v1020, %v1118
  %v1149 = vadd.f32 %v1021, %v1119
  %v1150 = vadd.f32 %v1022, %v1120
  %v1151 = vadd.f32 %v1023, %v1121
  %v1152 = vadd.f32 %v1024, %v1122
  %v1153 = vadd.f32 %v1025, %v1123
  %v1154 = vadd.f32 %v1026, %v1124
  %v1155 = vadd.f32 %v1027, %v1125
  %v1156 = vadd.f32 %v1028, %v1126
  %v1157 = vadd.f32 %v1029, %v1127
  %v1158 = vadd.f32 %v1030, %v1128
  %v1159 = vadd.f32 %v1031, %v1129
  %v1160 = vadd.f32 %v1032, %v1130
  %v1161 = vadd.f32 %v1033, %v1131
  %v1162 = vadd.f32 %v1034, %v1132
  %v1163 = vadd.f32 %v1035, %v1133
  %v1164 = vadd.f32 %v1036, %v1134
  %v1165 = vadd.f32 %v1037, %v1135
  %v1166 = vadd.f32 %v1038, %v1136
  %v1167 = vadd.f32 %v1039, %v1137
  %v1168 = vadd.f32 %v1040, %v1138
  %v1169 = vadd.f32 %v1041, %v1139
  %v1170 = vld [vmem:[%s2] sm:$0xff]
  %v1171 = vld [vmem:[%s2 + $0x8] sm:$0xff]
  %1173 = vset.pattern.permute.xlu0 0
  %1174 = vperm.xlu0 %1173, %v1170
  %v1175 = vpop.permute.xlu0 %1174
  %1178 = vset.pattern.permute.xlu0 0
  %1179 = vperm.xlu0 %1178, %v1171
  %v1180 = vpop.permute.xlu0 %1179
  %v1182 = vadd.f32 %v1140, %v1175
  %v1183 = vadd.f32 %v1141, %v1175
  %v1184 = vadd.f32 %v1142, %v1175
  %v1185 = vadd.f32 %v1143, %v1175
  %v1186 = vadd.f32 %v1144, %v1175
  %v1187 = vadd.f32 %v1145, %v1175
  %v1188 = vadd.f32 %v1146, %v1175
  %v1189 = vadd.f32 %v1147, %v1175
  %v1190 = vadd.f32 %v1148, %v1175
  %v1191 = vadd.f32 %v1149, %v1175
  %v1192 = vadd.f32 %v1150, %v1175
  %v1193 = vadd.f32 %v1151, %v1175
  %v1194 = vadd.f32 %v1152, %v1175
  %v1195 = vadd.f32 %v1153, %v1175
  %v1196 = vadd.f32 %v1154, %v1175
  %v1197 = vadd.f32 %v1155, %v1180
  %v1198 = vadd.f32 %v1156, %v1180
  %v1199 = vadd.f32 %v1157, %v1180
  %v1200 = vadd.f32 %v1158, %v1180
  %v1201 = vadd.f32 %v1159, %v1180
  %v1202 = vadd.f32 %v1160, %v1180
  %v1203 = vadd.f32 %v1161, %v1180
  %v1204 = vadd.f32 %v1162, %v1180
  %v1205 = vadd.f32 %v1163, %v1180
  %v1206 = vadd.f32 %v1164, %v1180
  %v1207 = vadd.f32 %v1165, %v1180
  %v1208 = vadd.f32 %v1166, %v1180
  %v1209 = vadd.f32 %v1167, %v1180
  %v1210 = vadd.f32 %v1168, %v1180
  %v1211 = vadd.f32 %v1169, %v1180
  %v1212 = vand.u32 2147483647, %v1182
  %v1213 = vand.u32 2147483647, %v1183
  %v1214 = vand.u32 2147483647, %v1184
  %v1215 = vand.u32 2147483647, %v1185
  %v1216 = vand.u32 2147483647, %v1186
  %v1217 = vand.u32 2147483647, %v1187
  %v1218 = vand.u32 2147483647, %v1188
  %v1219 = vand.u32 2147483647, %v1189
  %v1220 = vand.u32 2147483647, %v1190
  %v1221 = vand.u32 2147483647, %v1191
  %v1222 = vand.u32 2147483647, %v1192
  %v1223 = vand.u32 2147483647, %v1193
  %v1224 = vand.u32 2147483647, %v1194
  %v1225 = vand.u32 2147483647, %v1195
  %v1226 = vand.u32 2147483647, %v1196
  %v1227 = vand.u32 2147483647, %v1197
  %v1228 = vand.u32 2147483647, %v1198
  %v1229 = vand.u32 2147483647, %v1199
  %v1230 = vand.u32 2147483647, %v1200
  %v1231 = vand.u32 2147483647, %v1201
  %v1232 = vand.u32 2147483647, %v1202
  %v1233 = vand.u32 2147483647, %v1203
  %v1234 = vand.u32 2147483647, %v1204
  %v1235 = vand.u32 2147483647, %v1205
  %v1236 = vand.u32 2147483647, %v1206
  %v1237 = vand.u32 2147483647, %v1207
  %v1238 = vand.u32 2147483647, %v1208
  %v1239 = vand.u32 2147483647, %v1209
  %v1240 = vand.u32 2147483647, %v1210
  %v1241 = vand.u32 2147483647, %v1211
  %v1242 = vmul.f32 %v1212, 0.70710677
  %v1243 = vmul.f32 %v1213, 0.70710677
  %v1244 = vmul.f32 %v1214, 0.70710677
  %v1245 = vmul.f32 %v1215, 0.70710677
  %v1246 = vmul.f32 %v1216, 0.70710677
  %v1247 = vmul.f32 %v1217, 0.70710677
  %v1248 = vmul.f32 %v1218, 0.70710677
  %v1249 = vmul.f32 %v1219, 0.70710677
  %v1250 = vmul.f32 %v1220, 0.70710677
  %v1251 = vmul.f32 %v1221, 0.70710677
  %v1252 = vmul.f32 %v1222, 0.70710677
  %v1253 = vmul.f32 %v1223, 0.70710677
  %v1254 = vmul.f32 %v1224, 0.70710677
  %v1255 = vmul.f32 %v1225, 0.70710677
  %v1256 = vmul.f32 %v1226, 0.70710677
  %v1257 = vmul.f32 %v1227, 0.70710677
  %v1258 = vmul.f32 %v1228, 0.70710677
  %v1259 = vmul.f32 %v1229, 0.70710677
  %v1260 = vmul.f32 %v1230, 0.70710677
  %v1261 = vmul.f32 %v1231, 0.70710677
  %v1262 = vmul.f32 %v1232, 0.70710677
  %v1263 = vmul.f32 %v1233, 0.70710677
  %v1264 = vmul.f32 %v1234, 0.70710677
  %v1265 = vmul.f32 %v1235, 0.70710677
  %v1266 = vmul.f32 %v1236, 0.70710677
  %v1267 = vmul.f32 %v1237, 0.70710677
  %v1268 = vmul.f32 %v1238, 0.70710677
  %v1269 = vmul.f32 %v1239, 0.70710677
  %v1270 = vmul.f32 %v1240, 0.70710677
  %v1271 = vmul.f32 %v1241, 0.70710677
  %v1272 = vmul.f32 %v1242, 0.3275911
  %v1273 = vmul.f32 %v1243, 0.3275911
  %v1274 = vmul.f32 %v1244, 0.3275911
  %v1275 = vmul.f32 %v1245, 0.3275911
  %v1276 = vmul.f32 %v1246, 0.3275911
  %v1277 = vmul.f32 %v1247, 0.3275911
  %v1278 = vmul.f32 %v1248, 0.3275911
  %v1279 = vmul.f32 %v1249, 0.3275911
  %v1280 = vmul.f32 %v1250, 0.3275911
  %v1281 = vmul.f32 %v1251, 0.3275911
  %v1282 = vmul.f32 %v1252, 0.3275911
  %v1283 = vmul.f32 %v1253, 0.3275911
  %v1284 = vmul.f32 %v1254, 0.3275911
  %v1285 = vmul.f32 %v1255, 0.3275911
  %v1286 = vmul.f32 %v1256, 0.3275911
  %v1287 = vmul.f32 %v1257, 0.3275911
  %v1288 = vmul.f32 %v1258, 0.3275911
  %v1289 = vmul.f32 %v1259, 0.3275911
  %v1290 = vmul.f32 %v1260, 0.3275911
  %v1291 = vmul.f32 %v1261, 0.3275911
  %v1292 = vmul.f32 %v1262, 0.3275911
  %v1293 = vmul.f32 %v1263, 0.3275911
  %v1294 = vmul.f32 %v1264, 0.3275911
  %v1295 = vmul.f32 %v1265, 0.3275911
  %v1296 = vmul.f32 %v1266, 0.3275911
  %v1297 = vmul.f32 %v1267, 0.3275911
  %v1298 = vmul.f32 %v1268, 0.3275911
  %v1299 = vmul.f32 %v1269, 0.3275911
  %v1300 = vmul.f32 %v1270, 0.3275911
  %v1301 = vmul.f32 %v1271, 0.3275911
  %v1302 = vadd.f32 %v1272, 1.0
  %v1303 = vadd.f32 %v1273, 1.0
  %v1304 = vadd.f32 %v1274, 1.0
  %v1305 = vadd.f32 %v1275, 1.0
  %v1306 = vadd.f32 %v1276, 1.0
  %v1307 = vadd.f32 %v1277, 1.0
  %v1308 = vadd.f32 %v1278, 1.0
  %v1309 = vadd.f32 %v1279, 1.0
  %v1310 = vadd.f32 %v1280, 1.0
  %v1311 = vadd.f32 %v1281, 1.0
  %v1312 = vadd.f32 %v1282, 1.0
  %v1313 = vadd.f32 %v1283, 1.0
  %v1314 = vadd.f32 %v1284, 1.0
  %v1315 = vadd.f32 %v1285, 1.0
  %v1316 = vadd.f32 %v1286, 1.0
  %v1317 = vadd.f32 %v1287, 1.0
  %v1318 = vadd.f32 %v1288, 1.0
  %v1319 = vadd.f32 %v1289, 1.0
  %v1320 = vadd.f32 %v1290, 1.0
  %v1321 = vadd.f32 %v1291, 1.0
  %v1322 = vadd.f32 %v1292, 1.0
  %v1323 = vadd.f32 %v1293, 1.0
  %v1324 = vadd.f32 %v1294, 1.0
  %v1325 = vadd.f32 %v1295, 1.0
  %v1326 = vadd.f32 %v1296, 1.0
  %v1327 = vadd.f32 %v1297, 1.0
  %v1328 = vadd.f32 %v1298, 1.0
  %v1329 = vadd.f32 %v1299, 1.0
  %v1330 = vadd.f32 %v1300, 1.0
  %v1331 = vadd.f32 %v1301, 1.0
  %v1332 = vrcp.pop %v1302
  %v1333 = vmul.f32 1.0, %v1332
  %v1334 = vrcp.pop %v1303
  %v1335 = vmul.f32 1.0, %v1334
  %v1336 = vrcp.pop %v1304
  %v1337 = vmul.f32 1.0, %v1336
  %v1338 = vrcp.pop %v1305
  %v1339 = vmul.f32 1.0, %v1338
  %v1340 = vrcp.pop %v1306
  %v1341 = vmul.f32 1.0, %v1340
  %v1342 = vrcp.pop %v1307
  %v1343 = vmul.f32 1.0, %v1342
  %v1344 = vrcp.pop %v1308
  %v1345 = vmul.f32 1.0, %v1344
  %v1346 = vrcp.pop %v1309
  %v1347 = vmul.f32 1.0, %v1346
  %v1348 = vrcp.pop %v1310
  %v1349 = vmul.f32 1.0, %v1348
  %v1350 = vrcp.pop %v1311
  %v1351 = vmul.f32 1.0, %v1350
  %v1352 = vrcp.pop %v1312
  %v1353 = vmul.f32 1.0, %v1352
  %v1354 = vrcp.pop %v1313
  %v1355 = vmul.f32 1.0, %v1354
  %v1356 = vrcp.pop %v1314
  %v1357 = vmul.f32 1.0, %v1356
  %v1358 = vrcp.pop %v1315
  %v1359 = vmul.f32 1.0, %v1358
  %v1360 = vrcp.pop %v1316
  %v1361 = vmul.f32 1.0, %v1360
  %v1362 = vrcp.pop %v1317
  %v1363 = vmul.f32 1.0, %v1362
  %v1364 = vrcp.pop %v1318
  %v1365 = vmul.f32 1.0, %v1364
  %v1366 = vrcp.pop %v1319
  %v1367 = vmul.f32 1.0, %v1366
  %v1368 = vrcp.pop %v1320
  %v1369 = vmul.f32 1.0, %v1368
  %v1370 = vrcp.pop %v1321
  %v1371 = vmul.f32 1.0, %v1370
  %v1372 = vrcp.pop %v1322
  %v1373 = vmul.f32 1.0, %v1372
  %v1374 = vrcp.pop %v1323
  %v1375 = vmul.f32 1.0, %v1374
  %v1376 = vrcp.pop %v1324
  %v1377 = vmul.f32 1.0, %v1376
  %v1378 = vrcp.pop %v1325
  %v1379 = vmul.f32 1.0, %v1378
  %v1380 = vrcp.pop %v1326
  %v1381 = vmul.f32 1.0, %v1380
  %v1382 = vrcp.pop %v1327
  %v1383 = vmul.f32 1.0, %v1382
  %v1384 = vrcp.pop %v1328
  %v1385 = vmul.f32 1.0, %v1384
  %v1386 = vrcp.pop %v1329
  %v1387 = vmul.f32 1.0, %v1386
  %v1388 = vrcp.pop %v1330
  %v1389 = vmul.f32 1.0, %v1388
  %v1390 = vrcp.pop %v1331
  %v1391 = vmul.f32 1.0, %v1390
  %v1392 = vmul.f32 %v1333, 1.0614054
  %v1393 = vmul.f32 %v1335, 1.0614054
  %v1394 = vmul.f32 %v1337, 1.0614054
  %v1395 = vmul.f32 %v1339, 1.0614054
  %v1396 = vmul.f32 %v1341, 1.0614054
  %v1397 = vmul.f32 %v1343, 1.0614054
  %v1398 = vmul.f32 %v1345, 1.0614054
  %v1399 = vmul.f32 %v1347, 1.0614054
  %v1400 = vmul.f32 %v1349, 1.0614054
  %v1401 = vmul.f32 %v1351, 1.0614054
  %v1402 = vmul.f32 %v1353, 1.0614054
  %v1403 = vmul.f32 %v1355, 1.0614054
  %v1404 = vmul.f32 %v1357, 1.0614054
  %v1405 = vmul.f32 %v1359, 1.0614054
  %v1406 = vmul.f32 %v1361, 1.0614054
  %v1407 = vmul.f32 %v1363, 1.0614054
  %v1408 = vmul.f32 %v1365, 1.0614054
  %v1409 = vmul.f32 %v1367, 1.0614054
  %v1410 = vmul.f32 %v1369, 1.0614054
  %v1411 = vmul.f32 %v1371, 1.0614054
  %v1412 = vmul.f32 %v1373, 1.0614054
  %v1413 = vmul.f32 %v1375, 1.0614054
  %v1414 = vmul.f32 %v1377, 1.0614054
  %v1415 = vmul.f32 %v1379, 1.0614054
  %v1416 = vmul.f32 %v1381, 1.0614054
  %v1417 = vmul.f32 %v1383, 1.0614054
  %v1418 = vmul.f32 %v1385, 1.0614054
  %v1419 = vmul.f32 %v1387, 1.0614054
  %v1420 = vmul.f32 %v1389, 1.0614054
  %v1421 = vmul.f32 %v1391, 1.0614054
  %v1422 = vadd.f32 %v1392, -1.4531521
  %v1423 = vadd.f32 %v1393, -1.4531521
  %v1424 = vadd.f32 %v1394, -1.4531521
  %v1425 = vadd.f32 %v1395, -1.4531521
  %v1426 = vadd.f32 %v1396, -1.4531521
  %v1427 = vadd.f32 %v1397, -1.4531521
  %v1428 = vadd.f32 %v1398, -1.4531521
  %v1429 = vadd.f32 %v1399, -1.4531521
  %v1430 = vadd.f32 %v1400, -1.4531521
  %v1431 = vadd.f32 %v1401, -1.4531521
  %v1432 = vadd.f32 %v1402, -1.4531521
  %v1433 = vadd.f32 %v1403, -1.4531521
  %v1434 = vadd.f32 %v1404, -1.4531521
  %v1435 = vadd.f32 %v1405, -1.4531521
  %v1436 = vadd.f32 %v1406, -1.4531521
  %v1437 = vadd.f32 %v1407, -1.4531521
  %v1438 = vadd.f32 %v1408, -1.4531521
  %v1439 = vadd.f32 %v1409, -1.4531521
  %v1440 = vadd.f32 %v1410, -1.4531521
  %v1441 = vadd.f32 %v1411, -1.4531521
  %v1442 = vadd.f32 %v1412, -1.4531521
  %v1443 = vadd.f32 %v1413, -1.4531521
  %v1444 = vadd.f32 %v1414, -1.4531521
  %v1445 = vadd.f32 %v1415, -1.4531521
  %v1446 = vadd.f32 %v1416, -1.4531521
  %v1447 = vadd.f32 %v1417, -1.4531521
  %v1448 = vadd.f32 %v1418, -1.4531521
  %v1449 = vadd.f32 %v1419, -1.4531521
  %v1450 = vadd.f32 %v1420, -1.4531521
  %v1451 = vadd.f32 %v1421, -1.4531521
  %v1452 = vmul.f32 %v1422, %v1333
  %v1453 = vmul.f32 %v1423, %v1335
  %v1454 = vmul.f32 %v1424, %v1337
  %v1455 = vmul.f32 %v1425, %v1339
  %v1456 = vmul.f32 %v1426, %v1341
  %v1457 = vmul.f32 %v1427, %v1343
  %v1458 = vmul.f32 %v1428, %v1345
  %v1459 = vmul.f32 %v1429, %v1347
  %v1460 = vmul.f32 %v1430, %v1349
  %v1461 = vmul.f32 %v1431, %v1351
  %v1462 = vmul.f32 %v1432, %v1353
  %v1463 = vmul.f32 %v1433, %v1355
  %v1464 = vmul.f32 %v1434, %v1357
  %v1465 = vmul.f32 %v1435, %v1359
  %v1466 = vmul.f32 %v1436, %v1361
  %v1467 = vmul.f32 %v1437, %v1363
  %v1468 = vmul.f32 %v1438, %v1365
  %v1469 = vmul.f32 %v1439, %v1367
  %v1470 = vmul.f32 %v1440, %v1369
  %v1471 = vmul.f32 %v1441, %v1371
  %v1472 = vmul.f32 %v1442, %v1373
  %v1473 = vmul.f32 %v1443, %v1375
  %v1474 = vmul.f32 %v1444, %v1377
  %v1475 = vmul.f32 %v1445, %v1379
  %v1476 = vmul.f32 %v1446, %v1381
  %v1477 = vmul.f32 %v1447, %v1383
  %v1478 = vmul.f32 %v1448, %v1385
  %v1479 = vmul.f32 %v1449, %v1387
  %v1480 = vmul.f32 %v1450, %v1389
  %v1481 = vmul.f32 %v1451, %v1391
  %v1482 = vadd.f32 %v1452, 1.4214138
  %v1483 = vadd.f32 %v1453, 1.4214138
  %v1484 = vadd.f32 %v1454, 1.4214138
  %v1485 = vadd.f32 %v1455, 1.4214138
  %v1486 = vadd.f32 %v1456, 1.4214138
  %v1487 = vadd.f32 %v1457, 1.4214138
  %v1488 = vadd.f32 %v1458, 1.4214138
  %v1489 = vadd.f32 %v1459, 1.4214138
  %v1490 = vadd.f32 %v1460, 1.4214138
  %v1491 = vadd.f32 %v1461, 1.4214138
  %v1492 = vadd.f32 %v1462, 1.4214138
  %v1493 = vadd.f32 %v1463, 1.4214138
  %v1494 = vadd.f32 %v1464, 1.4214138
  %v1495 = vadd.f32 %v1465, 1.4214138
  %v1496 = vadd.f32 %v1466, 1.4214138
  %v1497 = vadd.f32 %v1467, 1.4214138
  %v1498 = vadd.f32 %v1468, 1.4214138
  %v1499 = vadd.f32 %v1469, 1.4214138
  %v1500 = vadd.f32 %v1470, 1.4214138
  %v1501 = vadd.f32 %v1471, 1.4214138
  %v1502 = vadd.f32 %v1472, 1.4214138
  %v1503 = vadd.f32 %v1473, 1.4214138
  %v1504 = vadd.f32 %v1474, 1.4214138
  %v1505 = vadd.f32 %v1475, 1.4214138
  %v1506 = vadd.f32 %v1476, 1.4214138
  %v1507 = vadd.f32 %v1477, 1.4214138
  %v1508 = vadd.f32 %v1478, 1.4214138
  %v1509 = vadd.f32 %v1479, 1.4214138
  %v1510 = vadd.f32 %v1480, 1.4214138
  %v1511 = vadd.f32 %v1481, 1.4214138
  %v1512 = vmul.f32 %v1482, %v1333
  %v1513 = vmul.f32 %v1483, %v1335
  %v1514 = vmul.f32 %v1484, %v1337
  %v1515 = vmul.f32 %v1485, %v1339
  %v1516 = vmul.f32 %v1486, %v1341
  %v1517 = vmul.f32 %v1487, %v1343
  %v1518 = vmul.f32 %v1488, %v1345
  %v1519 = vmul.f32 %v1489, %v1347
  %v1520 = vmul.f32 %v1490, %v1349
  %v1521 = vmul.f32 %v1491, %v1351
  %v1522 = vmul.f32 %v1492, %v1353
  %v1523 = vmul.f32 %v1493, %v1355
  %v1524 = vmul.f32 %v1494, %v1357
  %v1525 = vmul.f32 %v1495, %v1359
  %v1526 = vmul.f32 %v1496, %v1361
  %v1527 = vmul.f32 %v1497, %v1363
  %v1528 = vmul.f32 %v1498, %v1365
  %v1529 = vmul.f32 %v1499, %v1367
  %v1530 = vmul.f32 %v1500, %v1369
  %v1531 = vmul.f32 %v1501, %v1371
  %v1532 = vmul.f32 %v1502, %v1373
  %v1533 = vmul.f32 %v1503, %v1375
  %v1534 = vmul.f32 %v1504, %v1377
  %v1535 = vmul.f32 %v1505, %v1379
  %v1536 = vmul.f32 %v1506, %v1381
  %v1537 = vmul.f32 %v1507, %v1383
  %v1538 = vmul.f32 %v1508, %v1385
  %v1539 = vmul.f32 %v1509, %v1387
  %v1540 = vmul.f32 %v1510, %v1389
  %v1541 = vmul.f32 %v1511, %v1391
  %v1542 = vadd.f32 %v1512, -0.28449672
  %v1543 = vadd.f32 %v1513, -0.28449672
  %v1544 = vadd.f32 %v1514, -0.28449672
  %v1545 = vadd.f32 %v1515, -0.28449672
  %v1546 = vadd.f32 %v1516, -0.28449672
  %v1547 = vadd.f32 %v1517, -0.28449672
  %v1548 = vadd.f32 %v1518, -0.28449672
  %v1549 = vadd.f32 %v1519, -0.28449672
  %v1550 = vadd.f32 %v1520, -0.28449672
  %v1551 = vadd.f32 %v1521, -0.28449672
  %v1552 = vadd.f32 %v1522, -0.28449672
  %v1553 = vadd.f32 %v1523, -0.28449672
  %v1554 = vadd.f32 %v1524, -0.28449672
  %v1555 = vadd.f32 %v1525, -0.28449672
  %v1556 = vadd.f32 %v1526, -0.28449672
  %v1557 = vadd.f32 %v1527, -0.28449672
  %v1558 = vadd.f32 %v1528, -0.28449672
  %v1559 = vadd.f32 %v1529, -0.28449672
  %v1560 = vadd.f32 %v1530, -0.28449672
  %v1561 = vadd.f32 %v1531, -0.28449672
  %v1562 = vadd.f32 %v1532, -0.28449672
  %v1563 = vadd.f32 %v1533, -0.28449672
  %v1564 = vadd.f32 %v1534, -0.28449672
  %v1565 = vadd.f32 %v1535, -0.28449672
  %v1566 = vadd.f32 %v1536, -0.28449672
  %v1567 = vadd.f32 %v1537, -0.28449672
  %v1568 = vadd.f32 %v1538, -0.28449672
  %v1569 = vadd.f32 %v1539, -0.28449672
  %v1570 = vadd.f32 %v1540, -0.28449672
  %v1571 = vadd.f32 %v1541, -0.28449672
  %v1572 = vmul.f32 %v1542, %v1333
  %v1573 = vmul.f32 %v1543, %v1335
  %v1574 = vmul.f32 %v1544, %v1337
  %v1575 = vmul.f32 %v1545, %v1339
  %v1576 = vmul.f32 %v1546, %v1341
  %v1577 = vmul.f32 %v1547, %v1343
  %v1578 = vmul.f32 %v1548, %v1345
  %v1579 = vmul.f32 %v1549, %v1347
  %v1580 = vmul.f32 %v1550, %v1349
  %v1581 = vmul.f32 %v1551, %v1351
  %v1582 = vmul.f32 %v1552, %v1353
  %v1583 = vmul.f32 %v1553, %v1355
  %v1584 = vmul.f32 %v1554, %v1357
  %v1585 = vmul.f32 %v1555, %v1359
  %v1586 = vmul.f32 %v1556, %v1361
  %v1587 = vmul.f32 %v1557, %v1363
  %v1588 = vmul.f32 %v1558, %v1365
  %v1589 = vmul.f32 %v1559, %v1367
  %v1590 = vmul.f32 %v1560, %v1369
  %v1591 = vmul.f32 %v1561, %v1371
  %v1592 = vmul.f32 %v1562, %v1373
  %v1593 = vmul.f32 %v1563, %v1375
  %v1594 = vmul.f32 %v1564, %v1377
  %v1595 = vmul.f32 %v1565, %v1379
  %v1596 = vmul.f32 %v1566, %v1381
  %v1597 = vmul.f32 %v1567, %v1383
  %v1598 = vmul.f32 %v1568, %v1385
  %v1599 = vmul.f32 %v1569, %v1387
  %v1600 = vmul.f32 %v1570, %v1389
  %v1601 = vmul.f32 %v1571, %v1391
  %v1602 = vadd.f32 %v1572, 0.2548296
  %v1603 = vadd.f32 %v1573, 0.2548296
  %v1604 = vadd.f32 %v1574, 0.2548296
  %v1605 = vadd.f32 %v1575, 0.2548296
  %v1606 = vadd.f32 %v1576, 0.2548296
  %v1607 = vadd.f32 %v1577, 0.2548296
  %v1608 = vadd.f32 %v1578, 0.2548296
  %v1609 = vadd.f32 %v1579, 0.2548296
  %v1610 = vadd.f32 %v1580, 0.2548296
  %v1611 = vadd.f32 %v1581, 0.2548296
  %v1612 = vadd.f32 %v1582, 0.2548296
  %v1613 = vadd.f32 %v1583, 0.2548296
  %v1614 = vadd.f32 %v1584, 0.2548296
  %v1615 = vadd.f32 %v1585, 0.2548296
  %v1616 = vadd.f32 %v1586, 0.2548296
  %v1617 = vadd.f32 %v1587, 0.2548296
  %v1618 = vadd.f32 %v1588, 0.2548296
  %v1619 = vadd.f32 %v1589, 0.2548296
  %v1620 = vadd.f32 %v1590, 0.2548296
  %v1621 = vadd.f32 %v1591, 0.2548296
  %v1622 = vadd.f32 %v1592, 0.2548296
  %v1623 = vadd.f32 %v1593, 0.2548296
  %v1624 = vadd.f32 %v1594, 0.2548296
  %v1625 = vadd.f32 %v1595, 0.2548296
  %v1626 = vadd.f32 %v1596, 0.2548296
  %v1627 = vadd.f32 %v1597, 0.2548296
  %v1628 = vadd.f32 %v1598, 0.2548296
  %v1629 = vadd.f32 %v1599, 0.2548296
  %v1630 = vadd.f32 %v1600, 0.2548296
  %v1631 = vadd.f32 %v1601, 0.2548296
  %v1632 = vmul.f32 %v1602, %v1333
  %v1633 = vmul.f32 %v1603, %v1335
  %v1634 = vmul.f32 %v1604, %v1337
  %v1635 = vmul.f32 %v1605, %v1339
  %v1636 = vmul.f32 %v1606, %v1341
  %v1637 = vmul.f32 %v1607, %v1343
  %v1638 = vmul.f32 %v1608, %v1345
  %v1639 = vmul.f32 %v1609, %v1347
  %v1640 = vmul.f32 %v1610, %v1349
  %v1641 = vmul.f32 %v1611, %v1351
  %v1642 = vmul.f32 %v1612, %v1353
  %v1643 = vmul.f32 %v1613, %v1355
  %v1644 = vmul.f32 %v1614, %v1357
  %v1645 = vmul.f32 %v1615, %v1359
  %v1646 = vmul.f32 %v1616, %v1361
  %v1647 = vmul.f32 %v1617, %v1363
  %v1648 = vmul.f32 %v1618, %v1365
  %v1649 = vmul.f32 %v1619, %v1367
  %v1650 = vmul.f32 %v1620, %v1369
  %v1651 = vmul.f32 %v1621, %v1371
  %v1652 = vmul.f32 %v1622, %v1373
  %v1653 = vmul.f32 %v1623, %v1375
  %v1654 = vmul.f32 %v1624, %v1377
  %v1655 = vmul.f32 %v1625, %v1379
  %v1656 = vmul.f32 %v1626, %v1381
  %v1657 = vmul.f32 %v1627, %v1383
  %v1658 = vmul.f32 %v1628, %v1385
  %v1659 = vmul.f32 %v1629, %v1387
  %v1660 = vmul.f32 %v1630, %v1389
  %v1661 = vmul.f32 %v1631, %v1391
  %v1662 = vmul.f32 %v1182, 0.5
  %v1663 = vmul.f32 %v1183, 0.5
  %v1664 = vmul.f32 %v1184, 0.5
  %v1665 = vmul.f32 %v1185, 0.5
  %v1666 = vmul.f32 %v1186, 0.5
  %v1667 = vmul.f32 %v1187, 0.5
  %v1668 = vmul.f32 %v1188, 0.5
  %v1669 = vmul.f32 %v1189, 0.5
  %v1670 = vmul.f32 %v1190, 0.5
  %v1671 = vmul.f32 %v1191, 0.5
  %v1672 = vmul.f32 %v1192, 0.5
  %v1673 = vmul.f32 %v1193, 0.5
  %v1674 = vmul.f32 %v1194, 0.5
  %v1675 = vmul.f32 %v1195, 0.5
  %v1676 = vmul.f32 %v1196, 0.5
  %v1677 = vmul.f32 %v1197, 0.5
  %v1678 = vmul.f32 %v1198, 0.5
  %v1679 = vmul.f32 %v1199, 0.5
  %v1680 = vmul.f32 %v1200, 0.5
  %v1681 = vmul.f32 %v1201, 0.5
  %v1682 = vmul.f32 %v1202, 0.5
  %v1683 = vmul.f32 %v1203, 0.5
  %v1684 = vmul.f32 %v1204, 0.5
  %v1685 = vmul.f32 %v1205, 0.5
  %v1686 = vmul.f32 %v1206, 0.5
  %v1687 = vmul.f32 %v1207, 0.5
  %v1688 = vmul.f32 %v1208, 0.5
  %v1689 = vmul.f32 %v1209, 0.5
  %v1690 = vmul.f32 %v1210, 0.5
  %v1691 = vmul.f32 %v1211, 0.5
  %v1692 = vmul.f32 %v1662, %v1632
  %v1693 = vmul.f32 %v1663, %v1633
  %v1694 = vmul.f32 %v1664, %v1634
  %v1695 = vmul.f32 %v1665, %v1635
  %v1696 = vmul.f32 %v1666, %v1636
  %v1697 = vmul.f32 %v1667, %v1637
  %v1698 = vmul.f32 %v1668, %v1638
  %v1699 = vmul.f32 %v1669, %v1639
  %v1700 = vmul.f32 %v1670, %v1640
  %v1701 = vmul.f32 %v1671, %v1641
  %v1702 = vmul.f32 %v1672, %v1642
  %v1703 = vmul.f32 %v1673, %v1643
  %v1704 = vmul.f32 %v1674, %v1644
  %v1705 = vmul.f32 %v1675, %v1645
  %v1706 = vmul.f32 %v1676, %v1646
  %v1707 = vmul.f32 %v1677, %v1647
  %v1708 = vmul.f32 %v1678, %v1648
  %v1709 = vmul.f32 %v1679, %v1649
  %v1710 = vmul.f32 %v1680, %v1650
  %v1711 = vmul.f32 %v1681, %v1651
  %v1712 = vmul.f32 %v1682, %v1652
  %v1713 = vmul.f32 %v1683, %v1653
  %v1714 = vmul.f32 %v1684, %v1654
  %v1715 = vmul.f32 %v1685, %v1655
  %v1716 = vmul.f32 %v1686, %v1656
  %v1717 = vmul.f32 %v1687, %v1657
  %v1718 = vmul.f32 %v1688, %v1658
  %v1719 = vmul.f32 %v1689, %v1659
  %v1720 = vmul.f32 %v1690, %v1660
  %v1721 = vmul.f32 %v1691, %v1661
  %v1722 = vsub.f32 0.0, %v1242
  %v1723 = vsub.f32 0.0, %v1243
  %v1724 = vsub.f32 0.0, %v1244
  %v1725 = vsub.f32 0.0, %v1245
  %v1726 = vsub.f32 0.0, %v1246
  %v1727 = vsub.f32 0.0, %v1247
  %v1728 = vsub.f32 0.0, %v1248
  %v1729 = vsub.f32 0.0, %v1249
  %v1730 = vsub.f32 0.0, %v1250
  %v1731 = vsub.f32 0.0, %v1251
  %v1732 = vsub.f32 0.0, %v1252
  %v1733 = vsub.f32 0.0, %v1253
  %v1734 = vsub.f32 0.0, %v1254
  %v1735 = vsub.f32 0.0, %v1255
  %v1736 = vsub.f32 0.0, %v1256
  %v1737 = vsub.f32 0.0, %v1257
  %v1738 = vsub.f32 0.0, %v1258
  %v1739 = vsub.f32 0.0, %v1259
  %v1740 = vsub.f32 0.0, %v1260
  %v1741 = vsub.f32 0.0, %v1261
  %v1742 = vsub.f32 0.0, %v1262
  %v1743 = vsub.f32 0.0, %v1263
  %v1744 = vsub.f32 0.0, %v1264
  %v1745 = vsub.f32 0.0, %v1265
  %v1746 = vsub.f32 0.0, %v1266
  %v1747 = vsub.f32 0.0, %v1267
  %v1748 = vsub.f32 0.0, %v1268
  %v1749 = vsub.f32 0.0, %v1269
  %v1750 = vsub.f32 0.0, %v1270
  %v1751 = vsub.f32 0.0, %v1271
  %v1752 = vmul.f32 %v1722, %v1242
  %v1753 = vmul.f32 %v1723, %v1243
  %v1754 = vmul.f32 %v1724, %v1244
  %v1755 = vmul.f32 %v1725, %v1245
  %v1756 = vmul.f32 %v1726, %v1246
  %v1757 = vmul.f32 %v1727, %v1247
  %v1758 = vmul.f32 %v1728, %v1248
  %v1759 = vmul.f32 %v1729, %v1249
  %v1760 = vmul.f32 %v1730, %v1250
  %v1761 = vmul.f32 %v1731, %v1251
  %v1762 = vmul.f32 %v1732, %v1252
  %v1763 = vmul.f32 %v1733, %v1253
  %v1764 = vmul.f32 %v1734, %v1254
  %v1765 = vmul.f32 %v1735, %v1255
  %v1766 = vmul.f32 %v1736, %v1256
  %v1767 = vmul.f32 %v1737, %v1257
  %v1768 = vmul.f32 %v1738, %v1258
  %v1769 = vmul.f32 %v1739, %v1259
  %v1770 = vmul.f32 %v1740, %v1260
  %v1771 = vmul.f32 %v1741, %v1261
  %v1772 = vmul.f32 %v1742, %v1262
  %v1773 = vmul.f32 %v1743, %v1263
  %v1774 = vmul.f32 %v1744, %v1264
  %v1775 = vmul.f32 %v1745, %v1265
  %v1776 = vmul.f32 %v1746, %v1266
  %v1777 = vmul.f32 %v1747, %v1267
  %v1778 = vmul.f32 %v1748, %v1268
  %v1779 = vmul.f32 %v1749, %v1269
  %v1780 = vmul.f32 %v1750, %v1270
  %v1781 = vmul.f32 %v1751, %v1271
  %v1782 = vmul.f32 %v1752, 1.442695
  %v1783 = vpow.pop %v1782
  %v1784 = vmul.f32 %v1753, 1.442695
  %v1785 = vpow.pop %v1784
  %v1786 = vmul.f32 %v1754, 1.442695
  %v1787 = vpow.pop %v1786
  %v1788 = vmul.f32 %v1755, 1.442695
  %v1789 = vpow.pop %v1788
  %v1790 = vmul.f32 %v1756, 1.442695
  %v1791 = vpow.pop %v1790
  %v1792 = vmul.f32 %v1757, 1.442695
  %v1793 = vpow.pop %v1792
  %v1794 = vmul.f32 %v1758, 1.442695
  %v1795 = vpow.pop %v1794
  %v1796 = vmul.f32 %v1759, 1.442695
  %v1797 = vpow.pop %v1796
  %v1798 = vmul.f32 %v1760, 1.442695
  %v1799 = vpow.pop %v1798
  %v1800 = vmul.f32 %v1761, 1.442695
  %v1801 = vpow.pop %v1800
  %v1802 = vmul.f32 %v1762, 1.442695
  %v1803 = vpow.pop %v1802
  %v1804 = vmul.f32 %v1763, 1.442695
  %v1805 = vpow.pop %v1804
  %v1806 = vmul.f32 %v1764, 1.442695
  %v1807 = vpow.pop %v1806
  %v1808 = vmul.f32 %v1765, 1.442695
  %v1809 = vpow.pop %v1808
  %v1810 = vmul.f32 %v1766, 1.442695
  %v1811 = vpow.pop %v1810
  %v1812 = vmul.f32 %v1767, 1.442695
  %v1813 = vpow.pop %v1812
  %v1814 = vmul.f32 %v1768, 1.442695
  %v1815 = vpow.pop %v1814
  %v1816 = vmul.f32 %v1769, 1.442695
  %v1817 = vpow.pop %v1816
  %v1818 = vmul.f32 %v1770, 1.442695
  %v1819 = vpow.pop %v1818
  %v1820 = vmul.f32 %v1771, 1.442695
  %v1821 = vpow.pop %v1820
  %v1822 = vmul.f32 %v1772, 1.442695
  %v1823 = vpow.pop %v1822
  %v1824 = vmul.f32 %v1773, 1.442695
  %v1825 = vpow.pop %v1824
  %v1826 = vmul.f32 %v1774, 1.442695
  %v1827 = vpow.pop %v1826
  %v1828 = vmul.f32 %v1775, 1.442695
  %v1829 = vpow.pop %v1828
  %v1830 = vmul.f32 %v1776, 1.442695
  %v1831 = vpow.pop %v1830
  %v1832 = vmul.f32 %v1777, 1.442695
  %v1833 = vpow.pop %v1832
  %v1834 = vmul.f32 %v1778, 1.442695
  %v1835 = vpow.pop %v1834
  %v1836 = vmul.f32 %v1779, 1.442695
  %v1837 = vpow.pop %v1836
  %v1838 = vmul.f32 %v1780, 1.442695
  %v1839 = vpow.pop %v1838
  %v1840 = vmul.f32 %v1781, 1.442695
  %v1841 = vpow.pop %v1840
  %v1842 = vmul.f32 %v1692, %v1783
  %v1843 = vmul.f32 %v1693, %v1785
  %v1844 = vmul.f32 %v1694, %v1787
  %v1845 = vmul.f32 %v1695, %v1789
  %v1846 = vmul.f32 %v1696, %v1791
  %v1847 = vmul.f32 %v1697, %v1793
  %v1848 = vmul.f32 %v1698, %v1795
  %v1849 = vmul.f32 %v1699, %v1797
  %v1850 = vmul.f32 %v1700, %v1799
  %v1851 = vmul.f32 %v1701, %v1801
  %v1852 = vmul.f32 %v1702, %v1803
  %v1853 = vmul.f32 %v1703, %v1805
  %v1854 = vmul.f32 %v1704, %v1807
  %v1855 = vmul.f32 %v1705, %v1809
  %v1856 = vmul.f32 %v1706, %v1811
  %v1857 = vmul.f32 %v1707, %v1813
  %v1858 = vmul.f32 %v1708, %v1815
  %v1859 = vmul.f32 %v1709, %v1817
  %v1860 = vmul.f32 %v1710, %v1819
  %v1861 = vmul.f32 %v1711, %v1821
  %v1862 = vmul.f32 %v1712, %v1823
  %v1863 = vmul.f32 %v1713, %v1825
  %v1864 = vmul.f32 %v1714, %v1827
  %v1865 = vmul.f32 %v1715, %v1829
  %v1866 = vmul.f32 %v1716, %v1831
  %v1867 = vmul.f32 %v1717, %v1833
  %v1868 = vmul.f32 %v1718, %v1835
  %v1869 = vmul.f32 %v1719, %v1837
  %v1870 = vmul.f32 %v1720, %v1839
  %v1871 = vmul.f32 %v1721, %v1841
  %vm1872 = vcmp.ge.f32.partialorder %v1182, 0.0
  %vm1873 = vcmp.ge.f32.partialorder %v1183, 0.0
  %vm1874 = vcmp.ge.f32.partialorder %v1184, 0.0
  %vm1875 = vcmp.ge.f32.partialorder %v1185, 0.0
  %vm1876 = vcmp.ge.f32.partialorder %v1186, 0.0
  %vm1877 = vcmp.ge.f32.partialorder %v1187, 0.0
  %vm1878 = vcmp.ge.f32.partialorder %v1188, 0.0
  %vm1879 = vcmp.ge.f32.partialorder %v1189, 0.0
  %vm1880 = vcmp.ge.f32.partialorder %v1190, 0.0
  %vm1881 = vcmp.ge.f32.partialorder %v1191, 0.0
  %vm1882 = vcmp.ge.f32.partialorder %v1192, 0.0
  %vm1883 = vcmp.ge.f32.partialorder %v1193, 0.0
  %vm1884 = vcmp.ge.f32.partialorder %v1194, 0.0
  %vm1885 = vcmp.ge.f32.partialorder %v1195, 0.0
  %vm1886 = vcmp.ge.f32.partialorder %v1196, 0.0
  %vm1887 = vcmp.ge.f32.partialorder %v1197, 0.0
  %vm1888 = vcmp.ge.f32.partialorder %v1198, 0.0
  %vm1889 = vcmp.ge.f32.partialorder %v1199, 0.0
  %vm1890 = vcmp.ge.f32.partialorder %v1200, 0.0
  %vm1891 = vcmp.ge.f32.partialorder %v1201, 0.0
  %vm1892 = vcmp.ge.f32.partialorder %v1202, 0.0
  %vm1893 = vcmp.ge.f32.partialorder %v1203, 0.0
  %vm1894 = vcmp.ge.f32.partialorder %v1204, 0.0
  %vm1895 = vcmp.ge.f32.partialorder %v1205, 0.0
  %vm1896 = vcmp.ge.f32.partialorder %v1206, 0.0
  %vm1897 = vcmp.ge.f32.partialorder %v1207, 0.0
  %vm1898 = vcmp.ge.f32.partialorder %v1208, 0.0
  %vm1899 = vcmp.ge.f32.partialorder %v1209, 0.0
  %vm1900 = vcmp.ge.f32.partialorder %v1210, 0.0
  %vm1901 = vcmp.ge.f32.partialorder %v1211, 0.0
  %v1902 = vsub.f32 %v1182, %v1842
  %v1903 = vsub.f32 %v1183, %v1843
  %v1904 = vsub.f32 %v1184, %v1844
  %v1905 = vsub.f32 %v1185, %v1845
  %v1906 = vsub.f32 %v1186, %v1846
  %v1907 = vsub.f32 %v1187, %v1847
  %v1908 = vsub.f32 %v1188, %v1848
  %v1909 = vsub.f32 %v1189, %v1849
  %v1910 = vsub.f32 %v1190, %v1850
  %v1911 = vsub.f32 %v1191, %v1851
  %v1912 = vsub.f32 %v1192, %v1852
  %v1913 = vsub.f32 %v1193, %v1853
  %v1914 = vsub.f32 %v1194, %v1854
  %v1915 = vsub.f32 %v1195, %v1855
  %v1916 = vsub.f32 %v1196, %v1856
  %v1917 = vsub.f32 %v1197, %v1857
  %v1918 = vsub.f32 %v1198, %v1858
  %v1919 = vsub.f32 %v1199, %v1859
  %v1920 = vsub.f32 %v1200, %v1860
  %v1921 = vsub.f32 %v1201, %v1861
  %v1922 = vsub.f32 %v1202, %v1862
  %v1923 = vsub.f32 %v1203, %v1863
  %v1924 = vsub.f32 %v1204, %v1864
  %v1925 = vsub.f32 %v1205, %v1865
  %v1926 = vsub.f32 %v1206, %v1866
  %v1927 = vsub.f32 %v1207, %v1867
  %v1928 = vsub.f32 %v1208, %v1868
  %v1929 = vsub.f32 %v1209, %v1869
  %v1930 = vsub.f32 %v1210, %v1870
  %v1931 = vsub.f32 %v1211, %v1871
  %v1932 = vsel %vm1872, %v1902, %v1842
  %v1933 = vsel %vm1873, %v1903, %v1843
  %v1934 = vsel %vm1874, %v1904, %v1844
  %v1935 = vsel %vm1875, %v1905, %v1845
  %v1936 = vsel %vm1876, %v1906, %v1846
  %v1937 = vsel %vm1877, %v1907, %v1847
  %v1938 = vsel %vm1878, %v1908, %v1848
  %v1939 = vsel %vm1879, %v1909, %v1849
  %v1940 = vsel %vm1880, %v1910, %v1850
  %v1941 = vsel %vm1881, %v1911, %v1851
  %v1942 = vsel %vm1882, %v1912, %v1852
  %v1943 = vsel %vm1883, %v1913, %v1853
  %v1944 = vsel %vm1884, %v1914, %v1854
  %v1945 = vsel %vm1885, %v1915, %v1855
  %v1946 = vsel %vm1886, %v1916, %v1856
  %v1947 = vsel %vm1887, %v1917, %v1857
  %v1948 = vsel %vm1888, %v1918, %v1858
  %v1949 = vsel %vm1889, %v1919, %v1859
  %v1950 = vsel %vm1890, %v1920, %v1860
  %v1951 = vsel %vm1891, %v1921, %v1861
  %v1952 = vsel %vm1892, %v1922, %v1862
  %v1953 = vsel %vm1893, %v1923, %v1863
  %v1954 = vsel %vm1894, %v1924, %v1864
  %v1955 = vsel %vm1895, %v1925, %v1865
  %v1956 = vsel %vm1896, %v1926, %v1866
  %v1957 = vsel %vm1897, %v1927, %v1867
  %v1958 = vsel %vm1898, %v1928, %v1868
  %v1959 = vsel %vm1899, %v1929, %v1869
  %v1960 = vsel %vm1900, %v1930, %v1870
  %v1961 = vsel %vm1901, %v1931, %v1871
  %1962 = vst [vmem:[%s3] sm:$0xff] %v1932
  %1963 = vst [vmem:[%s3 + $0x8] sm:$0xff] %v1933
  %1964 = vst [vmem:[%s3 + $0x10] sm:$0xff] %v1934
  %1965 = vst [vmem:[%s3 + $0x18] sm:$0xff] %v1935
  %1966 = vst [vmem:[%s3 + $0x20] sm:$0xff] %v1936
  %1967 = vst [vmem:[%s3 + $0x28] sm:$0xff] %v1937
  %1968 = vst [vmem:[%s3 + $0x30] sm:$0xff] %v1938
  %1969 = vst [vmem:[%s3 + $0x38] sm:$0xff] %v1939
  %1970 = vst [vmem:[%s3 + $0x40] sm:$0xff] %v1940
  %1971 = vst [vmem:[%s3 + $0x48] sm:$0xff] %v1941
  %1972 = vst [vmem:[%s3 + $0x50] sm:$0xff] %v1942
  %1973 = vst [vmem:[%s3 + $0x58] sm:$0xff] %v1943
  %1974 = vst [vmem:[%s3 + $0x60] sm:$0xff] %v1944
  %1975 = vst [vmem:[%s3 + $0x68] sm:$0xff] %v1945
  %vm1976 = vcmask 64512
  %1977 = vst.msk [vmem:[%s3 + $0x70] sm:$0xff] %vm1976, %v1946
  %1978 = vst [vmem:[%s3 + $0x78] sm:$0xff] %v1947
  %1979 = vst [vmem:[%s3 + $0x80] sm:$0xff] %v1948
  %1980 = vst [vmem:[%s3 + $0x88] sm:$0xff] %v1949
  %1981 = vst [vmem:[%s3 + $0x90] sm:$0xff] %v1950
  %1982 = vst [vmem:[%s3 + $0x98] sm:$0xff] %v1951
  %1983 = vst [vmem:[%s3 + $0xa0] sm:$0xff] %v1952
  %1984 = vst [vmem:[%s3 + $0xa8] sm:$0xff] %v1953
  %1985 = vst [vmem:[%s3 + $0xb0] sm:$0xff] %v1954
  %1986 = vst [vmem:[%s3 + $0xb8] sm:$0xff] %v1955
  %1987 = vst [vmem:[%s3 + $0xc0] sm:$0xff] %v1956
  %1988 = vst [vmem:[%s3 + $0xc8] sm:$0xff] %v1957
  %1989 = vst [vmem:[%s3 + $0xd0] sm:$0xff] %v1958
  %1990 = vst [vmem:[%s3 + $0xd8] sm:$0xff] %v1959
  %1991 = vst [vmem:[%s3 + $0xe0] sm:$0xff] %v1960
  %1992 = vst.msk [vmem:[%s3 + $0xe8] sm:$0xff] %vm1976, %v1961
  // Predicated region
  $region14: #{encoder_forward.7} parent=0 // pred_check
    _
  $region15: #{encoder_forward.7} parent=0 // pred_check_branch
    %1994 = sbr.rel (0) target = $region17
  $region16: #{encoder_forward.7} parent=0 // pred_region
    _
  $region17: #{encoder_forward.7} parent=0 // pred_fallthru
    _
  // Predicated region
  $region18: #{encoder_forward.7} parent=0 // pred_check
    _
  $region19: #{encoder_forward.7} parent=0 // pred_check_branch
    %1996 = sbr.rel (0) target = $region21
  $region20: #{encoder_forward.7} parent=0 // pred_region
    _
  $region21: #{encoder_forward.7} parent=0 // pred_fallthru
    _

// kernel: encoder_forward.8
$region0: #{encoder_forward.8}
  #allocation0 [shape = 'u32[]', space=smem, size = 0x4, offset = 0x4, fixed_abs, tag = 'smem constant byte address 0x4 - core index']
  #allocation1 [shape = 'u32[144,128]{1,0:T(1,128)}', space=vmem, size = 0x12000, scoped, tag = 'internal scratch']
  %s0 = inlined_call_operand.vmem [shape: f32[32,144], index: 0, kind: input, shape index: {}]
  %s1 = inlined_call_operand.vmem [shape: f32[144,1568], index: 1, kind: input, shape index: {}]
  %s2 = inlined_call_operand.vmem [shape: f32[32,1], index: 2, kind: input, shape index: {}]
  %s3 = inlined_call_operand.vmem [shape: f32[32,1568], index: 3, kind: output, shape index: {}]
  %s4 = sld [smem:[#allocation0]]
  $region22: #{encoder_forward.8} parent=0
    _
  %s6 = ssub.s32 1, %s4
  %s7 = scalar_select 0, %s6, %s4
  // Predicated region
  $region2: #{encoder_forward.8} parent=0 // pred_check
    _
  $region3: #{encoder_forward.8} parent=0 // pred_check_branch
    %9 = sbr.rel (0) target = $region5
  $region4: #{encoder_forward.8} parent=0 // pred_region
    _
  $region5: #{encoder_forward.8} parent=0 // pred_fallthru
    _
  // Predicated region
  $region6: #{encoder_forward.8} parent=0 // pred_check
    _
  $region7: #{encoder_forward.8} parent=0 // pred_check_branch
    %11 = sbr.rel (0) target = $region9
  $region8: #{encoder_forward.8} parent=0 // pred_region
    _
  $region9: #{encoder_forward.8} parent=0 // pred_fallthru
    _
  // Predicated region
  $region10: #{encoder_forward.8} parent=0 // pred_check
    _
  $region11: #{encoder_forward.8} parent=0 // pred_check_branch
    %13 = sbr.rel (0) target = $region13
  $region12: #{encoder_forward.8} parent=0 // pred_region
    _
  $region13: #{encoder_forward.8} parent=0 // pred_fallthru
    _
  %v14 = vld [vmem:[%s0] sm:$0xff]
  %v15 = vld [vmem:[%s0 + $0x8] sm:$0xff]
  %v16 = vld [vmem:[%s0 + $0x10] sm:$0xff]
  %v17 = vld [vmem:[%s0 + $0x18] sm:$0xff]
  %v18 = vld [vmem:[%s0 + $0x20] sm:$0xff]
  %v19 = vld [vmem:[%s0 + $0x28] sm:$0xff]
  %v20 = vld [vmem:[%s0 + $0x30] sm:$0xff]
  %v21 = vld [vmem:[%s0 + $0x38] sm:$0xff]
  %v22 = vld [vmem:[%s1] sm:$0xff]
  %v23 = vld [vmem:[%s1 + $0x8] sm:$0xff]
  %v24 = vld [vmem:[%s1 + $0x10] sm:$0xff]
  %v25 = vld [vmem:[%s1 + $0x18] sm:$0xff]
  %v26 = vld [vmem:[%s1 + $0x20] sm:$0xff]
  %v27 = vld [vmem:[%s1 + $0x28] sm:$0xff]
  %v28 = vld [vmem:[%s1 + $0x30] sm:$0xff]
  %v29 = vld [vmem:[%s1 + $0x38] sm:$0xff]
  %v30 = vld [vmem:[%s1 + $0x40] sm:$0xff]
  %v31 = vld [vmem:[%s1 + $0x48] sm:$0xff]
  %v32 = vld [vmem:[%s1 + $0x50] sm:$0xff]
  %v33 = vld [vmem:[%s1 + $0x58] sm:$0xff]
  %v34 = vld [vmem:[%s1 + $0x60] sm:$0xff]
  %v35 = vld [vmem:[%s1 + $0x68] sm:$0xff]
  %v36 = vld [vmem:[%s1 + $0x70] sm:$0xff]
  %v37 = vld [vmem:[%s1 + $0x78] sm:$0xff]
  %v38 = vld [vmem:[%s1 + $0x80] sm:$0xff]
  %v39 = vld [vmem:[%s1 + $0x88] sm:$0xff]
  %v40 = vld [vmem:[%s1 + $0x90] sm:$0xff]
  %v41 = vld [vmem:[%s1 + $0x98] sm:$0xff]
  %v42 = vld [vmem:[%s1 + $0xa0] sm:$0xff]
  %v43 = vld [vmem:[%s1 + $0xa8] sm:$0xff]
  %v44 = vld [vmem:[%s1 + $0xb0] sm:$0xff]
  %v45 = vld [vmem:[%s1 + $0xb8] sm:$0xff]
  %v46 = vld [vmem:[%s1 + $0xc0] sm:$0xff]
  %v47 = vld [vmem:[%s1 + $0xc8] sm:$0xff]
  %v48 = vld [vmem:[%s1 + $0xd0] sm:$0xff]
  %v49 = vld [vmem:[%s1 + $0xd8] sm:$0xff]
  %v50 = vld [vmem:[%s1 + $0xe0] sm:$0xff]
  %v51 = vld [vmem:[%s1 + $0xe8] sm:$0xff]
  %v52 = vld [vmem:[%s1 + $0xf0] sm:$0xff]
  %v53 = vld [vmem:[%s1 + $0xf8] sm:$0xff]
  %v54 = vld [vmem:[%s1 + $0x100] sm:$0xff]
  %v55 = vld [vmem:[%s1 + $0x108] sm:$0xff]
  %v56 = vld [vmem:[%s1 + $0x110] sm:$0xff]
  %v57 = vld [vmem:[%s1 + $0x118] sm:$0xff]
  %v58 = vld [vmem:[%s1 + $0x120] sm:$0xff]
  %v59 = vld [vmem:[%s1 + $0x128] sm:$0xff]
  %v60 = vld [vmem:[%s1 + $0x130] sm:$0xff]
  %v61 = vld [vmem:[%s1 + $0x138] sm:$0xff]
  %v62 = vld [vmem:[%s1 + $0x140] sm:$0xff]
  %v63 = vld [vmem:[%s1 + $0x148] sm:$0xff]
  %v64 = vld [vmem:[%s1 + $0x150] sm:$0xff]
  %v65 = vld [vmem:[%s1 + $0x158] sm:$0xff]
  %v66 = vld [vmem:[%s1 + $0x160] sm:$0xff]
  %v67 = vld [vmem:[%s1 + $0x168] sm:$0xff]
  %v68 = vld [vmem:[%s1 + $0x170] sm:$0xff]
  %v69 = vld [vmem:[%s1 + $0x178] sm:$0xff]
  %v70 = vld [vmem:[%s1 + $0x180] sm:$0xff]
  %v71 = vld [vmem:[%s1 + $0x188] sm:$0xff]
  %v72 = vld [vmem:[%s1 + $0x190] sm:$0xff]
  %v73 = vld [vmem:[%s1 + $0x198] sm:$0xff]
  %v74 = vld [vmem:[%s1 + $0x1a0] sm:$0xff]
  %v75 = vld [vmem:[%s1 + $0x1a8] sm:$0xff]
  %v76 = vld [vmem:[%s1 + $0x1b0] sm:$0xff]
  %v77 = vld [vmem:[%s1 + $0x1b8] sm:$0xff]
  %v78 = vld [vmem:[%s1 + $0x1c0] sm:$0xff]
  %v79 = vld [vmem:[%s1 + $0x1c8] sm:$0xff]
  %v80 = vld [vmem:[%s1 + $0x1d0] sm:$0xff]
  %v81 = vld [vmem:[%s1 + $0x1d8] sm:$0xff]
  %v82 = vld [vmem:[%s1 + $0x1e0] sm:$0xff]
  %v83 = vld [vmem:[%s1 + $0x1e8] sm:$0xff]
  %v84 = vld [vmem:[%s1 + $0x1f0] sm:$0xff]
  %v85 = vld [vmem:[%s1 + $0x1f8] sm:$0xff]
  %v86 = vld [vmem:[%s1 + $0x200] sm:$0xff]
  %v87 = vld [vmem:[%s1 + $0x208] sm:$0xff]
  %v88 = vld [vmem:[%s1 + $0x210] sm:$0xff]
  %v89 = vld [vmem:[%s1 + $0x218] sm:$0xff]
  %v90 = vld [vmem:[%s1 + $0x220] sm:$0xff]
  %v91 = vld [vmem:[%s1 + $0x228] sm:$0xff]
  %v92 = vld [vmem:[%s1 + $0x230] sm:$0xff]
  %v93 = vld [vmem:[%s1 + $0x238] sm:$0xff]
  %v94 = vld [vmem:[%s1 + $0x240] sm:$0xff]
  %v95 = vld [vmem:[%s1 + $0x248] sm:$0xff]
  %v96 = vld [vmem:[%s1 + $0x250] sm:$0xff]
  %v97 = vld [vmem:[%s1 + $0x258] sm:$0xff]
  %v98 = vld [vmem:[%s1 + $0x260] sm:$0xff]
  %v99 = vld [vmem:[%s1 + $0x268] sm:$0xff]
  %v100 = vld [vmem:[%s1 + $0x270] sm:$0xff]
  %v101 = vld [vmem:[%s1 + $0x278] sm:$0xff]
  %v102 = vld [vmem:[%s1 + $0x280] sm:$0xff]
  %v103 = vld [vmem:[%s1 + $0x288] sm:$0xff]
  %v104 = vld [vmem:[%s1 + $0x290] sm:$0xff]
  %v105 = vld [vmem:[%s1 + $0x298] sm:$0xff]
  %v106 = vld [vmem:[%s1 + $0x2a0] sm:$0xff]
  %v107 = vld [vmem:[%s1 + $0x2a8] sm:$0xff]
  %v108 = vld [vmem:[%s1 + $0x2b0] sm:$0xff]
  %v109 = vld [vmem:[%s1 + $0x2b8] sm:$0xff]
  %v110 = vld [vmem:[%s1 + $0x2c0] sm:$0xff]
  %v111 = vld [vmem:[%s1 + $0x2c8] sm:$0xff]
  %v112 = vld [vmem:[%s1 + $0x2d0] sm:$0xff]
  %v113 = vld [vmem:[%s1 + $0x2d8] sm:$0xff]
  %v114 = vld [vmem:[%s1 + $0x2e0] sm:$0xff]
  %v115 = vld [vmem:[%s1 + $0x2e8] sm:$0xff]
  %v116 = vld [vmem:[%s1 + $0x2f0] sm:$0xff]
  %v117 = vld [vmem:[%s1 + $0x2f8] sm:$0xff]
  %v118 = vld [vmem:[%s1 + $0x300] sm:$0xff]
  %v119 = vld [vmem:[%s1 + $0x308] sm:$0xff]
  %v120 = vld [vmem:[%s1 + $0x310] sm:$0xff]
  %v121 = vld [vmem:[%s1 + $0x318] sm:$0xff]
  %v122 = vld [vmem:[%s1 + $0x320] sm:$0xff]
  %v123 = vld [vmem:[%s1 + $0x328] sm:$0xff]
  %v124 = vld [vmem:[%s1 + $0x330] sm:$0xff]
  %v125 = vld [vmem:[%s1 + $0x338] sm:$0xff]
  %v126 = vld [vmem:[%s1 + $0x340] sm:$0xff]
  %v127 = vld [vmem:[%s1 + $0x348] sm:$0xff]
  %v128 = vld [vmem:[%s1 + $0x350] sm:$0xff]
  %v129 = vld [vmem:[%s1 + $0x358] sm:$0xff]
  %v130 = vld [vmem:[%s1 + $0x360] sm:$0xff]
  %v131 = vld [vmem:[%s1 + $0x368] sm:$0xff]
  %v132 = vld [vmem:[%s1 + $0x370] sm:$0xff]
  %v133 = vld [vmem:[%s1 + $0x378] sm:$0xff]
  %v134 = vld [vmem:[%s1 + $0x380] sm:$0xff]
  %v135 = vld [vmem:[%s1 + $0x388] sm:$0xff]
  %v136 = vld [vmem:[%s1 + $0x390] sm:$0xff]
  %v137 = vld [vmem:[%s1 + $0x398] sm:$0xff]
  %v138 = vld [vmem:[%s1 + $0x3a0] sm:$0xff]
  %v139 = vld [vmem:[%s1 + $0x3a8] sm:$0xff]
  %v140 = vld [vmem:[%s1 + $0x3b0] sm:$0xff]
  %v141 = vld [vmem:[%s1 + $0x3b8] sm:$0xff]
  %v142 = vld [vmem:[%s1 + $0x3c0] sm:$0xff]
  %v143 = vld [vmem:[%s1 + $0x3c8] sm:$0xff]
  %v144 = vld [vmem:[%s1 + $0x3d0] sm:$0xff]
  %v145 = vld [vmem:[%s1 + $0x3d8] sm:$0xff]
  %v146 = vld [vmem:[%s1 + $0x3e0] sm:$0xff]
  %v147 = vld [vmem:[%s1 + $0x3e8] sm:$0xff]
  %v148 = vld [vmem:[%s1 + $0x3f0] sm:$0xff]
  %v149 = vld [vmem:[%s1 + $0x3f8] sm:$0xff]
  %v150 = vld [vmem:[%s1 + $0x400] sm:$0xff]
  %v151 = vld [vmem:[%s1 + $0x408] sm:$0xff]
  %v152 = vld [vmem:[%s1 + $0x410] sm:$0xff]
  %v153 = vld [vmem:[%s1 + $0x418] sm:$0xff]
  %v154 = vld [vmem:[%s1 + $0x420] sm:$0xff]
  %v155 = vld [vmem:[%s1 + $0x428] sm:$0xff]
  %v156 = vld [vmem:[%s1 + $0x430] sm:$0xff]
  %v157 = vld [vmem:[%s1 + $0x438] sm:$0xff]
  %v158 = vld [vmem:[%s1 + $0x440] sm:$0xff]
  %v159 = vld [vmem:[%s1 + $0x448] sm:$0xff]
  %v160 = vld [vmem:[%s1 + $0x450] sm:$0xff]
  %v161 = vld [vmem:[%s1 + $0x458] sm:$0xff]
  %v162 = vld [vmem:[%s1 + $0x460] sm:$0xff]
  %v163 = vld [vmem:[%s1 + $0x468] sm:$0xff]
  %v164 = vld [vmem:[%s1 + $0x470] sm:$0xff]
  %v165 = vld [vmem:[%s1 + $0x478] sm:$0xff]
  %v166 = vld [vmem:[%s1 + $0x480] sm:$0xff]
  %v167 = vld [vmem:[%s1 + $0x488] sm:$0xff]
  %v168 = vld [vmem:[%s1 + $0x490] sm:$0xff]
  %v169 = vld [vmem:[%s1 + $0x498] sm:$0xff]
  %v170 = vld [vmem:[%s1 + $0x4a0] sm:$0xff]
  %v171 = vld [vmem:[%s1 + $0x4a8] sm:$0xff]
  %v172 = vld [vmem:[%s1 + $0x4b0] sm:$0xff]
  %v173 = vld [vmem:[%s1 + $0x4b8] sm:$0xff]
  %v174 = vld [vmem:[%s1 + $0x4c0] sm:$0xff]
  %v175 = vld [vmem:[%s1 + $0x4c8] sm:$0xff]
  %v176 = vld [vmem:[%s1 + $0x4d0] sm:$0xff]
  %v177 = vld [vmem:[%s1 + $0x4d8] sm:$0xff]
  %v178 = vld [vmem:[%s1 + $0x4e0] sm:$0xff]
  %v179 = vld [vmem:[%s1 + $0x4e8] sm:$0xff]
  %v180 = vld [vmem:[%s1 + $0x4f0] sm:$0xff]
  %v181 = vld [vmem:[%s1 + $0x4f8] sm:$0xff]
  %v182 = vld [vmem:[%s1 + $0x500] sm:$0xff]
  %v183 = vld [vmem:[%s1 + $0x508] sm:$0xff]
  %v184 = vld [vmem:[%s1 + $0x510] sm:$0xff]
  %v185 = vld [vmem:[%s1 + $0x518] sm:$0xff]
  %v186 = vld [vmem:[%s1 + $0x520] sm:$0xff]
  %v187 = vld [vmem:[%s1 + $0x528] sm:$0xff]
  %v188 = vld [vmem:[%s1 + $0x530] sm:$0xff]
  %v189 = vld [vmem:[%s1 + $0x538] sm:$0xff]
  %v190 = vld [vmem:[%s1 + $0x540] sm:$0xff]
  %v191 = vld [vmem:[%s1 + $0x548] sm:$0xff]
  %v192 = vld [vmem:[%s1 + $0x550] sm:$0xff]
  %v193 = vld [vmem:[%s1 + $0x558] sm:$0xff]
  %v194 = vld [vmem:[%s1 + $0x560] sm:$0xff]
  %v195 = vld [vmem:[%s1 + $0x568] sm:$0xff]
  %v196 = vld [vmem:[%s1 + $0x570] sm:$0xff]
  %v197 = vld [vmem:[%s1 + $0x578] sm:$0xff]
  %v198 = vld [vmem:[%s1 + $0x580] sm:$0xff]
  %v199 = vld [vmem:[%s1 + $0x588] sm:$0xff]
  %v200 = vld [vmem:[%s1 + $0x590] sm:$0xff]
  %v201 = vld [vmem:[%s1 + $0x598] sm:$0xff]
  %v202 = vld [vmem:[%s1 + $0x5a0] sm:$0xff]
  %v203 = vld [vmem:[%s1 + $0x5a8] sm:$0xff]
  %v204 = vld [vmem:[%s1 + $0x5b0] sm:$0xff]
  %v205 = vld [vmem:[%s1 + $0x5b8] sm:$0xff]
  %v206 = vld [vmem:[%s1 + $0x5c0] sm:$0xff]
  %v207 = vld [vmem:[%s1 + $0x5c8] sm:$0xff]
  %v208 = vld [vmem:[%s1 + $0x5d0] sm:$0xff]
  %v209 = vld [vmem:[%s1 + $0x5d8] sm:$0xff]
  %v210 = vld [vmem:[%s1 + $0x5e0] sm:$0xff]
  %v211 = vld [vmem:[%s1 + $0x5e8] sm:$0xff]
  %v212 = vld [vmem:[%s1 + $0x5f0] sm:$0xff]
  %v213 = vld [vmem:[%s1 + $0x5f8] sm:$0xff]
  %v214 = vld [vmem:[%s1 + $0x600] sm:$0xff]
  %v215 = vld [vmem:[%s1 + $0x608] sm:$0xff]
  %v216 = vld [vmem:[%s1 + $0x610] sm:$0xff]
  %v217 = vld [vmem:[%s1 + $0x618] sm:$0xff]
  %v218 = vld [vmem:[%s1 + $0x620] sm:$0xff]
  %v219 = vld [vmem:[%s1 + $0x628] sm:$0xff]
  %v220 = vld [vmem:[%s1 + $0x630] sm:$0xff]
  %v221 = vld [vmem:[%s1 + $0x638] sm:$0xff]
  %v222 = vld [vmem:[%s1 + $0x640] sm:$0xff]
  %v223 = vld [vmem:[%s1 + $0x648] sm:$0xff]
  %v224 = vld [vmem:[%s1 + $0x650] sm:$0xff]
  %v225 = vld [vmem:[%s1 + $0x658] sm:$0xff]
  %v226 = vld [vmem:[%s1 + $0x660] sm:$0xff]
  %v227 = vld [vmem:[%s1 + $0x668] sm:$0xff]
  %v228 = vld [vmem:[%s1 + $0x670] sm:$0xff]
  %v229 = vld [vmem:[%s1 + $0x678] sm:$0xff]
  %v230 = vld [vmem:[%s1 + $0x680] sm:$0xff]
  %v231 = vld [vmem:[%s1 + $0x688] sm:$0xff]
  %v232 = vld [vmem:[%s1 + $0x690] sm:$0xff]
  %v233 = vld [vmem:[%s1 + $0x698] sm:$0xff]
  %v234 = vld [vmem:[%s1 + $0x6a0] sm:$0xff]
  %v235 = vld [vmem:[%s1 + $0x6a8] sm:$0xff]
  %v236 = vld [vmem:[%s1 + $0x6b0] sm:$0xff]
  %v237 = vld [vmem:[%s1 + $0x6b8] sm:$0xff]
  %v238 = vld [vmem:[%s1 + $0x6c0] sm:$0xff]
  %v239 = vld [vmem:[%s1 + $0x6c8] sm:$0xff]
  %v240 = vld [vmem:[%s1 + $0x6d0] sm:$0xff]
  %v241 = vld [vmem:[%s1 + $0x6d8] sm:$0xff]
  %v242 = vld [vmem:[%s1 + $0x6e0] sm:$0xff]
  %v243 = vld [vmem:[%s1 + $0x6e8] sm:$0xff]
  %v244 = vld [vmem:[%s1 + $0x6f0] sm:$0xff]
  %v245 = vld [vmem:[%s1 + $0x6f8] sm:$0xff]
  %v246 = vld [vmem:[%s1 + $0x700] sm:$0xff]
  %v247 = vld [vmem:[%s1 + $0x708] sm:$0xff]
  %v248 = vld [vmem:[%s1 + $0x710] sm:$0xff]
  %v249 = vld [vmem:[%s1 + $0x718] sm:$0xff]
  %v250 = vld [vmem:[%s1 + $0x720] sm:$0xff]
  %v251 = vld [vmem:[%s1 + $0x728] sm:$0xff]
  %v252 = vld [vmem:[%s1 + $0x730] sm:$0xff]
  %v253 = vld [vmem:[%s1 + $0x738] sm:$0xff]
  %v254 = vld [vmem:[%s1 + $0x740] sm:$0xff]
  %v255 = vld [vmem:[%s1 + $0x748] sm:$0xff]
  %v256 = vld [vmem:[%s2] sm:$0xff]
  %v257 = vld [vmem:[%s2 + $0x8] sm:$0xff]
  %v258 = vld [vmem:[%s2 + $0x10] sm:$0xff]
  %v259 = vld [vmem:[%s2 + $0x18] sm:$0xff]
  %261 = vset.pattern.permute.xlu0 0
  %262 = vperm.xlu0 %261, %v256
  %v263 = vpop.permute.xlu0 %262
  %266 = vset.pattern.permute.xlu0 0
  %267 = vperm.xlu0 %266, %v257
  %v268 = vpop.permute.xlu0 %267
  %271 = vset.pattern.permute.xlu0 0
  %272 = vperm.xlu0 %271, %v258
  %v273 = vpop.permute.xlu0 %272
  %276 = vset.pattern.permute.xlu0 0
  %277 = vperm.xlu0 %276, %v259
  %v278 = vpop.permute.xlu0 %277
  %vm280 = vcmask 130048
  %v282 = vsel %vm280, %v15, 0
  %v285 = vsel %vm280, %v17, 0
  %v288 = vsel %vm280, %v19, 0
  %v291 = vsel %vm280, %v21, 0
  %293 = vmatprep.subr.mxu0 %v23
  %294 = vmatpush1.msra.mxu0 %v22
  %295 = vmatprep.subr.mxu0 %v36
  %296 = vmatpush1.msra.mxu0 %v35
  %297 = vmatprep.subr.mxu0 %v49
  %298 = vmatpush1.msra.mxu0 %v48
  %299 = vmatprep.subr.mxu0 %v62
  %300 = vmatpush1.msra.mxu0 %v61
  %301 = vmatprep.subr.mxu0 %v75
  %302 = vmatpush1.msra.mxu0 %v74
  %303 = vmatprep.subr.mxu0 %v88
  %304 = vmatpush1.msra.mxu0 %v87
  %305 = vmatprep.subr.mxu0 %v101
  %306 = vmatpush1.msra.mxu0 %v100
  %307 = vmatprep.subr.mxu0 %v114
  %308 = vmatpush1.msra.mxu0 %v113
  %309 = vmatprep.subr.mxu0 %v127
  %310 = vmatpush1.msra.mxu0 %v126
  %311 = vmatprep.subr.mxu0 %v140
  %312 = vmatpush1.msra.mxu0 %v139
  %313 = vmatprep.subr.mxu0 %v153
  %314 = vmatpush1.msra.mxu0 %v152
  %315 = vmatprep.subr.mxu0 %v166
  %316 = vmatpush1.msra.mxu0 %v165
  %317 = vmatprep.subr.mxu0 %v179
  %318 = vmatpush1.msra.mxu0 %v178
  %319 = vmatprep.subr.mxu0 %v192
  %320 = vmatpush1.msra.mxu0 %v191
  %321 = vmatprep.subr.mxu0 %v205
  %322 = vmatpush1.msra.mxu0 %v204
  %323 = vmatprep.subr.mxu0 %v218
  %324 = vmatpush1.msra.mxu0 %v217
  %325 = vmatprep.subr.mxu0 %v231
  %326 = vmatpush1.msra.mxu0 %v230
  %327 = vmatprep.subr.mxu0 %v244
  %328 = vmatpush1.msra.mxu0 %v243
  %329 = vmatprep.subr.mxu0 0.0
  %330 = vmatpush1.msra.mxu0 0.0
  %331 = vmatprep.subr.mxu0 0.0
  %332 = vmatpush1.msra.mxu0 0.0
  %333 = vmatprep.subr.mxu0 0.0
  %334 = vmatpush1.msra.mxu0 0.0
  %335 = vmatprep.subr.mxu0 0.0
  %336 = vmatpush1.msra.mxu0 0.0
  %337 = vmatprep.subr.mxu0 0.0
  %338 = vmatpush1.msra.mxu0 0.0
  %339 = vmatprep.subr.mxu0 0.0
  %340 = vmatpush1.msra.mxu0 0.0
  %341 = vmatprep.subr.mxu0 0.0
  %342 = vmatpush1.msra.mxu0 0.0
  %343 = vmatprep.subr.mxu0 0.0
  %344 = vmatpush1.msra.mxu0 0.0
  %345 = vmatprep.subr.mxu0 0.0
  %346 = vmatpush1.msra.mxu0 0.0
  %347 = vmatprep.subr.mxu0 0.0
  %348 = vmatpush1.msra.mxu0 0.0
  %349 = vmatprep.subr.mxu0 0.0
  %350 = vmatpush1.msra.mxu0 0.0
  %351 = vmatprep.subr.mxu0 0.0
  %352 = vmatpush1.msra.mxu0 0.0
  %353 = vmatprep.subr.mxu0 0.0
  %354 = vmatpush1.msra.mxu0 0.0
  %355 = vmatprep.subr.mxu0 0.0
  %356 = vmatpush1.msra.mxu0 0.0
  %357 = vmatprep.mubr.f32.mxu0 %v282
  %358 = vmatmul.mubr.f32.gmra.mrb[0].mxu0 %v14
  %v359 = vpop.f32.mrb[0].mxu0
  %v360 = vadd.f32 %v263, %v359
  %v361 = vpop.f32.mrb[0].mxu0
  %v362 = vadd.f32 %v263, %v361
  %363 = vmatprep.mubr.f32.mxu0 %v285
  %364 = vmatmul.mubr.f32.gmra.mrb[0].mxu0 %v16
  %v365 = vpop.f32.mrb[0].mxu0
  %v366 = vadd.f32 %v268, %v365
  %v367 = vpop.f32.mrb[0].mxu0
  %v368 = vadd.f32 %v268, %v367
  %369 = vmatprep.mubr.f32.mxu0 %v288
  %370 = vmatmul.mubr.f32.gmra.mrb[0].mxu0 %v18
  %v371 = vpop.f32.mrb[0].mxu0
  %v372 = vadd.f32 %v273, %v371
  %v373 = vpop.f32.mrb[0].mxu0
  %v374 = vadd.f32 %v273, %v373
  %375 = vmatprep.mubr.f32.mxu0 %v291
  %376 = vmatmul.mubr.f32.gmra.mrb[0].mxu0 %v20
  %v377 = vpop.f32.mrb[0].mxu0
  %v378 = vadd.f32 %v278, %v377
  %v379 = vpop.f32.mrb[0].mxu0
  %v380 = vadd.f32 %v278, %v379
  %381 = vdwg.mxu0
  %382 = vmatprep.subr.mxu0 %v25
  %383 = vmatpush1.msra.mxu0 %v24
  %384 = vmatprep.subr.mxu0 %v38
  %385 = vmatpush1.msra.mxu0 %v37
  %386 = vmatprep.subr.mxu0 %v51
  %387 = vmatpush1.msra.mxu0 %v50
  %388 = vmatprep.subr.mxu0 %v64
  %389 = vmatpush1.msra.mxu0 %v63
  %390 = vmatprep.subr.mxu0 %v77
  %391 = vmatpush1.msra.mxu0 %v76
  %392 = vmatprep.subr.mxu0 %v90
  %393 = vmatpush1.msra.mxu0 %v89
  %394 = vmatprep.subr.mxu0 %v103
  %395 = vmatpush1.msra.mxu0 %v102
  %396 = vmatprep.subr.mxu0 %v116
  %397 = vmatpush1.msra.mxu0 %v115
  %398 = vmatprep.subr.mxu0 %v129
  %399 = vmatpush1.msra.mxu0 %v128
  %400 = vmatprep.subr.mxu0 %v142
  %401 = vmatpush1.msra.mxu0 %v141
  %402 = vmatprep.subr.mxu0 %v155
  %403 = vmatpush1.msra.mxu0 %v154
  %404 = vmatprep.subr.mxu0 %v168
  %405 = vmatpush1.msra.mxu0 %v167
  %406 = vmatprep.subr.mxu0 %v181
  %407 = vmatpush1.msra.mxu0 %v180
  %408 = vmatprep.subr.mxu0 %v194
  %409 = vmatpush1.msra.mxu0 %v193
  %410 = vmatprep.subr.mxu0 %v207
  %411 = vmatpush1.msra.mxu0 %v206
  %412 = vmatprep.subr.mxu0 %v220
  %413 = vmatpush1.msra.mxu0 %v219
  %414 = vmatprep.subr.mxu0 %v233
  %415 = vmatpush1.msra.mxu0 %v232
  %416 = vmatprep.subr.mxu0 %v246
  %417 = vmatpush1.msra.mxu0 %v245
  %418 = vmatprep.subr.mxu0 0.0
  %419 = vmatpush1.msra.mxu0 0.0
  %420 = vmatprep.subr.mxu0 0.0
  %421 = vmatpush1.msra.mxu0 0.0
  %422 = vmatprep.subr.mxu0 0.0
  %423 = vmatpush1.msra.mxu0 0.0
  %424 = vmatprep.subr.mxu0 0.0
  %425 = vmatpush1.msra.mxu0 0.0
  %426 = vmatprep.subr.mxu0 0.0
  %427 = vmatpush1.msra.mxu0 0.0
  %428 = vmatprep.subr.mxu0 0.0
  %429 = vmatpush1.msra.mxu0 0.0
  %430 = vmatprep.subr.mxu0 0.0
  %431 = vmatpush1.msra.mxu0 0.0
  %432 = vmatprep.subr.mxu0 0.0
  %433 = vmatpush1.msra.mxu0 0.0
  %434 = vmatprep.subr.mxu0 0.0
  %435 = vmatpush1.msra.mxu0 0.0
  %436 = vmatprep.subr.mxu0 0.0
  %437 = vmatpush1.msra.mxu0 0.0
  %438 = vmatprep.subr.mxu0 0.0
  %439 = vmatpush1.msra.mxu0 0.0
  %440 = vmatprep.subr.mxu0 0.0
  %441 = vmatpush1.msra.mxu0 0.0
  %442 = vmatprep.subr.mxu0 0.0
  %443 = vmatpush1.msra.mxu0 0.0
  %444 = vmatprep.subr.mxu0 0.0
  %445 = vmatpush1.msra.mxu0 0.0
  %446 = vmatprep.mubr.f32.mxu0 %v282
  %447 = vmatmul.mubr.f32.gmra.mrb[0].mxu0 %v14
  %v448 = vpop.f32.mrb[0].mxu0
  %v449 = vadd.f32 %v263, %v448
  %v450 = vpop.f32.mrb[0].mxu0
  %v451 = vadd.f32 %v263, %v450
  %452 = vmatprep.mubr.f32.mxu0 %v285
  %453 = vmatmul.mubr.f32.gmra.mrb[0].mxu0 %v16
  %v454 = vpop.f32.mrb[0].mxu0
  %v455 = vadd.f32 %v268, %v454
  %v456 = vpop.f32.mrb[0].mxu0
  %v457 = vadd.f32 %v268, %v456
  %458 = vmatprep.mubr.f32.mxu0 %v288
  %459 = vmatmul.mubr.f32.gmra.mrb[0].mxu0 %v18
  %v460 = vpop.f32.mrb[0].mxu0
  %v461 = vadd.f32 %v273, %v460
  %v462 = vpop.f32.mrb[0].mxu0
  %v463 = vadd.f32 %v273, %v462
  %464 = vmatprep.mubr.f32.mxu0 %v291
  %465 = vmatmul.mubr.f32.gmra.mrb[0].mxu0 %v20
  %v466 = vpop.f32.mrb[0].mxu0
  %v467 = vadd.f32 %v278, %v466
  %v468 = vpop.f32.mrb[0].mxu0
  %v469 = vadd.f32 %v278, %v468
  %470 = vdwg.mxu0
  %471 = vmatprep.subr.mxu0 %v27
  %472 = vmatpush1.msra.mxu0 %v26
  %473 = vmatprep.subr.mxu0 %v40
  %474 = vmatpush1.msra.mxu0 %v39
  %475 = vmatprep.subr.mxu0 %v53
  %476 = vmatpush1.msra.mxu0 %v52
  %477 = vmatprep.subr.mxu0 %v66
  %478 = vmatpush1.msra.mxu0 %v65
  %479 = vmatprep.subr.mxu0 %v79
  %480 = vmatpush1.msra.mxu0 %v78
  %481 = vmatprep.subr.mxu0 %v92
  %482 = vmatpush1.msra.mxu0 %v91
  %483 = vmatprep.subr.mxu0 %v105
  %484 = vmatpush1.msra.mxu0 %v104
  %485 = vmatprep.subr.mxu0 %v118
  %486 = vmatpush1.msra.mxu0 %v117
  %487 = vmatprep.subr.mxu0 %v131
  %488 = vmatpush1.msra.mxu0 %v130
  %489 = vmatprep.subr.mxu0 %v144
  %490 = vmatpush1.msra.mxu0 %v143
  %491 = vmatprep.subr.mxu0 %v157
  %492 = vmatpush1.msra.mxu0 %v156
  %493 = vmatprep.subr.mxu0 %v170
  %494 = vmatpush1.msra.mxu0 %v169
  %495 = vmatprep.subr.mxu0 %v183
  %496 = vmatpush1.msra.mxu0 %v182
  %497 = vmatprep.subr.mxu0 %v196
  %498 = vmatpush1.msra.mxu0 %v195
  %499 = vmatprep.subr.mxu0 %v209
  %500 = vmatpush1.msra.mxu0 %v208
  %501 = vmatprep.subr.mxu0 %v222
  %502 = vmatpush1.msra.mxu0 %v221
  %503 = vmatprep.subr.mxu0 %v235
  %504 = vmatpush1.msra.mxu0 %v234
  %505 = vmatprep.subr.mxu0 %v248
  %506 = vmatpush1.msra.mxu0 %v247
  %507 = vmatprep.subr.mxu0 0.0
  %508 = vmatpush1.msra.mxu0 0.0
  %509 = vmatprep.subr.mxu0 0.0
  %510 = vmatpush1.msra.mxu0 0.0
  %511 = vmatprep.subr.mxu0 0.0
  %512 = vmatpush1.msra.mxu0 0.0
  %513 = vmatprep.subr.mxu0 0.0
  %514 = vmatpush1.msra.mxu0 0.0
  %515 = vmatprep.subr.mxu0 0.0
  %516 = vmatpush1.msra.mxu0 0.0
  %517 = vmatprep.subr.mxu0 0.0
  %518 = vmatpush1.msra.mxu0 0.0
  %519 = vmatprep.subr.mxu0 0.0
  %520 = vmatpush1.msra.mxu0 0.0
  %521 = vmatprep.subr.mxu0 0.0
  %522 = vmatpush1.msra.mxu0 0.0
  %523 = vmatprep.subr.mxu0 0.0
  %524 = vmatpush1.msra.mxu0 0.0
  %525 = vmatprep.subr.mxu0 0.0
  %526 = vmatpush1.msra.mxu0 0.0
  %527 = vmatprep.subr.mxu0 0.0
  %528 = vmatpush1.msra.mxu0 0.0
  %529 = vmatprep.subr.mxu0 0.0
  %530 = vmatpush1.msra.mxu0 0.0
  %531 = vmatprep.subr.mxu0 0.0
  %532 = vmatpush1.msra.mxu0 0.0
  %533 = vmatprep.subr.mxu0 0.0
  %534 = vmatpush1.msra.mxu0 0.0
  %535 = vmatprep.mubr.f32.mxu0 %v282
  %536 = vmatmul.mubr.f32.gmra.mrb[0].mxu0 %v14
  %v537 = vpop.f32.mrb[0].mxu0
  %v538 = vadd.f32 %v263, %v537
  %v539 = vpop.f32.mrb[0].mxu0
  %v540 = vadd.f32 %v263, %v539
  %541 = vmatprep.mubr.f32.mxu0 %v285
  %542 = vmatmul.mubr.f32.gmra.mrb[0].mxu0 %v16
  %v543 = vpop.f32.mrb[0].mxu0
  %v544 = vadd.f32 %v268, %v543
  %v545 = vpop.f32.mrb[0].mxu0
  %v546 = vadd.f32 %v268, %v545
  %547 = vmatprep.mubr.f32.mxu0 %v288
  %548 = vmatmul.mubr.f32.gmra.mrb[0].mxu0 %v18
  %v549 = vpop.f32.mrb[0].mxu0
  %v550 = vadd.f32 %v273, %v549
  %v551 = vpop.f32.mrb[0].mxu0
  %v552 = vadd.f32 %v273, %v551
  %553 = vmatprep.mubr.f32.mxu0 %v291
  %554 = vmatmul.mubr.f32.gmra.mrb[0].mxu0 %v20
  %v555 = vpop.f32.mrb[0].mxu0
  %v556 = vadd.f32 %v278, %v555
  %v557 = vpop.f32.mrb[0].mxu0
  %v558 = vadd.f32 %v278, %v557
  %559 = vdwg.mxu0
  %560 = vmatprep.subr.mxu0 %v29
  %561 = vmatpush1.msra.mxu0 %v28
  %562 = vmatprep.subr.mxu0 %v42
  %563 = vmatpush1.msra.mxu0 %v41
  %564 = vmatprep.subr.mxu0 %v55
  %565 = vmatpush1.msra.mxu0 %v54
  %566 = vmatprep.subr.mxu0 %v68
  %567 = vmatpush1.msra.mxu0 %v67
  %568 = vmatprep.subr.mxu0 %v81
  %569 = vmatpush1.msra.mxu0 %v80
  %570 = vmatprep.subr.mxu0 %v94
  %571 = vmatpush1.msra.mxu0 %v93
  %572 = vmatprep.subr.mxu0 %v107
  %573 = vmatpush1.msra.mxu0 %v106
  %574 = vmatprep.subr.mxu0 %v120
  %575 = vmatpush1.msra.mxu0 %v119
  %576 = vmatprep.subr.mxu0 %v133
  %577 = vmatpush1.msra.mxu0 %v132
  %578 = vmatprep.subr.mxu0 %v146
  %579 = vmatpush1.msra.mxu0 %v145
  %580 = vmatprep.subr.mxu0 %v159
  %581 = vmatpush1.msra.mxu0 %v158
  %582 = vmatprep.subr.mxu0 %v172
  %583 = vmatpush1.msra.mxu0 %v171
  %584 = vmatprep.subr.mxu0 %v185
  %585 = vmatpush1.msra.mxu0 %v184
  %586 = vmatprep.subr.mxu0 %v198
  %587 = vmatpush1.msra.mxu0 %v197
  %588 = vmatprep.subr.mxu0 %v211
  %589 = vmatpush1.msra.mxu0 %v210
  %590 = vmatprep.subr.mxu0 %v224
  %591 = vmatpush1.msra.mxu0 %v223
  %592 = vmatprep.subr.mxu0 %v237
  %593 = vmatpush1.msra.mxu0 %v236
  %594 = vmatprep.subr.mxu0 %v250
  %595 = vmatpush1.msra.mxu0 %v249
  %596 = vmatprep.subr.mxu0 0.0
  %597 = vmatpush1.msra.mxu0 0.0
  %598 = vmatprep.subr.mxu0 0.0
  %599 = vmatpush1.msra.mxu0 0.0
  %600 = vmatprep.subr.mxu0 0.0
  %601 = vmatpush1.msra.mxu0 0.0
  %602 = vmatprep.subr.mxu0 0.0
  %603 = vmatpush1.msra.mxu0 0.0
  %604 = vmatprep.subr.mxu0 0.0
  %605 = vmatpush1.msra.mxu0 0.0
  %606 = vmatprep.subr.mxu0 0.0
  %607 = vmatpush1.msra.mxu0 0.0
  %608 = vmatprep.subr.mxu0 0.0
  %609 = vmatpush1.msra.mxu0 0.0
  %610 = vmatprep.subr.mxu0 0.0
  %611 = vmatpush1.msra.mxu0 0.0
  %612 = vmatprep.subr.mxu0 0.0
  %613 = vmatpush1.msra.mxu0 0.0
  %614 = vmatprep.subr.mxu0 0.0
  %615 = vmatpush1.msra.mxu0 0.0
  %616 = vmatprep.subr.mxu0 0.0
  %617 = vmatpush1.msra.mxu0 0.0
  %618 = vmatprep.subr.mxu0 0.0
  %619 = vmatpush1.msra.mxu0 0.0
  %620 = vmatprep.subr.mxu0 0.0
  %621 = vmatpush1.msra.mxu0 0.0
  %622 = vmatprep.subr.mxu0 0.0
  %623 = vmatpush1.msra.mxu0 0.0
  %624 = vmatprep.mubr.f32.mxu0 %v282
  %625 = vmatmul.mubr.f32.gmra.mrb[0].mxu0 %v14
  %v626 = vpop.f32.mrb[0].mxu0
  %v627 = vadd.f32 %v263, %v626
  %v628 = vpop.f32.mrb[0].mxu0
  %v629 = vadd.f32 %v263, %v628
  %630 = vmatprep.mubr.f32.mxu0 %v285
  %631 = vmatmul.mubr.f32.gmra.mrb[0].mxu0 %v16
  %v632 = vpop.f32.mrb[0].mxu0
  %v633 = vadd.f32 %v268, %v632
  %v634 = vpop.f32.mrb[0].mxu0
  %v635 = vadd.f32 %v268, %v634
  %636 = vmatprep.mubr.f32.mxu0 %v288
  %637 = vmatmul.mubr.f32.gmra.mrb[0].mxu0 %v18
  %v638 = vpop.f32.mrb[0].mxu0
  %v639 = vadd.f32 %v273, %v638
  %v640 = vpop.f32.mrb[0].mxu0
  %v641 = vadd.f32 %v273, %v640
  %642 = vmatprep.mubr.f32.mxu0 %v291
  %643 = vmatmul.mubr.f32.gmra.mrb[0].mxu0 %v20
  %v644 = vpop.f32.mrb[0].mxu0
  %v645 = vadd.f32 %v278, %v644
  %v646 = vpop.f32.mrb[0].mxu0
  %v647 = vadd.f32 %v278, %v646
  %648 = vdwg.mxu0
  %649 = vmatprep.subr.mxu0 %v31
  %650 = vmatpush1.msra.mxu0 %v30
  %651 = vmatprep.subr.mxu0 %v44
  %652 = vmatpush1.msra.mxu0 %v43
  %653 = vmatprep.subr.mxu0 %v57
  %654 = vmatpush1.msra.mxu0 %v56
  %655 = vmatprep.subr.mxu0 %v70
  %656 = vmatpush1.msra.mxu0 %v69
  %657 = vmatprep.subr.mxu0 %v83
  %658 = vmatpush1.msra.mxu0 %v82
  %659 = vmatprep.subr.mxu0 %v96
  %660 = vmatpush1.msra.mxu0 %v95
  %661 = vmatprep.subr.mxu0 %v109
  %662 = vmatpush1.msra.mxu0 %v108
  %663 = vmatprep.subr.mxu0 %v122
  %664 = vmatpush1.msra.mxu0 %v121
  %665 = vmatprep.subr.mxu0 %v135
  %666 = vmatpush1.msra.mxu0 %v134
  %667 = vmatprep.subr.mxu0 %v148
  %668 = vmatpush1.msra.mxu0 %v147
  %669 = vmatprep.subr.mxu0 %v161
  %670 = vmatpush1.msra.mxu0 %v160
  %671 = vmatprep.subr.mxu0 %v174
  %672 = vmatpush1.msra.mxu0 %v173
  %673 = vmatprep.subr.mxu0 %v187
  %674 = vmatpush1.msra.mxu0 %v186
  %675 = vmatprep.subr.mxu0 %v200
  %676 = vmatpush1.msra.mxu0 %v199
  %677 = vmatprep.subr.mxu0 %v213
  %678 = vmatpush1.msra.mxu0 %v212
  %679 = vmatprep.subr.mxu0 %v226
  %680 = vmatpush1.msra.mxu0 %v225
  %681 = vmatprep.subr.mxu0 %v239
  %682 = vmatpush1.msra.mxu0 %v238
  %683 = vmatprep.subr.mxu0 %v252
  %684 = vmatpush1.msra.mxu0 %v251
  %685 = vmatprep.subr.mxu0 0.0
  %686 = vmatpush1.msra.mxu0 0.0
  %687 = vmatprep.subr.mxu0 0.0
  %688 = vmatpush1.msra.mxu0 0.0
  %689 = vmatprep.subr.mxu0 0.0
  %690 = vmatpush1.msra.mxu0 0.0
  %691 = vmatprep.subr.mxu0 0.0
  %692 = vmatpush1.msra.mxu0 0.0
  %693 = vmatprep.subr.mxu0 0.0
  %694 = vmatpush1.msra.mxu0 0.0
  %695 = vmatprep.subr.mxu0 0.0
  %696 = vmatpush1.msra.mxu0 0.0
  %697 = vmatprep.subr.mxu0 0.0
  %698 = vmatpush1.msra.mxu0 0.0
  %699 = vmatprep.subr.mxu0 0.0
  %700 = vmatpush1.msra.mxu0 0.0
  %701 = vmatprep.subr.mxu0 0.0
  %702 = vmatpush1.msra.mxu0 0.0
  %703 = vmatprep.subr.mxu0 0.0
  %704 = vmatpush1.msra.mxu0 0.0
  %705 = vmatprep.subr.mxu0 0.0
  %706 = vmatpush1.msra.mxu0 0.0
  %707 = vmatprep.subr.mxu0 0.0
  %708 = vmatpush1.msra.mxu0 0.0
  %709 = vmatprep.subr.mxu0 0.0
  %710 = vmatpush1.msra.mxu0 0.0
  %711 = vmatprep.subr.mxu0 0.0
  %712 = vmatpush1.msra.mxu0 0.0
  %713 = vmatprep.mubr.f32.mxu0 %v282
  %714 = vmatmul.mubr.f32.gmra.mrb[0].mxu0 %v14
  %v715 = vpop.f32.mrb[0].mxu0
  %v716 = vadd.f32 %v263, %v715
  %v717 = vpop.f32.mrb[0].mxu0
  %v718 = vadd.f32 %v263, %v717
  %719 = vmatprep.mubr.f32.mxu0 %v285
  %720 = vmatmul.mubr.f32.gmra.mrb[0].mxu0 %v16
  %v721 = vpop.f32.mrb[0].mxu0
  %v722 = vadd.f32 %v268, %v721
  %v723 = vpop.f32.mrb[0].mxu0
  %v724 = vadd.f32 %v268, %v723
  %725 = vmatprep.mubr.f32.mxu0 %v288
  %726 = vmatmul.mubr.f32.gmra.mrb[0].mxu0 %v18
  %v727 = vpop.f32.mrb[0].mxu0
  %v728 = vadd.f32 %v273, %v727
  %v729 = vpop.f32.mrb[0].mxu0
  %v730 = vadd.f32 %v273, %v729
  %731 = vmatprep.mubr.f32.mxu0 %v291
  %732 = vmatmul.mubr.f32.gmra.mrb[0].mxu0 %v20
  %v733 = vpop.f32.mrb[0].mxu0
  %v734 = vadd.f32 %v278, %v733
  %v735 = vpop.f32.mrb[0].mxu0
  %v736 = vadd.f32 %v278, %v735
  %737 = vdwg.mxu0
  %738 = vmatprep.subr.mxu0 %v33
  %739 = vmatpush1.msra.mxu0 %v32
  %740 = vmatprep.subr.mxu0 %v46
  %741 = vmatpush1.msra.mxu0 %v45
  %742 = vmatprep.subr.mxu0 %v59
  %743 = vmatpush1.msra.mxu0 %v58
  %744 = vmatprep.subr.mxu0 %v72
  %745 = vmatpush1.msra.mxu0 %v71
  %746 = vmatprep.subr.mxu0 %v85
  %747 = vmatpush1.msra.mxu0 %v84
  %748 = vmatprep.subr.mxu0 %v98
  %749 = vmatpush1.msra.mxu0 %v97
  %750 = vmatprep.subr.mxu0 %v111
  %751 = vmatpush1.msra.mxu0 %v110
  %752 = vmatprep.subr.mxu0 %v124
  %753 = vmatpush1.msra.mxu0 %v123
  %754 = vmatprep.subr.mxu0 %v137
  %755 = vmatpush1.msra.mxu0 %v136
  %756 = vmatprep.subr.mxu0 %v150
  %757 = vmatpush1.msra.mxu0 %v149
  %758 = vmatprep.subr.mxu0 %v163
  %759 = vmatpush1.msra.mxu0 %v162
  %760 = vmatprep.subr.mxu0 %v176
  %761 = vmatpush1.msra.mxu0 %v175
  %762 = vmatprep.subr.mxu0 %v189
  %763 = vmatpush1.msra.mxu0 %v188
  %764 = vmatprep.subr.mxu0 %v202
  %765 = vmatpush1.msra.mxu0 %v201
  %766 = vmatprep.subr.mxu0 %v215
  %767 = vmatpush1.msra.mxu0 %v214
  %768 = vmatprep.subr.mxu0 %v228
  %769 = vmatpush1.msra.mxu0 %v227
  %770 = vmatprep.subr.mxu0 %v241
  %771 = vmatpush1.msra.mxu0 %v240
  %772 = vmatprep.subr.mxu0 %v254
  %773 = vmatpush1.msra.mxu0 %v253
  %774 = vmatprep.subr.mxu0 0.0
  %775 = vmatpush1.msra.mxu0 0.0
  %776 = vmatprep.subr.mxu0 0.0
  %777 = vmatpush1.msra.mxu0 0.0
  %778 = vmatprep.subr.mxu0 0.0
  %779 = vmatpush1.msra.mxu0 0.0
  %780 = vmatprep.subr.mxu0 0.0
  %781 = vmatpush1.msra.mxu0 0.0
  %782 = vmatprep.subr.mxu0 0.0
  %783 = vmatpush1.msra.mxu0 0.0
  %784 = vmatprep.subr.mxu0 0.0
  %785 = vmatpush1.msra.mxu0 0.0
  %786 = vmatprep.subr.mxu0 0.0
  %787 = vmatpush1.msra.mxu0 0.0
  %788 = vmatprep.subr.mxu0 0.0
  %789 = vmatpush1.msra.mxu0 0.0
  %790 = vmatprep.subr.mxu0 0.0
  %791 = vmatpush1.msra.mxu0 0.0
  %792 = vmatprep.subr.mxu0 0.0
  %793 = vmatpush1.msra.mxu0 0.0
  %794 = vmatprep.subr.mxu0 0.0
  %795 = vmatpush1.msra.mxu0 0.0
  %796 = vmatprep.subr.mxu0 0.0
  %797 = vmatpush1.msra.mxu0 0.0
  %798 = vmatprep.subr.mxu0 0.0
  %799 = vmatpush1.msra.mxu0 0.0
  %800 = vmatprep.subr.mxu0 0.0
  %801 = vmatpush1.msra.mxu0 0.0
  %802 = vmatprep.mubr.f32.mxu0 %v282
  %803 = vmatmul.mubr.f32.gmra.mrb[0].mxu0 %v14
  %v804 = vpop.f32.mrb[0].mxu0
  %v805 = vadd.f32 %v263, %v804
  %v806 = vpop.f32.mrb[0].mxu0
  %v807 = vadd.f32 %v263, %v806
  %808 = vmatprep.mubr.f32.mxu0 %v285
  %809 = vmatmul.mubr.f32.gmra.mrb[0].mxu0 %v16
  %v810 = vpop.f32.mrb[0].mxu0
  %v811 = vadd.f32 %v268, %v810
  %v812 = vpop.f32.mrb[0].mxu0
  %v813 = vadd.f32 %v268, %v812
  %814 = vmatprep.mubr.f32.mxu0 %v288
  %815 = vmatmul.mubr.f32.gmra.mrb[0].mxu0 %v18
  %v816 = vpop.f32.mrb[0].mxu0
  %v817 = vadd.f32 %v273, %v816
  %v818 = vpop.f32.mrb[0].mxu0
  %v819 = vadd.f32 %v273, %v818
  %820 = vmatprep.mubr.f32.mxu0 %v291
  %821 = vmatmul.mubr.f32.gmra.mrb[0].mxu0 %v20
  %v822 = vpop.f32.mrb[0].mxu0
  %v823 = vadd.f32 %v278, %v822
  %v824 = vpop.f32.mrb[0].mxu0
  %v825 = vadd.f32 %v278, %v824
  %826 = vdwg.mxu0
  %827 = vmatprep.subr.mxu0 0.0
  %828 = vmatpush1.msra.mxu0 %v34
  %829 = vmatprep.subr.mxu0 0.0
  %830 = vmatpush1.msra.mxu0 %v47
  %831 = vmatprep.subr.mxu0 0.0
  %832 = vmatpush1.msra.mxu0 %v60
  %833 = vmatprep.subr.mxu0 0.0
  %834 = vmatpush1.msra.mxu0 %v73
  %835 = vmatprep.subr.mxu0 0.0
  %836 = vmatpush1.msra.mxu0 %v86
  %837 = vmatprep.subr.mxu0 0.0
  %838 = vmatpush1.msra.mxu0 %v99
  %839 = vmatprep.subr.mxu0 0.0
  %840 = vmatpush1.msra.mxu0 %v112
  %841 = vmatprep.subr.mxu0 0.0
  %842 = vmatpush1.msra.mxu0 %v125
  %843 = vmatprep.subr.mxu0 0.0
  %844 = vmatpush1.msra.mxu0 %v138
  %845 = vmatprep.subr.mxu0 0.0
  %846 = vmatpush1.msra.mxu0 %v151
  %847 = vmatprep.subr.mxu0 0.0
  %848 = vmatpush1.msra.mxu0 %v164
  %849 = vmatprep.subr.mxu0 0.0
  %850 = vmatpush1.msra.mxu0 %v177
  %851 = vmatprep.subr.mxu0 0.0
  %852 = vmatpush1.msra.mxu0 %v190
  %853 = vmatprep.subr.mxu0 0.0
  %854 = vmatpush1.msra.mxu0 %v203
  %855 = vmatprep.subr.mxu0 0.0
  %856 = vmatpush1.msra.mxu0 %v216
  %857 = vmatprep.subr.mxu0 0.0
  %858 = vmatpush1.msra.mxu0 %v229
  %859 = vmatprep.subr.mxu0 0.0
  %860 = vmatpush1.msra.mxu0 %v242
  %861 = vmatprep.subr.mxu0 0.0
  %862 = vmatpush1.msra.mxu0 %v255
  %863 = vmatprep.subr.mxu0 0.0
  %864 = vmatpush1.msra.mxu0 0.0
  %865 = vmatprep.subr.mxu0 0.0
  %866 = vmatpush1.msra.mxu0 0.0
  %867 = vmatprep.subr.mxu0 0.0
  %868 = vmatpush1.msra.mxu0 0.0
  %869 = vmatprep.subr.mxu0 0.0
  %870 = vmatpush1.msra.mxu0 0.0
  %871 = vmatprep.subr.mxu0 0.0
  %872 = vmatpush1.msra.mxu0 0.0
  %873 = vmatprep.subr.mxu0 0.0
  %874 = vmatpush1.msra.mxu0 0.0
  %875 = vmatprep.subr.mxu0 0.0
  %876 = vmatpush1.msra.mxu0 0.0
  %877 = vmatprep.subr.mxu0 0.0
  %878 = vmatpush1.msra.mxu0 0.0
  %879 = vmatprep.subr.mxu0 0.0
  %880 = vmatpush1.msra.mxu0 0.0
  %881 = vmatprep.subr.mxu0 0.0
  %882 = vmatpush1.msra.mxu0 0.0
  %883 = vmatprep.subr.mxu0 0.0
  %884 = vmatpush1.msra.mxu0 0.0
  %885 = vmatprep.subr.mxu0 0.0
  %886 = vmatpush1.msra.mxu0 0.0
  %887 = vmatprep.subr.mxu0 0.0
  %888 = vmatpush1.msra.mxu0 0.0
  %889 = vmatprep.subr.mxu0 0.0
  %890 = vmatpush1.msra.mxu0 0.0
  %891 = vmatprep.mubr.f32.mxu0 %v282
  %892 = vmatmul.mubr.f32.gmra.mrb[0].mxu0 %v14
  %v893 = vpop.f32.mrb[0].mxu0
  %v894 = vadd.f32 %v263, %v893
  %v895 = vpop.f32.mrb[0].mxu0
  %896 = vmatprep.mubr.f32.mxu0 %v285
  %897 = vmatmul.mubr.f32.gmra.mrb[0].mxu0 %v16
  %v898 = vpop.f32.mrb[0].mxu0
  %v899 = vadd.f32 %v268, %v898
  %v900 = vpop.f32.mrb[0].mxu0
  %901 = vmatprep.mubr.f32.mxu0 %v288
  %902 = vmatmul.mubr.f32.gmra.mrb[0].mxu0 %v18
  %v903 = vpop.f32.mrb[0].mxu0
  %v904 = vadd.f32 %v273, %v903
  %v905 = vpop.f32.mrb[0].mxu0
  %906 = vmatprep.mubr.f32.mxu0 %v291
  %907 = vmatmul.mubr.f32.gmra.mrb[0].mxu0 %v20
  %v908 = vpop.f32.mrb[0].mxu0
  %v909 = vadd.f32 %v278, %v908
  %v910 = vpop.f32.mrb[0].mxu0
  %911 = vdwg.mxu0
  %v912 = vand.u32 2147483647, %v360
  %v913 = vand.u32 2147483647, %v362
  %v914 = vand.u32 2147483647, %v449
  %v915 = vand.u32 2147483647, %v451
  %v916 = vand.u32 2147483647, %v538
  %v917 = vand.u32 2147483647, %v540
  %v918 = vand.u32 2147483647, %v627
  %v919 = vand.u32 2147483647, %v629
  %v920 = vand.u32 2147483647, %v716
  %v921 = vand.u32 2147483647, %v718
  %v922 = vand.u32 2147483647, %v805
  %v923 = vand.u32 2147483647, %v807
  %v924 = vand.u32 2147483647, %v894
  %v925 = vand.u32 2147483647, %v366
  %v926 = vand.u32 2147483647, %v368
  %v927 = vand.u32 2147483647, %v455
  %v928 = vand.u32 2147483647, %v457
  %v929 = vand.u32 2147483647, %v544
  %v930 = vand.u32 2147483647, %v546
  %v931 = vand.u32 2147483647, %v633
  %v932 = vand.u32 2147483647, %v635
  %v933 = vand.u32 2147483647, %v722
  %v934 = vand.u32 2147483647, %v724
  %v935 = vand.u32 2147483647, %v811
  %v936 = vand.u32 2147483647, %v813
  %v937 = vand.u32 2147483647, %v899
  %v938 = vand.u32 2147483647, %v372
  %v939 = vand.u32 2147483647, %v374
  %v940 = vand.u32 2147483647, %v461
  %v941 = vand.u32 2147483647, %v463
  %v942 = vand.u32 2147483647, %v550
  %v943 = vand.u32 2147483647, %v552
  %v944 = vand.u32 2147483647, %v639
  %v945 = vand.u32 2147483647, %v641
  %v946 = vand.u32 2147483647, %v728
  %v947 = vand.u32 2147483647, %v730
  %v948 = vand.u32 2147483647, %v817
  %v949 = vand.u32 2147483647, %v819
  %v950 = vand.u32 2147483647, %v904
  %v951 = vand.u32 2147483647, %v378
  %v952 = vand.u32 2147483647, %v380
  %v953 = vand.u32 2147483647, %v467
  %v954 = vand.u32 2147483647, %v469
  %v955 = vand.u32 2147483647, %v556
  %v956 = vand.u32 2147483647, %v558
  %v957 = vand.u32 2147483647, %v645
  %v958 = vand.u32 2147483647, %v647
  %v959 = vand.u32 2147483647, %v734
  %v960 = vand.u32 2147483647, %v736
  %v961 = vand.u32 2147483647, %v823
  %v962 = vand.u32 2147483647, %v825
  %v963 = vand.u32 2147483647, %v909
  %v964 = vmul.f32 %v912, 0.70710677
  %v965 = vmul.f32 %v913, 0.70710677
  %v966 = vmul.f32 %v914, 0.70710677
  %v967 = vmul.f32 %v915, 0.70710677
  %v968 = vmul.f32 %v916, 0.70710677
  %v969 = vmul.f32 %v917, 0.70710677
  %v970 = vmul.f32 %v918, 0.70710677
  %v971 = vmul.f32 %v919, 0.70710677
  %v972 = vmul.f32 %v920, 0.70710677
  %v973 = vmul.f32 %v921, 0.70710677
  %v974 = vmul.f32 %v922, 0.70710677
  %v975 = vmul.f32 %v923, 0.70710677
  %v976 = vmul.f32 %v924, 0.70710677
  %v977 = vmul.f32 %v925, 0.70710677
  %v978 = vmul.f32 %v926, 0.70710677
  %v979 = vmul.f32 %v927, 0.70710677
  %v980 = vmul.f32 %v928, 0.70710677
  %v981 = vmul.f32 %v929, 0.70710677
  %v982 = vmul.f32 %v930, 0.70710677
  %v983 = vmul.f32 %v931, 0.70710677
  %v984 = vmul.f32 %v932, 0.70710677
  %v985 = vmul.f32 %v933, 0.70710677
  %v986 = vmul.f32 %v934, 0.70710677
  %v987 = vmul.f32 %v935, 0.70710677
  %v988 = vmul.f32 %v936, 0.70710677
  %v989 = vmul.f32 %v937, 0.70710677
  %v990 = vmul.f32 %v938, 0.70710677
  %v991 = vmul.f32 %v939, 0.70710677
  %v992 = vmul.f32 %v940, 0.70710677
  %v993 = vmul.f32 %v941, 0.70710677
  %v994 = vmul.f32 %v942, 0.70710677
  %v995 = vmul.f32 %v943, 0.70710677
  %v996 = vmul.f32 %v944, 0.70710677
  %v997 = vmul.f32 %v945, 0.70710677
  %v998 = vmul.f32 %v946, 0.70710677
  %v999 = vmul.f32 %v947, 0.70710677
  %v1000 = vmul.f32 %v948, 0.70710677
  %v1001 = vmul.f32 %v949, 0.70710677
  %v1002 = vmul.f32 %v950, 0.70710677
  %v1003 = vmul.f32 %v951, 0.70710677
  %v1004 = vmul.f32 %v952, 0.70710677
  %v1005 = vmul.f32 %v953, 0.70710677
  %v1006 = vmul.f32 %v954, 0.70710677
  %v1007 = vmul.f32 %v955, 0.70710677
  %v1008 = vmul.f32 %v956, 0.70710677
  %v1009 = vmul.f32 %v957, 0.70710677
  %v1010 = vmul.f32 %v958, 0.70710677
  %v1011 = vmul.f32 %v959, 0.70710677
  %v1012 = vmul.f32 %v960, 0.70710677
  %v1013 = vmul.f32 %v961, 0.70710677
  %v1014 = vmul.f32 %v962, 0.70710677
  %v1015 = vmul.f32 %v963, 0.70710677
  %v1016 = vmul.f32 %v964, 0.3275911
  %v1017 = vmul.f32 %v965, 0.3275911
  %v1018 = vmul.f32 %v966, 0.3275911
  %v1019 = vmul.f32 %v967, 0.3275911
  %v1020 = vmul.f32 %v968, 0.3275911
  %v1021 = vmul.f32 %v969, 0.3275911
  %v1022 = vmul.f32 %v970, 0.3275911
  %v1023 = vmul.f32 %v971, 0.3275911
  %v1024 = vmul.f32 %v972, 0.3275911
  %v1025 = vmul.f32 %v973, 0.3275911
  %v1026 = vmul.f32 %v974, 0.3275911
  %v1027 = vmul.f32 %v975, 0.3275911
  %v1028 = vmul.f32 %v976, 0.3275911
  %v1029 = vmul.f32 %v977, 0.3275911
  %v1030 = vmul.f32 %v978, 0.3275911
  %v1031 = vmul.f32 %v979, 0.3275911
  %v1032 = vmul.f32 %v980, 0.3275911
  %v1033 = vmul.f32 %v981, 0.3275911
  %v1034 = vmul.f32 %v982, 0.3275911
  %v1035 = vmul.f32 %v983, 0.3275911
  %v1036 = vmul.f32 %v984, 0.3275911
  %v1037 = vmul.f32 %v985, 0.3275911
  %v1038 = vmul.f32 %v986, 0.3275911
  %v1039 = vmul.f32 %v987, 0.3275911
  %v1040 = vmul.f32 %v988, 0.3275911
  %v1041 = vmul.f32 %v989, 0.3275911
  %v1042 = vmul.f32 %v990, 0.3275911
  %v1043 = vmul.f32 %v991, 0.3275911
  %v1044 = vmul.f32 %v992, 0.3275911
  %v1045 = vmul.f32 %v993, 0.3275911
  %v1046 = vmul.f32 %v994, 0.3275911
  %v1047 = vmul.f32 %v995, 0.3275911
  %v1048 = vmul.f32 %v996, 0.3275911
  %v1049 = vmul.f32 %v997, 0.3275911
  %v1050 = vmul.f32 %v998, 0.3275911
  %v1051 = vmul.f32 %v999, 0.3275911
  %v1052 = vmul.f32 %v1000, 0.3275911
  %v1053 = vmul.f32 %v1001, 0.3275911
  %v1054 = vmul.f32 %v1002, 0.3275911
  %v1055 = vmul.f32 %v1003, 0.3275911
  %v1056 = vmul.f32 %v1004, 0.3275911
  %v1057 = vmul.f32 %v1005, 0.3275911
  %v1058 = vmul.f32 %v1006, 0.3275911
  %v1059 = vmul.f32 %v1007, 0.3275911
  %v1060 = vmul.f32 %v1008, 0.3275911
  %v1061 = vmul.f32 %v1009, 0.3275911
  %v1062 = vmul.f32 %v1010, 0.3275911
  %v1063 = vmul.f32 %v1011, 0.3275911
  %v1064 = vmul.f32 %v1012, 0.3275911
  %v1065 = vmul.f32 %v1013, 0.3275911
  %v1066 = vmul.f32 %v1014, 0.3275911
  %v1067 = vmul.f32 %v1015, 0.3275911
  %v1068 = vadd.f32 %v1016, 1.0
  %v1069 = vadd.f32 %v1017, 1.0
  %v1070 = vadd.f32 %v1018, 1.0
  %v1071 = vadd.f32 %v1019, 1.0
  %v1072 = vadd.f32 %v1020, 1.0
  %v1073 = vadd.f32 %v1021, 1.0
  %v1074 = vadd.f32 %v1022, 1.0
  %v1075 = vadd.f32 %v1023, 1.0
  %v1076 = vadd.f32 %v1024, 1.0
  %v1077 = vadd.f32 %v1025, 1.0
  %v1078 = vadd.f32 %v1026, 1.0
  %v1079 = vadd.f32 %v1027, 1.0
  %v1080 = vadd.f32 %v1028, 1.0
  %v1081 = vadd.f32 %v1029, 1.0
  %v1082 = vadd.f32 %v1030, 1.0
  %v1083 = vadd.f32 %v1031, 1.0
  %v1084 = vadd.f32 %v1032, 1.0
  %v1085 = vadd.f32 %v1033, 1.0
  %v1086 = vadd.f32 %v1034, 1.0
  %v1087 = vadd.f32 %v1035, 1.0
  %v1088 = vadd.f32 %v1036, 1.0
  %v1089 = vadd.f32 %v1037, 1.0
  %v1090 = vadd.f32 %v1038, 1.0
  %v1091 = vadd.f32 %v1039, 1.0
  %v1092 = vadd.f32 %v1040, 1.0
  %v1093 = vadd.f32 %v1041, 1.0
  %v1094 = vadd.f32 %v1042, 1.0
  %v1095 = vadd.f32 %v1043, 1.0
  %v1096 = vadd.f32 %v1044, 1.0
  %v1097 = vadd.f32 %v1045, 1.0
  %v1098 = vadd.f32 %v1046, 1.0
  %v1099 = vadd.f32 %v1047, 1.0
  %v1100 = vadd.f32 %v1048, 1.0
  %v1101 = vadd.f32 %v1049, 1.0
  %v1102 = vadd.f32 %v1050, 1.0
  %v1103 = vadd.f32 %v1051, 1.0
  %v1104 = vadd.f32 %v1052, 1.0
  %v1105 = vadd.f32 %v1053, 1.0
  %v1106 = vadd.f32 %v1054, 1.0
  %v1107 = vadd.f32 %v1055, 1.0
  %v1108 = vadd.f32 %v1056, 1.0
  %v1109 = vadd.f32 %v1057, 1.0
  %v1110 = vadd.f32 %v1058, 1.0
  %v1111 = vadd.f32 %v1059, 1.0
  %v1112 = vadd.f32 %v1060, 1.0
  %v1113 = vadd.f32 %v1061, 1.0
  %v1114 = vadd.f32 %v1062, 1.0
  %v1115 = vadd.f32 %v1063, 1.0
  %v1116 = vadd.f32 %v1064, 1.0
  %v1117 = vadd.f32 %v1065, 1.0
  %v1118 = vadd.f32 %v1066, 1.0
  %v1119 = vadd.f32 %v1067, 1.0
  %v1120 = vrcp.pop %v1068
  %v1121 = vmul.f32 1.0, %v1120
  %v1122 = vrcp.pop %v1069
  %v1123 = vmul.f32 1.0, %v1122
  %v1124 = vrcp.pop %v1070
  %v1125 = vmul.f32 1.0, %v1124
  %v1126 = vrcp.pop %v1071
  %v1127 = vmul.f32 1.0, %v1126
  %v1128 = vrcp.pop %v1072
  %v1129 = vmul.f32 1.0, %v1128
  %v1130 = vrcp.pop %v1073
  %v1131 = vmul.f32 1.0, %v1130
  %v1132 = vrcp.pop %v1074
  %v1133 = vmul.f32 1.0, %v1132
  %v1134 = vrcp.pop %v1075
  %v1135 = vmul.f32 1.0, %v1134
  %v1136 = vrcp.pop %v1076
  %v1137 = vmul.f32 1.0, %v1136
  %v1138 = vrcp.pop %v1077
  %v1139 = vmul.f32 1.0, %v1138
  %v1140 = vrcp.pop %v1078
  %v1141 = vmul.f32 1.0, %v1140
  %v1142 = vrcp.pop %v1079
  %v1143 = vmul.f32 1.0, %v1142
  %v1144 = vrcp.pop %v1080
  %v1145 = vmul.f32 1.0, %v1144
  %v1146 = vrcp.pop %v1081
  %v1147 = vmul.f32 1.0, %v1146
  %v1148 = vrcp.pop %v1082
  %v1149 = vmul.f32 1.0, %v1148
  %v1150 = vrcp.pop %v1083
  %v1151 = vmul.f32 1.0, %v1150
  %v1152 = vrcp.pop %v1084
  %v1153 = vmul.f32 1.0, %v1152
  %v1154 = vrcp.pop %v1085
  %v1155 = vmul.f32 1.0, %v1154
  %v1156 = vrcp.pop %v1086
  %v1157 = vmul.f32 1.0, %v1156
  %v1158 = vrcp.pop %v1087
  %v1159 = vmul.f32 1.0, %v1158
  %v1160 = vrcp.pop %v1088
  %v1161 = vmul.f32 1.0, %v1160
  %v1162 = vrcp.pop %v1089
  %v1163 = vmul.f32 1.0, %v1162
  %v1164 = vrcp.pop %v1090
  %v1165 = vmul.f32 1.0, %v1164
  %v1166 = vrcp.pop %v1091
  %v1167 = vmul.f32 1.0, %v1166
  %v1168 = vrcp.pop %v1092
  %v1169 = vmul.f32 1.0, %v1168
  %v1170 = vrcp.pop %v1093
  %v1171 = vmul.f32 1.0, %v1170
  %v1172 = vrcp.pop %v1094
  %v1173 = vmul.f32 1.0, %v1172
  %v1174 = vrcp.pop %v1095
  %v1175 = vmul.f32 1.0, %v1174
  %v1176 = vrcp.pop %v1096
  %v1177 = vmul.f32 1.0, %v1176
  %v1178 = vrcp.pop %v1097
  %v1179 = vmul.f32 1.0, %v1178
  %v1180 = vrcp.pop %v1098
  %v1181 = vmul.f32 1.0, %v1180
  %v1182 = vrcp.pop %v1099
  %v1183 = vmul.f32 1.0, %v1182
  %v1184 = vrcp.pop %v1100
  %v1185 = vmul.f32 1.0, %v1184
  %v1186 = vrcp.pop %v1101
  %v1187 = vmul.f32 1.0, %v1186
  %v1188 = vrcp.pop %v1102
  %v1189 = vmul.f32 1.0, %v1188
  %v1190 = vrcp.pop %v1103
  %v1191 = vmul.f32 1.0, %v1190
  %v1192 = vrcp.pop %v1104
  %v1193 = vmul.f32 1.0, %v1192
  %v1194 = vrcp.pop %v1105
  %v1195 = vmul.f32 1.0, %v1194
  %v1196 = vrcp.pop %v1106
  %v1197 = vmul.f32 1.0, %v1196
  %v1198 = vrcp.pop %v1107
  %v1199 = vmul.f32 1.0, %v1198
  %v1200 = vrcp.pop %v1108
  %v1201 = vmul.f32 1.0, %v1200
  %v1202 = vrcp.pop %v1109
  %v1203 = vmul.f32 1.0, %v1202
  %v1204 = vrcp.pop %v1110
  %v1205 = vmul.f32 1.0, %v1204
  %v1206 = vrcp.pop %v1111
  %v1207 = vmul.f32 1.0, %v1206
  %v1208 = vrcp.pop %v1112
  %v1209 = vmul.f32 1.0, %v1208
  %v1210 = vrcp.pop %v1113
  %v1211 = vmul.f32 1.0, %v1210
  %v1212 = vrcp.pop %v1114
  %v1213 = vmul.f32 1.0, %v1212
  %v1214 = vrcp.pop %v1115
  %v1215 = vmul.f32 1.0, %v1214
  %v1216 = vrcp.pop %v1116
  %v1217 = vmul.f32 1.0, %v1216
  %v1218 = vrcp.pop %v1117
  %v1219 = vmul.f32 1.0, %v1218
  %v1220 = vrcp.pop %v1118
  %v1221 = vmul.f32 1.0, %v1220
  %v1222 = vrcp.pop %v1119
  %v1223 = vmul.f32 1.0, %v1222
  %v1224 = vmul.f32 %v1121, 1.0614054
  %v1225 = vmul.f32 %v1123, 1.0614054
  %v1226 = vmul.f32 %v1125, 1.0614054
  %v1227 = vmul.f32 %v1127, 1.0614054
  %v1228 = vmul.f32 %v1129, 1.0614054
  %v1229 = vmul.f32 %v1131, 1.0614054
  %v1230 = vmul.f32 %v1133, 1.0614054
  %v1231 = vmul.f32 %v1135, 1.0614054
  %v1232 = vmul.f32 %v1137, 1.0614054
  %v1233 = vmul.f32 %v1139, 1.0614054
  %v1234 = vmul.f32 %v1141, 1.0614054
  %v1235 = vmul.f32 %v1143, 1.0614054
  %v1236 = vmul.f32 %v1145, 1.0614054
  %v1237 = vmul.f32 %v1147, 1.0614054
  %v1238 = vmul.f32 %v1149, 1.0614054
  %v1239 = vmul.f32 %v1151, 1.0614054
  %v1240 = vmul.f32 %v1153, 1.0614054
  %v1241 = vmul.f32 %v1155, 1.0614054
  %v1242 = vmul.f32 %v1157, 1.0614054
  %v1243 = vmul.f32 %v1159, 1.0614054
  %v1244 = vmul.f32 %v1161, 1.0614054
  %v1245 = vmul.f32 %v1163, 1.0614054
  %v1246 = vmul.f32 %v1165, 1.0614054
  %v1247 = vmul.f32 %v1167, 1.0614054
  %v1248 = vmul.f32 %v1169, 1.0614054
  %v1249 = vmul.f32 %v1171, 1.0614054
  %v1250 = vmul.f32 %v1173, 1.0614054
  %v1251 = vmul.f32 %v1175, 1.0614054
  %v1252 = vmul.f32 %v1177, 1.0614054
  %v1253 = vmul.f32 %v1179, 1.0614054
  %v1254 = vmul.f32 %v1181, 1.0614054
  %v1255 = vmul.f32 %v1183, 1.0614054
  %v1256 = vmul.f32 %v1185, 1.0614054
  %v1257 = vmul.f32 %v1187, 1.0614054
  %v1258 = vmul.f32 %v1189, 1.0614054
  %v1259 = vmul.f32 %v1191, 1.0614054
  %v1260 = vmul.f32 %v1193, 1.0614054
  %v1261 = vmul.f32 %v1195, 1.0614054
  %v1262 = vmul.f32 %v1197, 1.0614054
  %v1263 = vmul.f32 %v1199, 1.0614054
  %v1264 = vmul.f32 %v1201, 1.0614054
  %v1265 = vmul.f32 %v1203, 1.0614054
  %v1266 = vmul.f32 %v1205, 1.0614054
  %v1267 = vmul.f32 %v1207, 1.0614054
  %v1268 = vmul.f32 %v1209, 1.0614054
  %v1269 = vmul.f32 %v1211, 1.0614054
  %v1270 = vmul.f32 %v1213, 1.0614054
  %v1271 = vmul.f32 %v1215, 1.0614054
  %v1272 = vmul.f32 %v1217, 1.0614054
  %v1273 = vmul.f32 %v1219, 1.0614054
  %v1274 = vmul.f32 %v1221, 1.0614054
  %v1275 = vmul.f32 %v1223, 1.0614054
  %v1276 = vadd.f32 %v1224, -1.4531521
  %v1277 = vadd.f32 %v1225, -1.4531521
  %v1278 = vadd.f32 %v1226, -1.4531521
  %v1279 = vadd.f32 %v1227, -1.4531521
  %v1280 = vadd.f32 %v1228, -1.4531521
  %v1281 = vadd.f32 %v1229, -1.4531521
  %v1282 = vadd.f32 %v1230, -1.4531521
  %v1283 = vadd.f32 %v1231, -1.4531521
  %v1284 = vadd.f32 %v1232, -1.4531521
  %v1285 = vadd.f32 %v1233, -1.4531521
  %v1286 = vadd.f32 %v1234, -1.4531521
  %v1287 = vadd.f32 %v1235, -1.4531521
  %v1288 = vadd.f32 %v1236, -1.4531521
  %v1289 = vadd.f32 %v1237, -1.4531521
  %v1290 = vadd.f32 %v1238, -1.4531521
  %v1291 = vadd.f32 %v1239, -1.4531521
  %v1292 = vadd.f32 %v1240, -1.4531521
  %v1293 = vadd.f32 %v1241, -1.4531521
  %v1294 = vadd.f32 %v1242, -1.4531521
  %v1295 = vadd.f32 %v1243, -1.4531521
  %v1296 = vadd.f32 %v1244, -1.4531521
  %v1297 = vadd.f32 %v1245, -1.4531521
  %v1298 = vadd.f32 %v1246, -1.4531521
  %v1299 = vadd.f32 %v1247, -1.4531521
  %v1300 = vadd.f32 %v1248, -1.4531521
  %v1301 = vadd.f32 %v1249, -1.4531521
  %v1302 = vadd.f32 %v1250, -1.4531521
  %v1303 = vadd.f32 %v1251, -1.4531521
  %v1304 = vadd.f32 %v1252, -1.4531521
  %v1305 = vadd.f32 %v1253, -1.4531521
  %v1306 = vadd.f32 %v1254, -1.4531521
  %v1307 = vadd.f32 %v1255, -1.4531521
  %v1308 = vadd.f32 %v1256, -1.4531521
  %v1309 = vadd.f32 %v1257, -1.4531521
  %v1310 = vadd.f32 %v1258, -1.4531521
  %v1311 = vadd.f32 %v1259, -1.4531521
  %v1312 = vadd.f32 %v1260, -1.4531521
  %v1313 = vadd.f32 %v1261, -1.4531521
  %v1314 = vadd.f32 %v1262, -1.4531521
  %v1315 = vadd.f32 %v1263, -1.4531521
  %v1316 = vadd.f32 %v1264, -1.4531521
  %v1317 = vadd.f32 %v1265, -1.4531521
  %v1318 = vadd.f32 %v1266, -1.4531521
  %v1319 = vadd.f32 %v1267, -1.4531521
  %v1320 = vadd.f32 %v1268, -1.4531521
  %v1321 = vadd.f32 %v1269, -1.4531521
  %v1322 = vadd.f32 %v1270, -1.4531521
  %v1323 = vadd.f32 %v1271, -1.4531521
  %v1324 = vadd.f32 %v1272, -1.4531521
  %v1325 = vadd.f32 %v1273, -1.4531521
  %v1326 = vadd.f32 %v1274, -1.4531521
  %v1327 = vadd.f32 %v1275, -1.4531521
  %v1328 = vmul.f32 %v1276, %v1121
  %v1329 = vmul.f32 %v1277, %v1123
  %v1330 = vmul.f32 %v1278, %v1125
  %v1331 = vmul.f32 %v1279, %v1127
  %v1332 = vmul.f32 %v1280, %v1129
  %v1333 = vmul.f32 %v1281, %v1131
  %v1334 = vmul.f32 %v1282, %v1133
  %v1335 = vmul.f32 %v1283, %v1135
  %v1336 = vmul.f32 %v1284, %v1137
  %v1337 = vmul.f32 %v1285, %v1139
  %v1338 = vmul.f32 %v1286, %v1141
  %v1339 = vmul.f32 %v1287, %v1143
  %v1340 = vmul.f32 %v1288, %v1145
  %v1341 = vmul.f32 %v1289, %v1147
  %v1342 = vmul.f32 %v1290, %v1149
  %v1343 = vmul.f32 %v1291, %v1151
  %v1344 = vmul.f32 %v1292, %v1153
  %v1345 = vmul.f32 %v1293, %v1155
  %v1346 = vmul.f32 %v1294, %v1157
  %v1347 = vmul.f32 %v1295, %v1159
  %v1348 = vmul.f32 %v1296, %v1161
  %v1349 = vmul.f32 %v1297, %v1163
  %v1350 = vmul.f32 %v1298, %v1165
  %v1351 = vmul.f32 %v1299, %v1167
  %v1352 = vmul.f32 %v1300, %v1169
  %v1353 = vmul.f32 %v1301, %v1171
  %v1354 = vmul.f32 %v1302, %v1173
  %v1355 = vmul.f32 %v1303, %v1175
  %v1356 = vmul.f32 %v1304, %v1177
  %v1357 = vmul.f32 %v1305, %v1179
  %v1358 = vmul.f32 %v1306, %v1181
  %v1359 = vmul.f32 %v1307, %v1183
  %v1360 = vmul.f32 %v1308, %v1185
  %v1361 = vmul.f32 %v1309, %v1187
  %v1362 = vmul.f32 %v1310, %v1189
  %v1363 = vmul.f32 %v1311, %v1191
  %v1364 = vmul.f32 %v1312, %v1193
  %v1365 = vmul.f32 %v1313, %v1195
  %v1366 = vmul.f32 %v1314, %v1197
  %v1367 = vmul.f32 %v1315, %v1199
  %v1368 = vmul.f32 %v1316, %v1201
  %v1369 = vmul.f32 %v1317, %v1203
  %v1370 = vmul.f32 %v1318, %v1205
  %v1371 = vmul.f32 %v1319, %v1207
  %v1372 = vmul.f32 %v1320, %v1209
  %v1373 = vmul.f32 %v1321, %v1211
  %v1374 = vmul.f32 %v1322, %v1213
  %v1375 = vmul.f32 %v1323, %v1215
  %v1376 = vmul.f32 %v1324, %v1217
  %v1377 = vmul.f32 %v1325, %v1219
  %v1378 = vmul.f32 %v1326, %v1221
  %v1379 = vmul.f32 %v1327, %v1223
  %v1380 = vadd.f32 %v1328, 1.4214138
  %v1381 = vadd.f32 %v1329, 1.4214138
  %v1382 = vadd.f32 %v1330, 1.4214138
  %v1383 = vadd.f32 %v1331, 1.4214138
  %v1384 = vadd.f32 %v1332, 1.4214138
  %v1385 = vadd.f32 %v1333, 1.4214138
  %v1386 = vadd.f32 %v1334, 1.4214138
  %v1387 = vadd.f32 %v1335, 1.4214138
  %v1388 = vadd.f32 %v1336, 1.4214138
  %v1389 = vadd.f32 %v1337, 1.4214138
  %v1390 = vadd.f32 %v1338, 1.4214138
  %v1391 = vadd.f32 %v1339, 1.4214138
  %v1392 = vadd.f32 %v1340, 1.4214138
  %v1393 = vadd.f32 %v1341, 1.4214138
  %v1394 = vadd.f32 %v1342, 1.4214138
  %v1395 = vadd.f32 %v1343, 1.4214138
  %v1396 = vadd.f32 %v1344, 1.4214138
  %v1397 = vadd.f32 %v1345, 1.4214138
  %v1398 = vadd.f32 %v1346, 1.4214138
  %v1399 = vadd.f32 %v1347, 1.4214138
  %v1400 = vadd.f32 %v1348, 1.4214138
  %v1401 = vadd.f32 %v1349, 1.4214138
  %v1402 = vadd.f32 %v1350, 1.4214138
  %v1403 = vadd.f32 %v1351, 1.4214138
  %v1404 = vadd.f32 %v1352, 1.4214138
  %v1405 = vadd.f32 %v1353, 1.4214138
  %v1406 = vadd.f32 %v1354, 1.4214138
  %v1407 = vadd.f32 %v1355, 1.4214138
  %v1408 = vadd.f32 %v1356, 1.4214138
  %v1409 = vadd.f32 %v1357, 1.4214138
  %v1410 = vadd.f32 %v1358, 1.4214138
  %v1411 = vadd.f32 %v1359, 1.4214138
  %v1412 = vadd.f32 %v1360, 1.4214138
  %v1413 = vadd.f32 %v1361, 1.4214138
  %v1414 = vadd.f32 %v1362, 1.4214138
  %v1415 = vadd.f32 %v1363, 1.4214138
  %v1416 = vadd.f32 %v1364, 1.4214138
  %v1417 = vadd.f32 %v1365, 1.4214138
  %v1418 = vadd.f32 %v1366, 1.4214138
  %v1419 = vadd.f32 %v1367, 1.4214138
  %v1420 = vadd.f32 %v1368, 1.4214138
  %v1421 = vadd.f32 %v1369, 1.4214138
  %v1422 = vadd.f32 %v1370, 1.4214138
  %v1423 = vadd.f32 %v1371, 1.4214138
  %v1424 = vadd.f32 %v1372, 1.4214138
  %v1425 = vadd.f32 %v1373, 1.4214138
  %v1426 = vadd.f32 %v1374, 1.4214138
  %v1427 = vadd.f32 %v1375, 1.4214138
  %v1428 = vadd.f32 %v1376, 1.4214138
  %v1429 = vadd.f32 %v1377, 1.4214138
  %v1430 = vadd.f32 %v1378, 1.4214138
  %v1431 = vadd.f32 %v1379, 1.4214138
  %v1432 = vmul.f32 %v1380, %v1121
  %v1433 = vmul.f32 %v1381, %v1123
  %v1434 = vmul.f32 %v1382, %v1125
  %v1435 = vmul.f32 %v1383, %v1127
  %v1436 = vmul.f32 %v1384, %v1129
  %v1437 = vmul.f32 %v1385, %v1131
  %v1438 = vmul.f32 %v1386, %v1133
  %v1439 = vmul.f32 %v1387, %v1135
  %v1440 = vmul.f32 %v1388, %v1137
  %v1441 = vmul.f32 %v1389, %v1139
  %v1442 = vmul.f32 %v1390, %v1141
  %v1443 = vmul.f32 %v1391, %v1143
  %v1444 = vmul.f32 %v1392, %v1145
  %v1445 = vmul.f32 %v1393, %v1147
  %v1446 = vmul.f32 %v1394, %v1149
  %v1447 = vmul.f32 %v1395, %v1151
  %v1448 = vmul.f32 %v1396, %v1153
  %v1449 = vmul.f32 %v1397, %v1155
  %v1450 = vmul.f32 %v1398, %v1157
  %v1451 = vmul.f32 %v1399, %v1159
  %v1452 = vmul.f32 %v1400, %v1161
  %v1453 = vmul.f32 %v1401, %v1163
  %v1454 = vmul.f32 %v1402, %v1165
  %v1455 = vmul.f32 %v1403, %v1167
  %v1456 = vmul.f32 %v1404, %v1169
  %v1457 = vmul.f32 %v1405, %v1171
  %v1458 = vmul.f32 %v1406, %v1173
  %v1459 = vmul.f32 %v1407, %v1175
  %v1460 = vmul.f32 %v1408, %v1177
  %v1461 = vmul.f32 %v1409, %v1179
  %v1462 = vmul.f32 %v1410, %v1181
  %v1463 = vmul.f32 %v1411, %v1183
  %v1464 = vmul.f32 %v1412, %v1185
  %v1465 = vmul.f32 %v1413, %v1187
  %v1466 = vmul.f32 %v1414, %v1189
  %v1467 = vmul.f32 %v1415, %v1191
  %v1468 = vmul.f32 %v1416, %v1193
  %v1469 = vmul.f32 %v1417, %v1195
  %v1470 = vmul.f32 %v1418, %v1197
  %v1471 = vmul.f32 %v1419, %v1199
  %v1472 = vmul.f32 %v1420, %v1201
  %v1473 = vmul.f32 %v1421, %v1203
  %v1474 = vmul.f32 %v1422, %v1205
  %v1475 = vmul.f32 %v1423, %v1207
  %v1476 = vmul.f32 %v1424, %v1209
  %v1477 = vmul.f32 %v1425, %v1211
  %v1478 = vmul.f32 %v1426, %v1213
  %v1479 = vmul.f32 %v1427, %v1215
  %v1480 = vmul.f32 %v1428, %v1217
  %v1481 = vmul.f32 %v1429, %v1219
  %v1482 = vmul.f32 %v1430, %v1221
  %v1483 = vmul.f32 %v1431, %v1223
  %v1484 = vadd.f32 %v1432, -0.28449672
  %v1485 = vadd.f32 %v1433, -0.28449672
  %v1486 = vadd.f32 %v1434, -0.28449672
  %v1487 = vadd.f32 %v1435, -0.28449672
  %v1488 = vadd.f32 %v1436, -0.28449672
  %v1489 = vadd.f32 %v1437, -0.28449672
  %v1490 = vadd.f32 %v1438, -0.28449672
  %v1491 = vadd.f32 %v1439, -0.28449672
  %v1492 = vadd.f32 %v1440, -0.28449672
  %v1493 = vadd.f32 %v1441, -0.28449672
  %v1494 = vadd.f32 %v1442, -0.28449672
  %v1495 = vadd.f32 %v1443, -0.28449672
  %v1496 = vadd.f32 %v1444, -0.28449672
  %v1497 = vadd.f32 %v1445, -0.28449672
  %v1498 = vadd.f32 %v1446, -0.28449672
  %v1499 = vadd.f32 %v1447, -0.28449672
  %v1500 = vadd.f32 %v1448, -0.28449672
  %v1501 = vadd.f32 %v1449, -0.28449672
  %v1502 = vadd.f32 %v1450, -0.28449672
  %v1503 = vadd.f32 %v1451, -0.28449672
  %v1504 = vadd.f32 %v1452, -0.28449672
  %v1505 = vadd.f32 %v1453, -0.28449672
  %v1506 = vadd.f32 %v1454, -0.28449672
  %v1507 = vadd.f32 %v1455, -0.28449672
  %v1508 = vadd.f32 %v1456, -0.28449672
  %v1509 = vadd.f32 %v1457, -0.28449672
  %v1510 = vadd.f32 %v1458, -0.28449672
  %v1511 = vadd.f32 %v1459, -0.28449672
  %v1512 = vadd.f32 %v1460, -0.28449672
  %v1513 = vadd.f32 %v1461, -0.28449672
  %v1514 = vadd.f32 %v1462, -0.28449672
  %v1515 = vadd.f32 %v1463, -0.28449672
  %v1516 = vadd.f32 %v1464, -0.28449672
  %v1517 = vadd.f32 %v1465, -0.28449672
  %v1518 = vadd.f32 %v1466, -0.28449672
  %v1519 = vadd.f32 %v1467, -0.28449672
  %v1520 = vadd.f32 %v1468, -0.28449672
  %v1521 = vadd.f32 %v1469, -0.28449672
  %v1522 = vadd.f32 %v1470, -0.28449672
  %v1523 = vadd.f32 %v1471, -0.28449672
  %v1524 = vadd.f32 %v1472, -0.28449672
  %v1525 = vadd.f32 %v1473, -0.28449672
  %v1526 = vadd.f32 %v1474, -0.28449672
  %v1527 = vadd.f32 %v1475, -0.28449672
  %v1528 = vadd.f32 %v1476, -0.28449672
  %v1529 = vadd.f32 %v1477, -0.28449672
  %v1530 = vadd.f32 %v1478, -0.28449672
  %v1531 = vadd.f32 %v1479, -0.28449672
  %v1532 = vadd.f32 %v1480, -0.28449672
  %v1533 = vadd.f32 %v1481, -0.28449672
  %v1534 = vadd.f32 %v1482, -0.28449672
  %v1535 = vadd.f32 %v1483, -0.28449672
  %v1536 = vmul.f32 %v1484, %v1121
  %v1537 = vmul.f32 %v1485, %v1123
  %v1538 = vmul.f32 %v1486, %v1125
  %v1539 = vmul.f32 %v1487, %v1127
  %v1540 = vmul.f32 %v1488, %v1129
  %v1541 = vmul.f32 %v1489, %v1131
  %v1542 = vmul.f32 %v1490, %v1133
  %v1543 = vmul.f32 %v1491, %v1135
  %v1544 = vmul.f32 %v1492, %v1137
  %v1545 = vmul.f32 %v1493, %v1139
  %v1546 = vmul.f32 %v1494, %v1141
  %v1547 = vmul.f32 %v1495, %v1143
  %v1548 = vmul.f32 %v1496, %v1145
  %v1549 = vmul.f32 %v1497, %v1147
  %v1550 = vmul.f32 %v1498, %v1149
  %v1551 = vmul.f32 %v1499, %v1151
  %v1552 = vmul.f32 %v1500, %v1153
  %v1553 = vmul.f32 %v1501, %v1155
  %v1554 = vmul.f32 %v1502, %v1157
  %v1555 = vmul.f32 %v1503, %v1159
  %v1556 = vmul.f32 %v1504, %v1161
  %v1557 = vmul.f32 %v1505, %v1163
  %v1558 = vmul.f32 %v1506, %v1165
  %v1559 = vmul.f32 %v1507, %v1167
  %v1560 = vmul.f32 %v1508, %v1169
  %v1561 = vmul.f32 %v1509, %v1171
  %v1562 = vmul.f32 %v1510, %v1173
  %v1563 = vmul.f32 %v1511, %v1175
  %v1564 = vmul.f32 %v1512, %v1177
  %v1565 = vmul.f32 %v1513, %v1179
  %v1566 = vmul.f32 %v1514, %v1181
  %v1567 = vmul.f32 %v1515, %v1183
  %v1568 = vmul.f32 %v1516, %v1185
  %v1569 = vmul.f32 %v1517, %v1187
  %v1570 = vmul.f32 %v1518, %v1189
  %v1571 = vmul.f32 %v1519, %v1191
  %v1572 = vmul.f32 %v1520, %v1193
  %v1573 = vmul.f32 %v1521, %v1195
  %v1574 = vmul.f32 %v1522, %v1197
  %v1575 = vmul.f32 %v1523, %v1199
  %v1576 = vmul.f32 %v1524, %v1201
  %v1577 = vmul.f32 %v1525, %v1203
  %v1578 = vmul.f32 %v1526, %v1205
  %v1579 = vmul.f32 %v1527, %v1207
  %v1580 = vmul.f32 %v1528, %v1209
  %v1581 = vmul.f32 %v1529, %v1211
  %v1582 = vmul.f32 %v1530, %v1213
  %v1583 = vmul.f32 %v1531, %v1215
  %v1584 = vmul.f32 %v1532, %v1217
  %v1585 = vmul.f32 %v1533, %v1219
  %v1586 = vmul.f32 %v1534, %v1221
  %v1587 = vmul.f32 %v1535, %v1223
  %v1588 = vadd.f32 %v1536, 0.2548296
  %v1589 = vadd.f32 %v1537, 0.2548296
  %v1590 = vadd.f32 %v1538, 0.2548296
  %v1591 = vadd.f32 %v1539, 0.2548296
  %v1592 = vadd.f32 %v1540, 0.2548296
  %v1593 = vadd.f32 %v1541, 0.2548296
  %v1594 = vadd.f32 %v1542, 0.2548296
  %v1595 = vadd.f32 %v1543, 0.2548296
  %v1596 = vadd.f32 %v1544, 0.2548296
  %v1597 = vadd.f32 %v1545, 0.2548296
  %v1598 = vadd.f32 %v1546, 0.2548296
  %v1599 = vadd.f32 %v1547, 0.2548296
  %v1600 = vadd.f32 %v1548, 0.2548296
  %v1601 = vadd.f32 %v1549, 0.2548296
  %v1602 = vadd.f32 %v1550, 0.2548296
  %v1603 = vadd.f32 %v1551, 0.2548296
  %v1604 = vadd.f32 %v1552, 0.2548296
  %v1605 = vadd.f32 %v1553, 0.2548296
  %v1606 = vadd.f32 %v1554, 0.2548296
  %v1607 = vadd.f32 %v1555, 0.2548296
  %v1608 = vadd.f32 %v1556, 0.2548296
  %v1609 = vadd.f32 %v1557, 0.2548296
  %v1610 = vadd.f32 %v1558, 0.2548296
  %v1611 = vadd.f32 %v1559, 0.2548296
  %v1612 = vadd.f32 %v1560, 0.2548296
  %v1613 = vadd.f32 %v1561, 0.2548296
  %v1614 = vadd.f32 %v1562, 0.2548296
  %v1615 = vadd.f32 %v1563, 0.2548296
  %v1616 = vadd.f32 %v1564, 0.2548296
  %v1617 = vadd.f32 %v1565, 0.2548296
  %v1618 = vadd.f32 %v1566, 0.2548296
  %v1619 = vadd.f32 %v1567, 0.2548296
  %v1620 = vadd.f32 %v1568, 0.2548296
  %v1621 = vadd.f32 %v1569, 0.2548296
  %v1622 = vadd.f32 %v1570, 0.2548296
  %v1623 = vadd.f32 %v1571, 0.2548296
  %v1624 = vadd.f32 %v1572, 0.2548296
  %v1625 = vadd.f32 %v1573, 0.2548296
  %v1626 = vadd.f32 %v1574, 0.2548296
  %v1627 = vadd.f32 %v1575, 0.2548296
  %v1628 = vadd.f32 %v1576, 0.2548296
  %v1629 = vadd.f32 %v1577, 0.2548296
  %v1630 = vadd.f32 %v1578, 0.2548296
  %v1631 = vadd.f32 %v1579, 0.2548296
  %v1632 = vadd.f32 %v1580, 0.2548296
  %v1633 = vadd.f32 %v1581, 0.2548296
  %v1634 = vadd.f32 %v1582, 0.2548296
  %v1635 = vadd.f32 %v1583, 0.2548296
  %v1636 = vadd.f32 %v1584, 0.2548296
  %v1637 = vadd.f32 %v1585, 0.2548296
  %v1638 = vadd.f32 %v1586, 0.2548296
  %v1639 = vadd.f32 %v1587, 0.2548296
  %v1640 = vmul.f32 %v1588, %v1121
  %v1641 = vmul.f32 %v1589, %v1123
  %v1642 = vmul.f32 %v1590, %v1125
  %v1643 = vmul.f32 %v1591, %v1127
  %v1644 = vmul.f32 %v1592, %v1129
  %v1645 = vmul.f32 %v1593, %v1131
  %v1646 = vmul.f32 %v1594, %v1133
  %v1647 = vmul.f32 %v1595, %v1135
  %v1648 = vmul.f32 %v1596, %v1137
  %v1649 = vmul.f32 %v1597, %v1139
  %v1650 = vmul.f32 %v1598, %v1141
  %v1651 = vmul.f32 %v1599, %v1143
  %v1652 = vmul.f32 %v1600, %v1145
  %v1653 = vmul.f32 %v1601, %v1147
  %v1654 = vmul.f32 %v1602, %v1149
  %v1655 = vmul.f32 %v1603, %v1151
  %v1656 = vmul.f32 %v1604, %v1153
  %v1657 = vmul.f32 %v1605, %v1155
  %v1658 = vmul.f32 %v1606, %v1157
  %v1659 = vmul.f32 %v1607, %v1159
  %v1660 = vmul.f32 %v1608, %v1161
  %v1661 = vmul.f32 %v1609, %v1163
  %v1662 = vmul.f32 %v1610, %v1165
  %v1663 = vmul.f32 %v1611, %v1167
  %v1664 = vmul.f32 %v1612, %v1169
  %v1665 = vmul.f32 %v1613, %v1171
  %v1666 = vmul.f32 %v1614, %v1173
  %v1667 = vmul.f32 %v1615, %v1175
  %v1668 = vmul.f32 %v1616, %v1177
  %v1669 = vmul.f32 %v1617, %v1179
  %v1670 = vmul.f32 %v1618, %v1181
  %v1671 = vmul.f32 %v1619, %v1183
  %v1672 = vmul.f32 %v1620, %v1185
  %v1673 = vmul.f32 %v1621, %v1187
  %v1674 = vmul.f32 %v1622, %v1189
  %v1675 = vmul.f32 %v1623, %v1191
  %v1676 = vmul.f32 %v1624, %v1193
  %v1677 = vmul.f32 %v1625, %v1195
  %v1678 = vmul.f32 %v1626, %v1197
  %v1679 = vmul.f32 %v1627, %v1199
  %v1680 = vmul.f32 %v1628, %v1201
  %v1681 = vmul.f32 %v1629, %v1203
  %v1682 = vmul.f32 %v1630, %v1205
  %v1683 = vmul.f32 %v1631, %v1207
  %v1684 = vmul.f32 %v1632, %v1209
  %v1685 = vmul.f32 %v1633, %v1211
  %v1686 = vmul.f32 %v1634, %v1213
  %v1687 = vmul.f32 %v1635, %v1215
  %v1688 = vmul.f32 %v1636, %v1217
  %v1689 = vmul.f32 %v1637, %v1219
  %v1690 = vmul.f32 %v1638, %v1221
  %v1691 = vmul.f32 %v1639, %v1223
  %v1692 = vmul.f32 %v360, 0.5
  %v1693 = vmul.f32 %v362, 0.5
  %v1694 = vmul.f32 %v449, 0.5
  %v1695 = vmul.f32 %v451, 0.5
  %v1696 = vmul.f32 %v538, 0.5
  %v1697 = vmul.f32 %v540, 0.5
  %v1698 = vmul.f32 %v627, 0.5
  %v1699 = vmul.f32 %v629, 0.5
  %v1700 = vmul.f32 %v716, 0.5
  %v1701 = vmul.f32 %v718, 0.5
  %v1702 = vmul.f32 %v805, 0.5
  %v1703 = vmul.f32 %v807, 0.5
  %v1704 = vmul.f32 %v894, 0.5
  %v1705 = vmul.f32 %v366, 0.5
  %v1706 = vmul.f32 %v368, 0.5
  %v1707 = vmul.f32 %v455, 0.5
  %v1708 = vmul.f32 %v457, 0.5
  %v1709 = vmul.f32 %v544, 0.5
  %v1710 = vmul.f32 %v546, 0.5
  %v1711 = vmul.f32 %v633, 0.5
  %v1712 = vmul.f32 %v635, 0.5
  %v1713 = vmul.f32 %v722, 0.5
  %v1714 = vmul.f32 %v724, 0.5
  %v1715 = vmul.f32 %v811, 0.5
  %v1716 = vmul.f32 %v813, 0.5
  %v1717 = vmul.f32 %v899, 0.5
  %v1718 = vmul.f32 %v372, 0.5
  %v1719 = vmul.f32 %v374, 0.5
  %v1720 = vmul.f32 %v461, 0.5
  %v1721 = vmul.f32 %v463, 0.5
  %v1722 = vmul.f32 %v550, 0.5
  %v1723 = vmul.f32 %v552, 0.5
  %v1724 = vmul.f32 %v639, 0.5
  %v1725 = vmul.f32 %v641, 0.5
  %v1726 = vmul.f32 %v728, 0.5
  %v1727 = vmul.f32 %v730, 0.5
  %v1728 = vmul.f32 %v817, 0.5
  %v1729 = vmul.f32 %v819, 0.5
  %v1730 = vmul.f32 %v904, 0.5
  %v1731 = vmul.f32 %v378, 0.5
  %v1732 = vmul.f32 %v380, 0.5
  %v1733 = vmul.f32 %v467, 0.5
  %v1734 = vmul.f32 %v469, 0.5
  %v1735 = vmul.f32 %v556, 0.5
  %v1736 = vmul.f32 %v558, 0.5
  %v1737 = vmul.f32 %v645, 0.5
  %v1738 = vmul.f32 %v647, 0.5
  %v1739 = vmul.f32 %v734, 0.5
  %v1740 = vmul.f32 %v736, 0.5
  %v1741 = vmul.f32 %v823, 0.5
  %v1742 = vmul.f32 %v825, 0.5
  %v1743 = vmul.f32 %v909, 0.5
  %v1744 = vmul.f32 %v1692, %v1640
  %v1745 = vmul.f32 %v1693, %v1641
  %v1746 = vmul.f32 %v1694, %v1642
  %v1747 = vmul.f32 %v1695, %v1643
  %v1748 = vmul.f32 %v1696, %v1644
  %v1749 = vmul.f32 %v1697, %v1645
  %v1750 = vmul.f32 %v1698, %v1646
  %v1751 = vmul.f32 %v1699, %v1647
  %v1752 = vmul.f32 %v1700, %v1648
  %v1753 = vmul.f32 %v1701, %v1649
  %v1754 = vmul.f32 %v1702, %v1650
  %v1755 = vmul.f32 %v1703, %v1651
  %v1756 = vmul.f32 %v1704, %v1652
  %v1757 = vmul.f32 %v1705, %v1653
  %v1758 = vmul.f32 %v1706, %v1654
  %v1759 = vmul.f32 %v1707, %v1655
  %v1760 = vmul.f32 %v1708, %v1656
  %v1761 = vmul.f32 %v1709, %v1657
  %v1762 = vmul.f32 %v1710, %v1658
  %v1763 = vmul.f32 %v1711, %v1659
  %v1764 = vmul.f32 %v1712, %v1660
  %v1765 = vmul.f32 %v1713, %v1661
  %v1766 = vmul.f32 %v1714, %v1662
  %v1767 = vmul.f32 %v1715, %v1663
  %v1768 = vmul.f32 %v1716, %v1664
  %v1769 = vmul.f32 %v1717, %v1665
  %v1770 = vmul.f32 %v1718, %v1666
  %v1771 = vmul.f32 %v1719, %v1667
  %v1772 = vmul.f32 %v1720, %v1668
  %v1773 = vmul.f32 %v1721, %v1669
  %v1774 = vmul.f32 %v1722, %v1670
  %v1775 = vmul.f32 %v1723, %v1671
  %v1776 = vmul.f32 %v1724, %v1672
  %v1777 = vmul.f32 %v1725, %v1673
  %v1778 = vmul.f32 %v1726, %v1674
  %v1779 = vmul.f32 %v1727, %v1675
  %v1780 = vmul.f32 %v1728, %v1676
  %v1781 = vmul.f32 %v1729, %v1677
  %v1782 = vmul.f32 %v1730, %v1678
  %v1783 = vmul.f32 %v1731, %v1679
  %v1784 = vmul.f32 %v1732, %v1680
  %v1785 = vmul.f32 %v1733, %v1681
  %v1786 = vmul.f32 %v1734, %v1682
  %v1787 = vmul.f32 %v1735, %v1683
  %v1788 = vmul.f32 %v1736, %v1684
  %v1789 = vmul.f32 %v1737, %v1685
  %v1790 = vmul.f32 %v1738, %v1686
  %v1791 = vmul.f32 %v1739, %v1687
  %v1792 = vmul.f32 %v1740, %v1688
  %v1793 = vmul.f32 %v1741, %v1689
  %v1794 = vmul.f32 %v1742, %v1690
  %v1795 = vmul.f32 %v1743, %v1691
  %v1796 = vsub.f32 0.0, %v964
  %v1797 = vsub.f32 0.0, %v965
  %v1798 = vsub.f32 0.0, %v966
  %v1799 = vsub.f32 0.0, %v967
  %v1800 = vsub.f32 0.0, %v968
  %v1801 = vsub.f32 0.0, %v969
  %v1802 = vsub.f32 0.0, %v970
  %v1803 = vsub.f32 0.0, %v971
  %v1804 = vsub.f32 0.0, %v972
  %v1805 = vsub.f32 0.0, %v973
  %v1806 = vsub.f32 0.0, %v974
  %v1807 = vsub.f32 0.0, %v975
  %v1808 = vsub.f32 0.0, %v976
  %v1809 = vsub.f32 0.0, %v977
  %v1810 = vsub.f32 0.0, %v978
  %v1811 = vsub.f32 0.0, %v979
  %v1812 = vsub.f32 0.0, %v980
  %v1813 = vsub.f32 0.0, %v981
  %v1814 = vsub.f32 0.0, %v982
  %v1815 = vsub.f32 0.0, %v983
  %v1816 = vsub.f32 0.0, %v984
  %v1817 = vsub.f32 0.0, %v985
  %v1818 = vsub.f32 0.0, %v986
  %v1819 = vsub.f32 0.0, %v987
  %v1820 = vsub.f32 0.0, %v988
  %v1821 = vsub.f32 0.0, %v989
  %v1822 = vsub.f32 0.0, %v990
  %v1823 = vsub.f32 0.0, %v991
  %v1824 = vsub.f32 0.0, %v992
  %v1825 = vsub.f32 0.0, %v993
  %v1826 = vsub.f32 0.0, %v994
  %v1827 = vsub.f32 0.0, %v995
  %v1828 = vsub.f32 0.0, %v996
  %v1829 = vsub.f32 0.0, %v997
  %v1830 = vsub.f32 0.0, %v998
  %v1831 = vsub.f32 0.0, %v999
  %v1832 = vsub.f32 0.0, %v1000
  %v1833 = vsub.f32 0.0, %v1001
  %v1834 = vsub.f32 0.0, %v1002
  %v1835 = vsub.f32 0.0, %v1003
  %v1836 = vsub.f32 0.0, %v1004
  %v1837 = vsub.f32 0.0, %v1005
  %v1838 = vsub.f32 0.0, %v1006
  %v1839 = vsub.f32 0.0, %v1007
  %v1840 = vsub.f32 0.0, %v1008
  %v1841 = vsub.f32 0.0, %v1009
  %v1842 = vsub.f32 0.0, %v1010
  %v1843 = vsub.f32 0.0, %v1011
  %v1844 = vsub.f32 0.0, %v1012
  %v1845 = vsub.f32 0.0, %v1013
  %v1846 = vsub.f32 0.0, %v1014
  %v1847 = vsub.f32 0.0, %v1015
  %v1848 = vmul.f32 %v1796, %v964
  %v1849 = vmul.f32 %v1797, %v965
  %v1850 = vmul.f32 %v1798, %v966
  %v1851 = vmul.f32 %v1799, %v967
  %v1852 = vmul.f32 %v1800, %v968
  %v1853 = vmul.f32 %v1801, %v969
  %v1854 = vmul.f32 %v1802, %v970
  %v1855 = vmul.f32 %v1803, %v971
  %v1856 = vmul.f32 %v1804, %v972
  %v1857 = vmul.f32 %v1805, %v973
  %v1858 = vmul.f32 %v1806, %v974
  %v1859 = vmul.f32 %v1807, %v975
  %v1860 = vmul.f32 %v1808, %v976
  %v1861 = vmul.f32 %v1809, %v977
  %v1862 = vmul.f32 %v1810, %v978
  %v1863 = vmul.f32 %v1811, %v979
  %v1864 = vmul.f32 %v1812, %v980
  %v1865 = vmul.f32 %v1813, %v981
  %v1866 = vmul.f32 %v1814, %v982
  %v1867 = vmul.f32 %v1815, %v983
  %v1868 = vmul.f32 %v1816, %v984
  %v1869 = vmul.f32 %v1817, %v985
  %v1870 = vmul.f32 %v1818, %v986
  %v1871 = vmul.f32 %v1819, %v987
  %v1872 = vmul.f32 %v1820, %v988
  %v1873 = vmul.f32 %v1821, %v989
  %v1874 = vmul.f32 %v1822, %v990
  %v1875 = vmul.f32 %v1823, %v991
  %v1876 = vmul.f32 %v1824, %v992
  %v1877 = vmul.f32 %v1825, %v993
  %v1878 = vmul.f32 %v1826, %v994
  %v1879 = vmul.f32 %v1827, %v995
  %v1880 = vmul.f32 %v1828, %v996
  %v1881 = vmul.f32 %v1829, %v997
  %v1882 = vmul.f32 %v1830, %v998
  %v1883 = vmul.f32 %v1831, %v999
  %v1884 = vmul.f32 %v1832, %v1000
  %v1885 = vmul.f32 %v1833, %v1001
  %v1886 = vmul.f32 %v1834, %v1002
  %v1887 = vmul.f32 %v1835, %v1003
  %v1888 = vmul.f32 %v1836, %v1004
  %v1889 = vmul.f32 %v1837, %v1005
  %v1890 = vmul.f32 %v1838, %v1006
  %v1891 = vmul.f32 %v1839, %v1007
  %v1892 = vmul.f32 %v1840, %v1008
  %v1893 = vmul.f32 %v1841, %v1009
  %v1894 = vmul.f32 %v1842, %v1010
  %v1895 = vmul.f32 %v1843, %v1011
  %v1896 = vmul.f32 %v1844, %v1012
  %v1897 = vmul.f32 %v1845, %v1013
  %v1898 = vmul.f32 %v1846, %v1014
  %v1899 = vmul.f32 %v1847, %v1015
  %v1900 = vmul.f32 %v1848, 1.442695
  %v1901 = vpow.pop %v1900
  %v1902 = vmul.f32 %v1849, 1.442695
  %v1903 = vpow.pop %v1902
  %v1904 = vmul.f32 %v1850, 1.442695
  %v1905 = vpow.pop %v1904
  %v1906 = vmul.f32 %v1851, 1.442695
  %v1907 = vpow.pop %v1906
  %v1908 = vmul.f32 %v1852, 1.442695
  %v1909 = vpow.pop %v1908
  %v1910 = vmul.f32 %v1853, 1.442695
  %v1911 = vpow.pop %v1910
  %v1912 = vmul.f32 %v1854, 1.442695
  %v1913 = vpow.pop %v1912
  %v1914 = vmul.f32 %v1855, 1.442695
  %v1915 = vpow.pop %v1914
  %v1916 = vmul.f32 %v1856, 1.442695
  %v1917 = vpow.pop %v1916
  %v1918 = vmul.f32 %v1857, 1.442695
  %v1919 = vpow.pop %v1918
  %v1920 = vmul.f32 %v1858, 1.442695
  %v1921 = vpow.pop %v1920
  %v1922 = vmul.f32 %v1859, 1.442695
  %v1923 = vpow.pop %v1922
  %v1924 = vmul.f32 %v1860, 1.442695
  %v1925 = vpow.pop %v1924
  %v1926 = vmul.f32 %v1861, 1.442695
  %v1927 = vpow.pop %v1926
  %v1928 = vmul.f32 %v1862, 1.442695
  %v1929 = vpow.pop %v1928
  %v1930 = vmul.f32 %v1863, 1.442695
  %v1931 = vpow.pop %v1930
  %v1932 = vmul.f32 %v1864, 1.442695
  %v1933 = vpow.pop %v1932
  %v1934 = vmul.f32 %v1865, 1.442695
  %v1935 = vpow.pop %v1934
  %v1936 = vmul.f32 %v1866, 1.442695
  %v1937 = vpow.pop %v1936
  %v1938 = vmul.f32 %v1867, 1.442695
  %v1939 = vpow.pop %v1938
  %v1940 = vmul.f32 %v1868, 1.442695
  %v1941 = vpow.pop %v1940
  %v1942 = vmul.f32 %v1869, 1.442695
  %v1943 = vpow.pop %v1942
  %v1944 = vmul.f32 %v1870, 1.442695
  %v1945 = vpow.pop %v1944
  %v1946 = vmul.f32 %v1871, 1.442695
  %v1947 = vpow.pop %v1946
  %v1948 = vmul.f32 %v1872, 1.442695
  %v1949 = vpow.pop %v1948
  %v1950 = vmul.f32 %v1873, 1.442695
  %v1951 = vpow.pop %v1950
  %v1952 = vmul.f32 %v1874, 1.442695
  %v1953 = vpow.pop %v1952
  %v1954 = vmul.f32 %v1875, 1.442695
  %v1955 = vpow.pop %v1954
  %v1956 = vmul.f32 %v1876, 1.442695
  %v1957 = vpow.pop %v1956
  %v1958 = vmul.f32 %v1877, 1.442695
  %v1959 = vpow.pop %v1958
  %v1960 = vmul.f32 %v1878, 1.442695
  %v1961 = vpow.pop %v1960
  %v1962 = vmul.f32 %v1879, 1.442695
  %v1963 = vpow.pop %v1962
  %v1964 = vmul.f32 %v1880, 1.442695
  %v1965 = vpow.pop %v1964
  %v1966 = vmul.f32 %v1881, 1.442695
  %v1967 = vpow.pop %v1966
  %v1968 = vmul.f32 %v1882, 1.442695
  %v1969 = vpow.pop %v1968
  %v1970 = vmul.f32 %v1883, 1.442695
  %v1971 = vpow.pop %v1970
  %v1972 = vmul.f32 %v1884, 1.442695
  %v1973 = vpow.pop %v1972
  %v1974 = vmul.f32 %v1885, 1.442695
  %v1975 = vpow.pop %v1974
  %v1976 = vmul.f32 %v1886, 1.442695
  %v1977 = vpow.pop %v1976
  %v1978 = vmul.f32 %v1887, 1.442695
  %v1979 = vpow.pop %v1978
  %v1980 = vmul.f32 %v1888, 1.442695
  %v1981 = vpow.pop %v1980
  %v1982 = vmul.f32 %v1889, 1.442695
  %v1983 = vpow.pop %v1982
  %v1984 = vmul.f32 %v1890, 1.442695
  %v1985 = vpow.pop %v1984
  %v1986 = vmul.f32 %v1891, 1.442695
  %v1987 = vpow.pop %v1986
  %v1988 = vmul.f32 %v1892, 1.442695
  %v1989 = vpow.pop %v1988
  %v1990 = vmul.f32 %v1893, 1.442695
  %v1991 = vpow.pop %v1990
  %v1992 = vmul.f32 %v1894, 1.442695
  %v1993 = vpow.pop %v1992
  %v1994 = vmul.f32 %v1895, 1.442695
  %v1995 = vpow.pop %v1994
  %v1996 = vmul.f32 %v1896, 1.442695
  %v1997 = vpow.pop %v1996
  %v1998 = vmul.f32 %v1897, 1.442695
  %v1999 = vpow.pop %v1998
  %v2000 = vmul.f32 %v1898, 1.442695
  %v2001 = vpow.pop %v2000
  %v2002 = vmul.f32 %v1899, 1.442695
  %v2003 = vpow.pop %v2002
  %v2004 = vmul.f32 %v1744, %v1901
  %v2005 = vmul.f32 %v1745, %v1903
  %v2006 = vmul.f32 %v1746, %v1905
  %v2007 = vmul.f32 %v1747, %v1907
  %v2008 = vmul.f32 %v1748, %v1909
  %v2009 = vmul.f32 %v1749, %v1911
  %v2010 = vmul.f32 %v1750, %v1913
  %v2011 = vmul.f32 %v1751, %v1915
  %v2012 = vmul.f32 %v1752, %v1917
  %v2013 = vmul.f32 %v1753, %v1919
  %v2014 = vmul.f32 %v1754, %v1921
  %v2015 = vmul.f32 %v1755, %v1923
  %v2016 = vmul.f32 %v1756, %v1925
  %v2017 = vmul.f32 %v1757, %v1927
  %v2018 = vmul.f32 %v1758, %v1929
  %v2019 = vmul.f32 %v1759, %v1931
  %v2020 = vmul.f32 %v1760, %v1933
  %v2021 = vmul.f32 %v1761, %v1935
  %v2022 = vmul.f32 %v1762, %v1937
  %v2023 = vmul.f32 %v1763, %v1939
  %v2024 = vmul.f32 %v1764, %v1941
  %v2025 = vmul.f32 %v1765, %v1943
  %v2026 = vmul.f32 %v1766, %v1945
  %v2027 = vmul.f32 %v1767, %v1947
  %v2028 = vmul.f32 %v1768, %v1949
  %v2029 = vmul.f32 %v1769, %v1951
  %v2030 = vmul.f32 %v1770, %v1953
  %v2031 = vmul.f32 %v1771, %v1955
  %v2032 = vmul.f32 %v1772, %v1957
  %v2033 = vmul.f32 %v1773, %v1959
  %v2034 = vmul.f32 %v1774, %v1961
  %v2035 = vmul.f32 %v1775, %v1963
  %v2036 = vmul.f32 %v1776, %v1965
  %v2037 = vmul.f32 %v1777, %v1967
  %v2038 = vmul.f32 %v1778, %v1969
  %v2039 = vmul.f32 %v1779, %v1971
  %v2040 = vmul.f32 %v1780, %v1973
  %v2041 = vmul.f32 %v1781, %v1975
  %v2042 = vmul.f32 %v1782, %v1977
  %v2043 = vmul.f32 %v1783, %v1979
  %v2044 = vmul.f32 %v1784, %v1981
  %v2045 = vmul.f32 %v1785, %v1983
  %v2046 = vmul.f32 %v1786, %v1985
  %v2047 = vmul.f32 %v1787, %v1987
  %v2048 = vmul.f32 %v1788, %v1989
  %v2049 = vmul.f32 %v1789, %v1991
  %v2050 = vmul.f32 %v1790, %v1993
  %v2051 = vmul.f32 %v1791, %v1995
  %v2052 = vmul.f32 %v1792, %v1997
  %v2053 = vmul.f32 %v1793, %v1999
  %v2054 = vmul.f32 %v1794, %v2001
  %v2055 = vmul.f32 %v1795, %v2003
  %vm2056 = vcmp.ge.f32.partialorder %v360, 0.0
  %vm2057 = vcmp.ge.f32.partialorder %v362, 0.0
  %vm2058 = vcmp.ge.f32.partialorder %v449, 0.0
  %vm2059 = vcmp.ge.f32.partialorder %v451, 0.0
  %vm2060 = vcmp.ge.f32.partialorder %v538, 0.0
  %vm2061 = vcmp.ge.f32.partialorder %v540, 0.0
  %vm2062 = vcmp.ge.f32.partialorder %v627, 0.0
  %vm2063 = vcmp.ge.f32.partialorder %v629, 0.0
  %vm2064 = vcmp.ge.f32.partialorder %v716, 0.0
  %vm2065 = vcmp.ge.f32.partialorder %v718, 0.0
  %vm2066 = vcmp.ge.f32.partialorder %v805, 0.0
  %vm2067 = vcmp.ge.f32.partialorder %v807, 0.0
  %vm2068 = vcmp.ge.f32.partialorder %v894, 0.0
  %vm2069 = vcmp.ge.f32.partialorder %v366, 0.0
  %vm2070 = vcmp.ge.f32.partialorder %v368, 0.0
  %vm2071 = vcmp.ge.f32.partialorder %v455, 0.0
  %vm2072 = vcmp.ge.f32.partialorder %v457, 0.0
  %vm2073 = vcmp.ge.f32.partialorder %v544, 0.0
  %vm2074 = vcmp.ge.f32.partialorder %v546, 0.0
  %vm2075 = vcmp.ge.f32.partialorder %v633, 0.0
  %vm2076 = vcmp.ge.f32.partialorder %v635, 0.0
  %vm2077 = vcmp.ge.f32.partialorder %v722, 0.0
  %vm2078 = vcmp.ge.f32.partialorder %v724, 0.0
  %vm2079 = vcmp.ge.f32.partialorder %v811, 0.0
  %vm2080 = vcmp.ge.f32.partialorder %v813, 0.0
  %vm2081 = vcmp.ge.f32.partialorder %v899, 0.0
  %vm2082 = vcmp.ge.f32.partialorder %v372, 0.0
  %vm2083 = vcmp.ge.f32.partialorder %v374, 0.0
  %vm2084 = vcmp.ge.f32.partialorder %v461, 0.0
  %vm2085 = vcmp.ge.f32.partialorder %v463, 0.0
  %vm2086 = vcmp.ge.f32.partialorder %v550, 0.0
  %vm2087 = vcmp.ge.f32.partialorder %v552, 0.0
  %vm2088 = vcmp.ge.f32.partialorder %v639, 0.0
  %vm2089 = vcmp.ge.f32.partialorder %v641, 0.0
  %vm2090 = vcmp.ge.f32.partialorder %v728, 0.0
  %vm2091 = vcmp.ge.f32.partialorder %v730, 0.0
  %vm2092 = vcmp.ge.f32.partialorder %v817, 0.0
  %vm2093 = vcmp.ge.f32.partialorder %v819, 0.0
  %vm2094 = vcmp.ge.f32.partialorder %v904, 0.0
  %vm2095 = vcmp.ge.f32.partialorder %v378, 0.0
  %vm2096 = vcmp.ge.f32.partialorder %v380, 0.0
  %vm2097 = vcmp.ge.f32.partialorder %v467, 0.0
  %vm2098 = vcmp.ge.f32.partialorder %v469, 0.0
  %vm2099 = vcmp.ge.f32.partialorder %v556, 0.0
  %vm2100 = vcmp.ge.f32.partialorder %v558, 0.0
  %vm2101 = vcmp.ge.f32.partialorder %v645, 0.0
  %vm2102 = vcmp.ge.f32.partialorder %v647, 0.0
  %vm2103 = vcmp.ge.f32.partialorder %v734, 0.0
  %vm2104 = vcmp.ge.f32.partialorder %v736, 0.0
  %vm2105 = vcmp.ge.f32.partialorder %v823, 0.0
  %vm2106 = vcmp.ge.f32.partialorder %v825, 0.0
  %vm2107 = vcmp.ge.f32.partialorder %v909, 0.0
  %v2108 = vsub.f32 %v360, %v2004
  %v2109 = vsub.f32 %v362, %v2005
  %v2110 = vsub.f32 %v449, %v2006
  %v2111 = vsub.f32 %v451, %v2007
  %v2112 = vsub.f32 %v538, %v2008
  %v2113 = vsub.f32 %v540, %v2009
  %v2114 = vsub.f32 %v627, %v2010
  %v2115 = vsub.f32 %v629, %v2011
  %v2116 = vsub.f32 %v716, %v2012
  %v2117 = vsub.f32 %v718, %v2013
  %v2118 = vsub.f32 %v805, %v2014
  %v2119 = vsub.f32 %v807, %v2015
  %v2120 = vsub.f32 %v894, %v2016
  %v2121 = vsub.f32 %v366, %v2017
  %v2122 = vsub.f32 %v368, %v2018
  %v2123 = vsub.f32 %v455, %v2019
  %v2124 = vsub.f32 %v457, %v2020
  %v2125 = vsub.f32 %v544, %v2021
  %v2126 = vsub.f32 %v546, %v2022
  %v2127 = vsub.f32 %v633, %v2023
  %v2128 = vsub.f32 %v635, %v2024
  %v2129 = vsub.f32 %v722, %v2025
  %v2130 = vsub.f32 %v724, %v2026
  %v2131 = vsub.f32 %v811, %v2027
  %v2132 = vsub.f32 %v813, %v2028
  %v2133 = vsub.f32 %v899, %v2029
  %v2134 = vsub.f32 %v372, %v2030
  %v2135 = vsub.f32 %v374, %v2031
  %v2136 = vsub.f32 %v461, %v2032
  %v2137 = vsub.f32 %v463, %v2033
  %v2138 = vsub.f32 %v550, %v2034
  %v2139 = vsub.f32 %v552, %v2035
  %v2140 = vsub.f32 %v639, %v2036
  %v2141 = vsub.f32 %v641, %v2037
  %v2142 = vsub.f32 %v728, %v2038
  %v2143 = vsub.f32 %v730, %v2039
  %v2144 = vsub.f32 %v817, %v2040
  %v2145 = vsub.f32 %v819, %v2041
  %v2146 = vsub.f32 %v904, %v2042
  %v2147 = vsub.f32 %v378, %v2043
  %v2148 = vsub.f32 %v380, %v2044
  %v2149 = vsub.f32 %v467, %v2045
  %v2150 = vsub.f32 %v469, %v2046
  %v2151 = vsub.f32 %v556, %v2047
  %v2152 = vsub.f32 %v558, %v2048
  %v2153 = vsub.f32 %v645, %v2049
  %v2154 = vsub.f32 %v647, %v2050
  %v2155 = vsub.f32 %v734, %v2051
  %v2156 = vsub.f32 %v736, %v2052
  %v2157 = vsub.f32 %v823, %v2053
  %v2158 = vsub.f32 %v825, %v2054
  %v2159 = vsub.f32 %v909, %v2055
  %v2160 = vsel %vm2056, %v2108, %v2004
  %v2161 = vsel %vm2057, %v2109, %v2005
  %v2162 = vsel %vm2058, %v2110, %v2006
  %v2163 = vsel %vm2059, %v2111, %v2007
  %v2164 = vsel %vm2060, %v2112, %v2008
  %v2165 = vsel %vm2061, %v2113, %v2009
  %v2166 = vsel %vm2062, %v2114, %v2010
  %v2167 = vsel %vm2063, %v2115, %v2011
  %v2168 = vsel %vm2064, %v2116, %v2012
  %v2169 = vsel %vm2065, %v2117, %v2013
  %v2170 = vsel %vm2066, %v2118, %v2014
  %v2171 = vsel %vm2067, %v2119, %v2015
  %v2172 = vsel %vm2068, %v2120, %v2016
  %v2173 = vsel %vm2069, %v2121, %v2017
  %v2174 = vsel %vm2070, %v2122, %v2018
  %v2175 = vsel %vm2071, %v2123, %v2019
  %v2176 = vsel %vm2072, %v2124, %v2020
  %v2177 = vsel %vm2073, %v2125, %v2021
  %v2178 = vsel %vm2074, %v2126, %v2022
  %v2179 = vsel %vm2075, %v2127, %v2023
  %v2180 = vsel %vm2076, %v2128, %v2024
  %v2181 = vsel %vm2077, %v2129, %v2025
  %v2182 = vsel %vm2078, %v2130, %v2026
  %v2183 = vsel %vm2079, %v2131, %v2027
  %v2184 = vsel %vm2080, %v2132, %v2028
  %v2185 = vsel %vm2081, %v2133, %v2029
  %v2186 = vsel %vm2082, %v2134, %v2030
  %v2187 = vsel %vm2083, %v2135, %v2031
  %v2188 = vsel %vm2084, %v2136, %v2032
  %v2189 = vsel %vm2085, %v2137, %v2033
  %v2190 = vsel %vm2086, %v2138, %v2034
  %v2191 = vsel %vm2087, %v2139, %v2035
  %v2192 = vsel %vm2088, %v2140, %v2036
  %v2193 = vsel %vm2089, %v2141, %v2037
  %v2194 = vsel %vm2090, %v2142, %v2038
  %v2195 = vsel %vm2091, %v2143, %v2039
  %v2196 = vsel %vm2092, %v2144, %v2040
  %v2197 = vsel %vm2093, %v2145, %v2041
  %v2198 = vsel %vm2094, %v2146, %v2042
  %v2199 = vsel %vm2095, %v2147, %v2043
  %v2200 = vsel %vm2096, %v2148, %v2044
  %v2201 = vsel %vm2097, %v2149, %v2045
  %v2202 = vsel %vm2098, %v2150, %v2046
  %v2203 = vsel %vm2099, %v2151, %v2047
  %v2204 = vsel %vm2100, %v2152, %v2048
  %v2205 = vsel %vm2101, %v2153, %v2049
  %v2206 = vsel %vm2102, %v2154, %v2050
  %v2207 = vsel %vm2103, %v2155, %v2051
  %v2208 = vsel %vm2104, %v2156, %v2052
  %v2209 = vsel %vm2105, %v2157, %v2053
  %v2210 = vsel %vm2106, %v2158, %v2054
  %v2211 = vsel %vm2107, %v2159, %v2055
  %2212 = vst [vmem:[%s3] sm:$0xff] %v2160
  %2213 = vst [vmem:[%s3 + $0x8] sm:$0xff] %v2161
  %2214 = vst [vmem:[%s3 + $0x10] sm:$0xff] %v2162
  %2215 = vst [vmem:[%s3 + $0x18] sm:$0xff] %v2163
  %2216 = vst [vmem:[%s3 + $0x20] sm:$0xff] %v2164
  %2217 = vst [vmem:[%s3 + $0x28] sm:$0xff] %v2165
  %2218 = vst [vmem:[%s3 + $0x30] sm:$0xff] %v2166
  %2219 = vst [vmem:[%s3 + $0x38] sm:$0xff] %v2167
  %2220 = vst [vmem:[%s3 + $0x40] sm:$0xff] %v2168
  %2221 = vst [vmem:[%s3 + $0x48] sm:$0xff] %v2169
  %2222 = vst [vmem:[%s3 + $0x50] sm:$0xff] %v2170
  %2223 = vst [vmem:[%s3 + $0x58] sm:$0xff] %v2171
  %vm2224 = vcmask 261120
  %2225 = vst.msk [vmem:[%s3 + $0x60] sm:$0xff] %vm2224, %v2172
  %2226 = vst [vmem:[%s3 + $0x68] sm:$0xff] %v2173
  %2227 = vst [vmem:[%s3 + $0x70] sm:$0xff] %v2174
  %2228 = vst [vmem:[%s3 + $0x78] sm:$0xff] %v2175
  %2229 = vst [vmem:[%s3 + $0x80] sm:$0xff] %v2176
  %2230 = vst [vmem:[%s3 + $0x88] sm:$0xff] %v2177
  %2231 = vst [vmem:[%s3 + $0x90] sm:$0xff] %v2178
  %2232 = vst [vmem:[%s3 + $0x98] sm:$0xff] %v2179
  %2233 = vst [vmem:[%s3 + $0xa0] sm:$0xff] %v2180
  %2234 = vst [vmem:[%s3 + $0xa8] sm:$0xff] %v2181
  %2235 = vst [vmem:[%s3 + $0xb0] sm:$0xff] %v2182
  %2236 = vst [vmem:[%s3 + $0xb8] sm:$0xff] %v2183
  %2237 = vst [vmem:[%s3 + $0xc0] sm:$0xff] %v2184
  %2238 = vst.msk [vmem:[%s3 + $0xc8] sm:$0xff] %vm2224, %v2185
  %2239 = vst [vmem:[%s3 + $0xd0] sm:$0xff] %v2186
  %2240 = vst [vmem:[%s3 + $0xd8] sm:$0xff] %v2187
  %2241 = vst [vmem:[%s3 + $0xe0] sm:$0xff] %v2188
  %2242 = vst [vmem:[%s3 + $0xe8] sm:$0xff] %v2189
  %2243 = vst [vmem:[%s3 + $0xf0] sm:$0xff] %v2190
  %2244 = vst [vmem:[%s3 + $0xf8] sm:$0xff] %v2191
  %2245 = vst [vmem:[%s3 + $0x100] sm:$0xff] %v2192
  %2246 = vst [vmem:[%s3 + $0x108] sm:$0xff] %v2193
  %2247 = vst [vmem:[%s3 + $0x110] sm:$0xff] %v2194
  %2248 = vst [vmem:[%s3 + $0x118] sm:$0xff] %v2195
  %2249 = vst [vmem:[%s3 + $0x120] sm:$0xff] %v2196
  %2250 = vst [vmem:[%s3 + $0x128] sm:$0xff] %v2197
  %2251 = vst.msk [vmem:[%s3 + $0x130] sm:$0xff] %vm2224, %v2198
  %2252 = vst [vmem:[%s3 + $0x138] sm:$0xff] %v2199
  %2253 = vst [vmem:[%s3 + $0x140] sm:$0xff] %v2200
  %2254 = vst [vmem:[%s3 + $0x148] sm:$0xff] %v2201
  %2255 = vst [vmem:[%s3 + $0x150] sm:$0xff] %v2202
  %2256 = vst [vmem:[%s3 + $0x158] sm:$0xff] %v2203
  %2257 = vst [vmem:[%s3 + $0x160] sm:$0xff] %v2204
  %2258 = vst [vmem:[%s3 + $0x168] sm:$0xff] %v2205
  %2259 = vst [vmem:[%s3 + $0x170] sm:$0xff] %v2206
  %2260 = vst [vmem:[%s3 + $0x178] sm:$0xff] %v2207
  %2261 = vst [vmem:[%s3 + $0x180] sm:$0xff] %v2208
  %2262 = vst [vmem:[%s3 + $0x188] sm:$0xff] %v2209
  %2263 = vst [vmem:[%s3 + $0x190] sm:$0xff] %v2210
  %2264 = vst.msk [vmem:[%s3 + $0x198] sm:$0xff] %vm2224, %v2211
  // Predicated region
  $region14: #{encoder_forward.8} parent=0 // pred_check
    _
  $region15: #{encoder_forward.8} parent=0 // pred_check_branch
    %2266 = sbr.rel (0) target = $region17
  $region16: #{encoder_forward.8} parent=0 // pred_region
    _
  $region17: #{encoder_forward.8} parent=0 // pred_fallthru
    _
  // Predicated region
  $region18: #{encoder_forward.8} parent=0 // pred_check
    _
  $region19: #{encoder_forward.8} parent=0 // pred_check_branch
    %2268 = sbr.rel (0) target = $region21
  $region20: #{encoder_forward.8} parent=0 // pred_region
    _
  $region21: #{encoder_forward.8} parent=0 // pred_fallthru
    _

// kernel: encoder_forward.9
$region0: #{encoder_forward.9}
  #allocation0 [shape = 'u32[]', space=smem, size = 0x4, offset = 0x4, fixed_abs, tag = 'smem constant byte address 0x4 - core index']
  #allocation1 [shape = 'u32[144,128]{1,0:T(1,128)}', space=vmem, size = 0x12000, scoped, tag = 'internal scratch']
  %s0 = inlined_call_operand.vmem [shape: f32[64,288], index: 0, kind: input, shape index: {}]
  %s1 = inlined_call_operand.vmem [shape: f32[288,288], index: 1, kind: input, shape index: {}]
  %s2 = inlined_call_operand.vmem [shape: f32[64,1], index: 2, kind: input, shape index: {}]
  %s3 = inlined_call_operand.vmem [shape: f32[64,288], index: 3, kind: output, shape index: {}]
  %s4 = sld [smem:[#allocation0]]
  $region22: #{encoder_forward.9} parent=0
    _
  %s6 = ssub.s32 1, %s4
  %s7 = scalar_select 0, %s6, %s4
  // Predicated region
  $region2: #{encoder_forward.9} parent=0 // pred_check
    _
  $region3: #{encoder_forward.9} parent=0 // pred_check_branch
    %9 = sbr.rel (0) target = $region5
  $region4: #{encoder_forward.9} parent=0 // pred_region
    _
  $region5: #{encoder_forward.9} parent=0 // pred_fallthru
    _
  // Predicated region
  $region6: #{encoder_forward.9} parent=0 // pred_check
    _
  $region7: #{encoder_forward.9} parent=0 // pred_check_branch
    %11 = sbr.rel (0) target = $region9
  $region8: #{encoder_forward.9} parent=0 // pred_region
    _
  $region9: #{encoder_forward.9} parent=0 // pred_fallthru
    _
  // Predicated region
  $region10: #{encoder_forward.9} parent=0 // pred_check
    _
  $region11: #{encoder_forward.9} parent=0 // pred_check_branch
    %13 = sbr.rel (0) target = $region13
  $region12: #{encoder_forward.9} parent=0 // pred_region
    _
  $region13: #{encoder_forward.9} parent=0 // pred_fallthru
    _
  %v14 = vld [vmem:[%s0] sm:$0xff]
  %v15 = vld [vmem:[%s0 + $0x8] sm:$0xff]
  %v16 = vld [vmem:[%s0 + $0x10] sm:$0xff]
  %v17 = vld [vmem:[%s0 + $0x18] sm:$0xff]
  %v18 = vld [vmem:[%s0 + $0x20] sm:$0xff]
  %v19 = vld [vmem:[%s0 + $0x28] sm:$0xff]
  %v20 = vld [vmem:[%s0 + $0x30] sm:$0xff]
  %v21 = vld [vmem:[%s0 + $0x38] sm:$0xff]
  %v22 = vld [vmem:[%s0 + $0x40] sm:$0xff]
  %v23 = vld [vmem:[%s0 + $0x48] sm:$0xff]
  %v24 = vld [vmem:[%s0 + $0x50] sm:$0xff]
  %v25 = vld [vmem:[%s0 + $0x58] sm:$0xff]
  %v26 = vld [vmem:[%s0 + $0x60] sm:$0xff]
  %v27 = vld [vmem:[%s0 + $0x68] sm:$0xff]
  %v28 = vld [vmem:[%s0 + $0x70] sm:$0xff]
  %v29 = vld [vmem:[%s0 + $0x78] sm:$0xff]
  %v30 = vld [vmem:[%s0 + $0x80] sm:$0xff]
  %v31 = vld [vmem:[%s0 + $0x88] sm:$0xff]
  %v32 = vld [vmem:[%s0 + $0x90] sm:$0xff]
  %v33 = vld [vmem:[%s0 + $0x98] sm:$0xff]
  %v34 = vld [vmem:[%s0 + $0xa0] sm:$0xff]
  %v35 = vld [vmem:[%s0 + $0xa8] sm:$0xff]
  %v36 = vld [vmem:[%s0 + $0xb0] sm:$0xff]
  %v37 = vld [vmem:[%s0 + $0xb8] sm:$0xff]
  %v38 = vld [vmem:[%s1] sm:$0xff]
  %v39 = vld [vmem:[%s1 + $0x8] sm:$0xff]
  %v40 = vld [vmem:[%s1 + $0x10] sm:$0xff]
  %v41 = vld [vmem:[%s1 + $0x18] sm:$0xff]
  %v42 = vld [vmem:[%s1 + $0x20] sm:$0xff]
  %v43 = vld [vmem:[%s1 + $0x28] sm:$0xff]
  %v44 = vld [vmem:[%s1 + $0x30] sm:$0xff]
  %v45 = vld [vmem:[%s1 + $0x38] sm:$0xff]
  %v46 = vld [vmem:[%s1 + $0x40] sm:$0xff]
  %v47 = vld [vmem:[%s1 + $0x48] sm:$0xff]
  %v48 = vld [vmem:[%s1 + $0x50] sm:$0xff]
  %v49 = vld [vmem:[%s1 + $0x58] sm:$0xff]
  %v50 = vld [vmem:[%s1 + $0x60] sm:$0xff]
  %v51 = vld [vmem:[%s1 + $0x68] sm:$0xff]
  %v52 = vld [vmem:[%s1 + $0x70] sm:$0xff]
  %v53 = vld [vmem:[%s1 + $0x78] sm:$0xff]
  %v54 = vld [vmem:[%s1 + $0x80] sm:$0xff]
  %v55 = vld [vmem:[%s1 + $0x88] sm:$0xff]
  %v56 = vld [vmem:[%s1 + $0x90] sm:$0xff]
  %v57 = vld [vmem:[%s1 + $0x98] sm:$0xff]
  %v58 = vld [vmem:[%s1 + $0xa0] sm:$0xff]
  %v59 = vld [vmem:[%s1 + $0xa8] sm:$0xff]
  %v60 = vld [vmem:[%s1 + $0xb0] sm:$0xff]
  %v61 = vld [vmem:[%s1 + $0xb8] sm:$0xff]
  %v62 = vld [vmem:[%s1 + $0xc0] sm:$0xff]
  %v63 = vld [vmem:[%s1 + $0xc8] sm:$0xff]
  %v64 = vld [vmem:[%s1 + $0xd0] sm:$0xff]
  %v65 = vld [vmem:[%s1 + $0xd8] sm:$0xff]
  %v66 = vld [vmem:[%s1 + $0xe0] sm:$0xff]
  %v67 = vld [vmem:[%s1 + $0xe8] sm:$0xff]
  %v68 = vld [vmem:[%s1 + $0xf0] sm:$0xff]
  %v69 = vld [vmem:[%s1 + $0xf8] sm:$0xff]
  %v70 = vld [vmem:[%s1 + $0x100] sm:$0xff]
  %v71 = vld [vmem:[%s1 + $0x108] sm:$0xff]
  %v72 = vld [vmem:[%s1 + $0x110] sm:$0xff]
  %v73 = vld [vmem:[%s1 + $0x118] sm:$0xff]
  %v74 = vld [vmem:[%s1 + $0x120] sm:$0xff]
  %v75 = vld [vmem:[%s1 + $0x128] sm:$0xff]
  %v76 = vld [vmem:[%s1 + $0x130] sm:$0xff]
  %v77 = vld [vmem:[%s1 + $0x138] sm:$0xff]
  %v78 = vld [vmem:[%s1 + $0x140] sm:$0xff]
  %v79 = vld [vmem:[%s1 + $0x148] sm:$0xff]
  %v80 = vld [vmem:[%s1 + $0x150] sm:$0xff]
  %v81 = vld [vmem:[%s1 + $0x158] sm:$0xff]
  %v82 = vld [vmem:[%s1 + $0x160] sm:$0xff]
  %v83 = vld [vmem:[%s1 + $0x168] sm:$0xff]
  %v84 = vld [vmem:[%s1 + $0x170] sm:$0xff]
  %v85 = vld [vmem:[%s1 + $0x178] sm:$0xff]
  %v86 = vld [vmem:[%s1 + $0x180] sm:$0xff]
  %v87 = vld [vmem:[%s1 + $0x188] sm:$0xff]
  %v88 = vld [vmem:[%s1 + $0x190] sm:$0xff]
  %v89 = vld [vmem:[%s1 + $0x198] sm:$0xff]
  %v90 = vld [vmem:[%s1 + $0x1a0] sm:$0xff]
  %v91 = vld [vmem:[%s1 + $0x1a8] sm:$0xff]
  %v92 = vld [vmem:[%s1 + $0x1b0] sm:$0xff]
  %v93 = vld [vmem:[%s1 + $0x1b8] sm:$0xff]
  %v94 = vld [vmem:[%s1 + $0x1c0] sm:$0xff]
  %v95 = vld [vmem:[%s1 + $0x1c8] sm:$0xff]
  %v96 = vld [vmem:[%s1 + $0x1d0] sm:$0xff]
  %v97 = vld [vmem:[%s1 + $0x1d8] sm:$0xff]
  %v98 = vld [vmem:[%s1 + $0x1e0] sm:$0xff]
  %v99 = vld [vmem:[%s1 + $0x1e8] sm:$0xff]
  %v100 = vld [vmem:[%s1 + $0x1f0] sm:$0xff]
  %v101 = vld [vmem:[%s1 + $0x1f8] sm:$0xff]
  %v102 = vld [vmem:[%s1 + $0x200] sm:$0xff]
  %v103 = vld [vmem:[%s1 + $0x208] sm:$0xff]
  %v104 = vld [vmem:[%s1 + $0x210] sm:$0xff]
  %v105 = vld [vmem:[%s1 + $0x218] sm:$0xff]
  %v106 = vld [vmem:[%s1 + $0x220] sm:$0xff]
  %v107 = vld [vmem:[%s1 + $0x228] sm:$0xff]
  %v108 = vld [vmem:[%s1 + $0x230] sm:$0xff]
  %v109 = vld [vmem:[%s1 + $0x238] sm:$0xff]
  %v110 = vld [vmem:[%s1 + $0x240] sm:$0xff]
  %v111 = vld [vmem:[%s1 + $0x248] sm:$0xff]
  %v112 = vld [vmem:[%s1 + $0x250] sm:$0xff]
  %v113 = vld [vmem:[%s1 + $0x258] sm:$0xff]
  %v114 = vld [vmem:[%s1 + $0x260] sm:$0xff]
  %v115 = vld [vmem:[%s1 + $0x268] sm:$0xff]
  %v116 = vld [vmem:[%s1 + $0x270] sm:$0xff]
  %v117 = vld [vmem:[%s1 + $0x278] sm:$0xff]
  %v118 = vld [vmem:[%s1 + $0x280] sm:$0xff]
  %v119 = vld [vmem:[%s1 + $0x288] sm:$0xff]
  %v120 = vld [vmem:[%s1 + $0x290] sm:$0xff]
  %v121 = vld [vmem:[%s1 + $0x298] sm:$0xff]
  %v122 = vld [vmem:[%s1 + $0x2a0] sm:$0xff]
  %v123 = vld [vmem:[%s1 + $0x2a8] sm:$0xff]
  %v124 = vld [vmem:[%s1 + $0x2b0] sm:$0xff]
  %v125 = vld [vmem:[%s1 + $0x2b8] sm:$0xff]
  %v126 = vld [vmem:[%s1 + $0x2c0] sm:$0xff]
  %v127 = vld [vmem:[%s1 + $0x2c8] sm:$0xff]
  %v128 = vld [vmem:[%s1 + $0x2d0] sm:$0xff]
  %v129 = vld [vmem:[%s1 + $0x2d8] sm:$0xff]
  %v130 = vld [vmem:[%s1 + $0x2e0] sm:$0xff]
  %v131 = vld [vmem:[%s1 + $0x2e8] sm:$0xff]
  %v132 = vld [vmem:[%s1 + $0x2f0] sm:$0xff]
  %v133 = vld [vmem:[%s1 + $0x2f8] sm:$0xff]
  %v134 = vld [vmem:[%s1 + $0x300] sm:$0xff]
  %v135 = vld [vmem:[%s1 + $0x308] sm:$0xff]
  %v136 = vld [vmem:[%s1 + $0x310] sm:$0xff]
  %v137 = vld [vmem:[%s1 + $0x318] sm:$0xff]
  %v138 = vld [vmem:[%s1 + $0x320] sm:$0xff]
  %v139 = vld [vmem:[%s1 + $0x328] sm:$0xff]
  %v140 = vld [vmem:[%s1 + $0x330] sm:$0xff]
  %v141 = vld [vmem:[%s1 + $0x338] sm:$0xff]
  %v142 = vld [vmem:[%s1 + $0x340] sm:$0xff]
  %v143 = vld [vmem:[%s1 + $0x348] sm:$0xff]
  %v144 = vld [vmem:[%s1 + $0x350] sm:$0xff]
  %v145 = vld [vmem:[%s1 + $0x358] sm:$0xff]
  %v146 = vld [vmem:[%s2] sm:$0xff]
  %v147 = vld [vmem:[%s2 + $0x8] sm:$0xff]
  %v148 = vld [vmem:[%s2 + $0x10] sm:$0xff]
  %v149 = vld [vmem:[%s2 + $0x18] sm:$0xff]
  %v150 = vld [vmem:[%s2 + $0x20] sm:$0xff]
  %v151 = vld [vmem:[%s2 + $0x28] sm:$0xff]
  %v152 = vld [vmem:[%s2 + $0x30] sm:$0xff]
  %v153 = vld [vmem:[%s2 + $0x38] sm:$0xff]
  %155 = vset.pattern.permute.xlu0 0
  %156 = vperm.xlu0 %155, %v146
  %v157 = vpop.permute.xlu0 %156
  %160 = vset.pattern.permute.xlu0 0
  %161 = vperm.xlu0 %160, %v147
  %v162 = vpop.permute.xlu0 %161
  %165 = vset.pattern.permute.xlu0 0
  %166 = vperm.xlu0 %165, %v148
  %v167 = vpop.permute.xlu0 %166
  %170 = vset.pattern.permute.xlu0 0
  %171 = vperm.xlu0 %170, %v149
  %v172 = vpop.permute.xlu0 %171
  %175 = vset.pattern.permute.xlu0 0
  %176 = vperm.xlu0 %175, %v150
  %v177 = vpop.permute.xlu0 %176
  %180 = vset.pattern.permute.xlu0 0
  %181 = vperm.xlu0 %180, %v151
  %v182 = vpop.permute.xlu0 %181
  %185 = vset.pattern.permute.xlu0 0
  %186 = vperm.xlu0 %185, %v152
  %v187 = vpop.permute.xlu0 %186
  %190 = vset.pattern.permute.xlu0 0
  %191 = vperm.xlu0 %190, %v153
  %v192 = vpop.permute.xlu0 %191
  %vm194 = vcmask 261120
  %v196 = vsel %vm194, %v16, 0
  %v199 = vsel %vm194, %v19, 0
  %v202 = vsel %vm194, %v22, 0
  %v205 = vsel %vm194, %v25, 0
  %v208 = vsel %vm194, %v28, 0
  %v211 = vsel %vm194, %v31, 0
  %v214 = vsel %vm194, %v34, 0
  %v217 = vsel %vm194, %v37, 0
  %219 = vmatprep.subr.mxu0 %v39
  %220 = vmatpush1.msra.mxu0 %v38
  %221 = vmatprep.subr.mxu0 %v42
  %222 = vmatpush1.msra.mxu0 %v41
  %223 = vmatprep.subr.mxu0 %v45
  %224 = vmatpush1.msra.mxu0 %v44
  %225 = vmatprep.subr.mxu0 %v48
  %226 = vmatpush1.msra.mxu0 %v47
  %227 = vmatprep.subr.mxu0 %v51
  %228 = vmatpush1.msra.mxu0 %v50
  %229 = vmatprep.subr.mxu0 %v54
  %230 = vmatpush1.msra.mxu0 %v53
  %231 = vmatprep.subr.mxu0 %v57
  %232 = vmatpush1.msra.mxu0 %v56
  %233 = vmatprep.subr.mxu0 %v60
  %234 = vmatpush1.msra.mxu0 %v59
  %235 = vmatprep.subr.mxu0 %v63
  %236 = vmatpush1.msra.mxu0 %v62
  %237 = vmatprep.subr.mxu0 %v66
  %238 = vmatpush1.msra.mxu0 %v65
  %239 = vmatprep.subr.mxu0 %v69
  %240 = vmatpush1.msra.mxu0 %v68
  %241 = vmatprep.subr.mxu0 %v72
  %242 = vmatpush1.msra.mxu0 %v71
  %243 = vmatprep.subr.mxu0 %v75
  %244 = vmatpush1.msra.mxu0 %v74
  %245 = vmatprep.subr.mxu0 %v78
  %246 = vmatpush1.msra.mxu0 %v77
  %247 = vmatprep.subr.mxu0 %v81
  %248 = vmatpush1.msra.mxu0 %v80
  %249 = vmatprep.subr.mxu0 %v84
  %250 = vmatpush1.msra.mxu0 %v83
  %251 = vmatprep.subr.mxu0 %v87
  %252 = vmatpush1.msra.mxu0 %v86
  %253 = vmatprep.subr.mxu0 %v90
  %254 = vmatpush1.msra.mxu0 %v89
  %255 = vmatprep.subr.mxu0 %v93
  %256 = vmatpush1.msra.mxu0 %v92
  %257 = vmatprep.subr.mxu0 %v96
  %258 = vmatpush1.msra.mxu0 %v95
  %259 = vmatprep.subr.mxu0 %v99
  %260 = vmatpush1.msra.mxu0 %v98
  %261 = vmatprep.subr.mxu0 %v102
  %262 = vmatpush1.msra.mxu0 %v101
  %263 = vmatprep.subr.mxu0 %v105
  %264 = vmatpush1.msra.mxu0 %v104
  %265 = vmatprep.subr.mxu0 %v108
  %266 = vmatpush1.msra.mxu0 %v107
  %267 = vmatprep.subr.mxu0 %v111
  %268 = vmatpush1.msra.mxu0 %v110
  %269 = vmatprep.subr.mxu0 %v114
  %270 = vmatpush1.msra.mxu0 %v113
  %271 = vmatprep.subr.mxu0 %v117
  %272 = vmatpush1.msra.mxu0 %v116
  %273 = vmatprep.subr.mxu0 %v120
  %274 = vmatpush1.msra.mxu0 %v119
  %275 = vmatprep.subr.mxu0 %v123
  %276 = vmatpush1.msra.mxu0 %v122
  %277 = vmatprep.subr.mxu0 %v126
  %278 = vmatpush1.msra.mxu0 %v125
  %279 = vmatprep.subr.mxu0 %v129
  %280 = vmatpush1.msra.mxu0 %v128
  %281 = vmatprep.subr.mxu0 %v132
  %282 = vmatpush1.msra.mxu0 %v131
  %283 = vmatprep.mubr.f32.mxu0 %v15
  %284 = vmatmul.mubr.f32.gmra.mrb[0].mxu0 %v14
  %v285 = vpop.f32.mrb[0].mxu0
  %v286 = vadd.f32 %v157, %v285
  %v287 = vpop.f32.mrb[0].mxu0
  %v288 = vadd.f32 %v157, %v287
  %289 = vmatprep.mubr.f32.mxu0 %v18
  %290 = vmatmul.mubr.f32.gmra.mrb[0].mxu0 %v17
  %v291 = vpop.f32.mrb[0].mxu0
  %v292 = vadd.f32 %v162, %v291
  %v293 = vpop.f32.mrb[0].mxu0
  %v294 = vadd.f32 %v162, %v293
  %295 = vmatprep.mubr.f32.mxu0 %v21
  %296 = vmatmul.mubr.f32.gmra.mrb[0].mxu0 %v20
  %v297 = vpop.f32.mrb[0].mxu0
  %v298 = vadd.f32 %v167, %v297
  %v299 = vpop.f32.mrb[0].mxu0
  %v300 = vadd.f32 %v167, %v299
  %301 = vmatprep.mubr.f32.mxu0 %v24
  %302 = vmatmul.mubr.f32.gmra.mrb[0].mxu0 %v23
  %v303 = vpop.f32.mrb[0].mxu0
  %v304 = vadd.f32 %v172, %v303
  %v305 = vpop.f32.mrb[0].mxu0
  %v306 = vadd.f32 %v172, %v305
  %307 = vmatprep.mubr.f32.mxu0 %v27
  %308 = vmatmul.mubr.f32.gmra.mrb[0].mxu0 %v26
  %v309 = vpop.f32.mrb[0].mxu0
  %v310 = vadd.f32 %v177, %v309
  %v311 = vpop.f32.mrb[0].mxu0
  %v312 = vadd.f32 %v177, %v311
  %313 = vmatprep.mubr.f32.mxu0 %v30
  %314 = vmatmul.mubr.f32.gmra.mrb[0].mxu0 %v29
  %v315 = vpop.f32.mrb[0].mxu0
  %v316 = vadd.f32 %v182, %v315
  %v317 = vpop.f32.mrb[0].mxu0
  %v318 = vadd.f32 %v182, %v317
  %319 = vmatprep.mubr.f32.mxu0 %v33
  %320 = vmatmul.mubr.f32.gmra.mrb[0].mxu0 %v32
  %v321 = vpop.f32.mrb[0].mxu0
  %v322 = vadd.f32 %v187, %v321
  %v323 = vpop.f32.mrb[0].mxu0
  %v324 = vadd.f32 %v187, %v323
  %325 = vmatprep.mubr.f32.mxu0 %v36
  %326 = vmatmul.mubr.f32.gmra.mrb[0].mxu0 %v35
  %v327 = vpop.f32.mrb[0].mxu0
  %v328 = vadd.f32 %v192, %v327
  %v329 = vpop.f32.mrb[0].mxu0
  %v330 = vadd.f32 %v192, %v329
  %331 = vdwg.mxu0
  %332 = vmatprep.subr.mxu0 %v135
  %333 = vmatpush1.msra.mxu0 %v134
  %334 = vmatprep.subr.mxu0 %v138
  %335 = vmatpush1.msra.mxu0 %v137
  %336 = vmatprep.subr.mxu0 %v141
  %337 = vmatpush1.msra.mxu0 %v140
  %338 = vmatprep.subr.mxu0 %v144
  %339 = vmatpush1.msra.mxu0 %v143
  %340 = vmatprep.subr.mxu0 0.0
  %341 = vmatpush1.msra.mxu0 0.0
  %342 = vmatprep.subr.mxu0 0.0
  %343 = vmatpush1.msra.mxu0 0.0
  %344 = vmatprep.subr.mxu0 0.0
  %345 = vmatpush1.msra.mxu0 0.0
  %346 = vmatprep.subr.mxu0 0.0
  %347 = vmatpush1.msra.mxu0 0.0
  %348 = vmatprep.subr.mxu0 0.0
  %349 = vmatpush1.msra.mxu0 0.0
  %350 = vmatprep.subr.mxu0 0.0
  %351 = vmatpush1.msra.mxu0 0.0
  %352 = vmatprep.subr.mxu0 0.0
  %353 = vmatpush1.msra.mxu0 0.0
  %354 = vmatprep.subr.mxu0 0.0
  %355 = vmatpush1.msra.mxu0 0.0
  %356 = vmatprep.subr.mxu0 0.0
  %357 = vmatpush1.msra.mxu0 0.0
  %358 = vmatprep.subr.mxu0 0.0
  %359 = vmatpush1.msra.mxu0 0.0
  %360 = vmatprep.subr.mxu0 0.0
  %361 = vmatpush1.msra.mxu0 0.0
  %362 = vmatprep.subr.mxu0 0.0
  %363 = vmatpush1.msra.mxu0 0.0
  %364 = vmatprep.subr.mxu0 0.0
  %365 = vmatpush1.msra.mxu0 0.0
  %366 = vmatprep.subr.mxu0 0.0
  %367 = vmatpush1.msra.mxu0 0.0
  %368 = vmatprep.subr.mxu0 0.0
  %369 = vmatpush1.msra.mxu0 0.0
  %370 = vmatprep.subr.mxu0 0.0
  %371 = vmatpush1.msra.mxu0 0.0
  %372 = vmatprep.subr.mxu0 0.0
  %373 = vmatpush1.msra.mxu0 0.0
  %374 = vmatprep.subr.mxu0 0.0
  %375 = vmatpush1.msra.mxu0 0.0
  %376 = vmatprep.subr.mxu0 0.0
  %377 = vmatpush1.msra.mxu0 0.0
  %378 = vmatprep.subr.mxu0 0.0
  %379 = vmatpush1.msra.mxu0 0.0
  %380 = vmatprep.subr.mxu0 0.0
  %381 = vmatpush1.msra.mxu0 0.0
  %382 = vmatprep.subr.mxu0 0.0
  %383 = vmatpush1.msra.mxu0 0.0
  %384 = vmatprep.subr.mxu0 0.0
  %385 = vmatpush1.msra.mxu0 0.0
  %386 = vmatprep.subr.mxu0 0.0
  %387 = vmatpush1.msra.mxu0 0.0
  %388 = vmatprep.subr.mxu0 0.0
  %389 = vmatpush1.msra.mxu0 0.0
  %390 = vmatprep.subr.mxu0 0.0
  %391 = vmatpush1.msra.mxu0 0.0
  %392 = vmatprep.subr.mxu0 0.0
  %393 = vmatpush1.msra.mxu0 0.0
  %394 = vmatprep.subr.mxu0 0.0
  %395 = vmatpush1.msra.mxu0 0.0
  %396 = vmatprep.mubr.f32.mxu0 0.0
  %397 = vmatmul.mubr.f32.gmra.mrb[0].mxu0 %v196
  %v398 = vpop.f32.mrb[0].mxu0
  %v399 = vadd.f32 %v286, %v398
  %v400 = vpop.f32.mrb[0].mxu0
  %v401 = vadd.f32 %v288, %v400
  %402 = vmatprep.mubr.f32.mxu0 0.0
  %403 = vmatmul.mubr.f32.gmra.mrb[0].mxu0 %v199
  %v404 = vpop.f32.mrb[0].mxu0
  %v405 = vadd.f32 %v292, %v404
  %v406 = vpop.f32.mrb[0].mxu0
  %v407 = vadd.f32 %v294, %v406
  %408 = vmatprep.mubr.f32.mxu0 0.0
  %409 = vmatmul.mubr.f32.gmra.mrb[0].mxu0 %v202
  %v410 = vpop.f32.mrb[0].mxu0
  %v411 = vadd.f32 %v298, %v410
  %v412 = vpop.f32.mrb[0].mxu0
  %v413 = vadd.f32 %v300, %v412
  %414 = vmatprep.mubr.f32.mxu0 0.0
  %415 = vmatmul.mubr.f32.gmra.mrb[0].mxu0 %v205
  %v416 = vpop.f32.mrb[0].mxu0
  %v417 = vadd.f32 %v304, %v416
  %v418 = vpop.f32.mrb[0].mxu0
  %v419 = vadd.f32 %v306, %v418
  %420 = vmatprep.mubr.f32.mxu0 0.0
  %421 = vmatmul.mubr.f32.gmra.mrb[0].mxu0 %v208
  %v422 = vpop.f32.mrb[0].mxu0
  %v423 = vadd.f32 %v310, %v422
  %v424 = vpop.f32.mrb[0].mxu0
  %v425 = vadd.f32 %v312, %v424
  %426 = vmatprep.mubr.f32.mxu0 0.0
  %427 = vmatmul.mubr.f32.gmra.mrb[0].mxu0 %v211
  %v428 = vpop.f32.mrb[0].mxu0
  %v429 = vadd.f32 %v316, %v428
  %v430 = vpop.f32.mrb[0].mxu0
  %v431 = vadd.f32 %v318, %v430
  %432 = vmatprep.mubr.f32.mxu0 0.0
  %433 = vmatmul.mubr.f32.gmra.mrb[0].mxu0 %v214
  %v434 = vpop.f32.mrb[0].mxu0
  %v435 = vadd.f32 %v322, %v434
  %v436 = vpop.f32.mrb[0].mxu0
  %v437 = vadd.f32 %v324, %v436
  %438 = vmatprep.mubr.f32.mxu0 0.0
  %439 = vmatmul.mubr.f32.gmra.mrb[0].mxu0 %v217
  %v440 = vpop.f32.mrb[0].mxu0
  %v441 = vadd.f32 %v328, %v440
  %v442 = vpop.f32.mrb[0].mxu0
  %v443 = vadd.f32 %v330, %v442
  %444 = vdwg.mxu0
  %445 = vmatprep.subr.mxu0 0.0
  %446 = vmatpush1.msra.mxu0 %v40
  %447 = vmatprep.subr.mxu0 0.0
  %448 = vmatpush1.msra.mxu0 %v43
  %449 = vmatprep.subr.mxu0 0.0
  %450 = vmatpush1.msra.mxu0 %v46
  %451 = vmatprep.subr.mxu0 0.0
  %452 = vmatpush1.msra.mxu0 %v49
  %453 = vmatprep.subr.mxu0 0.0
  %454 = vmatpush1.msra.mxu0 %v52
  %455 = vmatprep.subr.mxu0 0.0
  %456 = vmatpush1.msra.mxu0 %v55
  %457 = vmatprep.subr.mxu0 0.0
  %458 = vmatpush1.msra.mxu0 %v58
  %459 = vmatprep.subr.mxu0 0.0
  %460 = vmatpush1.msra.mxu0 %v61
  %461 = vmatprep.subr.mxu0 0.0
  %462 = vmatpush1.msra.mxu0 %v64
  %463 = vmatprep.subr.mxu0 0.0
  %464 = vmatpush1.msra.mxu0 %v67
  %465 = vmatprep.subr.mxu0 0.0
  %466 = vmatpush1.msra.mxu0 %v70
  %467 = vmatprep.subr.mxu0 0.0
  %468 = vmatpush1.msra.mxu0 %v73
  %469 = vmatprep.subr.mxu0 0.0
  %470 = vmatpush1.msra.mxu0 %v76
  %471 = vmatprep.subr.mxu0 0.0
  %472 = vmatpush1.msra.mxu0 %v79
  %473 = vmatprep.subr.mxu0 0.0
  %474 = vmatpush1.msra.mxu0 %v82
  %475 = vmatprep.subr.mxu0 0.0
  %476 = vmatpush1.msra.mxu0 %v85
  %477 = vmatprep.subr.mxu0 0.0
  %478 = vmatpush1.msra.mxu0 %v88
  %479 = vmatprep.subr.mxu0 0.0
  %480 = vmatpush1.msra.mxu0 %v91
  %481 = vmatprep.subr.mxu0 0.0
  %482 = vmatpush1.msra.mxu0 %v94
  %483 = vmatprep.subr.mxu0 0.0
  %484 = vmatpush1.msra.mxu0 %v97
  %485 = vmatprep.subr.mxu0 0.0
  %486 = vmatpush1.msra.mxu0 %v100
  %487 = vmatprep.subr.mxu0 0.0
  %488 = vmatpush1.msra.mxu0 %v103
  %489 = vmatprep.subr.mxu0 0.0
  %490 = vmatpush1.msra.mxu0 %v106
  %491 = vmatprep.subr.mxu0 0.0
  %492 = vmatpush1.msra.mxu0 %v109
  %493 = vmatprep.subr.mxu0 0.0
  %494 = vmatpush1.msra.mxu0 %v112
  %495 = vmatprep.subr.mxu0 0.0
  %496 = vmatpush1.msra.mxu0 %v115
  %497 = vmatprep.subr.mxu0 0.0
  %498 = vmatpush1.msra.mxu0 %v118
  %499 = vmatprep.subr.mxu0 0.0
  %500 = vmatpush1.msra.mxu0 %v121
  %501 = vmatprep.subr.mxu0 0.0
  %502 = vmatpush1.msra.mxu0 %v124
  %503 = vmatprep.subr.mxu0 0.0
  %504 = vmatpush1.msra.mxu0 %v127
  %505 = vmatprep.subr.mxu0 0.0
  %506 = vmatpush1.msra.mxu0 %v130
  %507 = vmatprep.subr.mxu0 0.0
  %508 = vmatpush1.msra.mxu0 %v133
  %509 = vmatprep.mubr.f32.mxu0 %v15
  %510 = vmatmul.mubr.f32.gmra.mrb[0].mxu0 %v14
  %v511 = vpop.f32.mrb[0].mxu0
  %v512 = vadd.f32 %v157, %v511
  %v513 = vpop.f32.mrb[0].mxu0
  %514 = vmatprep.mubr.f32.mxu0 %v18
  %515 = vmatmul.mubr.f32.gmra.mrb[0].mxu0 %v17
  %v516 = vpop.f32.mrb[0].mxu0
  %v517 = vadd.f32 %v162, %v516
  %v518 = vpop.f32.mrb[0].mxu0
  %519 = vmatprep.mubr.f32.mxu0 %v21
  %520 = vmatmul.mubr.f32.gmra.mrb[0].mxu0 %v20
  %v521 = vpop.f32.mrb[0].mxu0
  %v522 = vadd.f32 %v167, %v521
  %v523 = vpop.f32.mrb[0].mxu0
  %524 = vmatprep.mubr.f32.mxu0 %v24
  %525 = vmatmul.mubr.f32.gmra.mrb[0].mxu0 %v23
  %v526 = vpop.f32.mrb[0].mxu0
  %v527 = vadd.f32 %v172, %v526
  %v528 = vpop.f32.mrb[0].mxu0
  %529 = vmatprep.mubr.f32.mxu0 %v27
  %530 = vmatmul.mubr.f32.gmra.mrb[0].mxu0 %v26
  %v531 = vpop.f32.mrb[0].mxu0
  %v532 = vadd.f32 %v177, %v531
  %v533 = vpop.f32.mrb[0].mxu0
  %534 = vmatprep.mubr.f32.mxu0 %v30
  %535 = vmatmul.mubr.f32.gmra.mrb[0].mxu0 %v29
  %v536 = vpop.f32.mrb[0].mxu0
  %v537 = vadd.f32 %v182, %v536
  %v538 = vpop.f32.mrb[0].mxu0
  %539 = vmatprep.mubr.f32.mxu0 %v33
  %540 = vmatmul.mubr.f32.gmra.mrb[0].mxu0 %v32
  %v541 = vpop.f32.mrb[0].mxu0
  %v542 = vadd.f32 %v187, %v541
  %v543 = vpop.f32.mrb[0].mxu0
  %544 = vmatprep.mubr.f32.mxu0 %v36
  %545 = vmatmul.mubr.f32.gmra.mrb[0].mxu0 %v35
  %v546 = vpop.f32.mrb[0].mxu0
  %v547 = vadd.f32 %v192, %v546
  %v548 = vpop.f32.mrb[0].mxu0
  %549 = vdwg.mxu0
  %550 = vmatprep.subr.mxu0 0.0
  %551 = vmatpush1.msra.mxu0 %v136
  %552 = vmatprep.subr.mxu0 0.0
  %553 = vmatpush1.msra.mxu0 %v139
  %554 = vmatprep.subr.mxu0 0.0
  %555 = vmatpush1.msra.mxu0 %v142
  %556 = vmatprep.subr.mxu0 0.0
  %557 = vmatpush1.msra.mxu0 %v145
  %558 = vmatprep.subr.mxu0 0.0
  %559 = vmatpush1.msra.mxu0 0.0
  %560 = vmatprep.subr.mxu0 0.0
  %561 = vmatpush1.msra.mxu0 0.0
  %562 = vmatprep.subr.mxu0 0.0
  %563 = vmatpush1.msra.mxu0 0.0
  %564 = vmatprep.subr.mxu0 0.0
  %565 = vmatpush1.msra.mxu0 0.0
  %566 = vmatprep.subr.mxu0 0.0
  %567 = vmatpush1.msra.mxu0 0.0
  %568 = vmatprep.subr.mxu0 0.0
  %569 = vmatpush1.msra.mxu0 0.0
  %570 = vmatprep.subr.mxu0 0.0
  %571 = vmatpush1.msra.mxu0 0.0
  %572 = vmatprep.subr.mxu0 0.0
  %573 = vmatpush1.msra.mxu0 0.0
  %574 = vmatprep.subr.mxu0 0.0
  %575 = vmatpush1.msra.mxu0 0.0
  %576 = vmatprep.subr.mxu0 0.0
  %577 = vmatpush1.msra.mxu0 0.0
  %578 = vmatprep.subr.mxu0 0.0
  %579 = vmatpush1.msra.mxu0 0.0
  %580 = vmatprep.subr.mxu0 0.0
  %581 = vmatpush1.msra.mxu0 0.0
  %582 = vmatprep.subr.mxu0 0.0
  %583 = vmatpush1.msra.mxu0 0.0
  %584 = vmatprep.subr.mxu0 0.0
  %585 = vmatpush1.msra.mxu0 0.0
  %586 = vmatprep.subr.mxu0 0.0
  %587 = vmatpush1.msra.mxu0 0.0
  %588 = vmatprep.subr.mxu0 0.0
  %589 = vmatpush1.msra.mxu0 0.0
  %590 = vmatprep.subr.mxu0 0.0
  %591 = vmatpush1.msra.mxu0 0.0
  %592 = vmatprep.subr.mxu0 0.0
  %593 = vmatpush1.msra.mxu0 0.0
  %594 = vmatprep.subr.mxu0 0.0
  %595 = vmatpush1.msra.mxu0 0.0
  %596 = vmatprep.subr.mxu0 0.0
  %597 = vmatpush1.msra.mxu0 0.0
  %598 = vmatprep.subr.mxu0 0.0
  %599 = vmatpush1.msra.mxu0 0.0
  %600 = vmatprep.subr.mxu0 0.0
  %601 = vmatpush1.msra.mxu0 0.0
  %602 = vmatprep.subr.mxu0 0.0
  %603 = vmatpush1.msra.mxu0 0.0
  %604 = vmatprep.subr.mxu0 0.0
  %605 = vmatpush1.msra.mxu0 0.0
  %606 = vmatprep.subr.mxu0 0.0
  %607 = vmatpush1.msra.mxu0 0.0
  %608 = vmatprep.subr.mxu0 0.0
  %609 = vmatpush1.msra.mxu0 0.0
  %610 = vmatprep.subr.mxu0 0.0
  %611 = vmatpush1.msra.mxu0 0.0
  %612 = vmatprep.subr.mxu0 0.0
  %613 = vmatpush1.msra.mxu0 0.0
  %614 = vmatprep.mubr.f32.mxu0 0.0
  %615 = vmatmul.mubr.f32.gmra.mrb[0].mxu0 %v196
  %v616 = vpop.f32.mrb[0].mxu0
  %v617 = vadd.f32 %v512, %v616
  %v618 = vpop.f32.mrb[0].mxu0
  %619 = vmatprep.mubr.f32.mxu0 0.0
  %620 = vmatmul.mubr.f32.gmra.mrb[0].mxu0 %v199
  %v621 = vpop.f32.mrb[0].mxu0
  %v622 = vadd.f32 %v517, %v621
  %v623 = vpop.f32.mrb[0].mxu0
  %624 = vmatprep.mubr.f32.mxu0 0.0
  %625 = vmatmul.mubr.f32.gmra.mrb[0].mxu0 %v202
  %v626 = vpop.f32.mrb[0].mxu0
  %v627 = vadd.f32 %v522, %v626
  %v628 = vpop.f32.mrb[0].mxu0
  %629 = vmatprep.mubr.f32.mxu0 0.0
  %630 = vmatmul.mubr.f32.gmra.mrb[0].mxu0 %v205
  %v631 = vpop.f32.mrb[0].mxu0
  %v632 = vadd.f32 %v527, %v631
  %v633 = vpop.f32.mrb[0].mxu0
  %634 = vmatprep.mubr.f32.mxu0 0.0
  %635 = vmatmul.mubr.f32.gmra.mrb[0].mxu0 %v208
  %v636 = vpop.f32.mrb[0].mxu0
  %v637 = vadd.f32 %v532, %v636
  %v638 = vpop.f32.mrb[0].mxu0
  %639 = vmatprep.mubr.f32.mxu0 0.0
  %640 = vmatmul.mubr.f32.gmra.mrb[0].mxu0 %v211
  %v641 = vpop.f32.mrb[0].mxu0
  %v642 = vadd.f32 %v537, %v641
  %v643 = vpop.f32.mrb[0].mxu0
  %644 = vmatprep.mubr.f32.mxu0 0.0
  %645 = vmatmul.mubr.f32.gmra.mrb[0].mxu0 %v214
  %v646 = vpop.f32.mrb[0].mxu0
  %v647 = vadd.f32 %v542, %v646
  %v648 = vpop.f32.mrb[0].mxu0
  %649 = vmatprep.mubr.f32.mxu0 0.0
  %650 = vmatmul.mubr.f32.gmra.mrb[0].mxu0 %v217
  %v651 = vpop.f32.mrb[0].mxu0
  %v652 = vadd.f32 %v547, %v651
  %v653 = vpop.f32.mrb[0].mxu0
  %654 = vdwg.mxu0
  %v655 = vand.u32 2147483647, %v399
  %v656 = vand.u32 2147483647, %v401
  %v657 = vand.u32 2147483647, %v617
  %v658 = vand.u32 2147483647, %v405
  %v659 = vand.u32 2147483647, %v407
  %v660 = vand.u32 2147483647, %v622
  %v661 = vand.u32 2147483647, %v411
  %v662 = vand.u32 2147483647, %v413
  %v663 = vand.u32 2147483647, %v627
  %v664 = vand.u32 2147483647, %v417
  %v665 = vand.u32 2147483647, %v419
  %v666 = vand.u32 2147483647, %v632
  %v667 = vand.u32 2147483647, %v423
  %v668 = vand.u32 2147483647, %v425
  %v669 = vand.u32 2147483647, %v637
  %v670 = vand.u32 2147483647, %v429
  %v671 = vand.u32 2147483647, %v431
  %v672 = vand.u32 2147483647, %v642
  %v673 = vand.u32 2147483647, %v435
  %v674 = vand.u32 2147483647, %v437
  %v675 = vand.u32 2147483647, %v647
  %v676 = vand.u32 2147483647, %v441
  %v677 = vand.u32 2147483647, %v443
  %v678 = vand.u32 2147483647, %v652
  %v679 = vmul.f32 %v655, 0.70710677
  %v680 = vmul.f32 %v656, 0.70710677
  %v681 = vmul.f32 %v657, 0.70710677
  %v682 = vmul.f32 %v658, 0.70710677
  %v683 = vmul.f32 %v659, 0.70710677
  %v684 = vmul.f32 %v660, 0.70710677
  %v685 = vmul.f32 %v661, 0.70710677
  %v686 = vmul.f32 %v662, 0.70710677
  %v687 = vmul.f32 %v663, 0.70710677
  %v688 = vmul.f32 %v664, 0.70710677
  %v689 = vmul.f32 %v665, 0.70710677
  %v690 = vmul.f32 %v666, 0.70710677
  %v691 = vmul.f32 %v667, 0.70710677
  %v692 = vmul.f32 %v668, 0.70710677
  %v693 = vmul.f32 %v669, 0.70710677
  %v694 = vmul.f32 %v670, 0.70710677
  %v695 = vmul.f32 %v671, 0.70710677
  %v696 = vmul.f32 %v672, 0.70710677
  %v697 = vmul.f32 %v673, 0.70710677
  %v698 = vmul.f32 %v674, 0.70710677
  %v699 = vmul.f32 %v675, 0.70710677
  %v700 = vmul.f32 %v676, 0.70710677
  %v701 = vmul.f32 %v677, 0.70710677
  %v702 = vmul.f32 %v678, 0.70710677
  %v703 = vmul.f32 %v679, 0.3275911
  %v704 = vmul.f32 %v680, 0.3275911
  %v705 = vmul.f32 %v681, 0.3275911
  %v706 = vmul.f32 %v682, 0.3275911
  %v707 = vmul.f32 %v683, 0.3275911
  %v708 = vmul.f32 %v684, 0.3275911
  %v709 = vmul.f32 %v685, 0.3275911
  %v710 = vmul.f32 %v686, 0.3275911
  %v711 = vmul.f32 %v687, 0.3275911
  %v712 = vmul.f32 %v688, 0.3275911
  %v713 = vmul.f32 %v689, 0.3275911
  %v714 = vmul.f32 %v690, 0.3275911
  %v715 = vmul.f32 %v691, 0.3275911
  %v716 = vmul.f32 %v692, 0.3275911
  %v717 = vmul.f32 %v693, 0.3275911
  %v718 = vmul.f32 %v694, 0.3275911
  %v719 = vmul.f32 %v695, 0.3275911
  %v720 = vmul.f32 %v696, 0.3275911
  %v721 = vmul.f32 %v697, 0.3275911
  %v722 = vmul.f32 %v698, 0.3275911
  %v723 = vmul.f32 %v699, 0.3275911
  %v724 = vmul.f32 %v700, 0.3275911
  %v725 = vmul.f32 %v701, 0.3275911
  %v726 = vmul.f32 %v702, 0.3275911
  %v727 = vadd.f32 %v703, 1.0
  %v728 = vadd.f32 %v704, 1.0
  %v729 = vadd.f32 %v705, 1.0
  %v730 = vadd.f32 %v706, 1.0
  %v731 = vadd.f32 %v707, 1.0
  %v732 = vadd.f32 %v708, 1.0
  %v733 = vadd.f32 %v709, 1.0
  %v734 = vadd.f32 %v710, 1.0
  %v735 = vadd.f32 %v711, 1.0
  %v736 = vadd.f32 %v712, 1.0
  %v737 = vadd.f32 %v713, 1.0
  %v738 = vadd.f32 %v714, 1.0
  %v739 = vadd.f32 %v715, 1.0
  %v740 = vadd.f32 %v716, 1.0
  %v741 = vadd.f32 %v717, 1.0
  %v742 = vadd.f32 %v718, 1.0
  %v743 = vadd.f32 %v719, 1.0
  %v744 = vadd.f32 %v720, 1.0
  %v745 = vadd.f32 %v721, 1.0
  %v746 = vadd.f32 %v722, 1.0
  %v747 = vadd.f32 %v723, 1.0
  %v748 = vadd.f32 %v724, 1.0
  %v749 = vadd.f32 %v725, 1.0
  %v750 = vadd.f32 %v726, 1.0
  %v751 = vrcp.pop %v727
  %v752 = vmul.f32 1.0, %v751
  %v753 = vrcp.pop %v728
  %v754 = vmul.f32 1.0, %v753
  %v755 = vrcp.pop %v729
  %v756 = vmul.f32 1.0, %v755
  %v757 = vrcp.pop %v730
  %v758 = vmul.f32 1.0, %v757
  %v759 = vrcp.pop %v731
  %v760 = vmul.f32 1.0, %v759
  %v761 = vrcp.pop %v732
  %v762 = vmul.f32 1.0, %v761
  %v763 = vrcp.pop %v733
  %v764 = vmul.f32 1.0, %v763
  %v765 = vrcp.pop %v734
  %v766 = vmul.f32 1.0, %v765
  %v767 = vrcp.pop %v735
  %v768 = vmul.f32 1.0, %v767
  %v769 = vrcp.pop %v736
  %v770 = vmul.f32 1.0, %v769
  %v771 = vrcp.pop %v737
  %v772 = vmul.f32 1.0, %v771
  %v773 = vrcp.pop %v738
  %v774 = vmul.f32 1.0, %v773
  %v775 = vrcp.pop %v739
  %v776 = vmul.f32 1.0, %v775
  %v777 = vrcp.pop %v740
  %v778 = vmul.f32 1.0, %v777
  %v779 = vrcp.pop %v741
  %v780 = vmul.f32 1.0, %v779
  %v781 = vrcp.pop %v742
  %v782 = vmul.f32 1.0, %v781
  %v783 = vrcp.pop %v743
  %v784 = vmul.f32 1.0, %v783
  %v785 = vrcp.pop %v744
  %v786 = vmul.f32 1.0, %v785
  %v787 = vrcp.pop %v745
  %v788 = vmul.f32 1.0, %v787
  %v789 = vrcp.pop %v746
  %v790 = vmul.f32 1.0, %v789
  %v791 = vrcp.pop %v747
  %v792 = vmul.f32 1.0, %v791
  %v793 = vrcp.pop %v748
  %v794 = vmul.f32 1.0, %v793
  %v795 = vrcp.pop %v749
  %v796 = vmul.f32 1.0, %v795
  %v797 = vrcp.pop %v750
  %v798 = vmul.f32 1.0, %v797
  %v799 = vmul.f32 %v752, 1.0614054
  %v800 = vmul.f32 %v754, 1.0614054
  %v801 = vmul.f32 %v756, 1.0614054
  %v802 = vmul.f32 %v758, 1.0614054
  %v803 = vmul.f32 %v760, 1.0614054
  %v804 = vmul.f32 %v762, 1.0614054
  %v805 = vmul.f32 %v764, 1.0614054
  %v806 = vmul.f32 %v766, 1.0614054
  %v807 = vmul.f32 %v768, 1.0614054
  %v808 = vmul.f32 %v770, 1.0614054
  %v809 = vmul.f32 %v772, 1.0614054
  %v810 = vmul.f32 %v774, 1.0614054
  %v811 = vmul.f32 %v776, 1.0614054
  %v812 = vmul.f32 %v778, 1.0614054
  %v813 = vmul.f32 %v780, 1.0614054
  %v814 = vmul.f32 %v782, 1.0614054
  %v815 = vmul.f32 %v784, 1.0614054
  %v816 = vmul.f32 %v786, 1.0614054
  %v817 = vmul.f32 %v788, 1.0614054
  %v818 = vmul.f32 %v790, 1.0614054
  %v819 = vmul.f32 %v792, 1.0614054
  %v820 = vmul.f32 %v794, 1.0614054
  %v821 = vmul.f32 %v796, 1.0614054
  %v822 = vmul.f32 %v798, 1.0614054
  %v823 = vadd.f32 %v799, -1.4531521
  %v824 = vadd.f32 %v800, -1.4531521
  %v825 = vadd.f32 %v801, -1.4531521
  %v826 = vadd.f32 %v802, -1.4531521
  %v827 = vadd.f32 %v803, -1.4531521
  %v828 = vadd.f32 %v804, -1.4531521
  %v829 = vadd.f32 %v805, -1.4531521
  %v830 = vadd.f32 %v806, -1.4531521
  %v831 = vadd.f32 %v807, -1.4531521
  %v832 = vadd.f32 %v808, -1.4531521
  %v833 = vadd.f32 %v809, -1.4531521
  %v834 = vadd.f32 %v810, -1.4531521
  %v835 = vadd.f32 %v811, -1.4531521
  %v836 = vadd.f32 %v812, -1.4531521
  %v837 = vadd.f32 %v813, -1.4531521
  %v838 = vadd.f32 %v814, -1.4531521
  %v839 = vadd.f32 %v815, -1.4531521
  %v840 = vadd.f32 %v816, -1.4531521
  %v841 = vadd.f32 %v817, -1.4531521
  %v842 = vadd.f32 %v818, -1.4531521
  %v843 = vadd.f32 %v819, -1.4531521
  %v844 = vadd.f32 %v820, -1.4531521
  %v845 = vadd.f32 %v821, -1.4531521
  %v846 = vadd.f32 %v822, -1.4531521
  %v847 = vmul.f32 %v823, %v752
  %v848 = vmul.f32 %v824, %v754
  %v849 = vmul.f32 %v825, %v756
  %v850 = vmul.f32 %v826, %v758
  %v851 = vmul.f32 %v827, %v760
  %v852 = vmul.f32 %v828, %v762
  %v853 = vmul.f32 %v829, %v764
  %v854 = vmul.f32 %v830, %v766
  %v855 = vmul.f32 %v831, %v768
  %v856 = vmul.f32 %v832, %v770
  %v857 = vmul.f32 %v833, %v772
  %v858 = vmul.f32 %v834, %v774
  %v859 = vmul.f32 %v835, %v776
  %v860 = vmul.f32 %v836, %v778
  %v861 = vmul.f32 %v837, %v780
  %v862 = vmul.f32 %v838, %v782
  %v863 = vmul.f32 %v839, %v784
  %v864 = vmul.f32 %v840, %v786
  %v865 = vmul.f32 %v841, %v788
  %v866 = vmul.f32 %v842, %v790
  %v867 = vmul.f32 %v843, %v792
  %v868 = vmul.f32 %v844, %v794
  %v869 = vmul.f32 %v845, %v796
  %v870 = vmul.f32 %v846, %v798
  %v871 = vadd.f32 %v847, 1.4214138
  %v872 = vadd.f32 %v848, 1.4214138
  %v873 = vadd.f32 %v849, 1.4214138
  %v874 = vadd.f32 %v850, 1.4214138
  %v875 = vadd.f32 %v851, 1.4214138
  %v876 = vadd.f32 %v852, 1.4214138
  %v877 = vadd.f32 %v853, 1.4214138
  %v878 = vadd.f32 %v854, 1.4214138
  %v879 = vadd.f32 %v855, 1.4214138
  %v880 = vadd.f32 %v856, 1.4214138
  %v881 = vadd.f32 %v857, 1.4214138
  %v882 = vadd.f32 %v858, 1.4214138
  %v883 = vadd.f32 %v859, 1.4214138
  %v884 = vadd.f32 %v860, 1.4214138
  %v885 = vadd.f32 %v861, 1.4214138
  %v886 = vadd.f32 %v862, 1.4214138
  %v887 = vadd.f32 %v863, 1.4214138
  %v888 = vadd.f32 %v864, 1.4214138
  %v889 = vadd.f32 %v865, 1.4214138
  %v890 = vadd.f32 %v866, 1.4214138
  %v891 = vadd.f32 %v867, 1.4214138
  %v892 = vadd.f32 %v868, 1.4214138
  %v893 = vadd.f32 %v869, 1.4214138
  %v894 = vadd.f32 %v870, 1.4214138
  %v895 = vmul.f32 %v871, %v752
  %v896 = vmul.f32 %v872, %v754
  %v897 = vmul.f32 %v873, %v756
  %v898 = vmul.f32 %v874, %v758
  %v899 = vmul.f32 %v875, %v760
  %v900 = vmul.f32 %v876, %v762
  %v901 = vmul.f32 %v877, %v764
  %v902 = vmul.f32 %v878, %v766
  %v903 = vmul.f32 %v879, %v768
  %v904 = vmul.f32 %v880, %v770
  %v905 = vmul.f32 %v881, %v772
  %v906 = vmul.f32 %v882, %v774
  %v907 = vmul.f32 %v883, %v776
  %v908 = vmul.f32 %v884, %v778
  %v909 = vmul.f32 %v885, %v780
  %v910 = vmul.f32 %v886, %v782
  %v911 = vmul.f32 %v887, %v784
  %v912 = vmul.f32 %v888, %v786
  %v913 = vmul.f32 %v889, %v788
  %v914 = vmul.f32 %v890, %v790
  %v915 = vmul.f32 %v891, %v792
  %v916 = vmul.f32 %v892, %v794
  %v917 = vmul.f32 %v893, %v796
  %v918 = vmul.f32 %v894, %v798
  %v919 = vadd.f32 %v895, -0.28449672
  %v920 = vadd.f32 %v896, -0.28449672
  %v921 = vadd.f32 %v897, -0.28449672
  %v922 = vadd.f32 %v898, -0.28449672
  %v923 = vadd.f32 %v899, -0.28449672
  %v924 = vadd.f32 %v900, -0.28449672
  %v925 = vadd.f32 %v901, -0.28449672
  %v926 = vadd.f32 %v902, -0.28449672
  %v927 = vadd.f32 %v903, -0.28449672
  %v928 = vadd.f32 %v904, -0.28449672
  %v929 = vadd.f32 %v905, -0.28449672
  %v930 = vadd.f32 %v906, -0.28449672
  %v931 = vadd.f32 %v907, -0.28449672
  %v932 = vadd.f32 %v908, -0.28449672
  %v933 = vadd.f32 %v909, -0.28449672
  %v934 = vadd.f32 %v910, -0.28449672
  %v935 = vadd.f32 %v911, -0.28449672
  %v936 = vadd.f32 %v912, -0.28449672
  %v937 = vadd.f32 %v913, -0.28449672
  %v938 = vadd.f32 %v914, -0.28449672
  %v939 = vadd.f32 %v915, -0.28449672
  %v940 = vadd.f32 %v916, -0.28449672
  %v941 = vadd.f32 %v917, -0.28449672
  %v942 = vadd.f32 %v918, -0.28449672
  %v943 = vmul.f32 %v919, %v752
  %v944 = vmul.f32 %v920, %v754
  %v945 = vmul.f32 %v921, %v756
  %v946 = vmul.f32 %v922, %v758
  %v947 = vmul.f32 %v923, %v760
  %v948 = vmul.f32 %v924, %v762
  %v949 = vmul.f32 %v925, %v764
  %v950 = vmul.f32 %v926, %v766
  %v951 = vmul.f32 %v927, %v768
  %v952 = vmul.f32 %v928, %v770
  %v953 = vmul.f32 %v929, %v772
  %v954 = vmul.f32 %v930, %v774
  %v955 = vmul.f32 %v931, %v776
  %v956 = vmul.f32 %v932, %v778
  %v957 = vmul.f32 %v933, %v780
  %v958 = vmul.f32 %v934, %v782
  %v959 = vmul.f32 %v935, %v784
  %v960 = vmul.f32 %v936, %v786
  %v961 = vmul.f32 %v937, %v788
  %v962 = vmul.f32 %v938, %v790
  %v963 = vmul.f32 %v939, %v792
  %v964 = vmul.f32 %v940, %v794
  %v965 = vmul.f32 %v941, %v796
  %v966 = vmul.f32 %v942, %v798
  %v967 = vadd.f32 %v943, 0.2548296
  %v968 = vadd.f32 %v944, 0.2548296
  %v969 = vadd.f32 %v945, 0.2548296
  %v970 = vadd.f32 %v946, 0.2548296
  %v971 = vadd.f32 %v947, 0.2548296
  %v972 = vadd.f32 %v948, 0.2548296
  %v973 = vadd.f32 %v949, 0.2548296
  %v974 = vadd.f32 %v950, 0.2548296
  %v975 = vadd.f32 %v951, 0.2548296
  %v976 = vadd.f32 %v952, 0.2548296
  %v977 = vadd.f32 %v953, 0.2548296
  %v978 = vadd.f32 %v954, 0.2548296
  %v979 = vadd.f32 %v955, 0.2548296
  %v980 = vadd.f32 %v956, 0.2548296
  %v981 = vadd.f32 %v957, 0.2548296
  %v982 = vadd.f32 %v958, 0.2548296
  %v983 = vadd.f32 %v959, 0.2548296
  %v984 = vadd.f32 %v960, 0.2548296
  %v985 = vadd.f32 %v961, 0.2548296
  %v986 = vadd.f32 %v962, 0.2548296
  %v987 = vadd.f32 %v963, 0.2548296
  %v988 = vadd.f32 %v964, 0.2548296
  %v989 = vadd.f32 %v965, 0.2548296
  %v990 = vadd.f32 %v966, 0.2548296
  %v991 = vmul.f32 %v967, %v752
  %v992 = vmul.f32 %v968, %v754
  %v993 = vmul.f32 %v969, %v756
  %v994 = vmul.f32 %v970, %v758
  %v995 = vmul.f32 %v971, %v760
  %v996 = vmul.f32 %v972, %v762
  %v997 = vmul.f32 %v973, %v764
  %v998 = vmul.f32 %v974, %v766
  %v999 = vmul.f32 %v975, %v768
  %v1000 = vmul.f32 %v976, %v770
  %v1001 = vmul.f32 %v977, %v772
  %v1002 = vmul.f32 %v978, %v774
  %v1003 = vmul.f32 %v979, %v776
  %v1004 = vmul.f32 %v980, %v778
  %v1005 = vmul.f32 %v981, %v780
  %v1006 = vmul.f32 %v982, %v782
  %v1007 = vmul.f32 %v983, %v784
  %v1008 = vmul.f32 %v984, %v786
  %v1009 = vmul.f32 %v985, %v788
  %v1010 = vmul.f32 %v986, %v790
  %v1011 = vmul.f32 %v987, %v792
  %v1012 = vmul.f32 %v988, %v794
  %v1013 = vmul.f32 %v989, %v796
  %v1014 = vmul.f32 %v990, %v798
  %v1015 = vmul.f32 %v399, 0.5
  %v1016 = vmul.f32 %v401, 0.5
  %v1017 = vmul.f32 %v617, 0.5
  %v1018 = vmul.f32 %v405, 0.5
  %v1019 = vmul.f32 %v407, 0.5
  %v1020 = vmul.f32 %v622, 0.5
  %v1021 = vmul.f32 %v411, 0.5
  %v1022 = vmul.f32 %v413, 0.5
  %v1023 = vmul.f32 %v627, 0.5
  %v1024 = vmul.f32 %v417, 0.5
  %v1025 = vmul.f32 %v419, 0.5
  %v1026 = vmul.f32 %v632, 0.5
  %v1027 = vmul.f32 %v423, 0.5
  %v1028 = vmul.f32 %v425, 0.5
  %v1029 = vmul.f32 %v637, 0.5
  %v1030 = vmul.f32 %v429, 0.5
  %v1031 = vmul.f32 %v431, 0.5
  %v1032 = vmul.f32 %v642, 0.5
  %v1033 = vmul.f32 %v435, 0.5
  %v1034 = vmul.f32 %v437, 0.5
  %v1035 = vmul.f32 %v647, 0.5
  %v1036 = vmul.f32 %v441, 0.5
  %v1037 = vmul.f32 %v443, 0.5
  %v1038 = vmul.f32 %v652, 0.5
  %v1039 = vmul.f32 %v1015, %v991
  %v1040 = vmul.f32 %v1016, %v992
  %v1041 = vmul.f32 %v1017, %v993
  %v1042 = vmul.f32 %v1018, %v994
  %v1043 = vmul.f32 %v1019, %v995
  %v1044 = vmul.f32 %v1020, %v996
  %v1045 = vmul.f32 %v1021, %v997
  %v1046 = vmul.f32 %v1022, %v998
  %v1047 = vmul.f32 %v1023, %v999
  %v1048 = vmul.f32 %v1024, %v1000
  %v1049 = vmul.f32 %v1025, %v1001
  %v1050 = vmul.f32 %v1026, %v1002
  %v1051 = vmul.f32 %v1027, %v1003
  %v1052 = vmul.f32 %v1028, %v1004
  %v1053 = vmul.f32 %v1029, %v1005
  %v1054 = vmul.f32 %v1030, %v1006
  %v1055 = vmul.f32 %v1031, %v1007
  %v1056 = vmul.f32 %v1032, %v1008
  %v1057 = vmul.f32 %v1033, %v1009
  %v1058 = vmul.f32 %v1034, %v1010
  %v1059 = vmul.f32 %v1035, %v1011
  %v1060 = vmul.f32 %v1036, %v1012
  %v1061 = vmul.f32 %v1037, %v1013
  %v1062 = vmul.f32 %v1038, %v1014
  %v1063 = vsub.f32 0.0, %v679
  %v1064 = vsub.f32 0.0, %v680
  %v1065 = vsub.f32 0.0, %v681
  %v1066 = vsub.f32 0.0, %v682
  %v1067 = vsub.f32 0.0, %v683
  %v1068 = vsub.f32 0.0, %v684
  %v1069 = vsub.f32 0.0, %v685
  %v1070 = vsub.f32 0.0, %v686
  %v1071 = vsub.f32 0.0, %v687
  %v1072 = vsub.f32 0.0, %v688
  %v1073 = vsub.f32 0.0, %v689
  %v1074 = vsub.f32 0.0, %v690
  %v1075 = vsub.f32 0.0, %v691
  %v1076 = vsub.f32 0.0, %v692
  %v1077 = vsub.f32 0.0, %v693
  %v1078 = vsub.f32 0.0, %v694
  %v1079 = vsub.f32 0.0, %v695
  %v1080 = vsub.f32 0.0, %v696
  %v1081 = vsub.f32 0.0, %v697
  %v1082 = vsub.f32 0.0, %v698
  %v1083 = vsub.f32 0.0, %v699
  %v1084 = vsub.f32 0.0, %v700
  %v1085 = vsub.f32 0.0, %v701
  %v1086 = vsub.f32 0.0, %v702
  %v1087 = vmul.f32 %v1063, %v679
  %v1088 = vmul.f32 %v1064, %v680
  %v1089 = vmul.f32 %v1065, %v681
  %v1090 = vmul.f32 %v1066, %v682
  %v1091 = vmul.f32 %v1067, %v683
  %v1092 = vmul.f32 %v1068, %v684
  %v1093 = vmul.f32 %v1069, %v685
  %v1094 = vmul.f32 %v1070, %v686
  %v1095 = vmul.f32 %v1071, %v687
  %v1096 = vmul.f32 %v1072, %v688
  %v1097 = vmul.f32 %v1073, %v689
  %v1098 = vmul.f32 %v1074, %v690
  %v1099 = vmul.f32 %v1075, %v691
  %v1100 = vmul.f32 %v1076, %v692
  %v1101 = vmul.f32 %v1077, %v693
  %v1102 = vmul.f32 %v1078, %v694
  %v1103 = vmul.f32 %v1079, %v695
  %v1104 = vmul.f32 %v1080, %v696
  %v1105 = vmul.f32 %v1081, %v697
  %v1106 = vmul.f32 %v1082, %v698
  %v1107 = vmul.f32 %v1083, %v699
  %v1108 = vmul.f32 %v1084, %v700
  %v1109 = vmul.f32 %v1085, %v701
  %v1110 = vmul.f32 %v1086, %v702
  %v1111 = vmul.f32 %v1087, 1.442695
  %v1112 = vpow.pop %v1111
  %v1113 = vmul.f32 %v1088, 1.442695
  %v1114 = vpow.pop %v1113
  %v1115 = vmul.f32 %v1089, 1.442695
  %v1116 = vpow.pop %v1115
  %v1117 = vmul.f32 %v1090, 1.442695
  %v1118 = vpow.pop %v1117
  %v1119 = vmul.f32 %v1091, 1.442695
  %v1120 = vpow.pop %v1119
  %v1121 = vmul.f32 %v1092, 1.442695
  %v1122 = vpow.pop %v1121
  %v1123 = vmul.f32 %v1093, 1.442695
  %v1124 = vpow.pop %v1123
  %v1125 = vmul.f32 %v1094, 1.442695
  %v1126 = vpow.pop %v1125
  %v1127 = vmul.f32 %v1095, 1.442695
  %v1128 = vpow.pop %v1127
  %v1129 = vmul.f32 %v1096, 1.442695
  %v1130 = vpow.pop %v1129
  %v1131 = vmul.f32 %v1097, 1.442695
  %v1132 = vpow.pop %v1131
  %v1133 = vmul.f32 %v1098, 1.442695
  %v1134 = vpow.pop %v1133
  %v1135 = vmul.f32 %v1099, 1.442695
  %v1136 = vpow.pop %v1135
  %v1137 = vmul.f32 %v1100, 1.442695
  %v1138 = vpow.pop %v1137
  %v1139 = vmul.f32 %v1101, 1.442695
  %v1140 = vpow.pop %v1139
  %v1141 = vmul.f32 %v1102, 1.442695
  %v1142 = vpow.pop %v1141
  %v1143 = vmul.f32 %v1103, 1.442695
  %v1144 = vpow.pop %v1143
  %v1145 = vmul.f32 %v1104, 1.442695
  %v1146 = vpow.pop %v1145
  %v1147 = vmul.f32 %v1105, 1.442695
  %v1148 = vpow.pop %v1147
  %v1149 = vmul.f32 %v1106, 1.442695
  %v1150 = vpow.pop %v1149
  %v1151 = vmul.f32 %v1107, 1.442695
  %v1152 = vpow.pop %v1151
  %v1153 = vmul.f32 %v1108, 1.442695
  %v1154 = vpow.pop %v1153
  %v1155 = vmul.f32 %v1109, 1.442695
  %v1156 = vpow.pop %v1155
  %v1157 = vmul.f32 %v1110, 1.442695
  %v1158 = vpow.pop %v1157
  %v1159 = vmul.f32 %v1039, %v1112
  %v1160 = vmul.f32 %v1040, %v1114
  %v1161 = vmul.f32 %v1041, %v1116
  %v1162 = vmul.f32 %v1042, %v1118
  %v1163 = vmul.f32 %v1043, %v1120
  %v1164 = vmul.f32 %v1044, %v1122
  %v1165 = vmul.f32 %v1045, %v1124
  %v1166 = vmul.f32 %v1046, %v1126
  %v1167 = vmul.f32 %v1047, %v1128
  %v1168 = vmul.f32 %v1048, %v1130
  %v1169 = vmul.f32 %v1049, %v1132
  %v1170 = vmul.f32 %v1050, %v1134
  %v1171 = vmul.f32 %v1051, %v1136
  %v1172 = vmul.f32 %v1052, %v1138
  %v1173 = vmul.f32 %v1053, %v1140
  %v1174 = vmul.f32 %v1054, %v1142
  %v1175 = vmul.f32 %v1055, %v1144
  %v1176 = vmul.f32 %v1056, %v1146
  %v1177 = vmul.f32 %v1057, %v1148
  %v1178 = vmul.f32 %v1058, %v1150
  %v1179 = vmul.f32 %v1059, %v1152
  %v1180 = vmul.f32 %v1060, %v1154
  %v1181 = vmul.f32 %v1061, %v1156
  %v1182 = vmul.f32 %v1062, %v1158
  %vm1183 = vcmp.ge.f32.partialorder %v399, 0.0
  %vm1184 = vcmp.ge.f32.partialorder %v401, 0.0
  %vm1185 = vcmp.ge.f32.partialorder %v617, 0.0
  %vm1186 = vcmp.ge.f32.partialorder %v405, 0.0
  %vm1187 = vcmp.ge.f32.partialorder %v407, 0.0
  %vm1188 = vcmp.ge.f32.partialorder %v622, 0.0
  %vm1189 = vcmp.ge.f32.partialorder %v411, 0.0
  %vm1190 = vcmp.ge.f32.partialorder %v413, 0.0
  %vm1191 = vcmp.ge.f32.partialorder %v627, 0.0
  %vm1192 = vcmp.ge.f32.partialorder %v417, 0.0
  %vm1193 = vcmp.ge.f32.partialorder %v419, 0.0
  %vm1194 = vcmp.ge.f32.partialorder %v632, 0.0
  %vm1195 = vcmp.ge.f32.partialorder %v423, 0.0
  %vm1196 = vcmp.ge.f32.partialorder %v425, 0.0
  %vm1197 = vcmp.ge.f32.partialorder %v637, 0.0
  %vm1198 = vcmp.ge.f32.partialorder %v429, 0.0
  %vm1199 = vcmp.ge.f32.partialorder %v431, 0.0
  %vm1200 = vcmp.ge.f32.partialorder %v642, 0.0
  %vm1201 = vcmp.ge.f32.partialorder %v435, 0.0
  %vm1202 = vcmp.ge.f32.partialorder %v437, 0.0
  %vm1203 = vcmp.ge.f32.partialorder %v647, 0.0
  %vm1204 = vcmp.ge.f32.partialorder %v441, 0.0
  %vm1205 = vcmp.ge.f32.partialorder %v443, 0.0
  %vm1206 = vcmp.ge.f32.partialorder %v652, 0.0
  %v1207 = vsub.f32 %v399, %v1159
  %v1208 = vsub.f32 %v401, %v1160
  %v1209 = vsub.f32 %v617, %v1161
  %v1210 = vsub.f32 %v405, %v1162
  %v1211 = vsub.f32 %v407, %v1163
  %v1212 = vsub.f32 %v622, %v1164
  %v1213 = vsub.f32 %v411, %v1165
  %v1214 = vsub.f32 %v413, %v1166
  %v1215 = vsub.f32 %v627, %v1167
  %v1216 = vsub.f32 %v417, %v1168
  %v1217 = vsub.f32 %v419, %v1169
  %v1218 = vsub.f32 %v632, %v1170
  %v1219 = vsub.f32 %v423, %v1171
  %v1220 = vsub.f32 %v425, %v1172
  %v1221 = vsub.f32 %v637, %v1173
  %v1222 = vsub.f32 %v429, %v1174
  %v1223 = vsub.f32 %v431, %v1175
  %v1224 = vsub.f32 %v642, %v1176
  %v1225 = vsub.f32 %v435, %v1177
  %v1226 = vsub.f32 %v437, %v1178
  %v1227 = vsub.f32 %v647, %v1179
  %v1228 = vsub.f32 %v441, %v1180
  %v1229 = vsub.f32 %v443, %v1181
  %v1230 = vsub.f32 %v652, %v1182
  %v1231 = vsel %vm1183, %v1207, %v1159
  %v1232 = vsel %vm1184, %v1208, %v1160
  %v1233 = vsel %vm1185, %v1209, %v1161
  %v1234 = vsel %vm1186, %v1210, %v1162
  %v1235 = vsel %vm1187, %v1211, %v1163
  %v1236 = vsel %vm1188, %v1212, %v1164
  %v1237 = vsel %vm1189, %v1213, %v1165
  %v1238 = vsel %vm1190, %v1214, %v1166
  %v1239 = vsel %vm1191, %v1215, %v1167
  %v1240 = vsel %vm1192, %v1216, %v1168
  %v1241 = vsel %vm1193, %v1217, %v1169
  %v1242 = vsel %vm1194, %v1218, %v1170
  %v1243 = vsel %vm1195, %v1219, %v1171
  %v1244 = vsel %vm1196, %v1220, %v1172
  %v1245 = vsel %vm1197, %v1221, %v1173
  %v1246 = vsel %vm1198, %v1222, %v1174
  %v1247 = vsel %vm1199, %v1223, %v1175
  %v1248 = vsel %vm1200, %v1224, %v1176
  %v1249 = vsel %vm1201, %v1225, %v1177
  %v1250 = vsel %vm1202, %v1226, %v1178
  %v1251 = vsel %vm1203, %v1227, %v1179
  %v1252 = vsel %vm1204, %v1228, %v1180
  %v1253 = vsel %vm1205, %v1229, %v1181
  %v1254 = vsel %vm1206, %v1230, %v1182
  %1255 = vst [vmem:[%s3] sm:$0xff] %v1231
  %1256 = vst [vmem:[%s3 + $0x8] sm:$0xff] %v1232
  %1257 = vst.msk [vmem:[%s3 + $0x10] sm:$0xff] %vm194, %v1233
  %1258 = vst [vmem:[%s3 + $0x18] sm:$0xff] %v1234
  %1259 = vst [vmem:[%s3 + $0x20] sm:$0xff] %v1235
  %1260 = vst.msk [vmem:[%s3 + $0x28] sm:$0xff] %vm194, %v1236
  %1261 = vst [vmem:[%s3 + $0x30] sm:$0xff] %v1237
  %1262 = vst [vmem:[%s3 + $0x38] sm:$0xff] %v1238
  %1263 = vst.msk [vmem:[%s3 + $0x40] sm:$0xff] %vm194, %v1239
  %1264 = vst [vmem:[%s3 + $0x48] sm:$0xff] %v1240
  %1265 = vst [vmem:[%s3 + $0x50] sm:$0xff] %v1241
  %1266 = vst.msk [vmem:[%s3 + $0x58] sm:$0xff] %vm194, %v1242
  %1267 = vst [vmem:[%s3 + $0x60] sm:$0xff] %v1243
  %1268 = vst [vmem:[%s3 + $0x68] sm:$0xff] %v1244
  %1269 = vst.msk [vmem:[%s3 + $0x70] sm:$0xff] %vm194, %v1245
  %1270 = vst [vmem:[%s3 + $0x78] sm:$0xff] %v1246
  %1271 = vst [vmem:[%s3 + $0x80] sm:$0xff] %v1247
  %1272 = vst.msk [vmem:[%s3 + $0x88] sm:$0xff] %vm194, %v1248
  %1273 = vst [vmem:[%s3 + $0x90] sm:$0xff] %v1249
  %1274 = vst [vmem:[%s3 + $0x98] sm:$0xff] %v1250
  %1275 = vst.msk [vmem:[%s3 + $0xa0] sm:$0xff] %vm194, %v1251
  %1276 = vst [vmem:[%s3 + $0xa8] sm:$0xff] %v1252
  %1277 = vst [vmem:[%s3 + $0xb0] sm:$0xff] %v1253
  %1278 = vst.msk [vmem:[%s3 + $0xb8] sm:$0xff] %vm194, %v1254
  // Predicated region
  $region14: #{encoder_forward.9} parent=0 // pred_check
    _
  $region15: #{encoder_forward.9} parent=0 // pred_check_branch
    %1280 = sbr.rel (0) target = $region17
  $region16: #{encoder_forward.9} parent=0 // pred_region
    _
  $region17: #{encoder_forward.9} parent=0 // pred_fallthru
    _
  // Predicated region
  $region18: #{encoder_forward.9} parent=0 // pred_check
    _
  $region19: #{encoder_forward.9} parent=0 // pred_check_branch
    %1282 = sbr.rel (0) target = $region21
  $region20: #{encoder_forward.9} parent=0 // pred_region
    _
  $region21: #{encoder_forward.9} parent=0 // pred_fallthru
    _

// kernel: encoder_forward.10
$region0: #{encoder_forward.10}
  #allocation0 [shape = 'u32[]', space=smem, size = 0x4, offset = 0x4, fixed_abs, tag = 'smem constant byte address 0x4 - core index']
  #allocation1 [shape = 'u32[144,128]{1,0:T(1,128)}', space=vmem, size = 0x12000, scoped, tag = 'internal scratch']
  %s0 = inlined_call_operand.vmem [shape: f32[64,576], index: 0, kind: input, shape index: {}]
  %s1 = inlined_call_operand.vmem [shape: f32[576,32], index: 1, kind: input, shape index: {}]
  %s2 = inlined_call_operand.vmem [shape: f32[64,1], index: 2, kind: input, shape index: {}]
  %s3 = inlined_call_operand.vmem [shape: f32[64,32], index: 3, kind: output, shape index: {}]
  %s4 = sld [smem:[#allocation0]]
  $region22: #{encoder_forward.10} parent=0
    _
  %s6 = ssub.s32 1, %s4
  %s7 = scalar_select 0, %s6, %s4
  // Predicated region
  $region2: #{encoder_forward.10} parent=0 // pred_check
    _
  $region3: #{encoder_forward.10} parent=0 // pred_check_branch
    %9 = sbr.rel (0) target = $region5
  $region4: #{encoder_forward.10} parent=0 // pred_region
    _
  $region5: #{encoder_forward.10} parent=0 // pred_fallthru
    _
  // Predicated region
  $region6: #{encoder_forward.10} parent=0 // pred_check
    _
  $region7: #{encoder_forward.10} parent=0 // pred_check_branch
    %11 = sbr.rel (0) target = $region9
  $region8: #{encoder_forward.10} parent=0 // pred_region
    _
  $region9: #{encoder_forward.10} parent=0 // pred_fallthru
    _
  // Predicated region
  $region10: #{encoder_forward.10} parent=0 // pred_check
    _
  $region11: #{encoder_forward.10} parent=0 // pred_check_branch
    %13 = sbr.rel (0) target = $region13
  $region12: #{encoder_forward.10} parent=0 // pred_region
    _
  $region13: #{encoder_forward.10} parent=0 // pred_fallthru
    _
  %v14 = vld [vmem:[%s0] sm:$0xff]
  %v15 = vld [vmem:[%s0 + $0x8] sm:$0xff]
  %v16 = vld [vmem:[%s0 + $0x10] sm:$0xff]
  %v17 = vld [vmem:[%s0 + $0x18] sm:$0xff]
  %v18 = vld [vmem:[%s0 + $0x20] sm:$0xff]
  %v19 = vld [vmem:[%s0 + $0x28] sm:$0xff]
  %v20 = vld [vmem:[%s0 + $0x30] sm:$0xff]
  %v21 = vld [vmem:[%s0 + $0x38] sm:$0xff]
  %v22 = vld [vmem:[%s0 + $0x40] sm:$0xff]
  %v23 = vld [vmem:[%s0 + $0x48] sm:$0xff]
  %v24 = vld [vmem:[%s0 + $0x50] sm:$0xff]
  %v25 = vld [vmem:[%s0 + $0x58] sm:$0xff]
  %v26 = vld [vmem:[%s0 + $0x60] sm:$0xff]
  %v27 = vld [vmem:[%s0 + $0x68] sm:$0xff]
  %v28 = vld [vmem:[%s0 + $0x70] sm:$0xff]
  %v29 = vld [vmem:[%s0 + $0x78] sm:$0xff]
  %v30 = vld [vmem:[%s0 + $0x80] sm:$0xff]
  %v31 = vld [vmem:[%s0 + $0x88] sm:$0xff]
  %v32 = vld [vmem:[%s0 + $0x90] sm:$0xff]
  %v33 = vld [vmem:[%s0 + $0x98] sm:$0xff]
  %v34 = vld [vmem:[%s0 + $0xa0] sm:$0xff]
  %v35 = vld [vmem:[%s0 + $0xa8] sm:$0xff]
  %v36 = vld [vmem:[%s0 + $0xb0] sm:$0xff]
  %v37 = vld [vmem:[%s0 + $0xb8] sm:$0xff]
  %v38 = vld [vmem:[%s0 + $0xc0] sm:$0xff]
  %v39 = vld [vmem:[%s0 + $0xc8] sm:$0xff]
  %v40 = vld [vmem:[%s0 + $0xd0] sm:$0xff]
  %v41 = vld [vmem:[%s0 + $0xd8] sm:$0xff]
  %v42 = vld [vmem:[%s0 + $0xe0] sm:$0xff]
  %v43 = vld [vmem:[%s0 + $0xe8] sm:$0xff]
  %v44 = vld [vmem:[%s0 + $0xf0] sm:$0xff]
  %v45 = vld [vmem:[%s0 + $0xf8] sm:$0xff]
  %v46 = vld [vmem:[%s0 + $0x100] sm:$0xff]
  %v47 = vld [vmem:[%s0 + $0x108] sm:$0xff]
  %v48 = vld [vmem:[%s0 + $0x110] sm:$0xff]
  %v49 = vld [vmem:[%s0 + $0x118] sm:$0xff]
  %v50 = vld [vmem:[%s0 + $0x120] sm:$0xff]
  %v51 = vld [vmem:[%s0 + $0x128] sm:$0xff]
  %v52 = vld [vmem:[%s0 + $0x130] sm:$0xff]
  %v53 = vld [vmem:[%s0 + $0x138] sm:$0xff]
  %v54 = vld [vmem:[%s1] sm:$0xff]
  %v55 = vld [vmem:[%s1 + $0x8] sm:$0xff]
  %v56 = vld [vmem:[%s1 + $0x10] sm:$0xff]
  %v57 = vld [vmem:[%s1 + $0x18] sm:$0xff]
  %v58 = vld [vmem:[%s1 + $0x20] sm:$0xff]
  %v59 = vld [vmem:[%s1 + $0x28] sm:$0xff]
  %v60 = vld [vmem:[%s1 + $0x30] sm:$0xff]
  %v61 = vld [vmem:[%s1 + $0x38] sm:$0xff]
  %v62 = vld [vmem:[%s1 + $0x40] sm:$0xff]
  %v63 = vld [vmem:[%s1 + $0x48] sm:$0xff]
  %v64 = vld [vmem:[%s1 + $0x50] sm:$0xff]
  %v65 = vld [vmem:[%s1 + $0x58] sm:$0xff]
  %v66 = vld [vmem:[%s1 + $0x60] sm:$0xff]
  %v67 = vld [vmem:[%s1 + $0x68] sm:$0xff]
  %v68 = vld [vmem:[%s1 + $0x70] sm:$0xff]
  %v69 = vld [vmem:[%s1 + $0x78] sm:$0xff]
  %v70 = vld [vmem:[%s1 + $0x80] sm:$0xff]
  %v71 = vld [vmem:[%s1 + $0x88] sm:$0xff]
  %v72 = vld [vmem:[%s1 + $0x90] sm:$0xff]
  %v73 = vld [vmem:[%s1 + $0x98] sm:$0xff]
  %v74 = vld [vmem:[%s1 + $0xa0] sm:$0xff]
  %v75 = vld [vmem:[%s1 + $0xa8] sm:$0xff]
  %v76 = vld [vmem:[%s1 + $0xb0] sm:$0xff]
  %v77 = vld [vmem:[%s1 + $0xb8] sm:$0xff]
  %v78 = vld [vmem:[%s1 + $0xc0] sm:$0xff]
  %v79 = vld [vmem:[%s1 + $0xc8] sm:$0xff]
  %v80 = vld [vmem:[%s1 + $0xd0] sm:$0xff]
  %v81 = vld [vmem:[%s1 + $0xd8] sm:$0xff]
  %v82 = vld [vmem:[%s1 + $0xe0] sm:$0xff]
  %v83 = vld [vmem:[%s1 + $0xe8] sm:$0xff]
  %v84 = vld [vmem:[%s1 + $0xf0] sm:$0xff]
  %v85 = vld [vmem:[%s1 + $0xf8] sm:$0xff]
  %v86 = vld [vmem:[%s1 + $0x100] sm:$0xff]
  %v87 = vld [vmem:[%s1 + $0x108] sm:$0xff]
  %v88 = vld [vmem:[%s1 + $0x110] sm:$0xff]
  %v89 = vld [vmem:[%s1 + $0x118] sm:$0xff]
  %v90 = vld [vmem:[%s1 + $0x120] sm:$0xff]
  %v91 = vld [vmem:[%s1 + $0x128] sm:$0xff]
  %v92 = vld [vmem:[%s1 + $0x130] sm:$0xff]
  %v93 = vld [vmem:[%s1 + $0x138] sm:$0xff]
  %v94 = vld [vmem:[%s1 + $0x140] sm:$0xff]
  %v95 = vld [vmem:[%s1 + $0x148] sm:$0xff]
  %v96 = vld [vmem:[%s1 + $0x150] sm:$0xff]
  %v97 = vld [vmem:[%s1 + $0x158] sm:$0xff]
  %v98 = vld [vmem:[%s1 + $0x160] sm:$0xff]
  %v99 = vld [vmem:[%s1 + $0x168] sm:$0xff]
  %v100 = vld [vmem:[%s1 + $0x170] sm:$0xff]
  %v101 = vld [vmem:[%s1 + $0x178] sm:$0xff]
  %v102 = vld [vmem:[%s1 + $0x180] sm:$0xff]
  %v103 = vld [vmem:[%s1 + $0x188] sm:$0xff]
  %v104 = vld [vmem:[%s1 + $0x190] sm:$0xff]
  %v105 = vld [vmem:[%s1 + $0x198] sm:$0xff]
  %v106 = vld [vmem:[%s1 + $0x1a0] sm:$0xff]
  %v107 = vld [vmem:[%s1 + $0x1a8] sm:$0xff]
  %v108 = vld [vmem:[%s1 + $0x1b0] sm:$0xff]
  %v109 = vld [vmem:[%s1 + $0x1b8] sm:$0xff]
  %v110 = vld [vmem:[%s1 + $0x1c0] sm:$0xff]
  %v111 = vld [vmem:[%s1 + $0x1c8] sm:$0xff]
  %v112 = vld [vmem:[%s1 + $0x1d0] sm:$0xff]
  %v113 = vld [vmem:[%s1 + $0x1d8] sm:$0xff]
  %v114 = vld [vmem:[%s1 + $0x1e0] sm:$0xff]
  %v115 = vld [vmem:[%s1 + $0x1e8] sm:$0xff]
  %v116 = vld [vmem:[%s1 + $0x1f0] sm:$0xff]
  %v117 = vld [vmem:[%s1 + $0x1f8] sm:$0xff]
  %v118 = vld [vmem:[%s1 + $0x200] sm:$0xff]
  %v119 = vld [vmem:[%s1 + $0x208] sm:$0xff]
  %v120 = vld [vmem:[%s1 + $0x210] sm:$0xff]
  %v121 = vld [vmem:[%s1 + $0x218] sm:$0xff]
  %v122 = vld [vmem:[%s1 + $0x220] sm:$0xff]
  %v123 = vld [vmem:[%s1 + $0x228] sm:$0xff]
  %v124 = vld [vmem:[%s1 + $0x230] sm:$0xff]
  %v125 = vld [vmem:[%s1 + $0x238] sm:$0xff]
  %v126 = vld [vmem:[%s2] sm:$0xff]
  %v127 = vld [vmem:[%s2 + $0x8] sm:$0xff]
  %v128 = vld [vmem:[%s2 + $0x10] sm:$0xff]
  %v129 = vld [vmem:[%s2 + $0x18] sm:$0xff]
  %v130 = vld [vmem:[%s2 + $0x20] sm:$0xff]
  %v131 = vld [vmem:[%s2 + $0x28] sm:$0xff]
  %v132 = vld [vmem:[%s2 + $0x30] sm:$0xff]
  %v133 = vld [vmem:[%s2 + $0x38] sm:$0xff]
  %135 = vset.pattern.permute.xlu0 0
  %136 = vperm.xlu0 %135, %v126
  %v137 = vpop.permute.xlu0 %136
  %140 = vset.pattern.permute.xlu0 0
  %141 = vperm.xlu0 %140, %v127
  %v142 = vpop.permute.xlu0 %141
  %145 = vset.pattern.permute.xlu0 0
  %146 = vperm.xlu0 %145, %v128
  %v147 = vpop.permute.xlu0 %146
  %150 = vset.pattern.permute.xlu0 0
  %151 = vperm.xlu0 %150, %v129
  %v152 = vpop.permute.xlu0 %151
  %155 = vset.pattern.permute.xlu0 0
  %156 = vperm.xlu0 %155, %v130
  %v157 = vpop.permute.xlu0 %156
  %160 = vset.pattern.permute.xlu0 0
  %161 = vperm.xlu0 %160, %v131
  %v162 = vpop.permute.xlu0 %161
  %165 = vset.pattern.permute.xlu0 0
  %166 = vperm.xlu0 %165, %v132
  %v167 = vpop.permute.xlu0 %166
  %170 = vset.pattern.permute.xlu0 0
  %171 = vperm.xlu0 %170, %v133
  %v172 = vpop.permute.xlu0 %171
  %vm174 = vcmask 523264
  %v176 = vsel %vm174, %v18, 0
  %v179 = vsel %vm174, %v23, 0
  %v182 = vsel %vm174, %v28, 0
  %v185 = vsel %vm174, %v33, 0
  %v188 = vsel %vm174, %v38, 0
  %v191 = vsel %vm174, %v43, 0
  %v194 = vsel %vm174, %v48, 0
  %v197 = vsel %vm174, %v53, 0
  %199 = vmatprep.subr.mxu0 0.0
  %200 = vmatpush1.msra.mxu0 %v54
  %201 = vmatprep.subr.mxu0 0.0
  %202 = vmatpush1.msra.mxu0 %v55
  %203 = vmatprep.subr.mxu0 0.0
  %204 = vmatpush1.msra.mxu0 %v56
  %205 = vmatprep.subr.mxu0 0.0
  %206 = vmatpush1.msra.mxu0 %v57
  %207 = vmatprep.subr.mxu0 0.0
  %208 = vmatpush1.msra.mxu0 %v58
  %209 = vmatprep.subr.mxu0 0.0
  %210 = vmatpush1.msra.mxu0 %v59
  %211 = vmatprep.subr.mxu0 0.0
  %212 = vmatpush1.msra.mxu0 %v60
  %213 = vmatprep.subr.mxu0 0.0
  %214 = vmatpush1.msra.mxu0 %v61
  %215 = vmatprep.subr.mxu0 0.0
  %216 = vmatpush1.msra.mxu0 %v62
  %217 = vmatprep.subr.mxu0 0.0
  %218 = vmatpush1.msra.mxu0 %v63
  %219 = vmatprep.subr.mxu0 0.0
  %220 = vmatpush1.msra.mxu0 %v64
  %221 = vmatprep.subr.mxu0 0.0
  %222 = vmatpush1.msra.mxu0 %v65
  %223 = vmatprep.subr.mxu0 0.0
  %224 = vmatpush1.msra.mxu0 %v66
  %225 = vmatprep.subr.mxu0 0.0
  %226 = vmatpush1.msra.mxu0 %v67
  %227 = vmatprep.subr.mxu0 0.0
  %228 = vmatpush1.msra.mxu0 %v68
  %229 = vmatprep.subr.mxu0 0.0
  %230 = vmatpush1.msra.mxu0 %v69
  %231 = vmatprep.subr.mxu0 0.0
  %232 = vmatpush1.msra.mxu0 %v70
  %233 = vmatprep.subr.mxu0 0.0
  %234 = vmatpush1.msra.mxu0 %v71
  %235 = vmatprep.subr.mxu0 0.0
  %236 = vmatpush1.msra.mxu0 %v72
  %237 = vmatprep.subr.mxu0 0.0
  %238 = vmatpush1.msra.mxu0 %v73
  %239 = vmatprep.subr.mxu0 0.0
  %240 = vmatpush1.msra.mxu0 %v74
  %241 = vmatprep.subr.mxu0 0.0
  %242 = vmatpush1.msra.mxu0 %v75
  %243 = vmatprep.subr.mxu0 0.0
  %244 = vmatpush1.msra.mxu0 %v76
  %245 = vmatprep.subr.mxu0 0.0
  %246 = vmatpush1.msra.mxu0 %v77
  %247 = vmatprep.subr.mxu0 0.0
  %248 = vmatpush1.msra.mxu0 %v78
  %249 = vmatprep.subr.mxu0 0.0
  %250 = vmatpush1.msra.mxu0 %v79
  %251 = vmatprep.subr.mxu0 0.0
  %252 = vmatpush1.msra.mxu0 %v80
  %253 = vmatprep.subr.mxu0 0.0
  %254 = vmatpush1.msra.mxu0 %v81
  %255 = vmatprep.subr.mxu0 0.0
  %256 = vmatpush1.msra.mxu0 %v82
  %257 = vmatprep.subr.mxu0 0.0
  %258 = vmatpush1.msra.mxu0 %v83
  %259 = vmatprep.subr.mxu0 0.0
  %260 = vmatpush1.msra.mxu0 %v84
  %261 = vmatprep.subr.mxu0 0.0
  %262 = vmatpush1.msra.mxu0 %v85
  %263 = vmatprep.mubr.f32.mxu0 %v15
  %264 = vmatmul.mubr.f32.gmra.mrb[0].mxu0 %v14
  %v265 = vpop.f32.mrb[0].mxu0
  %v266 = vadd.f32 %v137, %v265
  %v267 = vpop.f32.mrb[0].mxu0
  %268 = vmatprep.mubr.f32.mxu0 %v20
  %269 = vmatmul.mubr.f32.gmra.mrb[0].mxu0 %v19
  %v270 = vpop.f32.mrb[0].mxu0
  %v271 = vadd.f32 %v142, %v270
  %v272 = vpop.f32.mrb[0].mxu0
  %273 = vmatprep.mubr.f32.mxu0 %v25
  %274 = vmatmul.mubr.f32.gmra.mrb[0].mxu0 %v24
  %v275 = vpop.f32.mrb[0].mxu0
  %v276 = vadd.f32 %v147, %v275
  %v277 = vpop.f32.mrb[0].mxu0
  %278 = vmatprep.mubr.f32.mxu0 %v30
  %279 = vmatmul.mubr.f32.gmra.mrb[0].mxu0 %v29
  %v280 = vpop.f32.mrb[0].mxu0
  %v281 = vadd.f32 %v152, %v280
  %v282 = vpop.f32.mrb[0].mxu0
  %283 = vmatprep.mubr.f32.mxu0 %v35
  %284 = vmatmul.mubr.f32.gmra.mrb[0].mxu0 %v34
  %v285 = vpop.f32.mrb[0].mxu0
  %v286 = vadd.f32 %v157, %v285
  %v287 = vpop.f32.mrb[0].mxu0
  %288 = vmatprep.mubr.f32.mxu0 %v40
  %289 = vmatmul.mubr.f32.gmra.mrb[0].mxu0 %v39
  %v290 = vpop.f32.mrb[0].mxu0
  %v291 = vadd.f32 %v162, %v290
  %v292 = vpop.f32.mrb[0].mxu0
  %293 = vmatprep.mubr.f32.mxu0 %v45
  %294 = vmatmul.mubr.f32.gmra.mrb[0].mxu0 %v44
  %v295 = vpop.f32.mrb[0].mxu0
  %v296 = vadd.f32 %v167, %v295
  %v297 = vpop.f32.mrb[0].mxu0
  %298 = vmatprep.mubr.f32.mxu0 %v50
  %299 = vmatmul.mubr.f32.gmra.mrb[0].mxu0 %v49
  %v300 = vpop.f32.mrb[0].mxu0
  %v301 = vadd.f32 %v172, %v300
  %v302 = vpop.f32.mrb[0].mxu0
  %303 = vdwg.mxu0
  %304 = vmatprep.subr.mxu0 0.0
  %305 = vmatpush1.msra.mxu0 %v86
  %306 = vmatprep.subr.mxu0 0.0
  %307 = vmatpush1.msra.mxu0 %v87
  %308 = vmatprep.subr.mxu0 0.0
  %309 = vmatpush1.msra.mxu0 %v88
  %310 = vmatprep.subr.mxu0 0.0
  %311 = vmatpush1.msra.mxu0 %v89
  %312 = vmatprep.subr.mxu0 0.0
  %313 = vmatpush1.msra.mxu0 %v90
  %314 = vmatprep.subr.mxu0 0.0
  %315 = vmatpush1.msra.mxu0 %v91
  %316 = vmatprep.subr.mxu0 0.0
  %317 = vmatpush1.msra.mxu0 %v92
  %318 = vmatprep.subr.mxu0 0.0
  %319 = vmatpush1.msra.mxu0 %v93
  %320 = vmatprep.subr.mxu0 0.0
  %321 = vmatpush1.msra.mxu0 %v94
  %322 = vmatprep.subr.mxu0 0.0
  %323 = vmatpush1.msra.mxu0 %v95
  %324 = vmatprep.subr.mxu0 0.0
  %325 = vmatpush1.msra.mxu0 %v96
  %326 = vmatprep.subr.mxu0 0.0
  %327 = vmatpush1.msra.mxu0 %v97
  %328 = vmatprep.subr.mxu0 0.0
  %329 = vmatpush1.msra.mxu0 %v98
  %330 = vmatprep.subr.mxu0 0.0
  %331 = vmatpush1.msra.mxu0 %v99
  %332 = vmatprep.subr.mxu0 0.0
  %333 = vmatpush1.msra.mxu0 %v100
  %334 = vmatprep.subr.mxu0 0.0
  %335 = vmatpush1.msra.mxu0 %v101
  %336 = vmatprep.subr.mxu0 0.0
  %337 = vmatpush1.msra.mxu0 %v102
  %338 = vmatprep.subr.mxu0 0.0
  %339 = vmatpush1.msra.mxu0 %v103
  %340 = vmatprep.subr.mxu0 0.0
  %341 = vmatpush1.msra.mxu0 %v104
  %342 = vmatprep.subr.mxu0 0.0
  %343 = vmatpush1.msra.mxu0 %v105
  %344 = vmatprep.subr.mxu0 0.0
  %345 = vmatpush1.msra.mxu0 %v106
  %346 = vmatprep.subr.mxu0 0.0
  %347 = vmatpush1.msra.mxu0 %v107
  %348 = vmatprep.subr.mxu0 0.0
  %349 = vmatpush1.msra.mxu0 %v108
  %350 = vmatprep.subr.mxu0 0.0
  %351 = vmatpush1.msra.mxu0 %v109
  %352 = vmatprep.subr.mxu0 0.0
  %353 = vmatpush1.msra.mxu0 %v110
  %354 = vmatprep.subr.mxu0 0.0
  %355 = vmatpush1.msra.mxu0 %v111
  %356 = vmatprep.subr.mxu0 0.0
  %357 = vmatpush1.msra.mxu0 %v112
  %358 = vmatprep.subr.mxu0 0.0
  %359 = vmatpush1.msra.mxu0 %v113
  %360 = vmatprep.subr.mxu0 0.0
  %361 = vmatpush1.msra.mxu0 %v114
  %362 = vmatprep.subr.mxu0 0.0
  %363 = vmatpush1.msra.mxu0 %v115
  %364 = vmatprep.subr.mxu0 0.0
  %365 = vmatpush1.msra.mxu0 %v116
  %366 = vmatprep.subr.mxu0 0.0
  %367 = vmatpush1.msra.mxu0 %v117
  %368 = vmatprep.mubr.f32.mxu0 %v17
  %369 = vmatmul.mubr.f32.gmra.mrb[0].mxu0 %v16
  %v370 = vpop.f32.mrb[0].mxu0
  %v371 = vadd.f32 %v266, %v370
  %v372 = vpop.f32.mrb[0].mxu0
  %373 = vmatprep.mubr.f32.mxu0 %v22
  %374 = vmatmul.mubr.f32.gmra.mrb[0].mxu0 %v21
  %v375 = vpop.f32.mrb[0].mxu0
  %v376 = vadd.f32 %v271, %v375
  %v377 = vpop.f32.mrb[0].mxu0
  %378 = vmatprep.mubr.f32.mxu0 %v27
  %379 = vmatmul.mubr.f32.gmra.mrb[0].mxu0 %v26
  %v380 = vpop.f32.mrb[0].mxu0
  %v381 = vadd.f32 %v276, %v380
  %v382 = vpop.f32.mrb[0].mxu0
  %383 = vmatprep.mubr.f32.mxu0 %v32
  %384 = vmatmul.mubr.f32.gmra.mrb[0].mxu0 %v31
  %v385 = vpop.f32.mrb[0].mxu0
  %v386 = vadd.f32 %v281, %v385
  %v387 = vpop.f32.mrb[0].mxu0
  %388 = vmatprep.mubr.f32.mxu0 %v37
  %389 = vmatmul.mubr.f32.gmra.mrb[0].mxu0 %v36
  %v390 = vpop.f32.mrb[0].mxu0
  %v391 = vadd.f32 %v286, %v390
  %v392 = vpop.f32.mrb[0].mxu0
  %393 = vmatprep.mubr.f32.mxu0 %v42
  %394 = vmatmul.mubr.f32.gmra.mrb[0].mxu0 %v41
  %v395 = vpop.f32.mrb[0].mxu0
  %v396 = vadd.f32 %v291, %v395
  %v397 = vpop.f32.mrb[0].mxu0
  %398 = vmatprep.mubr.f32.mxu0 %v47
  %399 = vmatmul.mubr.f32.gmra.mrb[0].mxu0 %v46
  %v400 = vpop.f32.mrb[0].mxu0
  %v401 = vadd.f32 %v296, %v400
  %v402 = vpop.f32.mrb[0].mxu0
  %403 = vmatprep.mubr.f32.mxu0 %v52
  %404 = vmatmul.mubr.f32.gmra.mrb[0].mxu0 %v51
  %v405 = vpop.f32.mrb[0].mxu0
  %v406 = vadd.f32 %v301, %v405
  %v407 = vpop.f32.mrb[0].mxu0
  %408 = vdwg.mxu0
  %409 = vmatprep.subr.mxu0 0.0
  %410 = vmatpush1.msra.mxu0 %v118
  %411 = vmatprep.subr.mxu0 0.0
  %412 = vmatpush1.msra.mxu0 %v119
  %413 = vmatprep.subr.mxu0 0.0
  %414 = vmatpush1.msra.mxu0 %v120
  %415 = vmatprep.subr.mxu0 0.0
  %416 = vmatpush1.msra.mxu0 %v121
  %417 = vmatprep.subr.mxu0 0.0
  %418 = vmatpush1.msra.mxu0 %v122
  %419 = vmatprep.subr.mxu0 0.0
  %420 = vmatpush1.msra.mxu0 %v123
  %421 = vmatprep.subr.mxu0 0.0
  %422 = vmatpush1.msra.mxu0 %v124
  %423 = vmatprep.subr.mxu0 0.0
  %424 = vmatpush1.msra.mxu0 %v125
  %425 = vmatprep.subr.mxu0 0.0
  %426 = vmatpush1.msra.mxu0 0.0
  %427 = vmatprep.subr.mxu0 0.0
  %428 = vmatpush1.msra.mxu0 0.0
  %429 = vmatprep.subr.mxu0 0.0
  %430 = vmatpush1.msra.mxu0 0.0
  %431 = vmatprep.subr.mxu0 0.0
  %432 = vmatpush1.msra.mxu0 0.0
  %433 = vmatprep.subr.mxu0 0.0
  %434 = vmatpush1.msra.mxu0 0.0
  %435 = vmatprep.subr.mxu0 0.0
  %436 = vmatpush1.msra.mxu0 0.0
  %437 = vmatprep.subr.mxu0 0.0
  %438 = vmatpush1.msra.mxu0 0.0
  %439 = vmatprep.subr.mxu0 0.0
  %440 = vmatpush1.msra.mxu0 0.0
  %441 = vmatprep.subr.mxu0 0.0
  %442 = vmatpush1.msra.mxu0 0.0
  %443 = vmatprep.subr.mxu0 0.0
  %444 = vmatpush1.msra.mxu0 0.0
  %445 = vmatprep.subr.mxu0 0.0
  %446 = vmatpush1.msra.mxu0 0.0
  %447 = vmatprep.subr.mxu0 0.0
  %448 = vmatpush1.msra.mxu0 0.0
  %449 = vmatprep.subr.mxu0 0.0
  %450 = vmatpush1.msra.mxu0 0.0
  %451 = vmatprep.subr.mxu0 0.0
  %452 = vmatpush1.msra.mxu0 0.0
  %453 = vmatprep.subr.mxu0 0.0
  %454 = vmatpush1.msra.mxu0 0.0
  %455 = vmatprep.subr.mxu0 0.0
  %456 = vmatpush1.msra.mxu0 0.0
  %457 = vmatprep.subr.mxu0 0.0
  %458 = vmatpush1.msra.mxu0 0.0
  %459 = vmatprep.subr.mxu0 0.0
  %460 = vmatpush1.msra.mxu0 0.0
  %461 = vmatprep.subr.mxu0 0.0
  %462 = vmatpush1.msra.mxu0 0.0
  %463 = vmatprep.subr.mxu0 0.0
  %464 = vmatpush1.msra.mxu0 0.0
  %465 = vmatprep.subr.mxu0 0.0
  %466 = vmatpush1.msra.mxu0 0.0
  %467 = vmatprep.subr.mxu0 0.0
  %468 = vmatpush1.msra.mxu0 0.0
  %469 = vmatprep.subr.mxu0 0.0
  %470 = vmatpush1.msra.mxu0 0.0
  %471 = vmatprep.subr.mxu0 0.0
  %472 = vmatpush1.msra.mxu0 0.0
  %473 = vmatprep.mubr.f32.mxu0 0.0
  %474 = vmatmul.mubr.f32.gmra.mrb[0].mxu0 %v176
  %v475 = vpop.f32.mrb[0].mxu0
  %v476 = vadd.f32 %v371, %v475
  %v477 = vpop.f32.mrb[0].mxu0
  %478 = vmatprep.mubr.f32.mxu0 0.0
  %479 = vmatmul.mubr.f32.gmra.mrb[0].mxu0 %v179
  %v480 = vpop.f32.mrb[0].mxu0
  %v481 = vadd.f32 %v376, %v480
  %v482 = vpop.f32.mrb[0].mxu0
  %483 = vmatprep.mubr.f32.mxu0 0.0
  %484 = vmatmul.mubr.f32.gmra.mrb[0].mxu0 %v182
  %v485 = vpop.f32.mrb[0].mxu0
  %v486 = vadd.f32 %v381, %v485
  %v487 = vpop.f32.mrb[0].mxu0
  %488 = vmatprep.mubr.f32.mxu0 0.0
  %489 = vmatmul.mubr.f32.gmra.mrb[0].mxu0 %v185
  %v490 = vpop.f32.mrb[0].mxu0
  %v491 = vadd.f32 %v386, %v490
  %v492 = vpop.f32.mrb[0].mxu0
  %493 = vmatprep.mubr.f32.mxu0 0.0
  %494 = vmatmul.mubr.f32.gmra.mrb[0].mxu0 %v188
  %v495 = vpop.f32.mrb[0].mxu0
  %v496 = vadd.f32 %v391, %v495
  %v497 = vpop.f32.mrb[0].mxu0
  %498 = vmatprep.mubr.f32.mxu0 0.0
  %499 = vmatmul.mubr.f32.gmra.mrb[0].mxu0 %v191
  %v500 = vpop.f32.mrb[0].mxu0
  %v501 = vadd.f32 %v396, %v500
  %v502 = vpop.f32.mrb[0].mxu0
  %503 = vmatprep.mubr.f32.mxu0 0.0
  %504 = vmatmul.mubr.f32.gmra.mrb[0].mxu0 %v194
  %v505 = vpop.f32.mrb[0].mxu0
  %v506 = vadd.f32 %v401, %v505
  %v507 = vpop.f32.mrb[0].mxu0
  %508 = vmatprep.mubr.f32.mxu0 0.0
  %509 = vmatmul.mubr.f32.gmra.mrb[0].mxu0 %v197
  %v510 = vpop.f32.mrb[0].mxu0
  %v511 = vadd.f32 %v406, %v510
  %v512 = vpop.f32.mrb[0].mxu0
  %513 = vdwg.mxu0
  %v514 = vand.u32 2147483647, %v476
  %v515 = vand.u32 2147483647, %v481
  %v516 = vand.u32 2147483647, %v486
  %v517 = vand.u32 2147483647, %v491
  %v518 = vand.u32 2147483647, %v496
  %v519 = vand.u32 2147483647, %v501
  %v520 = vand.u32 2147483647, %v506
  %v521 = vand.u32 2147483647, %v511
  %v522 = vmul.f32 %v514, 0.70710677
  %v523 = vmul.f32 %v515, 0.70710677
  %v524 = vmul.f32 %v516, 0.70710677
  %v525 = vmul.f32 %v517, 0.70710677
  %v526 = vmul.f32 %v518, 0.70710677
  %v527 = vmul.f32 %v519, 0.70710677
  %v528 = vmul.f32 %v520, 0.70710677
  %v529 = vmul.f32 %v521, 0.70710677
  %v530 = vmul.f32 %v522, 0.3275911
  %v531 = vmul.f32 %v523, 0.3275911
  %v532 = vmul.f32 %v524, 0.3275911
  %v533 = vmul.f32 %v525, 0.3275911
  %v534 = vmul.f32 %v526, 0.3275911
  %v535 = vmul.f32 %v527, 0.3275911
  %v536 = vmul.f32 %v528, 0.3275911
  %v537 = vmul.f32 %v529, 0.3275911
  %v538 = vadd.f32 %v530, 1.0
  %v539 = vadd.f32 %v531, 1.0
  %v540 = vadd.f32 %v532, 1.0
  %v541 = vadd.f32 %v533, 1.0
  %v542 = vadd.f32 %v534, 1.0
  %v543 = vadd.f32 %v535, 1.0
  %v544 = vadd.f32 %v536, 1.0
  %v545 = vadd.f32 %v537, 1.0
  %v546 = vrcp.pop %v538
  %v547 = vmul.f32 1.0, %v546
  %v548 = vrcp.pop %v539
  %v549 = vmul.f32 1.0, %v548
  %v550 = vrcp.pop %v540
  %v551 = vmul.f32 1.0, %v550
  %v552 = vrcp.pop %v541
  %v553 = vmul.f32 1.0, %v552
  %v554 = vrcp.pop %v542
  %v555 = vmul.f32 1.0, %v554
  %v556 = vrcp.pop %v543
  %v557 = vmul.f32 1.0, %v556
  %v558 = vrcp.pop %v544
  %v559 = vmul.f32 1.0, %v558
  %v560 = vrcp.pop %v545
  %v561 = vmul.f32 1.0, %v560
  %v562 = vmul.f32 %v547, 1.0614054
  %v563 = vmul.f32 %v549, 1.0614054
  %v564 = vmul.f32 %v551, 1.0614054
  %v565 = vmul.f32 %v553, 1.0614054
  %v566 = vmul.f32 %v555, 1.0614054
  %v567 = vmul.f32 %v557, 1.0614054
  %v568 = vmul.f32 %v559, 1.0614054
  %v569 = vmul.f32 %v561, 1.0614054
  %v570 = vadd.f32 %v562, -1.4531521
  %v571 = vadd.f32 %v563, -1.4531521
  %v572 = vadd.f32 %v564, -1.4531521
  %v573 = vadd.f32 %v565, -1.4531521
  %v574 = vadd.f32 %v566, -1.4531521
  %v575 = vadd.f32 %v567, -1.4531521
  %v576 = vadd.f32 %v568, -1.4531521
  %v577 = vadd.f32 %v569, -1.4531521
  %v578 = vmul.f32 %v570, %v547
  %v579 = vmul.f32 %v571, %v549
  %v580 = vmul.f32 %v572, %v551
  %v581 = vmul.f32 %v573, %v553
  %v582 = vmul.f32 %v574, %v555
  %v583 = vmul.f32 %v575, %v557
  %v584 = vmul.f32 %v576, %v559
  %v585 = vmul.f32 %v577, %v561
  %v586 = vadd.f32 %v578, 1.4214138
  %v587 = vadd.f32 %v579, 1.4214138
  %v588 = vadd.f32 %v580, 1.4214138
  %v589 = vadd.f32 %v581, 1.4214138
  %v590 = vadd.f32 %v582, 1.4214138
  %v591 = vadd.f32 %v583, 1.4214138
  %v592 = vadd.f32 %v584, 1.4214138
  %v593 = vadd.f32 %v585, 1.4214138
  %v594 = vmul.f32 %v586, %v547
  %v595 = vmul.f32 %v587, %v549
  %v596 = vmul.f32 %v588, %v551
  %v597 = vmul.f32 %v589, %v553
  %v598 = vmul.f32 %v590, %v555
  %v599 = vmul.f32 %v591, %v557
  %v600 = vmul.f32 %v592, %v559
  %v601 = vmul.f32 %v593, %v561
  %v602 = vadd.f32 %v594, -0.28449672
  %v603 = vadd.f32 %v595, -0.28449672
  %v604 = vadd.f32 %v596, -0.28449672
  %v605 = vadd.f32 %v597, -0.28449672
  %v606 = vadd.f32 %v598, -0.28449672
  %v607 = vadd.f32 %v599, -0.28449672
  %v608 = vadd.f32 %v600, -0.28449672
  %v609 = vadd.f32 %v601, -0.28449672
  %v610 = vmul.f32 %v602, %v547
  %v611 = vmul.f32 %v603, %v549
  %v612 = vmul.f32 %v604, %v551
  %v613 = vmul.f32 %v605, %v553
  %v614 = vmul.f32 %v606, %v555
  %v615 = vmul.f32 %v607, %v557
  %v616 = vmul.f32 %v608, %v559
  %v617 = vmul.f32 %v609, %v561
  %v618 = vadd.f32 %v610, 0.2548296
  %v619 = vadd.f32 %v611, 0.2548296
  %v620 = vadd.f32 %v612, 0.2548296
  %v621 = vadd.f32 %v613, 0.2548296
  %v622 = vadd.f32 %v614, 0.2548296
  %v623 = vadd.f32 %v615, 0.2548296
  %v624 = vadd.f32 %v616, 0.2548296
  %v625 = vadd.f32 %v617, 0.2548296
  %v626 = vmul.f32 %v618, %v547
  %v627 = vmul.f32 %v619, %v549
  %v628 = vmul.f32 %v620, %v551
  %v629 = vmul.f32 %v621, %v553
  %v630 = vmul.f32 %v622, %v555
  %v631 = vmul.f32 %v623, %v557
  %v632 = vmul.f32 %v624, %v559
  %v633 = vmul.f32 %v625, %v561
  %v634 = vmul.f32 %v476, 0.5
  %v635 = vmul.f32 %v481, 0.5
  %v636 = vmul.f32 %v486, 0.5
  %v637 = vmul.f32 %v491, 0.5
  %v638 = vmul.f32 %v496, 0.5
  %v639 = vmul.f32 %v501, 0.5
  %v640 = vmul.f32 %v506, 0.5
  %v641 = vmul.f32 %v511, 0.5
  %v642 = vmul.f32 %v634, %v626
  %v643 = vmul.f32 %v635, %v627
  %v644 = vmul.f32 %v636, %v628
  %v645 = vmul.f32 %v637, %v629
  %v646 = vmul.f32 %v638, %v630
  %v647 = vmul.f32 %v639, %v631
  %v648 = vmul.f32 %v640, %v632
  %v649 = vmul.f32 %v641, %v633
  %v650 = vsub.f32 0.0, %v522
  %v651 = vsub.f32 0.0, %v523
  %v652 = vsub.f32 0.0, %v524
  %v653 = vsub.f32 0.0, %v525
  %v654 = vsub.f32 0.0, %v526
  %v655 = vsub.f32 0.0, %v527
  %v656 = vsub.f32 0.0, %v528
  %v657 = vsub.f32 0.0, %v529
  %v658 = vmul.f32 %v650, %v522
  %v659 = vmul.f32 %v651, %v523
  %v660 = vmul.f32 %v652, %v524
  %v661 = vmul.f32 %v653, %v525
  %v662 = vmul.f32 %v654, %v526
  %v663 = vmul.f32 %v655, %v527
  %v664 = vmul.f32 %v656, %v528
  %v665 = vmul.f32 %v657, %v529
  %v666 = vmul.f32 %v658, 1.442695
  %v667 = vpow.pop %v666
  %v668 = vmul.f32 %v659, 1.442695
  %v669 = vpow.pop %v668
  %v670 = vmul.f32 %v660, 1.442695
  %v671 = vpow.pop %v670
  %v672 = vmul.f32 %v661, 1.442695
  %v673 = vpow.pop %v672
  %v674 = vmul.f32 %v662, 1.442695
  %v675 = vpow.pop %v674
  %v676 = vmul.f32 %v663, 1.442695
  %v677 = vpow.pop %v676
  %v678 = vmul.f32 %v664, 1.442695
  %v679 = vpow.pop %v678
  %v680 = vmul.f32 %v665, 1.442695
  %v681 = vpow.pop %v680
  %v682 = vmul.f32 %v642, %v667
  %v683 = vmul.f32 %v643, %v669
  %v684 = vmul.f32 %v644, %v671
  %v685 = vmul.f32 %v645, %v673
  %v686 = vmul.f32 %v646, %v675
  %v687 = vmul.f32 %v647, %v677
  %v688 = vmul.f32 %v648, %v679
  %v689 = vmul.f32 %v649, %v681
  %vm690 = vcmp.ge.f32.partialorder %v476, 0.0
  %vm691 = vcmp.ge.f32.partialorder %v481, 0.0
  %vm692 = vcmp.ge.f32.partialorder %v486, 0.0
  %vm693 = vcmp.ge.f32.partialorder %v491, 0.0
  %vm694 = vcmp.ge.f32.partialorder %v496, 0.0
  %vm695 = vcmp.ge.f32.partialorder %v501, 0.0
  %vm696 = vcmp.ge.f32.partialorder %v506, 0.0
  %vm697 = vcmp.ge.f32.partialorder %v511, 0.0
  %v698 = vsub.f32 %v476, %v682
  %v699 = vsub.f32 %v481, %v683
  %v700 = vsub.f32 %v486, %v684
  %v701 = vsub.f32 %v491, %v685
  %v702 = vsub.f32 %v496, %v686
  %v703 = vsub.f32 %v501, %v687
  %v704 = vsub.f32 %v506, %v688
  %v705 = vsub.f32 %v511, %v689
  %v706 = vsel %vm690, %v698, %v682
  %v707 = vsel %vm691, %v699, %v683
  %v708 = vsel %vm692, %v700, %v684
  %v709 = vsel %vm693, %v701, %v685
  %v710 = vsel %vm694, %v702, %v686
  %v711 = vsel %vm695, %v703, %v687
  %v712 = vsel %vm696, %v704, %v688
  %v713 = vsel %vm697, %v705, %v689
  %vm714 = vcmask 261120
  %715 = vst.msk [vmem:[%s3] sm:$0xff] %vm714, %v706
  %716 = vst.msk [vmem:[%s3 + $0x8] sm:$0xff] %vm714, %v707
  %717 = vst.msk [vmem:[%s3 + $0x10] sm:$0xff] %vm714, %v708
  %718 = vst.msk [vmem:[%s3 + $0x18] sm:$0xff] %vm714, %v709
  %719 = vst.msk [vmem:[%s3 + $0x20] sm:$0xff] %vm714, %v710
  %720 = vst.msk [vmem:[%s3 + $0x28] sm:$0xff] %vm714, %v711
  %721 = vst.msk [vmem:[%s3 + $0x30] sm:$0xff] %vm714, %v712
  %722 = vst.msk [vmem:[%s3 + $0x38] sm:$0xff] %vm714, %v713
  // Predicated region
  $region14: #{encoder_forward.10} parent=0 // pred_check
    _
  $region15: #{encoder_forward.10} parent=0 // pred_check_branch
    %724 = sbr.rel (0) target = $region17
  $region16: #{encoder_forward.10} parent=0 // pred_region
    _
  $region17: #{encoder_forward.10} parent=0 // pred_fallthru
    _
  // Predicated region
  $region18: #{encoder_forward.10} parent=0 // pred_check
    _
  $region19: #{encoder_forward.10} parent=0 // pred_check_branch
    %726 = sbr.rel (0) target = $region21
  $region20: #{encoder_forward.10} parent=0 // pred_region
    _
  $region21: #{encoder_forward.10} parent=0 // pred_fallthru
    _

// kernel: encoder_forward.11
$region0: #{encoder_forward.11}
  #allocation0 [shape = 'u32[]', space=smem, size = 0x4, offset = 0x4, fixed_abs, tag = 'smem constant byte address 0x4 - core index']
  #allocation1 [shape = 'u32[144,128]{1,0:T(1,128)}', space=vmem, size = 0x12000, scoped, tag = 'internal scratch']
  %s0 = inlined_call_operand.vmem [shape: f32[64,256], index: 0, kind: input, shape index: {}]
  %s1 = inlined_call_operand.vmem [shape: f32[256,2], index: 1, kind: input, shape index: {}]
  %s2 = inlined_call_operand.vmem [shape: f32[64,1], index: 2, kind: input, shape index: {}]
  %s3 = inlined_call_operand.vmem [shape: f32[64,2], index: 3, kind: output, shape index: {}]
  %s4 = sld [smem:[#allocation0]]
  $region22: #{encoder_forward.11} parent=0
    _
  %s6 = ssub.s32 1, %s4
  %s7 = scalar_select 0, %s6, %s4
  // Predicated region
  $region2: #{encoder_forward.11} parent=0 // pred_check
    _
  $region3: #{encoder_forward.11} parent=0 // pred_check_branch
    %9 = sbr.rel (0) target = $region5
  $region4: #{encoder_forward.11} parent=0 // pred_region
    _
  $region5: #{encoder_forward.11} parent=0 // pred_fallthru
    _
  // Predicated region
  $region6: #{encoder_forward.11} parent=0 // pred_check
    _
  $region7: #{encoder_forward.11} parent=0 // pred_check_branch
    %11 = sbr.rel (0) target = $region9
  $region8: #{encoder_forward.11} parent=0 // pred_region
    _
  $region9: #{encoder_forward.11} parent=0 // pred_fallthru
    _
  // Predicated region
  $region10: #{encoder_forward.11} parent=0 // pred_check
    _
  $region11: #{encoder_forward.11} parent=0 // pred_check_branch
    %13 = sbr.rel (0) target = $region13
  $region12: #{encoder_forward.11} parent=0 // pred_region
    _
  $region13: #{encoder_forward.11} parent=0 // pred_fallthru
    _
  %v14 = vld [vmem:[%s0] sm:$0xff]
  %v15 = vld [vmem:[%s0 + $0x8] sm:$0xff]
  %v16 = vld [vmem:[%s0 + $0x10] sm:$0xff]
  %v17 = vld [vmem:[%s0 + $0x18] sm:$0xff]
  %v18 = vld [vmem:[%s0 + $0x20] sm:$0xff]
  %v19 = vld [vmem:[%s0 + $0x28] sm:$0xff]
  %v20 = vld [vmem:[%s0 + $0x30] sm:$0xff]
  %v21 = vld [vmem:[%s0 + $0x38] sm:$0xff]
  %v22 = vld [vmem:[%s0 + $0x40] sm:$0xff]
  %v23 = vld [vmem:[%s0 + $0x48] sm:$0xff]
  %v24 = vld [vmem:[%s0 + $0x50] sm:$0xff]
  %v25 = vld [vmem:[%s0 + $0x58] sm:$0xff]
  %v26 = vld [vmem:[%s0 + $0x60] sm:$0xff]
  %v27 = vld [vmem:[%s0 + $0x68] sm:$0xff]
  %v28 = vld [vmem:[%s0 + $0x70] sm:$0xff]
  %v29 = vld [vmem:[%s0 + $0x78] sm:$0xff]
  %v30 = vld [vmem:[%s1] sm:$0xff]
  %v31 = vld [vmem:[%s1 + $0x8] sm:$0xff]
  %v32 = vld [vmem:[%s1 + $0x10] sm:$0xff]
  %v33 = vld [vmem:[%s1 + $0x18] sm:$0xff]
  %v34 = vld [vmem:[%s1 + $0x20] sm:$0xff]
  %v35 = vld [vmem:[%s1 + $0x28] sm:$0xff]
  %v36 = vld [vmem:[%s1 + $0x30] sm:$0xff]
  %v37 = vld [vmem:[%s1 + $0x38] sm:$0xff]
  %v38 = vld [vmem:[%s1 + $0x40] sm:$0xff]
  %v39 = vld [vmem:[%s1 + $0x48] sm:$0xff]
  %v40 = vld [vmem:[%s1 + $0x50] sm:$0xff]
  %v41 = vld [vmem:[%s1 + $0x58] sm:$0xff]
  %v42 = vld [vmem:[%s1 + $0x60] sm:$0xff]
  %v43 = vld [vmem:[%s1 + $0x68] sm:$0xff]
  %v44 = vld [vmem:[%s1 + $0x70] sm:$0xff]
  %v45 = vld [vmem:[%s1 + $0x78] sm:$0xff]
  %v46 = vld [vmem:[%s1 + $0x80] sm:$0xff]
  %v47 = vld [vmem:[%s1 + $0x88] sm:$0xff]
  %v48 = vld [vmem:[%s1 + $0x90] sm:$0xff]
  %v49 = vld [vmem:[%s1 + $0x98] sm:$0xff]
  %v50 = vld [vmem:[%s1 + $0xa0] sm:$0xff]
  %v51 = vld [vmem:[%s1 + $0xa8] sm:$0xff]
  %v52 = vld [vmem:[%s1 + $0xb0] sm:$0xff]
  %v53 = vld [vmem:[%s1 + $0xb8] sm:$0xff]
  %v54 = vld [vmem:[%s1 + $0xc0] sm:$0xff]
  %v55 = vld [vmem:[%s1 + $0xc8] sm:$0xff]
  %v56 = vld [vmem:[%s1 + $0xd0] sm:$0xff]
  %v57 = vld [vmem:[%s1 + $0xd8] sm:$0xff]
  %v58 = vld [vmem:[%s1 + $0xe0] sm:$0xff]
  %v59 = vld [vmem:[%s1 + $0xe8] sm:$0xff]
  %v60 = vld [vmem:[%s1 + $0xf0] sm:$0xff]
  %v61 = vld [vmem:[%s1 + $0xf8] sm:$0xff]
  %v62 = vld [vmem:[%s2] sm:$0xff]
  %v63 = vld [vmem:[%s2 + $0x8] sm:$0xff]
  %v64 = vld [vmem:[%s2 + $0x10] sm:$0xff]
  %v65 = vld [vmem:[%s2 + $0x18] sm:$0xff]
  %v66 = vld [vmem:[%s2 + $0x20] sm:$0xff]
  %v67 = vld [vmem:[%s2 + $0x28] sm:$0xff]
  %v68 = vld [vmem:[%s2 + $0x30] sm:$0xff]
  %v69 = vld [vmem:[%s2 + $0x38] sm:$0xff]
  %71 = vset.pattern.permute.xlu0 0
  %72 = vperm.xlu0 %71, %v62
  %v73 = vpop.permute.xlu0 %72
  %76 = vset.pattern.permute.xlu0 0
  %77 = vperm.xlu0 %76, %v63
  %v78 = vpop.permute.xlu0 %77
  %81 = vset.pattern.permute.xlu0 0
  %82 = vperm.xlu0 %81, %v64
  %v83 = vpop.permute.xlu0 %82
  %86 = vset.pattern.permute.xlu0 0
  %87 = vperm.xlu0 %86, %v65
  %v88 = vpop.permute.xlu0 %87
  %91 = vset.pattern.permute.xlu0 0
  %92 = vperm.xlu0 %91, %v66
  %v93 = vpop.permute.xlu0 %92
  %96 = vset.pattern.permute.xlu0 0
  %97 = vperm.xlu0 %96, %v67
  %v98 = vpop.permute.xlu0 %97
  %101 = vset.pattern.permute.xlu0 0
  %102 = vperm.xlu0 %101, %v68
  %v103 = vpop.permute.xlu0 %102
  %106 = vset.pattern.permute.xlu0 0
  %107 = vperm.xlu0 %106, %v69
  %v108 = vpop.permute.xlu0 %107
  %110 = vmatprep.subr.mxu0 0.0
  %111 = vmatpush1.msra.mxu0 %v30
  %112 = vmatprep.subr.mxu0 0.0
  %113 = vmatpush1.msra.mxu0 %v31
  %114 = vmatprep.subr.mxu0 0.0
  %115 = vmatpush1.msra.mxu0 %v32
  %116 = vmatprep.subr.mxu0 0.0
  %117 = vmatpush1.msra.mxu0 %v33
  %118 = vmatprep.subr.mxu0 0.0
  %119 = vmatpush1.msra.mxu0 %v34
  %120 = vmatprep.subr.mxu0 0.0
  %121 = vmatpush1.msra.mxu0 %v35
  %122 = vmatprep.subr.mxu0 0.0
  %123 = vmatpush1.msra.mxu0 %v36
  %124 = vmatprep.subr.mxu0 0.0
  %125 = vmatpush1.msra.mxu0 %v37
  %126 = vmatprep.subr.mxu0 0.0
  %127 = vmatpush1.msra.mxu0 %v38
  %128 = vmatprep.subr.mxu0 0.0
  %129 = vmatpush1.msra.mxu0 %v39
  %130 = vmatprep.subr.mxu0 0.0
  %131 = vmatpush1.msra.mxu0 %v40
  %132 = vmatprep.subr.mxu0 0.0
  %133 = vmatpush1.msra.mxu0 %v41
  %134 = vmatprep.subr.mxu0 0.0
  %135 = vmatpush1.msra.mxu0 %v42
  %136 = vmatprep.subr.mxu0 0.0
  %137 = vmatpush1.msra.mxu0 %v43
  %138 = vmatprep.subr.mxu0 0.0
  %139 = vmatpush1.msra.mxu0 %v44
  %140 = vmatprep.subr.mxu0 0.0
  %141 = vmatpush1.msra.mxu0 %v45
  %142 = vmatprep.subr.mxu0 0.0
  %143 = vmatpush1.msra.mxu0 %v46
  %144 = vmatprep.subr.mxu0 0.0
  %145 = vmatpush1.msra.mxu0 %v47
  %146 = vmatprep.subr.mxu0 0.0
  %147 = vmatpush1.msra.mxu0 %v48
  %148 = vmatprep.subr.mxu0 0.0
  %149 = vmatpush1.msra.mxu0 %v49
  %150 = vmatprep.subr.mxu0 0.0
  %151 = vmatpush1.msra.mxu0 %v50
  %152 = vmatprep.subr.mxu0 0.0
  %153 = vmatpush1.msra.mxu0 %v51
  %154 = vmatprep.subr.mxu0 0.0
  %155 = vmatpush1.msra.mxu0 %v52
  %156 = vmatprep.subr.mxu0 0.0
  %157 = vmatpush1.msra.mxu0 %v53
  %158 = vmatprep.subr.mxu0 0.0
  %159 = vmatpush1.msra.mxu0 %v54
  %160 = vmatprep.subr.mxu0 0.0
  %161 = vmatpush1.msra.mxu0 %v55
  %162 = vmatprep.subr.mxu0 0.0
  %163 = vmatpush1.msra.mxu0 %v56
  %164 = vmatprep.subr.mxu0 0.0
  %165 = vmatpush1.msra.mxu0 %v57
  %166 = vmatprep.subr.mxu0 0.0
  %167 = vmatpush1.msra.mxu0 %v58
  %168 = vmatprep.subr.mxu0 0.0
  %169 = vmatpush1.msra.mxu0 %v59
  %170 = vmatprep.subr.mxu0 0.0
  %171 = vmatpush1.msra.mxu0 %v60
  %172 = vmatprep.subr.mxu0 0.0
  %173 = vmatpush1.msra.mxu0 %v61
  %174 = vmatprep.mubr.f32.mxu0 %v15
  %175 = vmatmul.mubr.f32.gmra.mrb[0].mxu0 %v14
  %v176 = vpop.f32.mrb[0].mxu0
  %v177 = vadd.f32 %v73, %v176
  %v178 = vpop.f32.mrb[0].mxu0
  %179 = vmatprep.mubr.f32.mxu0 %v17
  %180 = vmatmul.mubr.f32.gmra.mrb[0].mxu0 %v16
  %v181 = vpop.f32.mrb[0].mxu0
  %v182 = vadd.f32 %v78, %v181
  %v183 = vpop.f32.mrb[0].mxu0
  %184 = vmatprep.mubr.f32.mxu0 %v19
  %185 = vmatmul.mubr.f32.gmra.mrb[0].mxu0 %v18
  %v186 = vpop.f32.mrb[0].mxu0
  %v187 = vadd.f32 %v83, %v186
  %v188 = vpop.f32.mrb[0].mxu0
  %189 = vmatprep.mubr.f32.mxu0 %v21
  %190 = vmatmul.mubr.f32.gmra.mrb[0].mxu0 %v20
  %v191 = vpop.f32.mrb[0].mxu0
  %v192 = vadd.f32 %v88, %v191
  %v193 = vpop.f32.mrb[0].mxu0
  %194 = vmatprep.mubr.f32.mxu0 %v23
  %195 = vmatmul.mubr.f32.gmra.mrb[0].mxu0 %v22
  %v196 = vpop.f32.mrb[0].mxu0
  %v197 = vadd.f32 %v93, %v196
  %v198 = vpop.f32.mrb[0].mxu0
  %199 = vmatprep.mubr.f32.mxu0 %v25
  %200 = vmatmul.mubr.f32.gmra.mrb[0].mxu0 %v24
  %v201 = vpop.f32.mrb[0].mxu0
  %v202 = vadd.f32 %v98, %v201
  %v203 = vpop.f32.mrb[0].mxu0
  %204 = vmatprep.mubr.f32.mxu0 %v27
  %205 = vmatmul.mubr.f32.gmra.mrb[0].mxu0 %v26
  %v206 = vpop.f32.mrb[0].mxu0
  %v207 = vadd.f32 %v103, %v206
  %v208 = vpop.f32.mrb[0].mxu0
  %209 = vmatprep.mubr.f32.mxu0 %v29
  %210 = vmatmul.mubr.f32.gmra.mrb[0].mxu0 %v28
  %v211 = vpop.f32.mrb[0].mxu0
  %v212 = vadd.f32 %v108, %v211
  %v213 = vpop.f32.mrb[0].mxu0
  %214 = vdwg.mxu0
  %v215 = vtanh.pop %v177
  %v216 = vtanh.pop %v182
  %v217 = vtanh.pop %v187
  %v218 = vtanh.pop %v192
  %v219 = vtanh.pop %v197
  %v220 = vtanh.pop %v202
  %v221 = vtanh.pop %v207
  %v222 = vtanh.pop %v212
  %vm223 = vcmask 15360
  %224 = vst.msk [vmem:[%s3] sm:$0xff] %vm223, %v215
  %225 = vst.msk [vmem:[%s3 + $0x8] sm:$0xff] %vm223, %v216
  %226 = vst.msk [vmem:[%s3 + $0x10] sm:$0xff] %vm223, %v217
  %227 = vst.msk [vmem:[%s3 + $0x18] sm:$0xff] %vm223, %v218
  %228 = vst.msk [vmem:[%s3 + $0x20] sm:$0xff] %vm223, %v219
  %229 = vst.msk [vmem:[%s3 + $0x28] sm:$0xff] %vm223, %v220
  %230 = vst.msk [vmem:[%s3 + $0x30] sm:$0xff] %vm223, %v221
  %231 = vst.msk [vmem:[%s3 + $0x38] sm:$0xff] %vm223, %v222
  // Predicated region
  $region14: #{encoder_forward.11} parent=0 // pred_check
    _
  $region15: #{encoder_forward.11} parent=0 // pred_check_branch
    %233 = sbr.rel (0) target = $region17
  $region16: #{encoder_forward.11} parent=0 // pred_region
    _
  $region17: #{encoder_forward.11} parent=0 // pred_fallthru
    _
  // Predicated region
  $region18: #{encoder_forward.11} parent=0 // pred_check
    _
  $region19: #{encoder_forward.11} parent=0 // pred_check_branch
    %235 = sbr.rel (0) target = $region21
  $region20: #{encoder_forward.11} parent=0 // pred_region
    _
  $region21: #{encoder_forward.11} parent=0 // pred_fallthru
    _

</llo_original>
